<compile_context>
chip_gen: v5e
topology: v5e:2x2
jax: 0.10.0
libtpu: 0.0.40
codegen_flags: <defaults>
</compile_context>

<pallas_src>
import math

import numpy as np
import jax
import jax.numpy as jnp
from jax import lax
from jax.experimental import pallas as pl
from jax.experimental.pallas import tpu as pltpu

# ---------------- hyperparameters (module __init__ defaults) ----------------
HIDDEN = 16
OUT_CH = 16
NUM_BLOCKS = 2
INT_EMB = 32
BASIS_EMB = 4
OUT_EMB = 32
NUM_SPH = 5
NUM_RAD = 4
CUTOFF = 5.0
ENV_EXP = 5
NUM_BEFORE_SKIP = 1
NUM_AFTER_SKIP = 1
NUM_OUTPUT_LAYERS = 2

FEAT = 128                       # lane-padded feature width shared by all activations/weights
EDGE_TILE = 512                  # row tile for edge-axis grids (parallel / arbitrary)
TRIP_TILE = 256                  # row tile for triplet-axis grid (arbitrary, accumulating)
VMEM_LIMIT_BYTES = 32 * 1024 * 1024   # explicit scoped-VMEM cap (safe on v5e/v6e/v7x)


def _round_up(v, m):
    return ((max(v, 1) + m - 1) // m) * m


# ========================= in-kernel helpers ================================
def _silu(y):
    # y * sigmoid(y); the reciprocal runs approximately on the EUP slot.
    return y * pl.reciprocal(1.0 + jnp.exp(-y), approx=True)


def _mm(a, w_bf16):
    # bf16 operands, f32 accumulation on the MXU.
    return jnp.dot(a.astype(jnp.bfloat16), w_bf16,
                   preferred_element_type=jnp.float32)


def _scatter_one_hot(num_rows, idx_row):
    # idx_row: (1, cols) int32.  one_hot[r, c] = (idx_row[0, c] == r); bf16 (0/1 exact).
    cols = idx_row.shape[1]
    eq = lax.broadcasted_iota(jnp.int32, (num_rows, cols), 0) == idx_row
    return jnp.where(eq, 1.0, 0.0).astype(jnp.bfloat16)


# ============================ Pallas kernels ================================
def _embedding_kernel(xcat_ref, rbf_ref, w_rbf_ref, b_rbf_ref, w_emb_ref, b_emb_ref, x_ref):
    # EmbeddingBlock.  xcat holds x_i in lanes 0:16 and x_j in lanes 16:32; silu(lin_rbf(rbf))
    # is produced in lanes 32:48 via a column-shifted weight, so concat == add.
    rbf_h = _silu(_mm(rbf_ref[...], w_rbf_ref[...]) + b_rbf_ref[...])
    z_in = xcat_ref[...].astype(jnp.float32) + rbf_h
    x_ref[...] = _silu(_mm(z_in, w_emb_ref[...]) + b_emb_ref[...]).astype(jnp.bfloat16)


def _inter_edge_kernel(x_ref, rbf_ref, w_ref, b_ref, xji_ref, xkj_ref):
    # Interaction block, edge-level stage.  lin_ji / lin_kj are lane-packed into one weight:
    # columns 0:16 -> x_ji, columns 16:32 -> x_kj.  rbf chain lands on lanes 16:32; lin_down
    # reads rows 16:32 and writes lanes 0:32.
    y = _silu(_mm(x_ref[...], w_ref[0]) + b_ref[0:1, :])
    lane = lax.broadcasted_iota(jnp.int32, y.shape, 1)
    xji_ref[...] = jnp.where(lane < HIDDEN, y, 0.0).astype(jnp.bfloat16)

    rbf_e = _mm(rbf_ref[...], w_ref[1])          # lin_rbf1@lin_rbf2, shifted to lanes 16:32
    ykj = y * rbf_e                              # zeroes the x_ji lanes
    xkj_ref[...] = _silu(_mm(ykj, w_ref[2])).astype(jnp.bfloat16)   # lin_down (no bias)


def _inter_scatter_kernel(xt_ref, sbf_ref, ji_ref, x_ref, xji_ref, w_ref, b_ref,
                          o_ref, acc_ref):
    # Interaction block, triplet-tiled stage: triplet->edge scatter-sum accumulates into
    # an (e_pad, FEAT) f32 scratch; residual MLP runs in the last-step epilogue.
    step = pl.program_id(0)

    @pl.when(step == 0)
    def _():
        acc_ref[...] = jnp.zeros_like(acc_ref)

    sbf_e = _mm(sbf_ref[...], w_ref[0])                       # lin_sbf1@lin_sbf2 (pre-mult)
    xt = xt_ref[...].astype(jnp.float32) * sbf_e              # gathered x_kj * sbf
    e_pad = acc_ref.shape[0]
    oh = _scatter_one_hot(e_pad, ji_ref[...])                 # [e_pad, t_tile] bf16
    acc_ref[...] += jnp.dot(oh, xt.astype(jnp.bfloat16),
                            preferred_element_type=jnp.float32)

    @pl.when(step == pl.num_programs(0) - 1)
    def _():
        x_kj = _silu(_mm(acc_ref[...], w_ref[1]))             # lin_up (no bias)
        h = xji_ref[...].astype(jnp.float32) + x_kj
        wi, bi = 2, 0
        for _ in range(NUM_BEFORE_SKIP):
            r = _silu(_mm(h, w_ref[wi]) + b_ref[bi:bi + 1, :])
            r = _silu(_mm(r, w_ref[wi + 1]) + b_ref[bi + 1:bi + 2, :])
            h = h + r
            wi += 2
            bi += 2
        h = _silu(_mm(h, w_ref[wi]) + b_ref[bi:bi + 1, :]) + x_ref[...].astype(jnp.float32)
        wi += 1
        bi += 1
        for _ in range(NUM_AFTER_SKIP):
            r = _silu(_mm(h, w_ref[wi]) + b_ref[bi:bi + 1, :])
            r = _silu(_mm(r, w_ref[wi + 1]) + b_ref[bi + 1:bi + 2, :])
            h = h + r
            wi += 2
            bi += 2
        o_ref[...] = h.astype(jnp.bfloat16)


def _output_kernel(x_ref, rbf_ref, irow_ref, brow_ref, w_ref, b_ref, o_ref, acc_ref):
    # OutputPPBlock, edge-tiled: edge->node scatter accumulates into an (n_pad, FEAT) f32
    # scratch; node MLP + node->graph scatter run in the last-step epilogue.
    step = pl.program_id(0)

    @pl.when(step == 0)
    def _():
        acc_ref[...] = jnp.zeros_like(acc_ref)

    g = _mm(rbf_ref[...], w_ref[0])                           # lin_rbf (no bias)
    xe = g * x_ref[...].astype(jnp.float32)
    n_pad = acc_ref.shape[0]
    oh = _scatter_one_hot(n_pad, irow_ref[...])               # [n_pad, e_tile] bf16
    acc_ref[...] += jnp.dot(oh, xe.astype(jnp.bfloat16),
                            preferred_element_type=jnp.float32)

    @pl.when(step == pl.num_programs(0) - 1)
    def _():
        xn = _mm(acc_ref[...], w_ref[1])                      # lin_up (no bias)
        for li in range(NUM_OUTPUT_LAYERS):
            xn = _silu(_mm(xn, w_ref[2 + li]) + b_ref[li:li + 1, :])
        node_out = _mm(xn, w_ref[2 + NUM_OUTPUT_LAYERS])      # lin (no bias)
        # node -> graph scatter (tiny, kept f32 so the final graph sum is exact).
        g_pad = o_ref.shape[0]
        geq = lax.broadcasted_iota(jnp.int32, (g_pad, n_pad), 0) == brow_ref[...]
        goh = jnp.where(geq, 1.0, 0.0)
        o_ref[...] = jnp.dot(goh, node_out, preferred_element_type=jnp.float32)


# ============================ kernel wrappers ================================
def embedding_block_call(xcat, rbf, emb):
    e_pad = xcat.shape[0]
    row = pl.BlockSpec((EDGE_TILE, FEAT), lambda i: (i, 0))
    wfull = pl.BlockSpec((FEAT, FEAT), lambda i: (0, 0))
    bfull = pl.BlockSpec((1, FEAT), lambda i: (0, 0))
    return pl.pallas_call(
        _embedding_kernel,
        out_shape=jax.ShapeDtypeStruct((e_pad, FEAT), jnp.bfloat16),
        grid=(e_pad // EDGE_TILE,),
        in_specs=[row, row, wfull, bfull, wfull, bfull],
        out_specs=row,
        compiler_params=pltpu.CompilerParams(
            dimension_semantics=("parallel",), vmem_limit_bytes=VMEM_LIMIT_BYTES),
    )(xcat, rbf, emb["w_rbf"], emb["b_rbf"], emb["w_emb"], emb["b_emb"])


def inter_edge_call(x, rbf, W, B):
    e_pad = x.shape[0]
    row = pl.BlockSpec((EDGE_TILE, FEAT), lambda i: (i, 0))
    wspec = pl.BlockSpec((W.shape[0], FEAT, FEAT), lambda i: (0, 0, 0))
    bspec = pl.BlockSpec((B.shape[0], FEAT), lambda i: (0, 0))
    return pl.pallas_call(
        _inter_edge_kernel,
        out_shape=(jax.ShapeDtypeStruct((e_pad, FEAT), jnp.bfloat16),
                   jax.ShapeDtypeStruct((e_pad, FEAT), jnp.bfloat16)),
        grid=(e_pad // EDGE_TILE,),
        in_specs=[row, row, wspec, bspec],
        out_specs=(row, row),
        compiler_params=pltpu.CompilerParams(
            dimension_semantics=("parallel",), vmem_limit_bytes=VMEM_LIMIT_BYTES),
    )(x, rbf, W, B)


def inter_scatter_call(xt, sbf, ji_row, x, x_ji, W, B):
    t_pad = xt.shape[0]
    e_pad = x.shape[0]
    trow = pl.BlockSpec((TRIP_TILE, FEAT), lambda t: (t, 0))
    jispec = pl.BlockSpec((1, TRIP_TILE), lambda t: (0, t))
    efull = pl.BlockSpec((e_pad, FEAT), lambda t: (0, 0))
    wspec = pl.BlockSpec((W.shape[0], FEAT, FEAT), lambda t: (0, 0, 0))
    bspec = pl.BlockSpec((B.shape[0], FEAT), lambda t: (0, 0))
    return pl.pallas_call(
        _inter_scatter_kernel,
        out_shape=jax.ShapeDtypeStruct((e_pad, FEAT), jnp.bfloat16),
        grid=(t_pad // TRIP_TILE,),
        in_specs=[trow, trow, jispec, efull, efull, wspec, bspec],
        out_specs=efull,
        scratch_shapes=[pltpu.VMEM((e_pad, FEAT), jnp.float32)],
        compiler_params=pltpu.CompilerParams(
            dimension_semantics=("arbitrary",), vmem_limit_bytes=VMEM_LIMIT_BYTES),
    )(xt, sbf, ji_row, x, x_ji, W, B)


def output_block_call(x, rbf, i_row, batch_row, W, B, n_pad, g_pad):
    e_pad = x.shape[0]
    erow = pl.BlockSpec((EDGE_TILE, FEAT), lambda e: (e, 0))
    ispec = pl.BlockSpec((1, EDGE_TILE), lambda e: (0, e))
    nfull = pl.BlockSpec((1, n_pad), lambda e: (0, 0))
    wspec = pl.BlockSpec((W.shape[0], FEAT, FEAT), lambda e: (0, 0, 0))
    bspec = pl.BlockSpec((B.shape[0], FEAT), lambda e: (0, 0))
    gout = pl.BlockSpec((g_pad, FEAT), lambda e: (0, 0))
    return pl.pallas_call(
        _output_kernel,
        out_shape=jax.ShapeDtypeStruct((g_pad, FEAT), jnp.float32),
        grid=(e_pad // EDGE_TILE,),
        in_specs=[erow, erow, ispec, nfull, wspec, bspec],
        out_specs=gout,
        scratch_shapes=[pltpu.VMEM((n_pad, FEAT), jnp.float32)],
        compiler_params=pltpu.CompilerParams(
            dimension_semantics=("arbitrary",), vmem_limit_bytes=VMEM_LIMIT_BYTES),
    )(x, rbf, i_row, batch_row, W, B)


# ====================== radial / spherical basis (glue) =====================
_P_ENV = ENV_EXP + 1
_ENV_A = -(_P_ENV + 1) * (_P_ENV + 2) / 2.0
_ENV_B = _P_ENV * (_P_ENV + 2)
_ENV_C = -_P_ENV * (_P_ENV + 1) / 2.0


def envelope(x):
    xp0 = x ** (_P_ENV - 1)
    xp1 = xp0 * x
    xp2 = xp1 * x
    return (1.0 / x + _ENV_A * xp0 + _ENV_B * xp1 + _ENV_C * xp2) * (x < 1.0).astype(x.dtype)


def bessel_rbf(dist, freq):
    d = (dist / CUTOFF)[:, None]
    return envelope(d) * jnp.sin(freq[None, :] * d)


def _sph_jl_jax(l, x):
    s, c = jnp.sin(x), jnp.cos(x)
    if l == 0:
        return s / x
    if l == 1:
        return s / x**2 - c / x
    if l == 2:
        return (3.0 / x**3 - 1.0 / x) * s - 3.0 / x**2 * c
    if l == 3:
        return (15.0 / x**4 - 6.0 / x**2) * s - (15.0 / x**3 - 1.0 / x) * c
    return (105.0 / x**5 - 45.0 / x**3 + 1.0 / x) * s - (105.0 / x**4 - 10.0 / x**2) * c


def _real_sph_harm(l, theta):
    c = jnp.cos(theta)
    if l == 0:
        return jnp.full_like(theta, 0.5 * math.sqrt(1.0 / math.pi))
    if l == 1:
        return 0.5 * math.sqrt(3.0 / math.pi) * c
    if l == 2:
        return 0.25 * math.sqrt(5.0 / math.pi) * (3.0 * c**2 - 1.0)
    if l == 3:
        return 0.25 * math.sqrt(7.0 / math.pi) * (5.0 * c**3 - 3.0 * c)
    return (3.0 / 16.0) * math.sqrt(1.0 / math.pi) * (35.0 * c**4 - 30.0 * c**2 + 3.0)


def spherical_sbf(dist, angle, idx_kj, bess_zeros, bess_norms):
    d = dist / CUTOFF
    env = envelope(d)
    per_l = []
    for l in range(NUM_SPH):
        xl = bess_zeros[l][None, :] * d[:, None]
        per_l.append(bess_norms[l][None, :] * _sph_jl_jax(l, xl))
    rbf = jnp.stack(per_l, axis=1) * env[:, None, None]            # [E, NS, NR]
    rbf_t = jnp.take(rbf, idx_kj, axis=0)                          # [T, NS, NR]
    cbf = jnp.stack([_real_sph_harm(l, angle) for l in range(NUM_SPH)], axis=1)
    return (rbf_t * cbf[:, :, None]).reshape(-1, NUM_SPH * NUM_RAD)


# spherical Bessel zeros / normalizers (numpy, deterministic, in-script)
def _sph_jn_np(l, x):
    x = np.asarray(x, dtype=np.float64)
    j0 = np.sin(x) / x
    if l == 0:
        return j0
    j1 = np.sin(x) / x**2 - np.cos(x) / x
    jm1, jc = j0, j1
    for n in range(1, l):
        jn1 = (2 * n + 1) / x * jc - jm1
        jm1, jc = jc, jn1
    return jc


def _sph_jn_zeros(n_orders, k):
    zeros = np.zeros((n_orders, k))
    xs = np.linspace(0.5, 80.0, 200000)
    for l in range(n_orders):
        vals = _sph_jn_np(l, xs)
        found = []
        t = 0
        while len(found) < k and t < len(xs) - 1:
            if vals[t] * vals[t + 1] < 0:
                a, b = xs[t], xs[t + 1]
                fa = _sph_jn_np(l, np.array([a]))[0]
                for _ in range(80):
                    m = 0.5 * (a + b)
                    fm = _sph_jn_np(l, np.array([m]))[0]
                    if fa * fm <= 0:
                        b = m
                    else:
                        a, fa = m, fm
                found.append(0.5 * (a + b))
            t += 1
        zeros[l] = found
    return zeros


def _bessel_norms(zeros):
    n_orders, _ = zeros.shape
    norms = np.zeros_like(zeros)
    for l in range(n_orders):
        norms[l] = 1.0 / np.sqrt(0.5 * _sph_jn_np(l + 1, zeros[l]) ** 2)
    return norms


# ==================== graph construction (host-side glue) ===================
def radius_graph_np(pos, r, batch):
    n = pos.shape[0]
    rows, cols = [], []
    for a in range(n):
        for b in range(n):
            if a == b or batch[a] != batch[b]:
                continue
            if np.linalg.norm(pos[a] - pos[b]) < r:
                rows.append(a)
                cols.append(b)
    return np.array([rows, cols], dtype=np.int64)


def triplets_np(edge_index, num_nodes):
    row, col = edge_index
    adj = [[] for _ in range(num_nodes)]
    for e, (j, k) in enumerate(zip(row, col)):
        adj[j].append((k, e))
    idx_i, idx_j, idx_k, idx_kj, idx_ji = [], [], [], [], []
    for j in range(num_nodes):
        for k, e_kj in adj[j]:
            for i, e_ji in adj[j]:
                if i != k:
                    idx_i.append(i)
                    idx_j.append(j)
                    idx_k.append(k)
                    idx_kj.append(e_kj)
                    idx_ji.append(e_ji)
    return (col, row,
            np.array(idx_i, dtype=np.int64), np.array(idx_j, dtype=np.int64),
            np.array(idx_k, dtype=np.int64), np.array(idx_kj, dtype=np.int64),
            np.array(idx_ji, dtype=np.int64))


# ====================== deterministic parameter init ========================
def init_params(key):
    keys = iter(jax.random.split(key, 512))

    def w(shape, scale=0.1):
        return scale * jax.random.normal(next(keys), shape, dtype=jnp.float32)

    def zeros(n):
        return jnp.zeros((n,), jnp.float32)

    params = {
        "freq": jnp.arange(1, NUM_RAD + 1, dtype=jnp.float32) * math.pi,
        "emb_weight": jax.random.uniform(next(keys), (95, HIDDEN), jnp.float32,
                                         minval=-math.sqrt(3.0), maxval=math.sqrt(3.0)),
        "emb_lin_rbf": (w((NUM_RAD, HIDDEN)), zeros(HIDDEN)),
        "emb_lin": (w((3 * HIDDEN, HIDDEN)), zeros(HIDDEN)),
    }
    params["output_blocks"] = [
        {
            "lin_rbf": w((NUM_RAD, HIDDEN)),
            "lin_up": w((HIDDEN, OUT_EMB)),
            "lins": [(w((OUT_EMB, OUT_EMB)), zeros(OUT_EMB)) for _ in range(NUM_OUTPUT_LAYERS)],
            "lin": w((OUT_EMB, OUT_CH)),
        }
        for _ in range(NUM_BLOCKS + 1)
    ]
    params["interaction_blocks"] = [
        {
            "lin_rbf1": w((NUM_RAD, BASIS_EMB)),
            "lin_rbf2": w((BASIS_EMB, HIDDEN)),
            "lin_sbf1": w((NUM_SPH * NUM_RAD, BASIS_EMB)),
            "lin_sbf2": w((BASIS_EMB, INT_EMB)),
            "lin_kj": (w((HIDDEN, HIDDEN)), zeros(HIDDEN)),
            "lin_ji": (w((HIDDEN, HIDDEN)), zeros(HIDDEN)),
            "lin_down": w((HIDDEN, INT_EMB)),
            "lin_up": w((INT_EMB, HIDDEN)),
            "before_skip": [((w((HIDDEN, HIDDEN)), zeros(HIDDEN)),
                             (w((HIDDEN, HIDDEN)), zeros(HIDDEN))) for _ in range(NUM_BEFORE_SKIP)],
            "lin": (w((HIDDEN, HIDDEN)), zeros(HIDDEN)),
            "after_skip": [((w((HIDDEN, HIDDEN)), zeros(HIDDEN)),
                            (w((HIDDEN, HIDDEN)), zeros(HIDDEN))) for _ in range(NUM_AFTER_SKIP)],
        }
        for _ in range(NUM_BLOCKS)
    ]
    return params


# =============== one-time weight padding / lane-packing / stacking ===========
def _place(w, r0, c0):
    w = jnp.asarray(w, jnp.float32)
    out = jnp.zeros((FEAT, FEAT), jnp.float32)
    return out.at[r0:r0 + w.shape[0], c0:c0 + w.shape[1]].set(w)


def _place_bias(b, c0):
    b = jnp.asarray(b, jnp.float32)
    return jnp.zeros((FEAT,), jnp.float32).at[c0:c0 + b.shape[0]].set(b)


def _stack_bias(bias_list):
    B = jnp.zeros((_round_up(len(bias_list), 8), FEAT), jnp.float32)
    for k, b in enumerate(bias_list):
        B = B.at[k, :].set(b)
    return B


def prepare_params(params):
    prep = {}

    # --- embedding block: lin_rbf column-shifted to lanes 32:48; emb_lin kept full.
    w_rbf, b_rbf = params["emb_lin_rbf"]
    w_emb, b_emb = params["emb_lin"]
    prep["emb"] = {
        "w_rbf": _place(w_rbf, 0, 2 * HIDDEN).astype(jnp.bfloat16),
        "b_rbf": _place_bias(b_rbf, 2 * HIDDEN)[None, :],
        "w_emb": _place(w_emb, 0, 0).astype(jnp.bfloat16),
        "b_emb": _place_bias(b_emb, 0)[None, :],
    }

    # --- output blocks
    prep["out"] = []
    for p in params["output_blocks"]:
        ws = [_place(p["lin_rbf"], 0, 0), _place(p["lin_up"], 0, 0)]
        ws += [_place(wl, 0, 0) for (wl, _) in p["lins"]]
        ws += [_place(p["lin"], 0, 0)]
        W = jnp.stack(ws).astype(jnp.bfloat16)
        B = _stack_bias([_place_bias(bl, 0) for (_, bl) in p["lins"]])
        prep["out"].append((W, B))

    # --- interaction blocks
    prep["int"] = []
    for p in params["interaction_blocks"]:
        # stage 1: lin_ji (cols 0:16) + lin_kj (cols 16:32) lane-packed; rbf chain shifted
        # to lanes 16:32; lin_down reads rows 16:32.
        w_ji, b_ji = p["lin_ji"]
        w_kj, b_kj = p["lin_kj"]
        w_jikj = _place(w_ji, 0, 0) + _place(w_kj, 0, HIDDEN)
        b_jikj = _place_bias(b_ji, 0) + _place_bias(b_kj, HIDDEN)
        w_rbf_c = jnp.asarray(p["lin_rbf1"], jnp.float32) @ jnp.asarray(p["lin_rbf2"], jnp.float32)
        W1 = jnp.stack([w_jikj,
                        _place(w_rbf_c, 0, HIDDEN),
                        _place(p["lin_down"], HIDDEN, 0)]).astype(jnp.bfloat16)
        B1 = _stack_bias([b_jikj])

        # stage 2: sbf chain (pre-multiplied), lin_up, residual MLP weights.
        w_sbf_c = jnp.asarray(p["lin_sbf1"], jnp.float32) @ jnp.asarray(p["lin_sbf2"], jnp.float32)
        ws = [_place(w_sbf_c, 0, 0), _place(p["lin_up"], 0, 0)]
        bs = []
        for (l1, l2) in p["before_skip"]:
            ws += [_place(l1[0], 0, 0), _place(l2[0], 0, 0)]
            bs += [_place_bias(l1[1], 0), _place_bias(l2[1], 0)]
        ws.append(_place(p["lin"][0], 0, 0))
        bs.append(_place_bias(p["lin"][1], 0))
        for (l1, l2) in p["after_skip"]:
            ws += [_place(l1[0], 0, 0), _place(l2[0], 0, 0)]
            bs += [_place_bias(l1[1], 0), _place_bias(l2[1], 0)]
        W2 = jnp.stack(ws).astype(jnp.bfloat16)
        B2 = _stack_bias(bs)
        prep["int"].append((W1, B1, W2, B2))
    return prep


# ============================= forward pass =================================
def dimenet_forward(prep, emb_table, freq, z, pos, batch, graph,
                    bess_zeros, bess_norms, num_graphs):
    i_idx, j_idx, idx_i, idx_j, idx_k, idx_kj, idx_ji = graph

    E = int(i_idx.shape[0])
    T = int(idx_kj.shape[0])
    N = int(pos.shape[0])

    dist = jnp.sqrt(jnp.sum((pos[i_idx] - pos[j_idx]) ** 2, axis=-1))
    pos_jk = pos[idx_j] - pos[idx_k]
    pos_ij = pos[idx_i] - pos[idx_j]
    a = jnp.sum(pos_ij * pos_jk, axis=-1)
    b = jnp.linalg.norm(jnp.cross(pos_ij, pos_jk), axis=-1)
    angle = jnp.arctan2(b, a)

    rbf = bessel_rbf(dist, freq)                                      # [E, NR]
    sbf = spherical_sbf(dist, angle, idx_kj, bess_zeros, bess_norms)  # [T, NS*NR]

    e_pad = _round_up(E, EDGE_TILE)
    t_pad = _round_up(T, TRIP_TILE)
    n_pad = _round_up(N, 8)
    g_pad = _round_up(num_graphs, 8)

    def pad_rows_bf16(v, rows, col0=0):
        out = jnp.zeros((rows, FEAT), jnp.float32)
        out = out.at[:v.shape[0], col0:col0 + v.shape[1]].set(v.astype(jnp.float32))
        return out.astype(jnp.bfloat16)

    # lane-dense bf16 padded activations, built once, kept padded end-to-end.
    x_node = jnp.take(emb_table, z, axis=0)                           # [N, H]
    xcat = jnp.concatenate([jnp.take(x_node, i_idx, axis=0),
                            jnp.take(x_node, j_idx, axis=0)], axis=1)  # [E, 2H]
    xcat_p = pad_rows_bf16(xcat, e_pad)
    rbf_p = pad_rows_bf16(rbf, e_pad)
    sbf_p = pad_rows_bf16(sbf, t_pad)

    # int32 index vectors for the in-kernel one-hot scatters (-1 = padding).
    i_row = jnp.full((1, e_pad), -1, jnp.int32).at[0, :E].set(i_idx.astype(jnp.int32))
    batch_row = jnp.full((1, n_pad), -1, jnp.int32).at[0, :N].set(batch.astype(jnp.int32))
    ji_row = jnp.full((1, t_pad), -1, jnp.int32).at[0, :T].set(idx_ji.astype(jnp.int32))
    kj_gather = jnp.zeros((t_pad,), jnp.int32).at[:T].set(idx_kj.astype(jnp.int32))

    # embedding block (edge-tiled, parallel)
    x = embedding_block_call(xcat_p, rbf_p, prep["emb"])              # [e_pad, FEAT] bf16

    Wo, Bo = prep["out"][0]
    P = output_block_call(x, rbf_p, i_row, batch_row, Wo, Bo, n_pad, g_pad)
    for blk in range(NUM_BLOCKS):
        W1, B1, W2, B2 = prep["int"][blk]
        x_ji, x_kj_down = inter_edge_call(x, rbf_p, W1, B1)
        # real edge->triplet gather (XLA); padding triplets gather edge 0 and are
        # zeroed by sbf padding rows + the -1 ji scatter index.
        xt_gath = jnp.take(x_kj_down, kj_gather, axis=0)              # [t_pad, FEAT] bf16
        x = inter_scatter_call(xt_gath, sbf_p, ji_row, x, x_ji, W2, B2)
        Wo, Bo = prep["out"][blk + 1]
        P = P + output_block_call(x, rbf_p, i_row, batch_row, Wo, Bo, n_pad, g_pad)

    return P[:num_graphs, :OUT_CH]


# ================================= main ======================================
if __name__ == "__main__":
    key = jax.random.PRNGKey(0)
    kp, kz, kpos = jax.random.split(key, 3)
    params = init_params(kp)
    prep = prepare_params(params)

    # small deterministic inputs: 2 molecules x 4 atoms
    N = 8
    num_graphs = 2
    batch_np = np.array([0, 0, 0, 0, 1, 1, 1, 1], dtype=np.int32)
    z_np = np.asarray(jax.random.randint(kz, (N,), 1, 10, dtype=jnp.int32))
    pos_np = np.asarray(jax.random.normal(kpos, (N, 3), dtype=jnp.float32)) * 1.5

    edge_index = radius_graph_np(pos_np, CUTOFF, batch_np)
    trip = triplets_np(edge_index, N)
    graph = tuple(jnp.asarray(t, dtype=jnp.int32) for t in trip)

    zeros_np = _sph_jn_zeros(NUM_SPH, NUM_RAD)
    bess_zeros = jnp.asarray(zeros_np, jnp.float32)
    bess_norms = jnp.asarray(_bessel_norms(zeros_np), jnp.float32)

    fwd = jax.jit(dimenet_forward, static_argnums=(9,))
    out = fwd(prep, params["emb_weight"], params["freq"],
              jnp.asarray(z_np), jnp.asarray(pos_np), jnp.asarray(batch_np),
              graph, bess_zeros, bess_norms, num_graphs)
    out = jax.block_until_ready(out)

    assert out.shape == (num_graphs, OUT_CH), out.shape
    assert np.all(np.isfinite(np.asarray(out)))
    print("KERNEL_OK")
</pallas_src>

<mosaic_0001>
module attributes {stable_mosaic.version = 11 : i64} {
  func.func @_output_kernel(%arg0: i32, %arg1: memref<512x128xbf16, #tpu.memory_space<vmem>>, %arg2: memref<512x128xbf16, #tpu.memory_space<vmem>>, %arg3: memref<1x512xi32, #tpu.memory_space<vmem>>, %arg4: memref<1x8xi32, #tpu.memory_space<vmem>>, %arg5: memref<5x128x128xbf16, #tpu.memory_space<vmem>>, %arg6: memref<8x128xf32, #tpu.memory_space<vmem>>, %arg7: memref<8x128xf32, #tpu.memory_space<vmem>>, %arg8: memref<8x128xf32, #tpu.memory_space<vmem>>) attributes {dimension_semantics = [#tpu.dimension_semantics<arbitrary>], iteration_bounds = array<i64: 1>, scalar_prefetch = 0 : i64, scratch_operands = 1 : i64, tpu.core_type = #tpu.core_type<tc>, window_params = [{transform_indices = @transform_0, window_bounds = array<i64: 512, 128>}, {transform_indices = @transform_1, window_bounds = array<i64: 512, 128>}, {transform_indices = @transform_2, window_bounds = array<i64: 1, 512>}, {pipeline_mode = #tpu.pipeline_mode<synchronous>, transform_indices = @transform_3, window_bounds = array<i64: 1, 8>}, {pipeline_mode = #tpu.pipeline_mode<synchronous>, transform_indices = @transform_4, window_bounds = array<i64: 5, 128, 128>}, {pipeline_mode = #tpu.pipeline_mode<synchronous>, transform_indices = @transform_5, window_bounds = array<i64: 8, 128>}, {pipeline_mode = #tpu.pipeline_mode<synchronous>, transform_indices = @transform_6, window_bounds = array<i64: 8, 128>}]} {
    %c0_i32 = arith.constant 0 : i32
    %0 = arith.cmpi eq, %arg0, %c0_i32 : i32
    %1 = arith.extui %0 : i1 to i32
    %c0_i32_0 = arith.constant 0 : i32
    %2 = arith.cmpi ne, %1, %c0_i32_0 : i32
    scf.if %2 {
      %cst_18 = arith.constant 0.000000e+00 : f32
      %26 = vector.broadcast %cst_18 : f32 to vector<8x128xf32>
      %c0_19 = arith.constant 0 : index
      %c0_20 = arith.constant 0 : index
      %27 = vector.load %arg8[%c0_19, %c0_20] : memref<8x128xf32, #tpu.memory_space<vmem>>, vector<8x128xf32>
      tpu.vector_store %arg8[%c0_19, %c0_20], %26 {strides = array<i32>} : memref<8x128xf32, #tpu.memory_space<vmem>>, vector<8x128xf32>,
    } else {
    }
    %c0 = arith.constant 0 : index
    %c0_1 = arith.constant 0 : index
    %3 = vector.load %arg2[%c0, %c0_1] : memref<512x128xbf16, #tpu.memory_space<vmem>>, vector<512x128xbf16>
    %c0_2 = arith.constant 0 : index
    %c0_3 = arith.constant 0 : index
    %c0_4 = arith.constant 0 : index
    %4 = vector.load %arg5[%c0_2, %c0_3, %c0_4] : memref<5x128x128xbf16, #tpu.memory_space<vmem>>, vector<1x128x128xbf16>
    %5 = vector.shape_cast %4 : vector<1x128x128xbf16> to vector<128x128xbf16>
    %cst = arith.constant dense<0.000000e+00> : vector<512x128xf32>
    %6 = tpu.matmul %3, %5, %cst {dimension_numbers = #tpu.dot_dimension_numbers<[1], [0], [0], [1], [0, 0, 1, 1], [], []>} : vector<512x128xbf16>, vector<128x128xbf16>, vector<512x128xf32> -> vector<512x128xf32>
    %c0_5 = arith.constant 0 : index
    %c0_6 = arith.constant 0 : index
    %7 = vector.load %arg1[%c0_5, %c0_6] : memref<512x128xbf16, #tpu.memory_space<vmem>>, vector<512x128xbf16>
    %8 = arith.extf %7 : vector<512x128xbf16> to vector<512x128xf32>
    %9 = arith.mulf %6, %8 : vector<512x128xf32>
    %c0_7 = arith.constant 0 : index
    %c0_8 = arith.constant 0 : index
    %10 = vector.load %arg3[%c0_7, %c0_8] : memref<1x512xi32, #tpu.memory_space<vmem>>, vector<1x512xi32>
    %11 = tpu.iota {dimensions = array<i32: 0>} : vector<8x512xi32>
    %12 = vector.broadcast %10 : vector<1x512xi32> to vector<8x512xi32>
    %13 = arith.cmpi eq, %11, %12 : vector<8x512xi32>
    %cst_9 = arith.constant 1.000000e+00 : f32
    %cst_10 = arith.constant 0.000000e+00 : f32
    %14 = vector.broadcast %cst_9 : f32 to vector<8x512xf32>
    %15 = vector.broadcast %cst_10 : f32 to vector<8x512xf32>
    %16 = arith.select %13, %14, %15 : vector<8x512xi1>, vector<8x512xf32>
    %17 = arith.truncf %16 : vector<8x512xf32> to vector<8x512xbf16>
    %c0_11 = arith.constant 0 : index
    %c0_12 = arith.constant 0 : index
    %18 = vector.load %arg8[%c0_11, %c0_12] : memref<8x128xf32, #tpu.memory_space<vmem>>, vector<8x128xf32>
    %19 = arith.truncf %9 : vector<512x128xf32> to vector<512x128xbf16>
    %cst_13 = arith.constant dense<0.000000e+00> : vector<8x128xf32>
    %20 = tpu.matmul %17, %19, %cst_13 {dimension_numbers = #tpu.dot_dimension_numbers<[1], [0], [0], [1], [0, 0, 1, 1], [], []>} : vector<8x512xbf16>, vector<512x128xbf16>, vector<8x128xf32> -> vector<8x128xf32>
    %21 = arith.addf %18, %20 : vector<8x128xf32>
    %c0_14 = arith.constant 0 : index
    %c0_15 = arith.constant 0 : index
    %22 = vector.load %arg8[%c0_14, %c0_15] : memref<8x128xf32, #tpu.memory_space<vmem>>, vector<8x128xf32>
    tpu.vector_store %arg8[%c0_14, %c0_15], %21 {strides = array<i32>} : memref<8x128xf32, #tpu.memory_space<vmem>>, vector<8x128xf32>,
    %c0_i32_16 = arith.constant 0 : i32
    %23 = arith.cmpi eq, %arg0, %c0_i32_16 : i32
    %24 = arith.extui %23 : i1 to i32
    %c0_i32_17 = arith.constant 0 : i32
    %25 = arith.cmpi ne, %24, %c0_i32_17 : i32
    scf.if %25 {
      %c0_18 = arith.constant 0 : index
      %c0_19 = arith.constant 0 : index
      %26 = vector.load %arg8[%c0_18, %c0_19] : memref<8x128xf32, #tpu.memory_space<vmem>>, vector<8x128xf32>
      %c1 = arith.constant 1 : index
      %c0_20 = arith.constant 0 : index
      %c0_21 = arith.constant 0 : index
      %27 = vector.load %arg5[%c1, %c0_20, %c0_21] : memref<5x128x128xbf16, #tpu.memory_space<vmem>>, vector<1x128x128xbf16>
      %28 = vector.shape_cast %27 : vector<1x128x128xbf16> to vector<128x128xbf16>
      %29 = arith.truncf %26 : vector<8x128xf32> to vector<8x128xbf16>
      %cst_22 = arith.constant dense<0.000000e+00> : vector<8x128xf32>
      %30 = tpu.matmul %29, %28, %cst_22 {dimension_numbers = #tpu.dot_dimension_numbers<[1], [0], [0], [1], [0, 0, 1, 1], [], []>} : vector<8x128xbf16>, vector<128x128xbf16>, vector<8x128xf32> -> vector<8x128xf32>
      %c2 = arith.constant 2 : index
      %c0_23 = arith.constant 0 : index
      %c0_24 = arith.constant 0 : index
      %31 = vector.load %arg5[%c2, %c0_23, %c0_24] : memref<5x128x128xbf16, #tpu.memory_space<vmem>>, vector<1x128x128xbf16>
      %32 = vector.shape_cast %31 : vector<1x128x128xbf16> to vector<128x128xbf16>
      %33 = arith.truncf %30 : vector<8x128xf32> to vector<8x128xbf16>
      %cst_25 = arith.constant dense<0.000000e+00> : vector<8x128xf32>
      %34 = tpu.matmul %33, %32, %cst_25 {dimension_numbers = #tpu.dot_dimension_numbers<[1], [0], [0], [1], [0, 0, 1, 1], [], []>} : vector<8x128xbf16>, vector<128x128xbf16>, vector<8x128xf32> -> vector<8x128xf32>
      %c0_26 = arith.constant 0 : index
      %c0_27 = arith.constant 0 : index
      %35 = vector.load %arg6[%c0_26, %c0_27] : memref<8x128xf32, #tpu.memory_space<vmem>>, vector<1x128xf32>
      %36 = vector.broadcast %35 : vector<1x128xf32> to vector<8x128xf32>
      %37 = arith.addf %34, %36 : vector<8x128xf32>
      %cst_28 = arith.constant 0.000000e+00 : f32
      %38 = vector.broadcast %cst_28 : f32 to vector<8x128xf32>
      %39 = arith.subf %38, %37 : vector<8x128xf32>
      %40 = math.exp %39 : vector<8x128xf32>
      %cst_29 = arith.constant 1.000000e+00 : f32
      %41 = vector.broadcast %cst_29 : f32 to vector<8x128xf32>
      %42 = arith.addf %41, %40 : vector<8x128xf32>
      %43 = tpu.reciprocal %42 {approx = true} : vector<8x128xf32> -> vector<8x128xf32>
      %44 = arith.mulf %37, %43 : vector<8x128xf32>
      %c3 = arith.constant 3 : index
      %c0_30 = arith.constant 0 : index
      %c0_31 = arith.constant 0 : index
      %45 = vector.load %arg5[%c3, %c0_30, %c0_31] : memref<5x128x128xbf16, #tpu.memory_space<vmem>>, vector<1x128x128xbf16>
      %46 = vector.shape_cast %45 : vector<1x128x128xbf16> to vector<128x128xbf16>
      %47 = arith.truncf %44 : vector<8x128xf32> to vector<8x128xbf16>
      %cst_32 = arith.constant dense<0.000000e+00> : vector<8x128xf32>
      %48 = tpu.matmul %47, %46, %cst_32 {dimension_numbers = #tpu.dot_dimension_numbers<[1], [0], [0], [1], [0, 0, 1, 1], [], []>} : vector<8x128xbf16>, vector<128x128xbf16>, vector<8x128xf32> -> vector<8x128xf32>
      %c1_33 = arith.constant 1 : index
      %c0_34 = arith.constant 0 : index
      %49 = vector.load %arg6[%c1_33, %c0_34] : memref<8x128xf32, #tpu.memory_space<vmem>>, vector<1x128xf32>
      %50 = vector.broadcast %49 : vector<1x128xf32> to vector<8x128xf32>
      %51 = arith.addf %48, %50 : vector<8x128xf32>
      %cst_35 = arith.constant 0.000000e+00 : f32
      %52 = vector.broadcast %cst_35 : f32 to vector<8x128xf32>
      %53 = arith.subf %52, %51 : vector<8x128xf32>
      %54 = math.exp %53 : vector<8x128xf32>
      %cst_36 = arith.constant 1.000000e+00 : f32
      %55 = vector.broadcast %cst_36 : f32 to vector<8x128xf32>
      %56 = arith.addf %55, %54 : vector<8x128xf32>
      %57 = tpu.reciprocal %56 {approx = true} : vector<8x128xf32> -> vector<8x128xf32>
      %58 = arith.mulf %51, %57 : vector<8x128xf32>
      %c4 = arith.constant 4 : index
      %c0_37 = arith.constant 0 : index
      %c0_38 = arith.constant 0 : index
      %59 = vector.load %arg5[%c4, %c0_37, %c0_38] : memref<5x128x128xbf16, #tpu.memory_space<vmem>>, vector<1x128x128xbf16>
      %60 = vector.shape_cast %59 : vector<1x128x128xbf16> to vector<128x128xbf16>
      %61 = arith.truncf %58 : vector<8x128xf32> to vector<8x128xbf16>
      %cst_39 = arith.constant dense<0.000000e+00> : vector<8x128xf32>
      %62 = tpu.matmul %61, %60, %cst_39 {dimension_numbers = #tpu.dot_dimension_numbers<[1], [0], [0], [1], [0, 0, 1, 1], [], []>} : vector<8x128xbf16>, vector<128x128xbf16>, vector<8x128xf32> -> vector<8x128xf32>
      %63 = tpu.iota {dimensions = array<i32: 0>} : vector<8x8xi32>
      %c0_40 = arith.constant 0 : index
      %c0_41 = arith.constant 0 : index
      %64 = vector.load %arg4[%c0_40, %c0_41] : memref<1x8xi32, #tpu.memory_space<vmem>>, vector<1x8xi32>
      %65 = vector.broadcast %64 : vector<1x8xi32> to vector<8x8xi32>
      %66 = arith.cmpi eq, %63, %65 : vector<8x8xi32>
      %cst_42 = arith.constant 1.000000e+00 : f32
      %cst_43 = arith.constant 0.000000e+00 : f32
      %67 = vector.broadcast %cst_42 : f32 to vector<8x8xf32>
      %68 = vector.broadcast %cst_43 : f32 to vector<8x8xf32>
      %69 = arith.select %66, %67, %68 : vector<8x8xi1>, vector<8x8xf32>
      %cst_44 = arith.constant dense<0.000000e+00> : vector<8x128xf32>
      %70 = tpu.matmul %69, %62, %cst_44 {dimension_numbers = #tpu.dot_dimension_numbers<[1], [0], [0], [1], [0, 0, 1, 1], [], []>} : vector<8x8xf32>, vector<8x128xf32>, vector<8x128xf32> -> vector<8x128xf32>
      %c0_45 = arith.constant 0 : index
      %c0_46 = arith.constant 0 : index
      %71 = vector.load %arg7[%c0_45, %c0_46] : memref<8x128xf32, #tpu.memory_space<vmem>>, vector<8x128xf32>
      tpu.vector_store %arg7[%c0_45, %c0_46], %70 {strides = array<i32>} : memref<8x128xf32, #tpu.memory_space<vmem>>, vector<8x128xf32>,
    } else {
    }
    return
  }
  func.func @transform_0(%arg0: i32) -> (i32, i32) {
    %c0_i32 = arith.constant 0 : i32
    %c0_i32_0 = arith.constant 0 : i32
    return %arg0, %c0_i32 : i32, i32
  }
  func.func @transform_1(%arg0: i32) -> (i32, i32) {
    %c0_i32 = arith.constant 0 : i32
    %c0_i32_0 = arith.constant 0 : i32
    return %arg0, %c0_i32 : i32, i32
  }
  func.func @transform_2(%arg0: i32) -> (i32, i32) {
    %c0_i32 = arith.constant 0 : i32
    %c0_i32_0 = arith.constant 0 : i32
    return %c0_i32, %arg0 : i32, i32
  }
  func.func @transform_3(%arg0: i32) -> (i32, i32) {
    %c0_i32 = arith.constant 0 : i32
    %c0_i32_0 = arith.constant 0 : i32
    %c0_i32_1 = arith.constant 0 : i32
    return %c0_i32, %c0_i32_0 : i32, i32
  }
  func.func @transform_4(%arg0: i32) -> (i32, i32, i32) {
    %c0_i32 = arith.constant 0 : i32
    %c0_i32_0 = arith.constant 0 : i32
    %c0_i32_1 = arith.constant 0 : i32
    %c0_i32_2 = arith.constant 0 : i32
    return %c0_i32, %c0_i32_0, %c0_i32_1 : i32, i32, i32
  }
  func.func @transform_5(%arg0: i32) -> (i32, i32) {
    %c0_i32 = arith.constant 0 : i32
    %c0_i32_0 = arith.constant 0 : i32
    %c0_i32_1 = arith.constant 0 : i32
    return %c0_i32, %c0_i32_0 : i32, i32
  }
  func.func @transform_6(%arg0: i32) -> (i32, i32) {
    %c0_i32 = arith.constant 0 : i32
    %c0_i32_0 = arith.constant 0 : i32
    %c0_i32_1 = arith.constant 0 : i32
    return %c0_i32, %c0_i32_0 : i32, i32
  }
}

module attributes {stable_mosaic.version = 11 : i64} {
  func.func @_embedding_kernel(%arg0: i32, %arg1: memref<512x128xbf16, #tpu.memory_space<vmem>>, %arg2: memref<512x128xbf16, #tpu.memory_space<vmem>>, %arg3: memref<128x128xbf16, #tpu.memory_space<vmem>>, %arg4: memref<1x128xf32, #tpu.memory_space<vmem>>, %arg5: memref<128x128xbf16, #tpu.memory_space<vmem>>, %arg6: memref<1x128xf32, #tpu.memory_space<vmem>>, %arg7: memref<512x128xbf16, #tpu.memory_space<vmem>>) attributes {dimension_semantics = [#tpu.dimension_semantics<parallel>], iteration_bounds = array<i64: 1>, scalar_prefetch = 0 : i64, scratch_operands = 0 : i64, tpu.core_type = #tpu.core_type<tc>, window_params = [{transform_indices = @transform_0, window_bounds = array<i64: 512, 128>}, {transform_indices = @transform_1, window_bounds = array<i64: 512, 128>}, {pipeline_mode = #tpu.pipeline_mode<synchronous>, transform_indices = @transform_2, window_bounds = array<i64: 128, 128>}, {pipeline_mode = #tpu.pipeline_mode<synchronous>, transform_indices = @transform_3, window_bounds = array<i64: 1, 128>}, {pipeline_mode = #tpu.pipeline_mode<synchronous>, transform_indices = @transform_4, window_bounds = array<i64: 128, 128>}, {pipeline_mode = #tpu.pipeline_mode<synchronous>, transform_indices = @transform_5, window_bounds = array<i64: 1, 128>}, {transform_indices = @transform_6, window_bounds = array<i64: 512, 128>}]} {
    %c0 = arith.constant 0 : index
    %c0_0 = arith.constant 0 : index
    %0 = vector.load %arg2[%c0, %c0_0] : memref<512x128xbf16, #tpu.memory_space<vmem>>, vector<512x128xbf16>
    %c0_1 = arith.constant 0 : index
    %c0_2 = arith.constant 0 : index
    %1 = vector.load %arg3[%c0_1, %c0_2] : memref<128x128xbf16, #tpu.memory_space<vmem>>, vector<128x128xbf16>
    %cst = arith.constant dense<0.000000e+00> : vector<512x128xf32>
    %2 = tpu.matmul %0, %1, %cst {dimension_numbers = #tpu.dot_dimension_numbers<[1], [0], [0], [1], [0, 0, 1, 1], [], []>} : vector<512x128xbf16>, vector<128x128xbf16>, vector<512x128xf32> -> vector<512x128xf32>
    %c0_3 = arith.constant 0 : index
    %c0_4 = arith.constant 0 : index
    %3 = vector.load %arg4[%c0_3, %c0_4] : memref<1x128xf32, #tpu.memory_space<vmem>>, vector<1x128xf32>
    %4 = vector.broadcast %3 : vector<1x128xf32> to vector<512x128xf32>
    %5 = arith.addf %2, %4 : vector<512x128xf32>
    %cst_5 = arith.constant 0.000000e+00 : f32
    %6 = vector.broadcast %cst_5 : f32 to vector<512x128xf32>
    %7 = arith.subf %6, %5 : vector<512x128xf32>
    %8 = math.exp %7 : vector<512x128xf32>
    %cst_6 = arith.constant 1.000000e+00 : f32
    %9 = vector.broadcast %cst_6 : f32 to vector<512x128xf32>
    %10 = arith.addf %9, %8 : vector<512x128xf32>
    %11 = tpu.reciprocal %10 {approx = true} : vector<512x128xf32> -> vector<512x128xf32>
    %12 = arith.mulf %5, %11 : vector<512x128xf32>
    %c0_7 = arith.constant 0 : index
    %c0_8 = arith.constant 0 : index
    %13 = vector.load %arg1[%c0_7, %c0_8] : memref<512x128xbf16, #tpu.memory_space<vmem>>, vector<512x128xbf16>
    %14 = arith.extf %13 : vector<512x128xbf16> to vector<512x128xf32>
    %15 = arith.addf %14, %12 : vector<512x128xf32>
    %c0_9 = arith.constant 0 : index
    %c0_10 = arith.constant 0 : index
    %16 = vector.load %arg5[%c0_9, %c0_10] : memref<128x128xbf16, #tpu.memory_space<vmem>>, vector<128x128xbf16>
    %17 = arith.truncf %15 : vector<512x128xf32> to vector<512x128xbf16>
    %cst_11 = arith.constant dense<0.000000e+00> : vector<512x128xf32>
    %18 = tpu.matmul %17, %16, %cst_11 {dimension_numbers = #tpu.dot_dimension_numbers<[1], [0], [0], [1], [0, 0, 1, 1], [], []>} : vector<512x128xbf16>, vector<128x128xbf16>, vector<512x128xf32> -> vector<512x128xf32>
    %c0_12 = arith.constant 0 : index
    %c0_13 = arith.constant 0 : index
    %19 = vector.load %arg6[%c0_12, %c0_13] : memref<1x128xf32, #tpu.memory_space<vmem>>, vector<1x128xf32>
    %20 = vector.broadcast %19 : vector<1x128xf32> to vector<512x128xf32>
    %21 = arith.addf %18, %20 : vector<512x128xf32>
    %cst_14 = arith.constant 0.000000e+00 : f32
    %22 = vector.broadcast %cst_14 : f32 to vector<512x128xf32>
    %23 = arith.subf %22, %21 : vector<512x128xf32>
    %24 = math.exp %23 : vector<512x128xf32>
    %cst_15 = arith.constant 1.000000e+00 : f32
    %25 = vector.broadcast %cst_15 : f32 to vector<512x128xf32>
    %26 = arith.addf %25, %24 : vector<512x128xf32>
    %27 = tpu.reciprocal %26 {approx = true} : vector<512x128xf32> -> vector<512x128xf32>
    %28 = arith.mulf %21, %27 : vector<512x128xf32>
    %29 = arith.truncf %28 : vector<512x128xf32> to vector<512x128xbf16>
    %c0_16 = arith.constant 0 : index
    %c0_17 = arith.constant 0 : index
    %30 = vector.load %arg7[%c0_16, %c0_17] : memref<512x128xbf16, #tpu.memory_space<vmem>>, vector<512x128xbf16>
    tpu.vector_store %arg7[%c0_16, %c0_17], %29 {strides = array<i32>} : memref<512x128xbf16, #tpu.memory_space<vmem>>, vector<512x128xbf16>,
    return
  }
  func.func @transform_0(%arg0: i32) -> (i32, i32) {
    %c0_i32 = arith.constant 0 : i32
    %c0_i32_0 = arith.constant 0 : i32
    return %arg0, %c0_i32 : i32, i32
  }
  func.func @transform_1(%arg0: i32) -> (i32, i32) {
    %c0_i32 = arith.constant 0 : i32
    %c0_i32_0 = arith.constant 0 : i32
    return %arg0, %c0_i32 : i32, i32
  }
  func.func @transform_2(%arg0: i32) -> (i32, i32) {
    %c0_i32 = arith.constant 0 : i32
    %c0_i32_0 = arith.constant 0 : i32
    %c0_i32_1 = arith.constant 0 : i32
    return %c0_i32, %c0_i32_0 : i32, i32
  }
  func.func @transform_3(%arg0: i32) -> (i32, i32) {
    %c0_i32 = arith.constant 0 : i32
    %c0_i32_0 = arith.constant 0 : i32
    %c0_i32_1 = arith.constant 0 : i32
    return %c0_i32, %c0_i32_0 : i32, i32
  }
  func.func @transform_4(%arg0: i32) -> (i32, i32) {
    %c0_i32 = arith.constant 0 : i32
    %c0_i32_0 = arith.constant 0 : i32
    %c0_i32_1 = arith.constant 0 : i32
    return %c0_i32, %c0_i32_0 : i32, i32
  }
  func.func @transform_5(%arg0: i32) -> (i32, i32) {
    %c0_i32 = arith.constant 0 : i32
    %c0_i32_0 = arith.constant 0 : i32
    %c0_i32_1 = arith.constant 0 : i32
    return %c0_i32, %c0_i32_0 : i32, i32
  }
  func.func @transform_6(%arg0: i32) -> (i32, i32) {
    %c0_i32 = arith.constant 0 : i32
    %c0_i32_0 = arith.constant 0 : i32
    return %arg0, %c0_i32 : i32, i32
  }
}

module attributes {stable_mosaic.version = 11 : i64} {
  func.func @_inter_edge_kernel(%arg0: i32, %arg1: memref<512x128xbf16, #tpu.memory_space<vmem>>, %arg2: memref<512x128xbf16, #tpu.memory_space<vmem>>, %arg3: memref<3x128x128xbf16, #tpu.memory_space<vmem>>, %arg4: memref<8x128xf32, #tpu.memory_space<vmem>>, %arg5: memref<512x128xbf16, #tpu.memory_space<vmem>>, %arg6: memref<512x128xbf16, #tpu.memory_space<vmem>>) attributes {dimension_semantics = [#tpu.dimension_semantics<parallel>], iteration_bounds = array<i64: 1>, scalar_prefetch = 0 : i64, scratch_operands = 0 : i64, tpu.core_type = #tpu.core_type<tc>, window_params = [{transform_indices = @transform_0, window_bounds = array<i64: 512, 128>}, {transform_indices = @transform_1, window_bounds = array<i64: 512, 128>}, {pipeline_mode = #tpu.pipeline_mode<synchronous>, transform_indices = @transform_2, window_bounds = array<i64: 3, 128, 128>}, {pipeline_mode = #tpu.pipeline_mode<synchronous>, transform_indices = @transform_3, window_bounds = array<i64: 8, 128>}, {transform_indices = @transform_4, window_bounds = array<i64: 512, 128>}, {transform_indices = @transform_5, window_bounds = array<i64: 512, 128>}]} {
    %c0 = arith.constant 0 : index
    %c0_0 = arith.constant 0 : index
    %0 = vector.load %arg1[%c0, %c0_0] : memref<512x128xbf16, #tpu.memory_space<vmem>>, vector<512x128xbf16>
    %c0_1 = arith.constant 0 : index
    %c0_2 = arith.constant 0 : index
    %c0_3 = arith.constant 0 : index
    %1 = vector.load %arg3[%c0_1, %c0_2, %c0_3] : memref<3x128x128xbf16, #tpu.memory_space<vmem>>, vector<1x128x128xbf16>
    %2 = vector.shape_cast %1 : vector<1x128x128xbf16> to vector<128x128xbf16>
    %cst = arith.constant dense<0.000000e+00> : vector<512x128xf32>
    %3 = tpu.matmul %0, %2, %cst {dimension_numbers = #tpu.dot_dimension_numbers<[1], [0], [0], [1], [0, 0, 1, 1], [], []>} : vector<512x128xbf16>, vector<128x128xbf16>, vector<512x128xf32> -> vector<512x128xf32>
    %c0_4 = arith.constant 0 : index
    %c0_5 = arith.constant 0 : index
    %4 = vector.load %arg4[%c0_4, %c0_5] : memref<8x128xf32, #tpu.memory_space<vmem>>, vector<1x128xf32>
    %5 = vector.broadcast %4 : vector<1x128xf32> to vector<512x128xf32>
    %6 = arith.addf %3, %5 : vector<512x128xf32>
    %cst_6 = arith.constant 0.000000e+00 : f32
    %7 = vector.broadcast %cst_6 : f32 to vector<512x128xf32>
    %8 = arith.subf %7, %6 : vector<512x128xf32>
    %9 = math.exp %8 : vector<512x128xf32>
    %cst_7 = arith.constant 1.000000e+00 : f32
    %10 = vector.broadcast %cst_7 : f32 to vector<512x128xf32>
    %11 = arith.addf %10, %9 : vector<512x128xf32>
    %12 = tpu.reciprocal %11 {approx = true} : vector<512x128xf32> -> vector<512x128xf32>
    %13 = arith.mulf %6, %12 : vector<512x128xf32>
    %14 = tpu.iota {dimensions = array<i32: 1>} : vector<512x128xi32>
    %c16_i32 = arith.constant 16 : i32
    %15 = vector.broadcast %c16_i32 : i32 to vector<512x128xi32>
    %16 = arith.cmpi slt, %14, %15 : vector<512x128xi32>
    %cst_8 = arith.constant 0.000000e+00 : f32
    %17 = vector.broadcast %cst_8 : f32 to vector<512x128xf32>
    %18 = arith.select %16, %13, %17 : vector<512x128xi1>, vector<512x128xf32>
    %19 = arith.truncf %18 : vector<512x128xf32> to vector<512x128xbf16>
    %c0_9 = arith.constant 0 : index
    %c0_10 = arith.constant 0 : index
    %20 = vector.load %arg5[%c0_9, %c0_10] : memref<512x128xbf16, #tpu.memory_space<vmem>>, vector<512x128xbf16>
    tpu.vector_store %arg5[%c0_9, %c0_10], %19 {strides = array<i32>} : memref<512x128xbf16, #tpu.memory_space<vmem>>, vector<512x128xbf16>,
    %c0_11 = arith.constant 0 : index
    %c0_12 = arith.constant 0 : index
    %21 = vector.load %arg2[%c0_11, %c0_12] : memref<512x128xbf16, #tpu.memory_space<vmem>>, vector<512x128xbf16>
    %c1 = arith.constant 1 : index
    %c0_13 = arith.constant 0 : index
    %c0_14 = arith.constant 0 : index
    %22 = vector.load %arg3[%c1, %c0_13, %c0_14] : memref<3x128x128xbf16, #tpu.memory_space<vmem>>, vector<1x128x128xbf16>
    %23 = vector.shape_cast %22 : vector<1x128x128xbf16> to vector<128x128xbf16>
    %cst_15 = arith.constant dense<0.000000e+00> : vector<512x128xf32>
    %24 = tpu.matmul %21, %23, %cst_15 {dimension_numbers = #tpu.dot_dimension_numbers<[1], [0], [0], [1], [0, 0, 1, 1], [], []>} : vector<512x128xbf16>, vector<128x128xbf16>, vector<512x128xf32> -> vector<512x128xf32>
    %25 = arith.mulf %13, %24 : vector<512x128xf32>
    %c2 = arith.constant 2 : index
    %c0_16 = arith.constant 0 : index
    %c0_17 = arith.constant 0 : index
    %26 = vector.load %arg3[%c2, %c0_16, %c0_17] : memref<3x128x128xbf16, #tpu.memory_space<vmem>>, vector<1x128x128xbf16>
    %27 = vector.shape_cast %26 : vector<1x128x128xbf16> to vector<128x128xbf16>
    %28 = arith.truncf %25 : vector<512x128xf32> to vector<512x128xbf16>
    %cst_18 = arith.constant dense<0.000000e+00> : vector<512x128xf32>
    %29 = tpu.matmul %28, %27, %cst_18 {dimension_numbers = #tpu.dot_dimension_numbers<[1], [0], [0], [1], [0, 0, 1, 1], [], []>} : vector<512x128xbf16>, vector<128x128xbf16>, vector<512x128xf32> -> vector<512x128xf32>
    %cst_19 = arith.constant 0.000000e+00 : f32
    %30 = vector.broadcast %cst_19 : f32 to vector<512x128xf32>
    %31 = arith.subf %30, %29 : vector<512x128xf32>
    %32 = math.exp %31 : vector<512x128xf32>
    %cst_20 = arith.constant 1.000000e+00 : f32
    %33 = vector.broadcast %cst_20 : f32 to vector<512x128xf32>
    %34 = arith.addf %33, %32 : vector<512x128xf32>
    %35 = tpu.reciprocal %34 {approx = true} : vector<512x128xf32> -> vector<512x128xf32>
    %36 = arith.mulf %29, %35 : vector<512x128xf32>
    %37 = arith.truncf %36 : vector<512x128xf32> to vector<512x128xbf16>
    %c0_21 = arith.constant 0 : index
    %c0_22 = arith.constant 0 : index
    %38 = vector.load %arg6[%c0_21, %c0_22] : memref<512x128xbf16, #tpu.memory_space<vmem>>, vector<512x128xbf16>
    tpu.vector_store %arg6[%c0_21, %c0_22], %37 {strides = array<i32>} : memref<512x128xbf16, #tpu.memory_space<vmem>>, vector<512x128xbf16>,
    return
  }
  func.func @transform_0(%arg0: i32) -> (i32, i32) {
    %c0_i32 = arith.constant 0 : i32
    %c0_i32_0 = arith.constant 0 : i32
    return %arg0, %c0_i32 : i32, i32
  }
  func.func @transform_1(%arg0: i32) -> (i32, i32) {
    %c0_i32 = arith.constant 0 : i32
    %c0_i32_0 = arith.constant 0 : i32
    return %arg0, %c0_i32 : i32, i32
  }
  func.func @transform_2(%arg0: i32) -> (i32, i32, i32) {
    %c0_i32 = arith.constant 0 : i32
    %c0_i32_0 = arith.constant 0 : i32
    %c0_i32_1 = arith.constant 0 : i32
    %c0_i32_2 = arith.constant 0 : i32
    return %c0_i32, %c0_i32_0, %c0_i32_1 : i32, i32, i32
  }
  func.func @transform_3(%arg0: i32) -> (i32, i32) {
    %c0_i32 = arith.constant 0 : i32
    %c0_i32_0 = arith.constant 0 : i32
    %c0_i32_1 = arith.constant 0 : i32
    return %c0_i32, %c0_i32_0 : i32, i32
  }
  func.func @transform_4(%arg0: i32) -> (i32, i32) {
    %c0_i32 = arith.constant 0 : i32
    %c0_i32_0 = arith.constant 0 : i32
    return %arg0, %c0_i32 : i32, i32
  }
  func.func @transform_5(%arg0: i32) -> (i32, i32) {
    %c0_i32 = arith.constant 0 : i32
    %c0_i32_0 = arith.constant 0 : i32
    return %arg0, %c0_i32 : i32, i32
  }
}

module attributes {stable_mosaic.version = 11 : i64} {
  func.func @_inter_scatter_kernel(%arg0: i32, %arg1: memref<256x128xbf16, #tpu.memory_space<vmem>>, %arg2: memref<256x128xbf16, #tpu.memory_space<vmem>>, %arg3: memref<1x256xi32, #tpu.memory_space<vmem>>, %arg4: memref<512x128xbf16, #tpu.memory_space<vmem>>, %arg5: memref<512x128xbf16, #tpu.memory_space<vmem>>, %arg6: memref<7x128x128xbf16, #tpu.memory_space<vmem>>, %arg7: memref<8x128xf32, #tpu.memory_space<vmem>>, %arg8: memref<512x128xbf16, #tpu.memory_space<vmem>>, %arg9: memref<512x128xf32, #tpu.memory_space<vmem>>) attributes {dimension_semantics = [#tpu.dimension_semantics<arbitrary>], iteration_bounds = array<i64: 1>, scalar_prefetch = 0 : i64, scratch_operands = 1 : i64, tpu.core_type = #tpu.core_type<tc>, window_params = [{transform_indices = @transform_0, window_bounds = array<i64: 256, 128>}, {transform_indices = @transform_1, window_bounds = array<i64: 256, 128>}, {transform_indices = @transform_2, window_bounds = array<i64: 1, 256>}, {pipeline_mode = #tpu.pipeline_mode<synchronous>, transform_indices = @transform_3, window_bounds = array<i64: 512, 128>}, {pipeline_mode = #tpu.pipeline_mode<synchronous>, transform_indices = @transform_4, window_bounds = array<i64: 512, 128>}, {pipeline_mode = #tpu.pipeline_mode<synchronous>, transform_indices = @transform_5, window_bounds = array<i64: 7, 128, 128>}, {pipeline_mode = #tpu.pipeline_mode<synchronous>, transform_indices = @transform_6, window_bounds = array<i64: 8, 128>}, {pipeline_mode = #tpu.pipeline_mode<synchronous>, transform_indices = @transform_7, window_bounds = array<i64: 512, 128>}]} {
    %c0_i32 = arith.constant 0 : i32
    %0 = arith.cmpi eq, %arg0, %c0_i32 : i32
    %1 = arith.extui %0 : i1 to i32
    %c0_i32_0 = arith.constant 0 : i32
    %2 = arith.cmpi ne, %1, %c0_i32_0 : i32
    scf.if %2 {
      %cst_18 = arith.constant 0.000000e+00 : f32
      %26 = vector.broadcast %cst_18 : f32 to vector<512x128xf32>
      %c0_19 = arith.constant 0 : index
      %c0_20 = arith.constant 0 : index
      %27 = vector.load %arg9[%c0_19, %c0_20] : memref<512x128xf32, #tpu.memory_space<vmem>>, vector<512x128xf32>
      tpu.vector_store %arg9[%c0_19, %c0_20], %26 {strides = array<i32>} : memref<512x128xf32, #tpu.memory_space<vmem>>, vector<512x128xf32>,
    } else {
    }
    %c0 = arith.constant 0 : index
    %c0_1 = arith.constant 0 : index
    %3 = vector.load %arg2[%c0, %c0_1] : memref<256x128xbf16, #tpu.memory_space<vmem>>, vector<256x128xbf16>
    %c0_2 = arith.constant 0 : index
    %c0_3 = arith.constant 0 : index
    %c0_4 = arith.constant 0 : index
    %4 = vector.load %arg6[%c0_2, %c0_3, %c0_4] : memref<7x128x128xbf16, #tpu.memory_space<vmem>>, vector<1x128x128xbf16>
    %5 = vector.shape_cast %4 : vector<1x128x128xbf16> to vector<128x128xbf16>
    %cst = arith.constant dense<0.000000e+00> : vector<256x128xf32>
    %6 = tpu.matmul %3, %5, %cst {dimension_numbers = #tpu.dot_dimension_numbers<[1], [0], [0], [1], [0, 0, 1, 1], [], []>} : vector<256x128xbf16>, vector<128x128xbf16>, vector<256x128xf32> -> vector<256x128xf32>
    %c0_5 = arith.constant 0 : index
    %c0_6 = arith.constant 0 : index
    %7 = vector.load %arg1[%c0_5, %c0_6] : memref<256x128xbf16, #tpu.memory_space<vmem>>, vector<256x128xbf16>
    %8 = arith.extf %7 : vector<256x128xbf16> to vector<256x128xf32>
    %9 = arith.mulf %8, %6 : vector<256x128xf32>
    %c0_7 = arith.constant 0 : index
    %c0_8 = arith.constant 0 : index
    %10 = vector.load %arg3[%c0_7, %c0_8] : memref<1x256xi32, #tpu.memory_space<vmem>>, vector<1x256xi32>
    %11 = tpu.iota {dimensions = array<i32: 0>} : vector<512x256xi32>
    %12 = vector.broadcast %10 : vector<1x256xi32> to vector<512x256xi32>
    %13 = arith.cmpi eq, %11, %12 : vector<512x256xi32>
    %cst_9 = arith.constant 1.000000e+00 : f32
    %cst_10 = arith.constant 0.000000e+00 : f32
    %14 = vector.broadcast %cst_9 : f32 to vector<512x256xf32>
    %15 = vector.broadcast %cst_10 : f32 to vector<512x256xf32>
    %16 = arith.select %13, %14, %15 : vector<512x256xi1>, vector<512x256xf32>
    %17 = arith.truncf %16 : vector<512x256xf32> to vector<512x256xbf16>
    %c0_11 = arith.constant 0 : index
    %c0_12 = arith.constant 0 : index
    %18 = vector.load %arg9[%c0_11, %c0_12] : memref<512x128xf32, #tpu.memory_space<vmem>>, vector<512x128xf32>
    %19 = arith.truncf %9 : vector<256x128xf32> to vector<256x128xbf16>
    %cst_13 = arith.constant dense<0.000000e+00> : vector<512x128xf32>
    %20 = tpu.matmul %17, %19, %cst_13 {dimension_numbers = #tpu.dot_dimension_numbers<[1], [0], [0], [1], [0, 0, 1, 1], [], []>} : vector<512x256xbf16>, vector<256x128xbf16>, vector<512x128xf32> -> vector<512x128xf32>
    %21 = arith.addf %18, %20 : vector<512x128xf32>
    %c0_14 = arith.constant 0 : index
    %c0_15 = arith.constant 0 : index
    %22 = vector.load %arg9[%c0_14, %c0_15] : memref<512x128xf32, #tpu.memory_space<vmem>>, vector<512x128xf32>
    tpu.vector_store %arg9[%c0_14, %c0_15], %21 {strides = array<i32>} : memref<512x128xf32, #tpu.memory_space<vmem>>, vector<512x128xf32>,
    %c0_i32_16 = arith.constant 0 : i32
    %23 = arith.cmpi eq, %arg0, %c0_i32_16 : i32
    %24 = arith.extui %23 : i1 to i32
    %c0_i32_17 = arith.constant 0 : i32
    %25 = arith.cmpi ne, %24, %c0_i32_17 : i32
    scf.if %25 {
      %c0_18 = arith.constant 0 : index
      %c0_19 = arith.constant 0 : index
      %26 = vector.load %arg9[%c0_18, %c0_19] : memref<512x128xf32, #tpu.memory_space<vmem>>, vector<512x128xf32>
      %c1 = arith.constant 1 : index
      %c0_20 = arith.constant 0 : index
      %c0_21 = arith.constant 0 : index
      %27 = vector.load %arg6[%c1, %c0_20, %c0_21] : memref<7x128x128xbf16, #tpu.memory_space<vmem>>, vector<1x128x128xbf16>
      %28 = vector.shape_cast %27 : vector<1x128x128xbf16> to vector<128x128xbf16>
      %29 = arith.truncf %26 : vector<512x128xf32> to vector<512x128xbf16>
      %cst_22 = arith.constant dense<0.000000e+00> : vector<512x128xf32>
      %30 = tpu.matmul %29, %28, %cst_22 {dimension_numbers = #tpu.dot_dimension_numbers<[1], [0], [0], [1], [0, 0, 1, 1], [], []>} : vector<512x128xbf16>, vector<128x128xbf16>, vector<512x128xf32> -> vector<512x128xf32>
      %cst_23 = arith.constant 0.000000e+00 : f32
      %31 = vector.broadcast %cst_23 : f32 to vector<512x128xf32>
      %32 = arith.subf %31, %30 : vector<512x128xf32>
      %33 = math.exp %32 : vector<512x128xf32>
      %cst_24 = arith.constant 1.000000e+00 : f32
      %34 = vector.broadcast %cst_24 : f32 to vector<512x128xf32>
      %35 = arith.addf %34, %33 : vector<512x128xf32>
      %36 = tpu.reciprocal %35 {approx = true} : vector<512x128xf32> -> vector<512x128xf32>
      %37 = arith.mulf %30, %36 : vector<512x128xf32>
      %c0_25 = arith.constant 0 : index
      %c0_26 = arith.constant 0 : index
      %38 = vector.load %arg5[%c0_25, %c0_26] : memref<512x128xbf16, #tpu.memory_space<vmem>>, vector<512x128xbf16>
      %39 = arith.extf %38 : vector<512x128xbf16> to vector<512x128xf32>
      %40 = arith.addf %39, %37 : vector<512x128xf32>
      %c2 = arith.constant 2 : index
      %c0_27 = arith.constant 0 : index
      %c0_28 = arith.constant 0 : index
      %41 = vector.load %arg6[%c2, %c0_27, %c0_28] : memref<7x128x128xbf16, #tpu.memory_space<vmem>>, vector<1x128x128xbf16>
      %42 = vector.shape_cast %41 : vector<1x128x128xbf16> to vector<128x128xbf16>
      %43 = arith.truncf %40 : vector<512x128xf32> to vector<512x128xbf16>
      %cst_29 = arith.constant dense<0.000000e+00> : vector<512x128xf32>
      %44 = tpu.matmul %43, %42, %cst_29 {dimension_numbers = #tpu.dot_dimension_numbers<[1], [0], [0], [1], [0, 0, 1, 1], [], []>} : vector<512x128xbf16>, vector<128x128xbf16>, vector<512x128xf32> -> vector<512x128xf32>
      %c0_30 = arith.constant 0 : index
      %c0_31 = arith.constant 0 : index
      %45 = vector.load %arg7[%c0_30, %c0_31] : memref<8x128xf32, #tpu.memory_space<vmem>>, vector<1x128xf32>
      %46 = vector.broadcast %45 : vector<1x128xf32> to vector<512x128xf32>
      %47 = arith.addf %44, %46 : vector<512x128xf32>
      %cst_32 = arith.constant 0.000000e+00 : f32
      %48 = vector.broadcast %cst_32 : f32 to vector<512x128xf32>
      %49 = arith.subf %48, %47 : vector<512x128xf32>
      %50 = math.exp %49 : vector<512x128xf32>
      %cst_33 = arith.constant 1.000000e+00 : f32
      %51 = vector.broadcast %cst_33 : f32 to vector<512x128xf32>
      %52 = arith.addf %51, %50 : vector<512x128xf32>
      %53 = tpu.reciprocal %52 {approx = true} : vector<512x128xf32> -> vector<512x128xf32>
      %54 = arith.mulf %47, %53 : vector<512x128xf32>
      %c3 = arith.constant 3 : index
      %c0_34 = arith.constant 0 : index
      %c0_35 = arith.constant 0 : index
      %55 = vector.load %arg6[%c3, %c0_34, %c0_35] : memref<7x128x128xbf16, #tpu.memory_space<vmem>>, vector<1x128x128xbf16>
      %56 = vector.shape_cast %55 : vector<1x128x128xbf16> to vector<128x128xbf16>
      %57 = arith.truncf %54 : vector<512x128xf32> to vector<512x128xbf16>
      %cst_36 = arith.constant dense<0.000000e+00> : vector<512x128xf32>
      %58 = tpu.matmul %57, %56, %cst_36 {dimension_numbers = #tpu.dot_dimension_numbers<[1], [0], [0], [1], [0, 0, 1, 1], [], []>} : vector<512x128xbf16>, vector<128x128xbf16>, vector<512x128xf32> -> vector<512x128xf32>
      %c1_37 = arith.constant 1 : index
      %c0_38 = arith.constant 0 : index
      %59 = vector.load %arg7[%c1_37, %c0_38] : memref<8x128xf32, #tpu.memory_space<vmem>>, vector<1x128xf32>
      %60 = vector.broadcast %59 : vector<1x128xf32> to vector<512x128xf32>
      %61 = arith.addf %58, %60 : vector<512x128xf32>
      %cst_39 = arith.constant 0.000000e+00 : f32
      %62 = vector.broadcast %cst_39 : f32 to vector<512x128xf32>
      %63 = arith.subf %62, %61 : vector<512x128xf32>
      %64 = math.exp %63 : vector<512x128xf32>
      %cst_40 = arith.constant 1.000000e+00 : f32
      %65 = vector.broadcast %cst_40 : f32 to vector<512x128xf32>
      %66 = arith.addf %65, %64 : vector<512x128xf32>
      %67 = tpu.reciprocal %66 {approx = true} : vector<512x128xf32> -> vector<512x128xf32>
      %68 = arith.mulf %61, %67 : vector<512x128xf32>
      %69 = arith.addf %40, %68 : vector<512x128xf32>
      %c4 = arith.constant 4 : index
      %c0_41 = arith.constant 0 : index
      %c0_42 = arith.constant 0 : index
      %70 = vector.load %arg6[%c4, %c0_41, %c0_42] : memref<7x128x128xbf16, #tpu.memory_space<vmem>>, vector<1x128x128xbf16>
      %71 = vector.shape_cast %70 : vector<1x128x128xbf16> to vector<128x128xbf16>
      %72 = arith.truncf %69 : vector<512x128xf32> to vector<512x128xbf16>
      %cst_43 = arith.constant dense<0.000000e+00> : vector<512x128xf32>
      %73 = tpu.matmul %72, %71, %cst_43 {dimension_numbers = #tpu.dot_dimension_numbers<[1], [0], [0], [1], [0, 0, 1, 1], [], []>} : vector<512x128xbf16>, vector<128x128xbf16>, vector<512x128xf32> -> vector<512x128xf32>
      %c2_44 = arith.constant 2 : index
      %c0_45 = arith.constant 0 : index
      %74 = vector.load %arg7[%c2_44, %c0_45] : memref<8x128xf32, #tpu.memory_space<vmem>>, vector<1x128xf32>
      %75 = vector.broadcast %74 : vector<1x128xf32> to vector<512x128xf32>
      %76 = arith.addf %73, %75 : vector<512x128xf32>
      %cst_46 = arith.constant 0.000000e+00 : f32
      %77 = vector.broadcast %cst_46 : f32 to vector<512x128xf32>
      %78 = arith.subf %77, %76 : vector<512x128xf32>
      %79 = math.exp %78 : vector<512x128xf32>
      %cst_47 = arith.constant 1.000000e+00 : f32
      %80 = vector.broadcast %cst_47 : f32 to vector<512x128xf32>
      %81 = arith.addf %80, %79 : vector<512x128xf32>
      %82 = tpu.reciprocal %81 {approx = true} : vector<512x128xf32> -> vector<512x128xf32>
      %83 = arith.mulf %76, %82 : vector<512x128xf32>
      %c0_48 = arith.constant 0 : index
      %c0_49 = arith.constant 0 : index
      %84 = vector.load %arg4[%c0_48, %c0_49] : memref<512x128xbf16, #tpu.memory_space<vmem>>, vector<512x128xbf16>
      %85 = arith.extf %84 : vector<512x128xbf16> to vector<512x128xf32>
      %86 = arith.addf %83, %85 : vector<512x128xf32>
      %c5 = arith.constant 5 : index
      %c0_50 = arith.constant 0 : index
      %c0_51 = arith.constant 0 : index
      %87 = vector.load %arg6[%c5, %c0_50, %c0_51] : memref<7x128x128xbf16, #tpu.memory_space<vmem>>, vector<1x128x128xbf16>
      %88 = vector.shape_cast %87 : vector<1x128x128xbf16> to vector<128x128xbf16>
      %89 = arith.truncf %86 : vector<512x128xf32> to vector<512x128xbf16>
      %cst_52 = arith.constant dense<0.000000e+00> : vector<512x128xf32>
      %90 = tpu.matmul %89, %88, %cst_52 {dimension_numbers = #tpu.dot_dimension_numbers<[1], [0], [0], [1], [0, 0, 1, 1], [], []>} : vector<512x128xbf16>, vector<128x128xbf16>, vector<512x128xf32> -> vector<512x128xf32>
      %c3_53 = arith.constant 3 : index
      %c0_54 = arith.constant 0 : index
      %91 = vector.load %arg7[%c3_53, %c0_54] : memref<8x128xf32, #tpu.memory_space<vmem>>, vector<1x128xf32>
      %92 = vector.broadcast %91 : vector<1x128xf32> to vector<512x128xf32>
      %93 = arith.addf %90, %92 : vector<512x128xf32>
      %cst_55 = arith.constant 0.000000e+00 : f32
      %94 = vector.broadcast %cst_55 : f32 to vector<512x128xf32>
      %95 = arith.subf %94, %93 : vector<512x128xf32>
      %96 = math.exp %95 : vector<512x128xf32>
      %cst_56 = arith.constant 1.000000e+00 : f32
      %97 = vector.broadcast %cst_56 : f32 to vector<512x128xf32>
      %98 = arith.addf %97, %96 : vector<512x128xf32>
      %99 = tpu.reciprocal %98 {approx = true} : vector<512x128xf32> -> vector<512x128xf32>
      %100 = arith.mulf %93, %99 : vector<512x128xf32>
      %c6 = arith.constant 6 : index
      %c0_57 = arith.constant 0 : index
      %c0_58 = arith.constant 0 : index
      %101 = vector.load %arg6[%c6, %c0_57, %c0_58] : memref<7x128x128xbf16, #tpu.memory_space<vmem>>, vector<1x128x128xbf16>
      %102 = vector.shape_cast %101 : vector<1x128x128xbf16> to vector<128x128xbf16>
      %103 = arith.truncf %100 : vector<512x128xf32> to vector<512x128xbf16>
      %cst_59 = arith.constant dense<0.000000e+00> : vector<512x128xf32>
      %104 = tpu.matmul %103, %102, %cst_59 {dimension_numbers = #tpu.dot_dimension_numbers<[1], [0], [0], [1], [0, 0, 1, 1], [], []>} : vector<512x128xbf16>, vector<128x128xbf16>, vector<512x128xf32> -> vector<512x128xf32>
      %c4_60 = arith.constant 4 : index
      %c0_61 = arith.constant 0 : index
      %105 = vector.load %arg7[%c4_60, %c0_61] : memref<8x128xf32, #tpu.memory_space<vmem>>, vector<1x128xf32>
      %106 = vector.broadcast %105 : vector<1x128xf32> to vector<512x128xf32>
      %107 = arith.addf %104, %106 : vector<512x128xf32>
      %cst_62 = arith.constant 0.000000e+00 : f32
      %108 = vector.broadcast %cst_62 : f32 to vector<512x128xf32>
      %109 = arith.subf %108, %107 : vector<512x128xf32>
      %110 = math.exp %109 : vector<512x128xf32>
      %cst_63 = arith.constant 1.000000e+00 : f32
      %111 = vector.broadcast %cst_63 : f32 to vector<512x128xf32>
      %112 = arith.addf %111, %110 : vector<512x128xf32>
      %113 = tpu.reciprocal %112 {approx = true} : vector<512x128xf32> -> vector<512x128xf32>
      %114 = arith.mulf %107, %113 : vector<512x128xf32>
      %115 = arith.addf %86, %114 : vector<512x128xf32>
      %116 = arith.truncf %115 : vector<512x128xf32> to vector<512x128xbf16>
      %c0_64 = arith.constant 0 : index
      %c0_65 = arith.constant 0 : index
      %117 = vector.load %arg8[%c0_64, %c0_65] : memref<512x128xbf16, #tpu.memory_space<vmem>>, vector<512x128xbf16>
      tpu.vector_store %arg8[%c0_64, %c0_65], %116 {strides = array<i32>} : memref<512x128xbf16, #tpu.memory_space<vmem>>, vector<512x128xbf16>,
    } else {
    }
    return
  }
  func.func @transform_0(%arg0: i32) -> (i32, i32) {
    %c0_i32 = arith.constant 0 : i32
    %c0_i32_0 = arith.constant 0 : i32
    return %arg0, %c0_i32 : i32, i32
  }
  func.func @transform_1(%arg0: i32) -> (i32, i32) {
    %c0_i32 = arith.constant 0 : i32
    %c0_i32_0 = arith.constant 0 : i32
    return %arg0, %c0_i32 : i32, i32
  }
  func.func @transform_2(%arg0: i32) -> (i32, i32) {
    %c0_i32 = arith.constant 0 : i32
    %c0_i32_0 = arith.constant 0 : i32
    return %c0_i32, %arg0 : i32, i32
  }
  func.func @transform_3(%arg0: i32) -> (i32, i32) {
    %c0_i32 = arith.constant 0 : i32
    %c0_i32_0 = arith.constant 0 : i32
    %c0_i32_1 = arith.constant 0 : i32
    return %c0_i32, %c0_i32_0 : i32, i32
  }
  func.func @transform_4(%arg0: i32) -> (i32, i32) {
    %c0_i32 = arith.constant 0 : i32
    %c0_i32_0 = arith.constant 0 : i32
    %c0_i32_1 = arith.constant 0 : i32
    return %c0_i32, %c0_i32_0 : i32, i32
  }
  func.func @transform_5(%arg0: i32) -> (i32, i32, i32) {
    %c0_i32 = arith.constant 0 : i32
    %c0_i32_0 = arith.constant 0 : i32
    %c0_i32_1 = arith.constant 0 : i32
    %c0_i32_2 = arith.constant 0 : i32
    return %c0_i32, %c0_i32_0, %c0_i32_1 : i32, i32, i32
  }
  func.func @transform_6(%arg0: i32) -> (i32, i32) {
    %c0_i32 = arith.constant 0 : i32
    %c0_i32_0 = arith.constant 0 : i32
    %c0_i32_1 = arith.constant 0 : i32
    return %c0_i32, %c0_i32_0 : i32, i32
  }
  func.func @transform_7(%arg0: i32) -> (i32, i32) {
    %c0_i32 = arith.constant 0 : i32
    %c0_i32_0 = arith.constant 0 : i32
    %c0_i32_1 = arith.constant 0 : i32
    return %c0_i32, %c0_i32_0 : i32, i32
  }
}

</mosaic_0001>

<llo_original>
// kernel: dimenet_forward.9
$region0: #{dimenet_forward.9}
  #allocation0 [shape = 'u32[]', space=smem, size = 0x4, offset = 0x4, fixed_abs, tag = 'smem constant byte address 0x4 - core index']
  #allocation1 [shape = 'u32[72,128]{1,0:T(1,128)}', space=vmem, size = 0x9000, scoped, tag = 'internal scratch']
  #allocation2 [shape = 'f32[8,128]{1,0:T(8,128)}', space=vmem, size = 0x1000, scoped, tag = 'scratch operand']
  %s0 = inlined_call_operand.vmem [shape: bf16[512,128], index: 0, kind: input, shape index: {}]
  %s1 = inlined_call_operand.vmem [shape: bf16[512,128], index: 1, kind: input, shape index: {}]
  %s2 = inlined_call_operand.vmem [shape: s32[1,512], index: 2, kind: input, shape index: {}]
  %s3 = inlined_call_operand.vmem [shape: s32[1,8], index: 3, kind: input, shape index: {}]
  %s4 = inlined_call_operand.vmem [shape: bf16[5,128,128], index: 4, kind: input, shape index: {}]
  %s5 = inlined_call_operand.vmem [shape: f32[8,128], index: 5, kind: input, shape index: {}]
  %s6 = inlined_call_operand.vmem [shape: f32[8,128], index: 6, kind: output, shape index: {}]
  %s7 = sld [smem:[#allocation0]]
  $region42: #{dimenet_forward.9} parent=0
    _
  %s9 = ssub.s32 1, %s7
  %s10 = scalar_select 0, %s9, %s7
  // Predicated region
  $region2: #{dimenet_forward.9} parent=0 // pred_check
    _
  $region3: #{dimenet_forward.9} parent=0 // pred_check_branch
    %12 = sbr.rel (0) target = $region5
  $region4: #{dimenet_forward.9} parent=0 // pred_region
    _
  $region5: #{dimenet_forward.9} parent=0 // pred_fallthru
    _
  // Predicated region
  $region6: #{dimenet_forward.9} parent=0 // pred_check
    _
  $region7: #{dimenet_forward.9} parent=0 // pred_check_branch
    %14 = sbr.rel (0) target = $region9
  $region8: #{dimenet_forward.9} parent=0 // pred_region
    _
  $region9: #{dimenet_forward.9} parent=0 // pred_fallthru
    _
  // Predicated region
  $region10: #{dimenet_forward.9} parent=0 // pred_check
    _
  $region11: #{dimenet_forward.9} parent=0 // pred_check_branch
    %16 = sbr.rel (0) target = $region13
  $region12: #{dimenet_forward.9} parent=0 // pred_region
    _
  $region13: #{dimenet_forward.9} parent=0 // pred_fallthru
    _
  // Predicated region
  $region14: #{dimenet_forward.9} parent=0 // pred_check
    _
  $region15: #{dimenet_forward.9} parent=0 // pred_check_branch
    %18 = sbr.rel (0) target = $region17
  $region16: #{dimenet_forward.9} parent=0 // pred_region
    _
  $region17: #{dimenet_forward.9} parent=0 // pred_fallthru
    _
  // Predicated region
  $region18: #{dimenet_forward.9} parent=0 // pred_check
    _
  $region19: #{dimenet_forward.9} parent=0 // pred_check_branch
    %20 = sbr.rel (0) target = $region21
  $region20: #{dimenet_forward.9} parent=0 // pred_region
    _
  $region21: #{dimenet_forward.9} parent=0 // pred_fallthru
    _
  // Predicated region
  $region22: #{dimenet_forward.9} parent=0 // pred_check
    _
  $region23: #{dimenet_forward.9} parent=0 // pred_check_branch
    %22 = sbr.rel (0) target = $region25
  $region24: #{dimenet_forward.9} parent=0 // pred_region
    _
  $region25: #{dimenet_forward.9} parent=0 // pred_fallthru
    _
  %p23 = scmp.eq.s32.totalorder 0, 0
  // Predicated region
  $region26: #{dimenet_forward.9} parent=0 // pred_check
    %p24 = pneg %p23
  $region27: #{dimenet_forward.9} parent=0 // pred_check_branch
    %26 = sbr.rel (%p24) target = $region29
  $region28: #{dimenet_forward.9} parent=0 // pred_region
    %27 = vst [vmem:[#allocation2] sm:$0xff] 0.0
  $region29: #{dimenet_forward.9} parent=0 // pred_fallthru
    _
  %v28 = vld [vmem:[%s1] sm:$0xf]
  %v29 = vld [vmem:[%s1 + $0x4] sm:$0xf]
  %v30 = vld [vmem:[%s1 + $0x8] sm:$0xf]
  %v31 = vld [vmem:[%s1 + $0xc] sm:$0xf]
  %v32 = vld [vmem:[%s1 + $0x10] sm:$0xf]
  %v33 = vld [vmem:[%s1 + $0x14] sm:$0xf]
  %v34 = vld [vmem:[%s1 + $0x18] sm:$0xf]
  %v35 = vld [vmem:[%s1 + $0x1c] sm:$0xf]
  %v36 = vld [vmem:[%s1 + $0x20] sm:$0xf]
  %v37 = vld [vmem:[%s1 + $0x24] sm:$0xf]
  %v38 = vld [vmem:[%s1 + $0x28] sm:$0xf]
  %v39 = vld [vmem:[%s1 + $0x2c] sm:$0xf]
  %v40 = vld [vmem:[%s1 + $0x30] sm:$0xf]
  %v41 = vld [vmem:[%s1 + $0x34] sm:$0xf]
  %v42 = vld [vmem:[%s1 + $0x38] sm:$0xf]
  %v43 = vld [vmem:[%s1 + $0x3c] sm:$0xf]
  %v44 = vld [vmem:[%s1 + $0x40] sm:$0xf]
  %v45 = vld [vmem:[%s1 + $0x44] sm:$0xf]
  %v46 = vld [vmem:[%s1 + $0x48] sm:$0xf]
  %v47 = vld [vmem:[%s1 + $0x4c] sm:$0xf]
  %v48 = vld [vmem:[%s1 + $0x50] sm:$0xf]
  %v49 = vld [vmem:[%s1 + $0x54] sm:$0xf]
  %v50 = vld [vmem:[%s1 + $0x58] sm:$0xf]
  %v51 = vld [vmem:[%s1 + $0x5c] sm:$0xf]
  %v52 = vld [vmem:[%s1 + $0x60] sm:$0xf]
  %v53 = vld [vmem:[%s1 + $0x64] sm:$0xf]
  %v54 = vld [vmem:[%s1 + $0x68] sm:$0xf]
  %v55 = vld [vmem:[%s1 + $0x6c] sm:$0xf]
  %v56 = vld [vmem:[%s1 + $0x70] sm:$0xf]
  %v57 = vld [vmem:[%s1 + $0x74] sm:$0xf]
  %v58 = vld [vmem:[%s1 + $0x78] sm:$0xf]
  %v59 = vld [vmem:[%s1 + $0x7c] sm:$0xf]
  %v60 = vld [vmem:[%s1 + $0x80] sm:$0xf]
  %v61 = vld [vmem:[%s1 + $0x84] sm:$0xf]
  %v62 = vld [vmem:[%s1 + $0x88] sm:$0xf]
  %v63 = vld [vmem:[%s1 + $0x8c] sm:$0xf]
  %v64 = vld [vmem:[%s1 + $0x90] sm:$0xf]
  %v65 = vld [vmem:[%s1 + $0x94] sm:$0xf]
  %v66 = vld [vmem:[%s1 + $0x98] sm:$0xf]
  %v67 = vld [vmem:[%s1 + $0x9c] sm:$0xf]
  %v68 = vld [vmem:[%s1 + $0xa0] sm:$0xf]
  %v69 = vld [vmem:[%s1 + $0xa4] sm:$0xf]
  %v70 = vld [vmem:[%s1 + $0xa8] sm:$0xf]
  %v71 = vld [vmem:[%s1 + $0xac] sm:$0xf]
  %v72 = vld [vmem:[%s1 + $0xb0] sm:$0xf]
  %v73 = vld [vmem:[%s1 + $0xb4] sm:$0xf]
  %v74 = vld [vmem:[%s1 + $0xb8] sm:$0xf]
  %v75 = vld [vmem:[%s1 + $0xbc] sm:$0xf]
  %v76 = vld [vmem:[%s1 + $0xc0] sm:$0xf]
  %v77 = vld [vmem:[%s1 + $0xc4] sm:$0xf]
  %v78 = vld [vmem:[%s1 + $0xc8] sm:$0xf]
  %v79 = vld [vmem:[%s1 + $0xcc] sm:$0xf]
  %v80 = vld [vmem:[%s1 + $0xd0] sm:$0xf]
  %v81 = vld [vmem:[%s1 + $0xd4] sm:$0xf]
  %v82 = vld [vmem:[%s1 + $0xd8] sm:$0xf]
  %v83 = vld [vmem:[%s1 + $0xdc] sm:$0xf]
  %v84 = vld [vmem:[%s1 + $0xe0] sm:$0xf]
  %v85 = vld [vmem:[%s1 + $0xe4] sm:$0xf]
  %v86 = vld [vmem:[%s1 + $0xe8] sm:$0xf]
  %v87 = vld [vmem:[%s1 + $0xec] sm:$0xf]
  %v88 = vld [vmem:[%s1 + $0xf0] sm:$0xf]
  %v89 = vld [vmem:[%s1 + $0xf4] sm:$0xf]
  %v90 = vld [vmem:[%s1 + $0xf8] sm:$0xf]
  %v91 = vld [vmem:[%s1 + $0xfc] sm:$0xf]
  %v92 = vld [vmem:[%s4] sm:$0xf]
  %v93 = vld [vmem:[%s4 + $0x4] sm:$0xf]
  %v94 = vld [vmem:[%s4 + $0x8] sm:$0xf]
  %v95 = vld [vmem:[%s4 + $0xc] sm:$0xf]
  %v96 = vld [vmem:[%s4 + $0x10] sm:$0xf]
  %v97 = vld [vmem:[%s4 + $0x14] sm:$0xf]
  %v98 = vld [vmem:[%s4 + $0x18] sm:$0xf]
  %v99 = vld [vmem:[%s4 + $0x1c] sm:$0xf]
  %v100 = vld [vmem:[%s4 + $0x20] sm:$0xf]
  %v101 = vld [vmem:[%s4 + $0x24] sm:$0xf]
  %v102 = vld [vmem:[%s4 + $0x28] sm:$0xf]
  %v103 = vld [vmem:[%s4 + $0x2c] sm:$0xf]
  %v104 = vld [vmem:[%s4 + $0x30] sm:$0xf]
  %v105 = vld [vmem:[%s4 + $0x34] sm:$0xf]
  %v106 = vld [vmem:[%s4 + $0x38] sm:$0xf]
  %v107 = vld [vmem:[%s4 + $0x3c] sm:$0xf]
  %v172 = vunpack.c.l.b16 %v28
  %v173 = vunpack.c.l.b16 %v29
  %v174 = vunpack.c.l.b16 %v30
  %v175 = vunpack.c.l.b16 %v31
  %v176 = vunpack.c.l.b16 %v32
  %v177 = vunpack.c.l.b16 %v33
  %v178 = vunpack.c.l.b16 %v34
  %v179 = vunpack.c.l.b16 %v35
  %v180 = vunpack.c.l.b16 %v36
  %v181 = vunpack.c.l.b16 %v37
  %v182 = vunpack.c.l.b16 %v38
  %v183 = vunpack.c.l.b16 %v39
  %v184 = vunpack.c.l.b16 %v40
  %v185 = vunpack.c.l.b16 %v41
  %v186 = vunpack.c.l.b16 %v42
  %v187 = vunpack.c.l.b16 %v43
  %v188 = vunpack.c.l.b16 %v44
  %v189 = vunpack.c.l.b16 %v45
  %v190 = vunpack.c.l.b16 %v46
  %v191 = vunpack.c.l.b16 %v47
  %v192 = vunpack.c.l.b16 %v48
  %v193 = vunpack.c.l.b16 %v49
  %v194 = vunpack.c.l.b16 %v50
  %v195 = vunpack.c.l.b16 %v51
  %v196 = vunpack.c.l.b16 %v52
  %v197 = vunpack.c.l.b16 %v53
  %v198 = vunpack.c.l.b16 %v54
  %v199 = vunpack.c.l.b16 %v55
  %v200 = vunpack.c.l.b16 %v56
  %v201 = vunpack.c.l.b16 %v57
  %v202 = vunpack.c.l.b16 %v58
  %v203 = vunpack.c.l.b16 %v59
  %v204 = vunpack.c.l.b16 %v60
  %v205 = vunpack.c.l.b16 %v61
  %v206 = vunpack.c.l.b16 %v62
  %v207 = vunpack.c.l.b16 %v63
  %v208 = vunpack.c.l.b16 %v64
  %v209 = vunpack.c.l.b16 %v65
  %v210 = vunpack.c.l.b16 %v66
  %v211 = vunpack.c.l.b16 %v67
  %v212 = vunpack.c.l.b16 %v68
  %v213 = vunpack.c.l.b16 %v69
  %v214 = vunpack.c.l.b16 %v70
  %v215 = vunpack.c.l.b16 %v71
  %v216 = vunpack.c.l.b16 %v72
  %v217 = vunpack.c.l.b16 %v73
  %v218 = vunpack.c.l.b16 %v74
  %v219 = vunpack.c.l.b16 %v75
  %v220 = vunpack.c.l.b16 %v76
  %v221 = vunpack.c.l.b16 %v77
  %v222 = vunpack.c.l.b16 %v78
  %v223 = vunpack.c.l.b16 %v79
  %v224 = vunpack.c.l.b16 %v80
  %v225 = vunpack.c.l.b16 %v81
  %v226 = vunpack.c.l.b16 %v82
  %v227 = vunpack.c.l.b16 %v83
  %v228 = vunpack.c.l.b16 %v84
  %v229 = vunpack.c.l.b16 %v85
  %v230 = vunpack.c.l.b16 %v86
  %v231 = vunpack.c.l.b16 %v87
  %v232 = vunpack.c.l.b16 %v88
  %v233 = vunpack.c.l.b16 %v89
  %v234 = vunpack.c.l.b16 %v90
  %v235 = vunpack.c.l.b16 %v91
  %v236 = vpack.c.b16 %v173, %v172
  %v237 = vpack.c.b16 %v175, %v174
  %v238 = vpack.c.b16 %v177, %v176
  %v239 = vpack.c.b16 %v179, %v178
  %v240 = vpack.c.b16 %v181, %v180
  %v241 = vpack.c.b16 %v183, %v182
  %v242 = vpack.c.b16 %v185, %v184
  %v243 = vpack.c.b16 %v187, %v186
  %v244 = vpack.c.b16 %v189, %v188
  %v245 = vpack.c.b16 %v191, %v190
  %v246 = vpack.c.b16 %v193, %v192
  %v247 = vpack.c.b16 %v195, %v194
  %v248 = vpack.c.b16 %v197, %v196
  %v249 = vpack.c.b16 %v199, %v198
  %v250 = vpack.c.b16 %v201, %v200
  %v251 = vpack.c.b16 %v203, %v202
  %v252 = vpack.c.b16 %v205, %v204
  %v253 = vpack.c.b16 %v207, %v206
  %v254 = vpack.c.b16 %v209, %v208
  %v255 = vpack.c.b16 %v211, %v210
  %v256 = vpack.c.b16 %v213, %v212
  %v257 = vpack.c.b16 %v215, %v214
  %v258 = vpack.c.b16 %v217, %v216
  %v259 = vpack.c.b16 %v219, %v218
  %v260 = vpack.c.b16 %v221, %v220
  %v261 = vpack.c.b16 %v223, %v222
  %v262 = vpack.c.b16 %v225, %v224
  %v263 = vpack.c.b16 %v227, %v226
  %v264 = vpack.c.b16 %v229, %v228
  %v265 = vpack.c.b16 %v231, %v230
  %v266 = vpack.c.b16 %v233, %v232
  %v267 = vpack.c.b16 %v235, %v234
  %v316 = vunpack.c.l.b16 %v92
  %v317 = vunpack.c.l.b16 %v93
  %v318 = vunpack.c.l.b16 %v94
  %v319 = vunpack.c.l.b16 %v95
  %v320 = vunpack.c.l.b16 %v96
  %v321 = vunpack.c.l.b16 %v97
  %v322 = vunpack.c.l.b16 %v98
  %v323 = vunpack.c.l.b16 %v99
  %v324 = vunpack.c.l.b16 %v100
  %v325 = vunpack.c.l.b16 %v101
  %v326 = vunpack.c.l.b16 %v102
  %v327 = vunpack.c.l.b16 %v103
  %v328 = vunpack.c.l.b16 %v104
  %v329 = vunpack.c.l.b16 %v105
  %v330 = vunpack.c.l.b16 %v106
  %v331 = vunpack.c.l.b16 %v107
  %v332 = vpack.c.b16 %v317, %v316
  %v333 = vpack.c.b16 %v319, %v318
  %v334 = vpack.c.b16 %v321, %v320
  %v335 = vpack.c.b16 %v323, %v322
  %v336 = vpack.c.b16 %v325, %v324
  %v337 = vpack.c.b16 %v327, %v326
  %v338 = vpack.c.b16 %v329, %v328
  %v339 = vpack.c.b16 %v331, %v330
  %348 = vmatpush.bf16.msra.mxu0 %v339
  %349 = vmatpush.bf16.msra.mxu0 %v338
  %350 = vmatpush.bf16.msra.mxu0 %v337
  %351 = vmatpush.bf16.msra.mxu0 %v336
  %352 = vmatpush.bf16.msra.mxu0 %v335
  %353 = vmatpush.bf16.msra.mxu0 %v334
  %354 = vmatpush.bf16.msra.mxu0 %v333
  %355 = vmatpush.bf16.msra.mxu0 %v332
  %356 = vmatmul.bf16.gmra.mxu0 %v236
  %v357 = vpop.f32.mrf.mxu0
  %v358 = vadd.f32 0.0, %v357
  %v359 = vpop.f32.mrf.mxu0
  %v360 = vadd.f32 0.0, %v359
  %361 = vmatmul.bf16.gmra.mxu0 %v237
  %v362 = vpop.f32.mrf.mxu0
  %v363 = vadd.f32 0.0, %v362
  %v364 = vpop.f32.mrf.mxu0
  %v365 = vadd.f32 0.0, %v364
  %366 = vmatmul.bf16.gmra.mxu0 %v238
  %v367 = vpop.f32.mrf.mxu0
  %v368 = vadd.f32 0.0, %v367
  %v369 = vpop.f32.mrf.mxu0
  %v370 = vadd.f32 0.0, %v369
  %371 = vmatmul.bf16.gmra.mxu0 %v239
  %v372 = vpop.f32.mrf.mxu0
  %v373 = vadd.f32 0.0, %v372
  %v374 = vpop.f32.mrf.mxu0
  %v375 = vadd.f32 0.0, %v374
  %376 = vmatmul.bf16.gmra.mxu0 %v240
  %v377 = vpop.f32.mrf.mxu0
  %v378 = vadd.f32 0.0, %v377
  %v379 = vpop.f32.mrf.mxu0
  %v380 = vadd.f32 0.0, %v379
  %381 = vmatmul.bf16.gmra.mxu0 %v241
  %v382 = vpop.f32.mrf.mxu0
  %v383 = vadd.f32 0.0, %v382
  %v384 = vpop.f32.mrf.mxu0
  %v385 = vadd.f32 0.0, %v384
  %386 = vmatmul.bf16.gmra.mxu0 %v242
  %v387 = vpop.f32.mrf.mxu0
  %v388 = vadd.f32 0.0, %v387
  %v389 = vpop.f32.mrf.mxu0
  %v390 = vadd.f32 0.0, %v389
  %391 = vmatmul.bf16.gmra.mxu0 %v243
  %v392 = vpop.f32.mrf.mxu0
  %v393 = vadd.f32 0.0, %v392
  %v394 = vpop.f32.mrf.mxu0
  %v395 = vadd.f32 0.0, %v394
  %396 = vmatmul.bf16.gmra.mxu0 %v244
  %v397 = vpop.f32.mrf.mxu0
  %v398 = vadd.f32 0.0, %v397
  %v399 = vpop.f32.mrf.mxu0
  %v400 = vadd.f32 0.0, %v399
  %401 = vmatmul.bf16.gmra.mxu0 %v245
  %v402 = vpop.f32.mrf.mxu0
  %v403 = vadd.f32 0.0, %v402
  %v404 = vpop.f32.mrf.mxu0
  %v405 = vadd.f32 0.0, %v404
  %406 = vmatmul.bf16.gmra.mxu0 %v246
  %v407 = vpop.f32.mrf.mxu0
  %v408 = vadd.f32 0.0, %v407
  %v409 = vpop.f32.mrf.mxu0
  %v410 = vadd.f32 0.0, %v409
  %411 = vmatmul.bf16.gmra.mxu0 %v247
  %v412 = vpop.f32.mrf.mxu0
  %v413 = vadd.f32 0.0, %v412
  %v414 = vpop.f32.mrf.mxu0
  %v415 = vadd.f32 0.0, %v414
  %416 = vmatmul.bf16.gmra.mxu0 %v248
  %v417 = vpop.f32.mrf.mxu0
  %v418 = vadd.f32 0.0, %v417
  %v419 = vpop.f32.mrf.mxu0
  %v420 = vadd.f32 0.0, %v419
  %421 = vmatmul.bf16.gmra.mxu0 %v249
  %v422 = vpop.f32.mrf.mxu0
  %v423 = vadd.f32 0.0, %v422
  %v424 = vpop.f32.mrf.mxu0
  %v425 = vadd.f32 0.0, %v424
  %426 = vmatmul.bf16.gmra.mxu0 %v250
  %v427 = vpop.f32.mrf.mxu0
  %v428 = vadd.f32 0.0, %v427
  %v429 = vpop.f32.mrf.mxu0
  %v430 = vadd.f32 0.0, %v429
  %431 = vmatmul.bf16.gmra.mxu0 %v251
  %v432 = vpop.f32.mrf.mxu0
  %v433 = vadd.f32 0.0, %v432
  %v434 = vpop.f32.mrf.mxu0
  %v435 = vadd.f32 0.0, %v434
  %436 = vmatmul.bf16.gmra.mxu0 %v252
  %v437 = vpop.f32.mrf.mxu0
  %v438 = vadd.f32 0.0, %v437
  %v439 = vpop.f32.mrf.mxu0
  %v440 = vadd.f32 0.0, %v439
  %441 = vmatmul.bf16.gmra.mxu0 %v253
  %v442 = vpop.f32.mrf.mxu0
  %v443 = vadd.f32 0.0, %v442
  %v444 = vpop.f32.mrf.mxu0
  %v445 = vadd.f32 0.0, %v444
  %446 = vmatmul.bf16.gmra.mxu0 %v254
  %v447 = vpop.f32.mrf.mxu0
  %v448 = vadd.f32 0.0, %v447
  %v449 = vpop.f32.mrf.mxu0
  %v450 = vadd.f32 0.0, %v449
  %451 = vmatmul.bf16.gmra.mxu0 %v255
  %v452 = vpop.f32.mrf.mxu0
  %v453 = vadd.f32 0.0, %v452
  %v454 = vpop.f32.mrf.mxu0
  %v455 = vadd.f32 0.0, %v454
  %456 = vmatmul.bf16.gmra.mxu0 %v256
  %v457 = vpop.f32.mrf.mxu0
  %v458 = vadd.f32 0.0, %v457
  %v459 = vpop.f32.mrf.mxu0
  %v460 = vadd.f32 0.0, %v459
  %461 = vmatmul.bf16.gmra.mxu0 %v257
  %v462 = vpop.f32.mrf.mxu0
  %v463 = vadd.f32 0.0, %v462
  %v464 = vpop.f32.mrf.mxu0
  %v465 = vadd.f32 0.0, %v464
  %466 = vmatmul.bf16.gmra.mxu0 %v258
  %v467 = vpop.f32.mrf.mxu0
  %v468 = vadd.f32 0.0, %v467
  %v469 = vpop.f32.mrf.mxu0
  %v470 = vadd.f32 0.0, %v469
  %471 = vmatmul.bf16.gmra.mxu0 %v259
  %v472 = vpop.f32.mrf.mxu0
  %v473 = vadd.f32 0.0, %v472
  %v474 = vpop.f32.mrf.mxu0
  %v475 = vadd.f32 0.0, %v474
  %476 = vmatmul.bf16.gmra.mxu0 %v260
  %v477 = vpop.f32.mrf.mxu0
  %v478 = vadd.f32 0.0, %v477
  %v479 = vpop.f32.mrf.mxu0
  %v480 = vadd.f32 0.0, %v479
  %481 = vmatmul.bf16.gmra.mxu0 %v261
  %v482 = vpop.f32.mrf.mxu0
  %v483 = vadd.f32 0.0, %v482
  %v484 = vpop.f32.mrf.mxu0
  %v485 = vadd.f32 0.0, %v484
  %486 = vmatmul.bf16.gmra.mxu0 %v262
  %v487 = vpop.f32.mrf.mxu0
  %v488 = vadd.f32 0.0, %v487
  %v489 = vpop.f32.mrf.mxu0
  %v490 = vadd.f32 0.0, %v489
  %491 = vmatmul.bf16.gmra.mxu0 %v263
  %v492 = vpop.f32.mrf.mxu0
  %v493 = vadd.f32 0.0, %v492
  %v494 = vpop.f32.mrf.mxu0
  %v495 = vadd.f32 0.0, %v494
  %496 = vmatmul.bf16.gmra.mxu0 %v264
  %v497 = vpop.f32.mrf.mxu0
  %v498 = vadd.f32 0.0, %v497
  %v499 = vpop.f32.mrf.mxu0
  %v500 = vadd.f32 0.0, %v499
  %501 = vmatmul.bf16.gmra.mxu0 %v265
  %v502 = vpop.f32.mrf.mxu0
  %v503 = vadd.f32 0.0, %v502
  %v504 = vpop.f32.mrf.mxu0
  %v505 = vadd.f32 0.0, %v504
  %506 = vmatmul.bf16.gmra.mxu0 %v266
  %v507 = vpop.f32.mrf.mxu0
  %v508 = vadd.f32 0.0, %v507
  %v509 = vpop.f32.mrf.mxu0
  %v510 = vadd.f32 0.0, %v509
  %511 = vmatmul.bf16.gmra.mxu0 %v267
  %v512 = vpop.f32.mrf.mxu0
  %v513 = vadd.f32 0.0, %v512
  %v514 = vpop.f32.mrf.mxu0
  %v515 = vadd.f32 0.0, %v514
  %516 = vdwg.mxu0
  %v517 = vld [vmem:[%s0] sm:$0xf]
  %v518 = vld [vmem:[%s0 + $0x4] sm:$0xf]
  %v519 = vld [vmem:[%s0 + $0x8] sm:$0xf]
  %v520 = vld [vmem:[%s0 + $0xc] sm:$0xf]
  %v521 = vld [vmem:[%s0 + $0x10] sm:$0xf]
  %v522 = vld [vmem:[%s0 + $0x14] sm:$0xf]
  %v523 = vld [vmem:[%s0 + $0x18] sm:$0xf]
  %v524 = vld [vmem:[%s0 + $0x1c] sm:$0xf]
  %v525 = vld [vmem:[%s0 + $0x20] sm:$0xf]
  %v526 = vld [vmem:[%s0 + $0x24] sm:$0xf]
  %v527 = vld [vmem:[%s0 + $0x28] sm:$0xf]
  %v528 = vld [vmem:[%s0 + $0x2c] sm:$0xf]
  %v529 = vld [vmem:[%s0 + $0x30] sm:$0xf]
  %v530 = vld [vmem:[%s0 + $0x34] sm:$0xf]
  %v531 = vld [vmem:[%s0 + $0x38] sm:$0xf]
  %v532 = vld [vmem:[%s0 + $0x3c] sm:$0xf]
  %v533 = vld [vmem:[%s0 + $0x40] sm:$0xf]
  %v534 = vld [vmem:[%s0 + $0x44] sm:$0xf]
  %v535 = vld [vmem:[%s0 + $0x48] sm:$0xf]
  %v536 = vld [vmem:[%s0 + $0x4c] sm:$0xf]
  %v537 = vld [vmem:[%s0 + $0x50] sm:$0xf]
  %v538 = vld [vmem:[%s0 + $0x54] sm:$0xf]
  %v539 = vld [vmem:[%s0 + $0x58] sm:$0xf]
  %v540 = vld [vmem:[%s0 + $0x5c] sm:$0xf]
  %v541 = vld [vmem:[%s0 + $0x60] sm:$0xf]
  %v542 = vld [vmem:[%s0 + $0x64] sm:$0xf]
  %v543 = vld [vmem:[%s0 + $0x68] sm:$0xf]
  %v544 = vld [vmem:[%s0 + $0x6c] sm:$0xf]
  %v545 = vld [vmem:[%s0 + $0x70] sm:$0xf]
  %v546 = vld [vmem:[%s0 + $0x74] sm:$0xf]
  %v547 = vld [vmem:[%s0 + $0x78] sm:$0xf]
  %v548 = vld [vmem:[%s0 + $0x7c] sm:$0xf]
  %v549 = vld [vmem:[%s0 + $0x80] sm:$0xf]
  %v550 = vld [vmem:[%s0 + $0x84] sm:$0xf]
  %v551 = vld [vmem:[%s0 + $0x88] sm:$0xf]
  %v552 = vld [vmem:[%s0 + $0x8c] sm:$0xf]
  %v553 = vld [vmem:[%s0 + $0x90] sm:$0xf]
  %v554 = vld [vmem:[%s0 + $0x94] sm:$0xf]
  %v555 = vld [vmem:[%s0 + $0x98] sm:$0xf]
  %v556 = vld [vmem:[%s0 + $0x9c] sm:$0xf]
  %v557 = vld [vmem:[%s0 + $0xa0] sm:$0xf]
  %v558 = vld [vmem:[%s0 + $0xa4] sm:$0xf]
  %v559 = vld [vmem:[%s0 + $0xa8] sm:$0xf]
  %v560 = vld [vmem:[%s0 + $0xac] sm:$0xf]
  %v561 = vld [vmem:[%s0 + $0xb0] sm:$0xf]
  %v562 = vld [vmem:[%s0 + $0xb4] sm:$0xf]
  %v563 = vld [vmem:[%s0 + $0xb8] sm:$0xf]
  %v564 = vld [vmem:[%s0 + $0xbc] sm:$0xf]
  %v565 = vld [vmem:[%s0 + $0xc0] sm:$0xf]
  %v566 = vld [vmem:[%s0 + $0xc4] sm:$0xf]
  %v567 = vld [vmem:[%s0 + $0xc8] sm:$0xf]
  %v568 = vld [vmem:[%s0 + $0xcc] sm:$0xf]
  %v569 = vld [vmem:[%s0 + $0xd0] sm:$0xf]
  %v570 = vld [vmem:[%s0 + $0xd4] sm:$0xf]
  %v571 = vld [vmem:[%s0 + $0xd8] sm:$0xf]
  %v572 = vld [vmem:[%s0 + $0xdc] sm:$0xf]
  %v573 = vld [vmem:[%s0 + $0xe0] sm:$0xf]
  %v574 = vld [vmem:[%s0 + $0xe4] sm:$0xf]
  %v575 = vld [vmem:[%s0 + $0xe8] sm:$0xf]
  %v576 = vld [vmem:[%s0 + $0xec] sm:$0xf]
  %v577 = vld [vmem:[%s0 + $0xf0] sm:$0xf]
  %v578 = vld [vmem:[%s0 + $0xf4] sm:$0xf]
  %v579 = vld [vmem:[%s0 + $0xf8] sm:$0xf]
  %v580 = vld [vmem:[%s0 + $0xfc] sm:$0xf]
  %v581 = vunpack.c.l.bf16 %v517
  %v582 = vunpack.c.l.bf16 %v518
  %v583 = vunpack.c.l.bf16 %v519
  %v584 = vunpack.c.l.bf16 %v520
  %v585 = vunpack.c.l.bf16 %v521
  %v586 = vunpack.c.l.bf16 %v522
  %v587 = vunpack.c.l.bf16 %v523
  %v588 = vunpack.c.l.bf16 %v524
  %v589 = vunpack.c.l.bf16 %v525
  %v590 = vunpack.c.l.bf16 %v526
  %v591 = vunpack.c.l.bf16 %v527
  %v592 = vunpack.c.l.bf16 %v528
  %v593 = vunpack.c.l.bf16 %v529
  %v594 = vunpack.c.l.bf16 %v530
  %v595 = vunpack.c.l.bf16 %v531
  %v596 = vunpack.c.l.bf16 %v532
  %v597 = vunpack.c.l.bf16 %v533
  %v598 = vunpack.c.l.bf16 %v534
  %v599 = vunpack.c.l.bf16 %v535
  %v600 = vunpack.c.l.bf16 %v536
  %v601 = vunpack.c.l.bf16 %v537
  %v602 = vunpack.c.l.bf16 %v538
  %v603 = vunpack.c.l.bf16 %v539
  %v604 = vunpack.c.l.bf16 %v540
  %v605 = vunpack.c.l.bf16 %v541
  %v606 = vunpack.c.l.bf16 %v542
  %v607 = vunpack.c.l.bf16 %v543
  %v608 = vunpack.c.l.bf16 %v544
  %v609 = vunpack.c.l.bf16 %v545
  %v610 = vunpack.c.l.bf16 %v546
  %v611 = vunpack.c.l.bf16 %v547
  %v612 = vunpack.c.l.bf16 %v548
  %v613 = vunpack.c.l.bf16 %v549
  %v614 = vunpack.c.l.bf16 %v550
  %v615 = vunpack.c.l.bf16 %v551
  %v616 = vunpack.c.l.bf16 %v552
  %v617 = vunpack.c.l.bf16 %v553
  %v618 = vunpack.c.l.bf16 %v554
  %v619 = vunpack.c.l.bf16 %v555
  %v620 = vunpack.c.l.bf16 %v556
  %v621 = vunpack.c.l.bf16 %v557
  %v622 = vunpack.c.l.bf16 %v558
  %v623 = vunpack.c.l.bf16 %v559
  %v624 = vunpack.c.l.bf16 %v560
  %v625 = vunpack.c.l.bf16 %v561
  %v626 = vunpack.c.l.bf16 %v562
  %v627 = vunpack.c.l.bf16 %v563
  %v628 = vunpack.c.l.bf16 %v564
  %v629 = vunpack.c.l.bf16 %v565
  %v630 = vunpack.c.l.bf16 %v566
  %v631 = vunpack.c.l.bf16 %v567
  %v632 = vunpack.c.l.bf16 %v568
  %v633 = vunpack.c.l.bf16 %v569
  %v634 = vunpack.c.l.bf16 %v570
  %v635 = vunpack.c.l.bf16 %v571
  %v636 = vunpack.c.l.bf16 %v572
  %v637 = vunpack.c.l.bf16 %v573
  %v638 = vunpack.c.l.bf16 %v574
  %v639 = vunpack.c.l.bf16 %v575
  %v640 = vunpack.c.l.bf16 %v576
  %v641 = vunpack.c.l.bf16 %v577
  %v642 = vunpack.c.l.bf16 %v578
  %v643 = vunpack.c.l.bf16 %v579
  %v644 = vunpack.c.l.bf16 %v580
  %v645 = vmul.f32 %v358, %v581
  %v646 = vmul.f32 %v360, %v582
  %v647 = vmul.f32 %v363, %v583
  %v648 = vmul.f32 %v365, %v584
  %v649 = vmul.f32 %v368, %v585
  %v650 = vmul.f32 %v370, %v586
  %v651 = vmul.f32 %v373, %v587
  %v652 = vmul.f32 %v375, %v588
  %v653 = vmul.f32 %v378, %v589
  %v654 = vmul.f32 %v380, %v590
  %v655 = vmul.f32 %v383, %v591
  %v656 = vmul.f32 %v385, %v592
  %v657 = vmul.f32 %v388, %v593
  %v658 = vmul.f32 %v390, %v594
  %v659 = vmul.f32 %v393, %v595
  %v660 = vmul.f32 %v395, %v596
  %v661 = vmul.f32 %v398, %v597
  %v662 = vmul.f32 %v400, %v598
  %v663 = vmul.f32 %v403, %v599
  %v664 = vmul.f32 %v405, %v600
  %v665 = vmul.f32 %v408, %v601
  %v666 = vmul.f32 %v410, %v602
  %v667 = vmul.f32 %v413, %v603
  %v668 = vmul.f32 %v415, %v604
  %v669 = vmul.f32 %v418, %v605
  %v670 = vmul.f32 %v420, %v606
  %v671 = vmul.f32 %v423, %v607
  %v672 = vmul.f32 %v425, %v608
  %v673 = vmul.f32 %v428, %v609
  %v674 = vmul.f32 %v430, %v610
  %v675 = vmul.f32 %v433, %v611
  %v676 = vmul.f32 %v435, %v612
  %v677 = vmul.f32 %v438, %v613
  %v678 = vmul.f32 %v440, %v614
  %v679 = vmul.f32 %v443, %v615
  %v680 = vmul.f32 %v445, %v616
  %v681 = vmul.f32 %v448, %v617
  %v682 = vmul.f32 %v450, %v618
  %v683 = vmul.f32 %v453, %v619
  %v684 = vmul.f32 %v455, %v620
  %v685 = vmul.f32 %v458, %v621
  %v686 = vmul.f32 %v460, %v622
  %v687 = vmul.f32 %v463, %v623
  %v688 = vmul.f32 %v465, %v624
  %v689 = vmul.f32 %v468, %v625
  %v690 = vmul.f32 %v470, %v626
  %v691 = vmul.f32 %v473, %v627
  %v692 = vmul.f32 %v475, %v628
  %v693 = vmul.f32 %v478, %v629
  %v694 = vmul.f32 %v480, %v630
  %v695 = vmul.f32 %v483, %v631
  %v696 = vmul.f32 %v485, %v632
  %v697 = vmul.f32 %v488, %v633
  %v698 = vmul.f32 %v490, %v634
  %v699 = vmul.f32 %v493, %v635
  %v700 = vmul.f32 %v495, %v636
  %v701 = vmul.f32 %v498, %v637
  %v702 = vmul.f32 %v500, %v638
  %v703 = vmul.f32 %v503, %v639
  %v704 = vmul.f32 %v505, %v640
  %v705 = vmul.f32 %v508, %v641
  %v706 = vmul.f32 %v510, %v642
  %v707 = vmul.f32 %v513, %v643
  %v708 = vmul.f32 %v515, %v644
  %v709 = vld [vmem:[%s2] sm:$0xf]
  %v710 = vlaneseq
  %v711 = vshrl.u32 %v710, 7
  %v712 = vperm.slane %v709, 0
  %v713 = vperm.slane %v709, 1
  %v714 = vperm.slane %v709, 2
  %v715 = vperm.slane %v709, 3
  %vm716 = vcmp.eq.s32.totalorder %v711, %v712
  %vm717 = vcmp.eq.s32.totalorder %v711, %v713
  %vm718 = vcmp.eq.s32.totalorder %v711, %v714
  %vm719 = vcmp.eq.s32.totalorder %v711, %v715
  %v720 = vsel %vm716, 1.0, 0.0
  %v721 = vsel %vm717, 1.0, 0.0
  %v722 = vsel %vm718, 1.0, 0.0
  %v723 = vsel %vm719, 1.0, 0.0
  %v724 = vpack.c.bf16 %v720, %v720
  %v725 = vpack.c.bf16 %v721, %v721
  %v726 = vpack.c.bf16 %v722, %v722
  %v727 = vpack.c.bf16 %v723, %v723
  %v728 = vld [vmem:[#allocation2] sm:$0xff]
  %v729 = vpack.c.bf16 %v646, %v645
  %v730 = vpack.c.bf16 %v648, %v647
  %v731 = vpack.c.bf16 %v650, %v649
  %v732 = vpack.c.bf16 %v652, %v651
  %v733 = vpack.c.bf16 %v654, %v653
  %v734 = vpack.c.bf16 %v656, %v655
  %v735 = vpack.c.bf16 %v658, %v657
  %v736 = vpack.c.bf16 %v660, %v659
  %v737 = vpack.c.bf16 %v662, %v661
  %v738 = vpack.c.bf16 %v664, %v663
  %v739 = vpack.c.bf16 %v666, %v665
  %v740 = vpack.c.bf16 %v668, %v667
  %v741 = vpack.c.bf16 %v670, %v669
  %v742 = vpack.c.bf16 %v672, %v671
  %v743 = vpack.c.bf16 %v674, %v673
  %v744 = vpack.c.bf16 %v676, %v675
  %v745 = vpack.c.bf16 %v678, %v677
  %v746 = vpack.c.bf16 %v680, %v679
  %v747 = vpack.c.bf16 %v682, %v681
  %v748 = vpack.c.bf16 %v684, %v683
  %v749 = vpack.c.bf16 %v686, %v685
  %v750 = vpack.c.bf16 %v688, %v687
  %v751 = vpack.c.bf16 %v690, %v689
  %v752 = vpack.c.bf16 %v692, %v691
  %v753 = vpack.c.bf16 %v694, %v693
  %v754 = vpack.c.bf16 %v696, %v695
  %v755 = vpack.c.bf16 %v698, %v697
  %v756 = vpack.c.bf16 %v700, %v699
  %v757 = vpack.c.bf16 %v702, %v701
  %v758 = vpack.c.bf16 %v704, %v703
  %v759 = vpack.c.bf16 %v706, %v705
  %v760 = vpack.c.bf16 %v708, %v707
  %761 = vmatpush.bf16.msra.mxu0 %v736
  %762 = vmatpush.bf16.msra.mxu0 %v735
  %763 = vmatpush.bf16.msra.mxu0 %v734
  %764 = vmatpush.bf16.msra.mxu0 %v733
  %765 = vmatpush.bf16.msra.mxu0 %v732
  %766 = vmatpush.bf16.msra.mxu0 %v731
  %767 = vmatpush.bf16.msra.mxu0 %v730
  %768 = vmatpush.bf16.msra.mxu0 %v729
  %769 = vmatmul.bf16.gmra.mxu0 %v724
  %v770 = vpop.f32.mrf.mxu0
  %v771 = vadd.f32 0.0, %v770
  %v772 = vpop.f32.mrf.mxu0
  %773 = vdwg.mxu0
  %774 = vmatpush.bf16.msra.mxu0 %v744
  %775 = vmatpush.bf16.msra.mxu0 %v743
  %776 = vmatpush.bf16.msra.mxu0 %v742
  %777 = vmatpush.bf16.msra.mxu0 %v741
  %778 = vmatpush.bf16.msra.mxu0 %v740
  %779 = vmatpush.bf16.msra.mxu0 %v739
  %780 = vmatpush.bf16.msra.mxu0 %v738
  %781 = vmatpush.bf16.msra.mxu0 %v737
  %782 = vmatmul.bf16.gmra.mxu0 %v725
  %v783 = vpop.f32.mrf.mxu0
  %v784 = vadd.f32 %v771, %v783
  %v785 = vpop.f32.mrf.mxu0
  %786 = vdwg.mxu0
  %787 = vmatpush.bf16.msra.mxu0 %v752
  %788 = vmatpush.bf16.msra.mxu0 %v751
  %789 = vmatpush.bf16.msra.mxu0 %v750
  %790 = vmatpush.bf16.msra.mxu0 %v749
  %791 = vmatpush.bf16.msra.mxu0 %v748
  %792 = vmatpush.bf16.msra.mxu0 %v747
  %793 = vmatpush.bf16.msra.mxu0 %v746
  %794 = vmatpush.bf16.msra.mxu0 %v745
  %795 = vmatmul.bf16.gmra.mxu0 %v726
  %v796 = vpop.f32.mrf.mxu0
  %v797 = vadd.f32 %v784, %v796
  %v798 = vpop.f32.mrf.mxu0
  %799 = vdwg.mxu0
  %800 = vmatpush.bf16.msra.mxu0 %v760
  %801 = vmatpush.bf16.msra.mxu0 %v759
  %802 = vmatpush.bf16.msra.mxu0 %v758
  %803 = vmatpush.bf16.msra.mxu0 %v757
  %804 = vmatpush.bf16.msra.mxu0 %v756
  %805 = vmatpush.bf16.msra.mxu0 %v755
  %806 = vmatpush.bf16.msra.mxu0 %v754
  %807 = vmatpush.bf16.msra.mxu0 %v753
  %808 = vmatmul.bf16.gmra.mxu0 %v727
  %v809 = vpop.f32.mrf.mxu0
  %v810 = vadd.f32 %v797, %v809
  %v811 = vpop.f32.mrf.mxu0
  %812 = vdwg.mxu0
  %v813 = vadd.f32 %v728, %v810
  %814 = vst [vmem:[#allocation2] sm:$0xff] %v813
  // Predicated region
  $region30: #{dimenet_forward.9} parent=0 // pred_check
    %p815 = pneg %p23
  $region31: #{dimenet_forward.9} parent=0 // pred_check_branch
    %817 = sbr.rel (%p815) target = $region33
  $region32: #{dimenet_forward.9} parent=0 // pred_region
    %v818 = vld [vmem:[#allocation2] sm:$0xff]
    %s819 = scalar_lea.vmem %s4, 64
    %v820 = vld [vmem:[%s819] sm:$0xf]
    %v821 = vld [vmem:[%s819 + $0x4] sm:$0xf]
    %v822 = vld [vmem:[%s819 + $0x8] sm:$0xf]
    %v823 = vld [vmem:[%s819 + $0xc] sm:$0xf]
    %v824 = vld [vmem:[%s819 + $0x10] sm:$0xf]
    %v825 = vld [vmem:[%s819 + $0x14] sm:$0xf]
    %v826 = vld [vmem:[%s819 + $0x18] sm:$0xf]
    %v827 = vld [vmem:[%s819 + $0x1c] sm:$0xf]
    %v828 = vld [vmem:[%s819 + $0x20] sm:$0xf]
    %v829 = vld [vmem:[%s819 + $0x24] sm:$0xf]
    %v830 = vld [vmem:[%s819 + $0x28] sm:$0xf]
    %v831 = vld [vmem:[%s819 + $0x2c] sm:$0xf]
    %v832 = vld [vmem:[%s819 + $0x30] sm:$0xf]
    %v833 = vld [vmem:[%s819 + $0x34] sm:$0xf]
    %v834 = vld [vmem:[%s819 + $0x38] sm:$0xf]
    %v835 = vld [vmem:[%s819 + $0x3c] sm:$0xf]
    %v836 = vpack.c.bf16 %v818, %v818
    %v853 = vunpack.c.l.b16 %v820
    %v854 = vunpack.c.l.b16 %v821
    %v855 = vunpack.c.l.b16 %v822
    %v856 = vunpack.c.l.b16 %v823
    %v857 = vunpack.c.l.b16 %v824
    %v858 = vunpack.c.l.b16 %v825
    %v859 = vunpack.c.l.b16 %v826
    %v860 = vunpack.c.l.b16 %v827
    %v861 = vunpack.c.l.b16 %v828
    %v862 = vunpack.c.l.b16 %v829
    %v863 = vunpack.c.l.b16 %v830
    %v864 = vunpack.c.l.b16 %v831
    %v865 = vunpack.c.l.b16 %v832
    %v866 = vunpack.c.l.b16 %v833
    %v867 = vunpack.c.l.b16 %v834
    %v868 = vunpack.c.l.b16 %v835
    %v869 = vpack.c.b16 %v854, %v853
    %v870 = vpack.c.b16 %v856, %v855
    %v871 = vpack.c.b16 %v858, %v857
    %v872 = vpack.c.b16 %v860, %v859
    %v873 = vpack.c.b16 %v862, %v861
    %v874 = vpack.c.b16 %v864, %v863
    %v875 = vpack.c.b16 %v866, %v865
    %v876 = vpack.c.b16 %v868, %v867
    %885 = vmatpush.bf16.msra.mxu0 %v876
    %886 = vmatpush.bf16.msra.mxu0 %v875
    %887 = vmatpush.bf16.msra.mxu0 %v874
    %888 = vmatpush.bf16.msra.mxu0 %v873
    %889 = vmatpush.bf16.msra.mxu0 %v872
    %890 = vmatpush.bf16.msra.mxu0 %v871
    %891 = vmatpush.bf16.msra.mxu0 %v870
    %892 = vmatpush.bf16.msra.mxu0 %v869
    %893 = vmatmul.bf16.gmra.mxu0 %v836
    %v894 = vpop.f32.mrf.mxu0
    %v895 = vadd.f32 0.0, %v894
    %v896 = vpop.f32.mrf.mxu0
    %897 = vdwg.mxu0
    %s898 = scalar_lea.vmem %s4, 128
    %v899 = vld [vmem:[%s898] sm:$0xf]
    %v900 = vld [vmem:[%s898 + $0x4] sm:$0xf]
    %v901 = vld [vmem:[%s898 + $0x8] sm:$0xf]
    %v902 = vld [vmem:[%s898 + $0xc] sm:$0xf]
    %v903 = vld [vmem:[%s898 + $0x10] sm:$0xf]
    %v904 = vld [vmem:[%s898 + $0x14] sm:$0xf]
    %v905 = vld [vmem:[%s898 + $0x18] sm:$0xf]
    %v906 = vld [vmem:[%s898 + $0x1c] sm:$0xf]
    %v907 = vld [vmem:[%s898 + $0x20] sm:$0xf]
    %v908 = vld [vmem:[%s898 + $0x24] sm:$0xf]
    %v909 = vld [vmem:[%s898 + $0x28] sm:$0xf]
    %v910 = vld [vmem:[%s898 + $0x2c] sm:$0xf]
    %v911 = vld [vmem:[%s898 + $0x30] sm:$0xf]
    %v912 = vld [vmem:[%s898 + $0x34] sm:$0xf]
    %v913 = vld [vmem:[%s898 + $0x38] sm:$0xf]
    %v914 = vld [vmem:[%s898 + $0x3c] sm:$0xf]
    %v915 = vpack.c.bf16 %v895, %v895
    %v916 = vld [vmem:[%s5] sm:$0x1]
    %v917 = vperm.slane %v916, 0
    %v934 = vunpack.c.l.b16 %v899
    %v935 = vunpack.c.l.b16 %v900
    %v936 = vunpack.c.l.b16 %v901
    %v937 = vunpack.c.l.b16 %v902
    %v938 = vunpack.c.l.b16 %v903
    %v939 = vunpack.c.l.b16 %v904
    %v940 = vunpack.c.l.b16 %v905
    %v941 = vunpack.c.l.b16 %v906
    %v942 = vunpack.c.l.b16 %v907
    %v943 = vunpack.c.l.b16 %v908
    %v944 = vunpack.c.l.b16 %v909
    %v945 = vunpack.c.l.b16 %v910
    %v946 = vunpack.c.l.b16 %v911
    %v947 = vunpack.c.l.b16 %v912
    %v948 = vunpack.c.l.b16 %v913
    %v949 = vunpack.c.l.b16 %v914
    %v950 = vpack.c.b16 %v935, %v934
    %v951 = vpack.c.b16 %v937, %v936
    %v952 = vpack.c.b16 %v939, %v938
    %v953 = vpack.c.b16 %v941, %v940
    %v954 = vpack.c.b16 %v943, %v942
    %v955 = vpack.c.b16 %v945, %v944
    %v956 = vpack.c.b16 %v947, %v946
    %v957 = vpack.c.b16 %v949, %v948
    %966 = vmatpush.bf16.msra.mxu0 %v957
    %967 = vmatpush.bf16.msra.mxu0 %v956
    %968 = vmatpush.bf16.msra.mxu0 %v955
    %969 = vmatpush.bf16.msra.mxu0 %v954
    %970 = vmatpush.bf16.msra.mxu0 %v953
    %971 = vmatpush.bf16.msra.mxu0 %v952
    %972 = vmatpush.bf16.msra.mxu0 %v951
    %973 = vmatpush.bf16.msra.mxu0 %v950
    %974 = vmatmul.bf16.gmra.mxu0 %v915
    %v975 = vpop.f32.mrf.mxu0
    %v976 = vadd.f32 %v917, %v975
    %v977 = vpop.f32.mrf.mxu0
    %978 = vdwg.mxu0
    %v979 = vsub.f32 0.0, %v976
    %v980 = vmul.f32 %v979, 1.442695
    %v981 = vpow.pop %v980
    %v982 = vadd.f32 %v981, 1.0
    %v983 = vrcp.pop %v982
    %v984 = vmul.f32 %v976, %v983
    %s985 = scalar_lea.vmem %s4, 192
    %v986 = vld [vmem:[%s985] sm:$0xf]
    %v987 = vld [vmem:[%s985 + $0x4] sm:$0xf]
    %v988 = vld [vmem:[%s985 + $0x8] sm:$0xf]
    %v989 = vld [vmem:[%s985 + $0xc] sm:$0xf]
    %v990 = vld [vmem:[%s985 + $0x10] sm:$0xf]
    %v991 = vld [vmem:[%s985 + $0x14] sm:$0xf]
    %v992 = vld [vmem:[%s985 + $0x18] sm:$0xf]
    %v993 = vld [vmem:[%s985 + $0x1c] sm:$0xf]
    %v994 = vld [vmem:[%s985 + $0x20] sm:$0xf]
    %v995 = vld [vmem:[%s985 + $0x24] sm:$0xf]
    %v996 = vld [vmem:[%s985 + $0x28] sm:$0xf]
    %v997 = vld [vmem:[%s985 + $0x2c] sm:$0xf]
    %v998 = vld [vmem:[%s985 + $0x30] sm:$0xf]
    %v999 = vld [vmem:[%s985 + $0x34] sm:$0xf]
    %v1000 = vld [vmem:[%s985 + $0x38] sm:$0xf]
    %v1001 = vld [vmem:[%s985 + $0x3c] sm:$0xf]
    %v1002 = vpack.c.bf16 %v984, %v984
    %v1003 = vld [vmem:[%s5 + $0x1] sm:$0x1]
    %v1004 = vperm.slane %v1003, 0
    %v1021 = vunpack.c.l.b16 %v986
    %v1022 = vunpack.c.l.b16 %v987
    %v1023 = vunpack.c.l.b16 %v988
    %v1024 = vunpack.c.l.b16 %v989
    %v1025 = vunpack.c.l.b16 %v990
    %v1026 = vunpack.c.l.b16 %v991
    %v1027 = vunpack.c.l.b16 %v992
    %v1028 = vunpack.c.l.b16 %v993
    %v1029 = vunpack.c.l.b16 %v994
    %v1030 = vunpack.c.l.b16 %v995
    %v1031 = vunpack.c.l.b16 %v996
    %v1032 = vunpack.c.l.b16 %v997
    %v1033 = vunpack.c.l.b16 %v998
    %v1034 = vunpack.c.l.b16 %v999
    %v1035 = vunpack.c.l.b16 %v1000
    %v1036 = vunpack.c.l.b16 %v1001
    %v1037 = vpack.c.b16 %v1022, %v1021
    %v1038 = vpack.c.b16 %v1024, %v1023
    %v1039 = vpack.c.b16 %v1026, %v1025
    %v1040 = vpack.c.b16 %v1028, %v1027
    %v1041 = vpack.c.b16 %v1030, %v1029
    %v1042 = vpack.c.b16 %v1032, %v1031
    %v1043 = vpack.c.b16 %v1034, %v1033
    %v1044 = vpack.c.b16 %v1036, %v1035
    %1053 = vmatpush.bf16.msra.mxu0 %v1044
    %1054 = vmatpush.bf16.msra.mxu0 %v1043
    %1055 = vmatpush.bf16.msra.mxu0 %v1042
    %1056 = vmatpush.bf16.msra.mxu0 %v1041
    %1057 = vmatpush.bf16.msra.mxu0 %v1040
    %1058 = vmatpush.bf16.msra.mxu0 %v1039
    %1059 = vmatpush.bf16.msra.mxu0 %v1038
    %1060 = vmatpush.bf16.msra.mxu0 %v1037
    %1061 = vmatmul.bf16.gmra.mxu0 %v1002
    %v1062 = vpop.f32.mrf.mxu0
    %v1063 = vadd.f32 %v1004, %v1062
    %v1064 = vpop.f32.mrf.mxu0
    %1065 = vdwg.mxu0
    %v1066 = vsub.f32 0.0, %v1063
    %v1067 = vmul.f32 %v1066, 1.442695
    %v1068 = vpow.pop %v1067
    %v1069 = vadd.f32 %v1068, 1.0
    %v1070 = vrcp.pop %v1069
    %v1071 = vmul.f32 %v1063, %v1070
    %s1072 = scalar_lea.vmem %s4, 256
    %v1073 = vld [vmem:[%s1072] sm:$0xf]
    %v1074 = vld [vmem:[%s1072 + $0x4] sm:$0xf]
    %v1075 = vld [vmem:[%s1072 + $0x8] sm:$0xf]
    %v1076 = vld [vmem:[%s1072 + $0xc] sm:$0xf]
    %v1077 = vld [vmem:[%s1072 + $0x10] sm:$0xf]
    %v1078 = vld [vmem:[%s1072 + $0x14] sm:$0xf]
    %v1079 = vld [vmem:[%s1072 + $0x18] sm:$0xf]
    %v1080 = vld [vmem:[%s1072 + $0x1c] sm:$0xf]
    %v1081 = vld [vmem:[%s1072 + $0x20] sm:$0xf]
    %v1082 = vld [vmem:[%s1072 + $0x24] sm:$0xf]
    %v1083 = vld [vmem:[%s1072 + $0x28] sm:$0xf]
    %v1084 = vld [vmem:[%s1072 + $0x2c] sm:$0xf]
    %v1085 = vld [vmem:[%s1072 + $0x30] sm:$0xf]
    %v1086 = vld [vmem:[%s1072 + $0x34] sm:$0xf]
    %v1087 = vld [vmem:[%s1072 + $0x38] sm:$0xf]
    %v1088 = vld [vmem:[%s1072 + $0x3c] sm:$0xf]
    %v1089 = vpack.c.bf16 %v1071, %v1071
    %v1106 = vunpack.c.l.b16 %v1073
    %v1107 = vunpack.c.l.b16 %v1074
    %v1108 = vunpack.c.l.b16 %v1075
    %v1109 = vunpack.c.l.b16 %v1076
    %v1110 = vunpack.c.l.b16 %v1077
    %v1111 = vunpack.c.l.b16 %v1078
    %v1112 = vunpack.c.l.b16 %v1079
    %v1113 = vunpack.c.l.b16 %v1080
    %v1114 = vunpack.c.l.b16 %v1081
    %v1115 = vunpack.c.l.b16 %v1082
    %v1116 = vunpack.c.l.b16 %v1083
    %v1117 = vunpack.c.l.b16 %v1084
    %v1118 = vunpack.c.l.b16 %v1085
    %v1119 = vunpack.c.l.b16 %v1086
    %v1120 = vunpack.c.l.b16 %v1087
    %v1121 = vunpack.c.l.b16 %v1088
    %v1122 = vpack.c.b16 %v1107, %v1106
    %v1123 = vpack.c.b16 %v1109, %v1108
    %v1124 = vpack.c.b16 %v1111, %v1110
    %v1125 = vpack.c.b16 %v1113, %v1112
    %v1126 = vpack.c.b16 %v1115, %v1114
    %v1127 = vpack.c.b16 %v1117, %v1116
    %v1128 = vpack.c.b16 %v1119, %v1118
    %v1129 = vpack.c.b16 %v1121, %v1120
    %1138 = vmatpush.bf16.msra.mxu0 %v1129
    %1139 = vmatpush.bf16.msra.mxu0 %v1128
    %1140 = vmatpush.bf16.msra.mxu0 %v1127
    %1141 = vmatpush.bf16.msra.mxu0 %v1126
    %1142 = vmatpush.bf16.msra.mxu0 %v1125
    %1143 = vmatpush.bf16.msra.mxu0 %v1124
    %1144 = vmatpush.bf16.msra.mxu0 %v1123
    %1145 = vmatpush.bf16.msra.mxu0 %v1122
    %1146 = vmatmul.bf16.gmra.mxu0 %v1089
    %v1147 = vpop.f32.mrf.mxu0
    %v1148 = vadd.f32 0.0, %v1147
    %v1149 = vpop.f32.mrf.mxu0
    %1150 = vdwg.mxu0
    %v1151 = vld [vmem:[%s3] sm:$0x1]
    %v1152 = vperm.slane %v1151, 0
    %vm1153 = vcmp.eq.s32.totalorder %v711, %v1152
    %v1154 = vsel %vm1153, 1.0, 0.0
    %vm1155 = vcmask 64512
    %v1157 = vsel %vm1155, %v1154, 0
    %1159 = vmatpush.msra.mxu0 0.0
    %1160 = vmatpush.msra.mxu0 0.0
    %1161 = vmatpush.msra.mxu0 0.0
    %1162 = vmatpush.msra.mxu0 0.0
    %1163 = vmatpush.msra.mxu0 0.0
    %1164 = vmatpush.msra.mxu0 0.0
    %1165 = vmatpush.msra.mxu0 0.0
    %1166 = vmatpush.msra.mxu0 0.0
    %1167 = vmatpush.msra.mxu0 0.0
    %1168 = vmatpush.msra.mxu0 0.0
    %1169 = vmatpush.msra.mxu0 0.0
    %1170 = vmatpush.msra.mxu0 0.0
    %1171 = vmatpush.msra.mxu0 0.0
    %1172 = vmatpush.msra.mxu0 0.0
    %1173 = vmatpush.msra.mxu0 0.0
    %1174 = vmatpush.msra.mxu0 %v1148
    %1175 = vmatmul.f32.gmra.mxu0 %v1157
    %v1176 = vpop.f32.mrf.mxu0
    %v1177 = vadd.f32 0.0, %v1176
    %1178 = vdwg.mxu0
    %1179 = vst [vmem:[%s6] sm:$0xff] %v1177
  $region33: #{dimenet_forward.9} parent=0 // pred_fallthru
    _
  // Predicated region
  $region34: #{dimenet_forward.9} parent=0 // pred_check
    _
  $region35: #{dimenet_forward.9} parent=0 // pred_check_branch
    %1181 = sbr.rel (0) target = $region37
  $region36: #{dimenet_forward.9} parent=0 // pred_region
    _
  $region37: #{dimenet_forward.9} parent=0 // pred_fallthru
    _
  // Predicated region
  $region38: #{dimenet_forward.9} parent=0 // pred_check
    _
  $region39: #{dimenet_forward.9} parent=0 // pred_check_branch
    %1183 = sbr.rel (0) target = $region41
  $region40: #{dimenet_forward.9} parent=0 // pred_region
    _
  $region41: #{dimenet_forward.9} parent=0 // pred_fallthru
    _

// kernel: dimenet_forward.8
$region0: #{dimenet_forward.8}
  #allocation0 [shape = 'u32[]', space=smem, size = 0x4, offset = 0x4, fixed_abs, tag = 'smem constant byte address 0x4 - core index']
  #allocation1 [shape = 'u32[72,128]{1,0:T(1,128)}', space=vmem, size = 0x9000, scoped, tag = 'internal scratch']
  %s0 = inlined_call_operand.vmem [shape: bf16[512,128], index: 0, kind: input, shape index: {}]
  %s1 = inlined_call_operand.vmem [shape: bf16[512,128], index: 1, kind: input, shape index: {}]
  %s2 = inlined_call_operand.vmem [shape: bf16[128,128], index: 2, kind: input, shape index: {}]
  %s3 = inlined_call_operand.vmem [shape: f32[1,128], index: 3, kind: input, shape index: {}]
  %s4 = inlined_call_operand.vmem [shape: bf16[128,128], index: 4, kind: input, shape index: {}]
  %s5 = inlined_call_operand.vmem [shape: f32[1,128], index: 5, kind: input, shape index: {}]
  %s6 = inlined_call_operand.vmem [shape: bf16[512,128], index: 6, kind: output, shape index: {}]
  %s7 = sld [smem:[#allocation0]]
  $region34: #{dimenet_forward.8} parent=0
    _
  %s9 = ssub.s32 1, %s7
  %s10 = scalar_select 0, %s9, %s7
  // Predicated region
  $region2: #{dimenet_forward.8} parent=0 // pred_check
    _
  $region3: #{dimenet_forward.8} parent=0 // pred_check_branch
    %12 = sbr.rel (0) target = $region5
  $region4: #{dimenet_forward.8} parent=0 // pred_region
    _
  $region5: #{dimenet_forward.8} parent=0 // pred_fallthru
    _
  // Predicated region
  $region6: #{dimenet_forward.8} parent=0 // pred_check
    _
  $region7: #{dimenet_forward.8} parent=0 // pred_check_branch
    %14 = sbr.rel (0) target = $region9
  $region8: #{dimenet_forward.8} parent=0 // pred_region
    _
  $region9: #{dimenet_forward.8} parent=0 // pred_fallthru
    _
  // Predicated region
  $region10: #{dimenet_forward.8} parent=0 // pred_check
    _
  $region11: #{dimenet_forward.8} parent=0 // pred_check_branch
    %16 = sbr.rel (0) target = $region13
  $region12: #{dimenet_forward.8} parent=0 // pred_region
    _
  $region13: #{dimenet_forward.8} parent=0 // pred_fallthru
    _
  // Predicated region
  $region14: #{dimenet_forward.8} parent=0 // pred_check
    _
  $region15: #{dimenet_forward.8} parent=0 // pred_check_branch
    %18 = sbr.rel (0) target = $region17
  $region16: #{dimenet_forward.8} parent=0 // pred_region
    _
  $region17: #{dimenet_forward.8} parent=0 // pred_fallthru
    _
  // Predicated region
  $region18: #{dimenet_forward.8} parent=0 // pred_check
    _
  $region19: #{dimenet_forward.8} parent=0 // pred_check_branch
    %20 = sbr.rel (0) target = $region21
  $region20: #{dimenet_forward.8} parent=0 // pred_region
    _
  $region21: #{dimenet_forward.8} parent=0 // pred_fallthru
    _
  // Predicated region
  $region22: #{dimenet_forward.8} parent=0 // pred_check
    _
  $region23: #{dimenet_forward.8} parent=0 // pred_check_branch
    %22 = sbr.rel (0) target = $region25
  $region24: #{dimenet_forward.8} parent=0 // pred_region
    _
  $region25: #{dimenet_forward.8} parent=0 // pred_fallthru
    _
  %v23 = vld [vmem:[%s1] sm:$0xf]
  %v24 = vld [vmem:[%s1 + $0x4] sm:$0xf]
  %v25 = vld [vmem:[%s1 + $0x8] sm:$0xf]
  %v26 = vld [vmem:[%s1 + $0xc] sm:$0xf]
  %v27 = vld [vmem:[%s1 + $0x10] sm:$0xf]
  %v28 = vld [vmem:[%s1 + $0x14] sm:$0xf]
  %v29 = vld [vmem:[%s1 + $0x18] sm:$0xf]
  %v30 = vld [vmem:[%s1 + $0x1c] sm:$0xf]
  %v31 = vld [vmem:[%s1 + $0x20] sm:$0xf]
  %v32 = vld [vmem:[%s1 + $0x24] sm:$0xf]
  %v33 = vld [vmem:[%s1 + $0x28] sm:$0xf]
  %v34 = vld [vmem:[%s1 + $0x2c] sm:$0xf]
  %v35 = vld [vmem:[%s1 + $0x30] sm:$0xf]
  %v36 = vld [vmem:[%s1 + $0x34] sm:$0xf]
  %v37 = vld [vmem:[%s1 + $0x38] sm:$0xf]
  %v38 = vld [vmem:[%s1 + $0x3c] sm:$0xf]
  %v39 = vld [vmem:[%s1 + $0x40] sm:$0xf]
  %v40 = vld [vmem:[%s1 + $0x44] sm:$0xf]
  %v41 = vld [vmem:[%s1 + $0x48] sm:$0xf]
  %v42 = vld [vmem:[%s1 + $0x4c] sm:$0xf]
  %v43 = vld [vmem:[%s1 + $0x50] sm:$0xf]
  %v44 = vld [vmem:[%s1 + $0x54] sm:$0xf]
  %v45 = vld [vmem:[%s1 + $0x58] sm:$0xf]
  %v46 = vld [vmem:[%s1 + $0x5c] sm:$0xf]
  %v47 = vld [vmem:[%s1 + $0x60] sm:$0xf]
  %v48 = vld [vmem:[%s1 + $0x64] sm:$0xf]
  %v49 = vld [vmem:[%s1 + $0x68] sm:$0xf]
  %v50 = vld [vmem:[%s1 + $0x6c] sm:$0xf]
  %v51 = vld [vmem:[%s1 + $0x70] sm:$0xf]
  %v52 = vld [vmem:[%s1 + $0x74] sm:$0xf]
  %v53 = vld [vmem:[%s1 + $0x78] sm:$0xf]
  %v54 = vld [vmem:[%s1 + $0x7c] sm:$0xf]
  %v55 = vld [vmem:[%s1 + $0x80] sm:$0xf]
  %v56 = vld [vmem:[%s1 + $0x84] sm:$0xf]
  %v57 = vld [vmem:[%s1 + $0x88] sm:$0xf]
  %v58 = vld [vmem:[%s1 + $0x8c] sm:$0xf]
  %v59 = vld [vmem:[%s1 + $0x90] sm:$0xf]
  %v60 = vld [vmem:[%s1 + $0x94] sm:$0xf]
  %v61 = vld [vmem:[%s1 + $0x98] sm:$0xf]
  %v62 = vld [vmem:[%s1 + $0x9c] sm:$0xf]
  %v63 = vld [vmem:[%s1 + $0xa0] sm:$0xf]
  %v64 = vld [vmem:[%s1 + $0xa4] sm:$0xf]
  %v65 = vld [vmem:[%s1 + $0xa8] sm:$0xf]
  %v66 = vld [vmem:[%s1 + $0xac] sm:$0xf]
  %v67 = vld [vmem:[%s1 + $0xb0] sm:$0xf]
  %v68 = vld [vmem:[%s1 + $0xb4] sm:$0xf]
  %v69 = vld [vmem:[%s1 + $0xb8] sm:$0xf]
  %v70 = vld [vmem:[%s1 + $0xbc] sm:$0xf]
  %v71 = vld [vmem:[%s1 + $0xc0] sm:$0xf]
  %v72 = vld [vmem:[%s1 + $0xc4] sm:$0xf]
  %v73 = vld [vmem:[%s1 + $0xc8] sm:$0xf]
  %v74 = vld [vmem:[%s1 + $0xcc] sm:$0xf]
  %v75 = vld [vmem:[%s1 + $0xd0] sm:$0xf]
  %v76 = vld [vmem:[%s1 + $0xd4] sm:$0xf]
  %v77 = vld [vmem:[%s1 + $0xd8] sm:$0xf]
  %v78 = vld [vmem:[%s1 + $0xdc] sm:$0xf]
  %v79 = vld [vmem:[%s1 + $0xe0] sm:$0xf]
  %v80 = vld [vmem:[%s1 + $0xe4] sm:$0xf]
  %v81 = vld [vmem:[%s1 + $0xe8] sm:$0xf]
  %v82 = vld [vmem:[%s1 + $0xec] sm:$0xf]
  %v83 = vld [vmem:[%s1 + $0xf0] sm:$0xf]
  %v84 = vld [vmem:[%s1 + $0xf4] sm:$0xf]
  %v85 = vld [vmem:[%s1 + $0xf8] sm:$0xf]
  %v86 = vld [vmem:[%s1 + $0xfc] sm:$0xf]
  %v87 = vld [vmem:[%s2] sm:$0xf]
  %v88 = vld [vmem:[%s2 + $0x4] sm:$0xf]
  %v89 = vld [vmem:[%s2 + $0x8] sm:$0xf]
  %v90 = vld [vmem:[%s2 + $0xc] sm:$0xf]
  %v91 = vld [vmem:[%s2 + $0x10] sm:$0xf]
  %v92 = vld [vmem:[%s2 + $0x14] sm:$0xf]
  %v93 = vld [vmem:[%s2 + $0x18] sm:$0xf]
  %v94 = vld [vmem:[%s2 + $0x1c] sm:$0xf]
  %v95 = vld [vmem:[%s2 + $0x20] sm:$0xf]
  %v96 = vld [vmem:[%s2 + $0x24] sm:$0xf]
  %v97 = vld [vmem:[%s2 + $0x28] sm:$0xf]
  %v98 = vld [vmem:[%s2 + $0x2c] sm:$0xf]
  %v99 = vld [vmem:[%s2 + $0x30] sm:$0xf]
  %v100 = vld [vmem:[%s2 + $0x34] sm:$0xf]
  %v101 = vld [vmem:[%s2 + $0x38] sm:$0xf]
  %v102 = vld [vmem:[%s2 + $0x3c] sm:$0xf]
  %v103 = vld [vmem:[%s3] sm:$0x1]
  %v105 = vperm.slane %v103, 0
  %v171 = vunpack.c.l.b16 %v23
  %v172 = vunpack.c.l.b16 %v24
  %v173 = vunpack.c.l.b16 %v25
  %v174 = vunpack.c.l.b16 %v26
  %v175 = vunpack.c.l.b16 %v27
  %v176 = vunpack.c.l.b16 %v28
  %v177 = vunpack.c.l.b16 %v29
  %v178 = vunpack.c.l.b16 %v30
  %v179 = vunpack.c.l.b16 %v31
  %v180 = vunpack.c.l.b16 %v32
  %v181 = vunpack.c.l.b16 %v33
  %v182 = vunpack.c.l.b16 %v34
  %v183 = vunpack.c.l.b16 %v35
  %v184 = vunpack.c.l.b16 %v36
  %v185 = vunpack.c.l.b16 %v37
  %v186 = vunpack.c.l.b16 %v38
  %v187 = vunpack.c.l.b16 %v39
  %v188 = vunpack.c.l.b16 %v40
  %v189 = vunpack.c.l.b16 %v41
  %v190 = vunpack.c.l.b16 %v42
  %v191 = vunpack.c.l.b16 %v43
  %v192 = vunpack.c.l.b16 %v44
  %v193 = vunpack.c.l.b16 %v45
  %v194 = vunpack.c.l.b16 %v46
  %v195 = vunpack.c.l.b16 %v47
  %v196 = vunpack.c.l.b16 %v48
  %v197 = vunpack.c.l.b16 %v49
  %v198 = vunpack.c.l.b16 %v50
  %v199 = vunpack.c.l.b16 %v51
  %v200 = vunpack.c.l.b16 %v52
  %v201 = vunpack.c.l.b16 %v53
  %v202 = vunpack.c.l.b16 %v54
  %v203 = vunpack.c.l.b16 %v55
  %v204 = vunpack.c.l.b16 %v56
  %v205 = vunpack.c.l.b16 %v57
  %v206 = vunpack.c.l.b16 %v58
  %v207 = vunpack.c.l.b16 %v59
  %v208 = vunpack.c.l.b16 %v60
  %v209 = vunpack.c.l.b16 %v61
  %v210 = vunpack.c.l.b16 %v62
  %v211 = vunpack.c.l.b16 %v63
  %v212 = vunpack.c.l.b16 %v64
  %v213 = vunpack.c.l.b16 %v65
  %v214 = vunpack.c.l.b16 %v66
  %v215 = vunpack.c.l.b16 %v67
  %v216 = vunpack.c.l.b16 %v68
  %v217 = vunpack.c.l.b16 %v69
  %v218 = vunpack.c.l.b16 %v70
  %v219 = vunpack.c.l.b16 %v71
  %v220 = vunpack.c.l.b16 %v72
  %v221 = vunpack.c.l.b16 %v73
  %v222 = vunpack.c.l.b16 %v74
  %v223 = vunpack.c.l.b16 %v75
  %v224 = vunpack.c.l.b16 %v76
  %v225 = vunpack.c.l.b16 %v77
  %v226 = vunpack.c.l.b16 %v78
  %v227 = vunpack.c.l.b16 %v79
  %v228 = vunpack.c.l.b16 %v80
  %v229 = vunpack.c.l.b16 %v81
  %v230 = vunpack.c.l.b16 %v82
  %v231 = vunpack.c.l.b16 %v83
  %v232 = vunpack.c.l.b16 %v84
  %v233 = vunpack.c.l.b16 %v85
  %v234 = vunpack.c.l.b16 %v86
  %v235 = vpack.c.b16 %v172, %v171
  %v236 = vpack.c.b16 %v174, %v173
  %v237 = vpack.c.b16 %v176, %v175
  %v238 = vpack.c.b16 %v178, %v177
  %v239 = vpack.c.b16 %v180, %v179
  %v240 = vpack.c.b16 %v182, %v181
  %v241 = vpack.c.b16 %v184, %v183
  %v242 = vpack.c.b16 %v186, %v185
  %v243 = vpack.c.b16 %v188, %v187
  %v244 = vpack.c.b16 %v190, %v189
  %v245 = vpack.c.b16 %v192, %v191
  %v246 = vpack.c.b16 %v194, %v193
  %v247 = vpack.c.b16 %v196, %v195
  %v248 = vpack.c.b16 %v198, %v197
  %v249 = vpack.c.b16 %v200, %v199
  %v250 = vpack.c.b16 %v202, %v201
  %v251 = vpack.c.b16 %v204, %v203
  %v252 = vpack.c.b16 %v206, %v205
  %v253 = vpack.c.b16 %v208, %v207
  %v254 = vpack.c.b16 %v210, %v209
  %v255 = vpack.c.b16 %v212, %v211
  %v256 = vpack.c.b16 %v214, %v213
  %v257 = vpack.c.b16 %v216, %v215
  %v258 = vpack.c.b16 %v218, %v217
  %v259 = vpack.c.b16 %v220, %v219
  %v260 = vpack.c.b16 %v222, %v221
  %v261 = vpack.c.b16 %v224, %v223
  %v262 = vpack.c.b16 %v226, %v225
  %v263 = vpack.c.b16 %v228, %v227
  %v264 = vpack.c.b16 %v230, %v229
  %v265 = vpack.c.b16 %v232, %v231
  %v266 = vpack.c.b16 %v234, %v233
  %v315 = vunpack.c.l.b16 %v87
  %v316 = vunpack.c.l.b16 %v88
  %v317 = vunpack.c.l.b16 %v89
  %v318 = vunpack.c.l.b16 %v90
  %v319 = vunpack.c.l.b16 %v91
  %v320 = vunpack.c.l.b16 %v92
  %v321 = vunpack.c.l.b16 %v93
  %v322 = vunpack.c.l.b16 %v94
  %v323 = vunpack.c.l.b16 %v95
  %v324 = vunpack.c.l.b16 %v96
  %v325 = vunpack.c.l.b16 %v97
  %v326 = vunpack.c.l.b16 %v98
  %v327 = vunpack.c.l.b16 %v99
  %v328 = vunpack.c.l.b16 %v100
  %v329 = vunpack.c.l.b16 %v101
  %v330 = vunpack.c.l.b16 %v102
  %v331 = vpack.c.b16 %v316, %v315
  %v332 = vpack.c.b16 %v318, %v317
  %v333 = vpack.c.b16 %v320, %v319
  %v334 = vpack.c.b16 %v322, %v321
  %v335 = vpack.c.b16 %v324, %v323
  %v336 = vpack.c.b16 %v326, %v325
  %v337 = vpack.c.b16 %v328, %v327
  %v338 = vpack.c.b16 %v330, %v329
  %347 = vmatpush.bf16.msra.mxu0 %v338
  %348 = vmatpush.bf16.msra.mxu0 %v337
  %349 = vmatpush.bf16.msra.mxu0 %v336
  %350 = vmatpush.bf16.msra.mxu0 %v335
  %351 = vmatpush.bf16.msra.mxu0 %v334
  %352 = vmatpush.bf16.msra.mxu0 %v333
  %353 = vmatpush.bf16.msra.mxu0 %v332
  %354 = vmatpush.bf16.msra.mxu0 %v331
  %355 = vmatmul.bf16.gmra.mxu0 %v235
  %v356 = vpop.f32.mrf.mxu0
  %v357 = vadd.f32 %v105, %v356
  %v358 = vpop.f32.mrf.mxu0
  %v359 = vadd.f32 %v105, %v358
  %360 = vmatmul.bf16.gmra.mxu0 %v236
  %v361 = vpop.f32.mrf.mxu0
  %v362 = vadd.f32 %v105, %v361
  %v363 = vpop.f32.mrf.mxu0
  %v364 = vadd.f32 %v105, %v363
  %365 = vmatmul.bf16.gmra.mxu0 %v237
  %v366 = vpop.f32.mrf.mxu0
  %v367 = vadd.f32 %v105, %v366
  %v368 = vpop.f32.mrf.mxu0
  %v369 = vadd.f32 %v105, %v368
  %370 = vmatmul.bf16.gmra.mxu0 %v238
  %v371 = vpop.f32.mrf.mxu0
  %v372 = vadd.f32 %v105, %v371
  %v373 = vpop.f32.mrf.mxu0
  %v374 = vadd.f32 %v105, %v373
  %375 = vmatmul.bf16.gmra.mxu0 %v239
  %v376 = vpop.f32.mrf.mxu0
  %v377 = vadd.f32 %v105, %v376
  %v378 = vpop.f32.mrf.mxu0
  %v379 = vadd.f32 %v105, %v378
  %380 = vmatmul.bf16.gmra.mxu0 %v240
  %v381 = vpop.f32.mrf.mxu0
  %v382 = vadd.f32 %v105, %v381
  %v383 = vpop.f32.mrf.mxu0
  %v384 = vadd.f32 %v105, %v383
  %385 = vmatmul.bf16.gmra.mxu0 %v241
  %v386 = vpop.f32.mrf.mxu0
  %v387 = vadd.f32 %v105, %v386
  %v388 = vpop.f32.mrf.mxu0
  %v389 = vadd.f32 %v105, %v388
  %390 = vmatmul.bf16.gmra.mxu0 %v242
  %v391 = vpop.f32.mrf.mxu0
  %v392 = vadd.f32 %v105, %v391
  %v393 = vpop.f32.mrf.mxu0
  %v394 = vadd.f32 %v105, %v393
  %395 = vmatmul.bf16.gmra.mxu0 %v243
  %v396 = vpop.f32.mrf.mxu0
  %v397 = vadd.f32 %v105, %v396
  %v398 = vpop.f32.mrf.mxu0
  %v399 = vadd.f32 %v105, %v398
  %400 = vmatmul.bf16.gmra.mxu0 %v244
  %v401 = vpop.f32.mrf.mxu0
  %v402 = vadd.f32 %v105, %v401
  %v403 = vpop.f32.mrf.mxu0
  %v404 = vadd.f32 %v105, %v403
  %405 = vmatmul.bf16.gmra.mxu0 %v245
  %v406 = vpop.f32.mrf.mxu0
  %v407 = vadd.f32 %v105, %v406
  %v408 = vpop.f32.mrf.mxu0
  %v409 = vadd.f32 %v105, %v408
  %410 = vmatmul.bf16.gmra.mxu0 %v246
  %v411 = vpop.f32.mrf.mxu0
  %v412 = vadd.f32 %v105, %v411
  %v413 = vpop.f32.mrf.mxu0
  %v414 = vadd.f32 %v105, %v413
  %415 = vmatmul.bf16.gmra.mxu0 %v247
  %v416 = vpop.f32.mrf.mxu0
  %v417 = vadd.f32 %v105, %v416
  %v418 = vpop.f32.mrf.mxu0
  %v419 = vadd.f32 %v105, %v418
  %420 = vmatmul.bf16.gmra.mxu0 %v248
  %v421 = vpop.f32.mrf.mxu0
  %v422 = vadd.f32 %v105, %v421
  %v423 = vpop.f32.mrf.mxu0
  %v424 = vadd.f32 %v105, %v423
  %425 = vmatmul.bf16.gmra.mxu0 %v249
  %v426 = vpop.f32.mrf.mxu0
  %v427 = vadd.f32 %v105, %v426
  %v428 = vpop.f32.mrf.mxu0
  %v429 = vadd.f32 %v105, %v428
  %430 = vmatmul.bf16.gmra.mxu0 %v250
  %v431 = vpop.f32.mrf.mxu0
  %v432 = vadd.f32 %v105, %v431
  %v433 = vpop.f32.mrf.mxu0
  %v434 = vadd.f32 %v105, %v433
  %435 = vmatmul.bf16.gmra.mxu0 %v251
  %v436 = vpop.f32.mrf.mxu0
  %v437 = vadd.f32 %v105, %v436
  %v438 = vpop.f32.mrf.mxu0
  %v439 = vadd.f32 %v105, %v438
  %440 = vmatmul.bf16.gmra.mxu0 %v252
  %v441 = vpop.f32.mrf.mxu0
  %v442 = vadd.f32 %v105, %v441
  %v443 = vpop.f32.mrf.mxu0
  %v444 = vadd.f32 %v105, %v443
  %445 = vmatmul.bf16.gmra.mxu0 %v253
  %v446 = vpop.f32.mrf.mxu0
  %v447 = vadd.f32 %v105, %v446
  %v448 = vpop.f32.mrf.mxu0
  %v449 = vadd.f32 %v105, %v448
  %450 = vmatmul.bf16.gmra.mxu0 %v254
  %v451 = vpop.f32.mrf.mxu0
  %v452 = vadd.f32 %v105, %v451
  %v453 = vpop.f32.mrf.mxu0
  %v454 = vadd.f32 %v105, %v453
  %455 = vmatmul.bf16.gmra.mxu0 %v255
  %v456 = vpop.f32.mrf.mxu0
  %v457 = vadd.f32 %v105, %v456
  %v458 = vpop.f32.mrf.mxu0
  %v459 = vadd.f32 %v105, %v458
  %460 = vmatmul.bf16.gmra.mxu0 %v256
  %v461 = vpop.f32.mrf.mxu0
  %v462 = vadd.f32 %v105, %v461
  %v463 = vpop.f32.mrf.mxu0
  %v464 = vadd.f32 %v105, %v463
  %465 = vmatmul.bf16.gmra.mxu0 %v257
  %v466 = vpop.f32.mrf.mxu0
  %v467 = vadd.f32 %v105, %v466
  %v468 = vpop.f32.mrf.mxu0
  %v469 = vadd.f32 %v105, %v468
  %470 = vmatmul.bf16.gmra.mxu0 %v258
  %v471 = vpop.f32.mrf.mxu0
  %v472 = vadd.f32 %v105, %v471
  %v473 = vpop.f32.mrf.mxu0
  %v474 = vadd.f32 %v105, %v473
  %475 = vmatmul.bf16.gmra.mxu0 %v259
  %v476 = vpop.f32.mrf.mxu0
  %v477 = vadd.f32 %v105, %v476
  %v478 = vpop.f32.mrf.mxu0
  %v479 = vadd.f32 %v105, %v478
  %480 = vmatmul.bf16.gmra.mxu0 %v260
  %v481 = vpop.f32.mrf.mxu0
  %v482 = vadd.f32 %v105, %v481
  %v483 = vpop.f32.mrf.mxu0
  %v484 = vadd.f32 %v105, %v483
  %485 = vmatmul.bf16.gmra.mxu0 %v261
  %v486 = vpop.f32.mrf.mxu0
  %v487 = vadd.f32 %v105, %v486
  %v488 = vpop.f32.mrf.mxu0
  %v489 = vadd.f32 %v105, %v488
  %490 = vmatmul.bf16.gmra.mxu0 %v262
  %v491 = vpop.f32.mrf.mxu0
  %v492 = vadd.f32 %v105, %v491
  %v493 = vpop.f32.mrf.mxu0
  %v494 = vadd.f32 %v105, %v493
  %495 = vmatmul.bf16.gmra.mxu0 %v263
  %v496 = vpop.f32.mrf.mxu0
  %v497 = vadd.f32 %v105, %v496
  %v498 = vpop.f32.mrf.mxu0
  %v499 = vadd.f32 %v105, %v498
  %500 = vmatmul.bf16.gmra.mxu0 %v264
  %v501 = vpop.f32.mrf.mxu0
  %v502 = vadd.f32 %v105, %v501
  %v503 = vpop.f32.mrf.mxu0
  %v504 = vadd.f32 %v105, %v503
  %505 = vmatmul.bf16.gmra.mxu0 %v265
  %v506 = vpop.f32.mrf.mxu0
  %v507 = vadd.f32 %v105, %v506
  %v508 = vpop.f32.mrf.mxu0
  %v509 = vadd.f32 %v105, %v508
  %510 = vmatmul.bf16.gmra.mxu0 %v266
  %v511 = vpop.f32.mrf.mxu0
  %v512 = vadd.f32 %v105, %v511
  %v513 = vpop.f32.mrf.mxu0
  %v514 = vadd.f32 %v105, %v513
  %515 = vdwg.mxu0
  %v516 = vsub.f32 0.0, %v357
  %v517 = vsub.f32 0.0, %v359
  %v518 = vsub.f32 0.0, %v362
  %v519 = vsub.f32 0.0, %v364
  %v520 = vsub.f32 0.0, %v367
  %v521 = vsub.f32 0.0, %v369
  %v522 = vsub.f32 0.0, %v372
  %v523 = vsub.f32 0.0, %v374
  %v524 = vsub.f32 0.0, %v377
  %v525 = vsub.f32 0.0, %v379
  %v526 = vsub.f32 0.0, %v382
  %v527 = vsub.f32 0.0, %v384
  %v528 = vsub.f32 0.0, %v387
  %v529 = vsub.f32 0.0, %v389
  %v530 = vsub.f32 0.0, %v392
  %v531 = vsub.f32 0.0, %v394
  %v532 = vsub.f32 0.0, %v397
  %v533 = vsub.f32 0.0, %v399
  %v534 = vsub.f32 0.0, %v402
  %v535 = vsub.f32 0.0, %v404
  %v536 = vsub.f32 0.0, %v407
  %v537 = vsub.f32 0.0, %v409
  %v538 = vsub.f32 0.0, %v412
  %v539 = vsub.f32 0.0, %v414
  %v540 = vsub.f32 0.0, %v417
  %v541 = vsub.f32 0.0, %v419
  %v542 = vsub.f32 0.0, %v422
  %v543 = vsub.f32 0.0, %v424
  %v544 = vsub.f32 0.0, %v427
  %v545 = vsub.f32 0.0, %v429
  %v546 = vsub.f32 0.0, %v432
  %v547 = vsub.f32 0.0, %v434
  %v548 = vsub.f32 0.0, %v437
  %v549 = vsub.f32 0.0, %v439
  %v550 = vsub.f32 0.0, %v442
  %v551 = vsub.f32 0.0, %v444
  %v552 = vsub.f32 0.0, %v447
  %v553 = vsub.f32 0.0, %v449
  %v554 = vsub.f32 0.0, %v452
  %v555 = vsub.f32 0.0, %v454
  %v556 = vsub.f32 0.0, %v457
  %v557 = vsub.f32 0.0, %v459
  %v558 = vsub.f32 0.0, %v462
  %v559 = vsub.f32 0.0, %v464
  %v560 = vsub.f32 0.0, %v467
  %v561 = vsub.f32 0.0, %v469
  %v562 = vsub.f32 0.0, %v472
  %v563 = vsub.f32 0.0, %v474
  %v564 = vsub.f32 0.0, %v477
  %v565 = vsub.f32 0.0, %v479
  %v566 = vsub.f32 0.0, %v482
  %v567 = vsub.f32 0.0, %v484
  %v568 = vsub.f32 0.0, %v487
  %v569 = vsub.f32 0.0, %v489
  %v570 = vsub.f32 0.0, %v492
  %v571 = vsub.f32 0.0, %v494
  %v572 = vsub.f32 0.0, %v497
  %v573 = vsub.f32 0.0, %v499
  %v574 = vsub.f32 0.0, %v502
  %v575 = vsub.f32 0.0, %v504
  %v576 = vsub.f32 0.0, %v507
  %v577 = vsub.f32 0.0, %v509
  %v578 = vsub.f32 0.0, %v512
  %v579 = vsub.f32 0.0, %v514
  %v580 = vmul.f32 %v516, 1.442695
  %v581 = vpow.pop %v580
  %v582 = vmul.f32 %v517, 1.442695
  %v583 = vpow.pop %v582
  %v584 = vmul.f32 %v518, 1.442695
  %v585 = vpow.pop %v584
  %v586 = vmul.f32 %v519, 1.442695
  %v587 = vpow.pop %v586
  %v588 = vmul.f32 %v520, 1.442695
  %v589 = vpow.pop %v588
  %v590 = vmul.f32 %v521, 1.442695
  %v591 = vpow.pop %v590
  %v592 = vmul.f32 %v522, 1.442695
  %v593 = vpow.pop %v592
  %v594 = vmul.f32 %v523, 1.442695
  %v595 = vpow.pop %v594
  %v596 = vmul.f32 %v524, 1.442695
  %v597 = vpow.pop %v596
  %v598 = vmul.f32 %v525, 1.442695
  %v599 = vpow.pop %v598
  %v600 = vmul.f32 %v526, 1.442695
  %v601 = vpow.pop %v600
  %v602 = vmul.f32 %v527, 1.442695
  %v603 = vpow.pop %v602
  %v604 = vmul.f32 %v528, 1.442695
  %v605 = vpow.pop %v604
  %v606 = vmul.f32 %v529, 1.442695
  %v607 = vpow.pop %v606
  %v608 = vmul.f32 %v530, 1.442695
  %v609 = vpow.pop %v608
  %v610 = vmul.f32 %v531, 1.442695
  %v611 = vpow.pop %v610
  %v612 = vmul.f32 %v532, 1.442695
  %v613 = vpow.pop %v612
  %v614 = vmul.f32 %v533, 1.442695
  %v615 = vpow.pop %v614
  %v616 = vmul.f32 %v534, 1.442695
  %v617 = vpow.pop %v616
  %v618 = vmul.f32 %v535, 1.442695
  %v619 = vpow.pop %v618
  %v620 = vmul.f32 %v536, 1.442695
  %v621 = vpow.pop %v620
  %v622 = vmul.f32 %v537, 1.442695
  %v623 = vpow.pop %v622
  %v624 = vmul.f32 %v538, 1.442695
  %v625 = vpow.pop %v624
  %v626 = vmul.f32 %v539, 1.442695
  %v627 = vpow.pop %v626
  %v628 = vmul.f32 %v540, 1.442695
  %v629 = vpow.pop %v628
  %v630 = vmul.f32 %v541, 1.442695
  %v631 = vpow.pop %v630
  %v632 = vmul.f32 %v542, 1.442695
  %v633 = vpow.pop %v632
  %v634 = vmul.f32 %v543, 1.442695
  %v635 = vpow.pop %v634
  %v636 = vmul.f32 %v544, 1.442695
  %v637 = vpow.pop %v636
  %v638 = vmul.f32 %v545, 1.442695
  %v639 = vpow.pop %v638
  %v640 = vmul.f32 %v546, 1.442695
  %v641 = vpow.pop %v640
  %v642 = vmul.f32 %v547, 1.442695
  %v643 = vpow.pop %v642
  %v644 = vmul.f32 %v548, 1.442695
  %v645 = vpow.pop %v644
  %v646 = vmul.f32 %v549, 1.442695
  %v647 = vpow.pop %v646
  %v648 = vmul.f32 %v550, 1.442695
  %v649 = vpow.pop %v648
  %v650 = vmul.f32 %v551, 1.442695
  %v651 = vpow.pop %v650
  %v652 = vmul.f32 %v552, 1.442695
  %v653 = vpow.pop %v652
  %v654 = vmul.f32 %v553, 1.442695
  %v655 = vpow.pop %v654
  %v656 = vmul.f32 %v554, 1.442695
  %v657 = vpow.pop %v656
  %v658 = vmul.f32 %v555, 1.442695
  %v659 = vpow.pop %v658
  %v660 = vmul.f32 %v556, 1.442695
  %v661 = vpow.pop %v660
  %v662 = vmul.f32 %v557, 1.442695
  %v663 = vpow.pop %v662
  %v664 = vmul.f32 %v558, 1.442695
  %v665 = vpow.pop %v664
  %v666 = vmul.f32 %v559, 1.442695
  %v667 = vpow.pop %v666
  %v668 = vmul.f32 %v560, 1.442695
  %v669 = vpow.pop %v668
  %v670 = vmul.f32 %v561, 1.442695
  %v671 = vpow.pop %v670
  %v672 = vmul.f32 %v562, 1.442695
  %v673 = vpow.pop %v672
  %v674 = vmul.f32 %v563, 1.442695
  %v675 = vpow.pop %v674
  %v676 = vmul.f32 %v564, 1.442695
  %v677 = vpow.pop %v676
  %v678 = vmul.f32 %v565, 1.442695
  %v679 = vpow.pop %v678
  %v680 = vmul.f32 %v566, 1.442695
  %v681 = vpow.pop %v680
  %v682 = vmul.f32 %v567, 1.442695
  %v683 = vpow.pop %v682
  %v684 = vmul.f32 %v568, 1.442695
  %v685 = vpow.pop %v684
  %v686 = vmul.f32 %v569, 1.442695
  %v687 = vpow.pop %v686
  %v688 = vmul.f32 %v570, 1.442695
  %v689 = vpow.pop %v688
  %v690 = vmul.f32 %v571, 1.442695
  %v691 = vpow.pop %v690
  %v692 = vmul.f32 %v572, 1.442695
  %v693 = vpow.pop %v692
  %v694 = vmul.f32 %v573, 1.442695
  %v695 = vpow.pop %v694
  %v696 = vmul.f32 %v574, 1.442695
  %v697 = vpow.pop %v696
  %v698 = vmul.f32 %v575, 1.442695
  %v699 = vpow.pop %v698
  %v700 = vmul.f32 %v576, 1.442695
  %v701 = vpow.pop %v700
  %v702 = vmul.f32 %v577, 1.442695
  %v703 = vpow.pop %v702
  %v704 = vmul.f32 %v578, 1.442695
  %v705 = vpow.pop %v704
  %v706 = vmul.f32 %v579, 1.442695
  %v707 = vpow.pop %v706
  %v708 = vadd.f32 %v581, 1.0
  %v709 = vadd.f32 %v583, 1.0
  %v710 = vadd.f32 %v585, 1.0
  %v711 = vadd.f32 %v587, 1.0
  %v712 = vadd.f32 %v589, 1.0
  %v713 = vadd.f32 %v591, 1.0
  %v714 = vadd.f32 %v593, 1.0
  %v715 = vadd.f32 %v595, 1.0
  %v716 = vadd.f32 %v597, 1.0
  %v717 = vadd.f32 %v599, 1.0
  %v718 = vadd.f32 %v601, 1.0
  %v719 = vadd.f32 %v603, 1.0
  %v720 = vadd.f32 %v605, 1.0
  %v721 = vadd.f32 %v607, 1.0
  %v722 = vadd.f32 %v609, 1.0
  %v723 = vadd.f32 %v611, 1.0
  %v724 = vadd.f32 %v613, 1.0
  %v725 = vadd.f32 %v615, 1.0
  %v726 = vadd.f32 %v617, 1.0
  %v727 = vadd.f32 %v619, 1.0
  %v728 = vadd.f32 %v621, 1.0
  %v729 = vadd.f32 %v623, 1.0
  %v730 = vadd.f32 %v625, 1.0
  %v731 = vadd.f32 %v627, 1.0
  %v732 = vadd.f32 %v629, 1.0
  %v733 = vadd.f32 %v631, 1.0
  %v734 = vadd.f32 %v633, 1.0
  %v735 = vadd.f32 %v635, 1.0
  %v736 = vadd.f32 %v637, 1.0
  %v737 = vadd.f32 %v639, 1.0
  %v738 = vadd.f32 %v641, 1.0
  %v739 = vadd.f32 %v643, 1.0
  %v740 = vadd.f32 %v645, 1.0
  %v741 = vadd.f32 %v647, 1.0
  %v742 = vadd.f32 %v649, 1.0
  %v743 = vadd.f32 %v651, 1.0
  %v744 = vadd.f32 %v653, 1.0
  %v745 = vadd.f32 %v655, 1.0
  %v746 = vadd.f32 %v657, 1.0
  %v747 = vadd.f32 %v659, 1.0
  %v748 = vadd.f32 %v661, 1.0
  %v749 = vadd.f32 %v663, 1.0
  %v750 = vadd.f32 %v665, 1.0
  %v751 = vadd.f32 %v667, 1.0
  %v752 = vadd.f32 %v669, 1.0
  %v753 = vadd.f32 %v671, 1.0
  %v754 = vadd.f32 %v673, 1.0
  %v755 = vadd.f32 %v675, 1.0
  %v756 = vadd.f32 %v677, 1.0
  %v757 = vadd.f32 %v679, 1.0
  %v758 = vadd.f32 %v681, 1.0
  %v759 = vadd.f32 %v683, 1.0
  %v760 = vadd.f32 %v685, 1.0
  %v761 = vadd.f32 %v687, 1.0
  %v762 = vadd.f32 %v689, 1.0
  %v763 = vadd.f32 %v691, 1.0
  %v764 = vadd.f32 %v693, 1.0
  %v765 = vadd.f32 %v695, 1.0
  %v766 = vadd.f32 %v697, 1.0
  %v767 = vadd.f32 %v699, 1.0
  %v768 = vadd.f32 %v701, 1.0
  %v769 = vadd.f32 %v703, 1.0
  %v770 = vadd.f32 %v705, 1.0
  %v771 = vadd.f32 %v707, 1.0
  %v772 = vrcp.pop %v708
  %v773 = vrcp.pop %v709
  %v774 = vrcp.pop %v710
  %v775 = vrcp.pop %v711
  %v776 = vrcp.pop %v712
  %v777 = vrcp.pop %v713
  %v778 = vrcp.pop %v714
  %v779 = vrcp.pop %v715
  %v780 = vrcp.pop %v716
  %v781 = vrcp.pop %v717
  %v782 = vrcp.pop %v718
  %v783 = vrcp.pop %v719
  %v784 = vrcp.pop %v720
  %v785 = vrcp.pop %v721
  %v786 = vrcp.pop %v722
  %v787 = vrcp.pop %v723
  %v788 = vrcp.pop %v724
  %v789 = vrcp.pop %v725
  %v790 = vrcp.pop %v726
  %v791 = vrcp.pop %v727
  %v792 = vrcp.pop %v728
  %v793 = vrcp.pop %v729
  %v794 = vrcp.pop %v730
  %v795 = vrcp.pop %v731
  %v796 = vrcp.pop %v732
  %v797 = vrcp.pop %v733
  %v798 = vrcp.pop %v734
  %v799 = vrcp.pop %v735
  %v800 = vrcp.pop %v736
  %v801 = vrcp.pop %v737
  %v802 = vrcp.pop %v738
  %v803 = vrcp.pop %v739
  %v804 = vrcp.pop %v740
  %v805 = vrcp.pop %v741
  %v806 = vrcp.pop %v742
  %v807 = vrcp.pop %v743
  %v808 = vrcp.pop %v744
  %v809 = vrcp.pop %v745
  %v810 = vrcp.pop %v746
  %v811 = vrcp.pop %v747
  %v812 = vrcp.pop %v748
  %v813 = vrcp.pop %v749
  %v814 = vrcp.pop %v750
  %v815 = vrcp.pop %v751
  %v816 = vrcp.pop %v752
  %v817 = vrcp.pop %v753
  %v818 = vrcp.pop %v754
  %v819 = vrcp.pop %v755
  %v820 = vrcp.pop %v756
  %v821 = vrcp.pop %v757
  %v822 = vrcp.pop %v758
  %v823 = vrcp.pop %v759
  %v824 = vrcp.pop %v760
  %v825 = vrcp.pop %v761
  %v826 = vrcp.pop %v762
  %v827 = vrcp.pop %v763
  %v828 = vrcp.pop %v764
  %v829 = vrcp.pop %v765
  %v830 = vrcp.pop %v766
  %v831 = vrcp.pop %v767
  %v832 = vrcp.pop %v768
  %v833 = vrcp.pop %v769
  %v834 = vrcp.pop %v770
  %v835 = vrcp.pop %v771
  %v836 = vmul.f32 %v357, %v772
  %v837 = vmul.f32 %v359, %v773
  %v838 = vmul.f32 %v362, %v774
  %v839 = vmul.f32 %v364, %v775
  %v840 = vmul.f32 %v367, %v776
  %v841 = vmul.f32 %v369, %v777
  %v842 = vmul.f32 %v372, %v778
  %v843 = vmul.f32 %v374, %v779
  %v844 = vmul.f32 %v377, %v780
  %v845 = vmul.f32 %v379, %v781
  %v846 = vmul.f32 %v382, %v782
  %v847 = vmul.f32 %v384, %v783
  %v848 = vmul.f32 %v387, %v784
  %v849 = vmul.f32 %v389, %v785
  %v850 = vmul.f32 %v392, %v786
  %v851 = vmul.f32 %v394, %v787
  %v852 = vmul.f32 %v397, %v788
  %v853 = vmul.f32 %v399, %v789
  %v854 = vmul.f32 %v402, %v790
  %v855 = vmul.f32 %v404, %v791
  %v856 = vmul.f32 %v407, %v792
  %v857 = vmul.f32 %v409, %v793
  %v858 = vmul.f32 %v412, %v794
  %v859 = vmul.f32 %v414, %v795
  %v860 = vmul.f32 %v417, %v796
  %v861 = vmul.f32 %v419, %v797
  %v862 = vmul.f32 %v422, %v798
  %v863 = vmul.f32 %v424, %v799
  %v864 = vmul.f32 %v427, %v800
  %v865 = vmul.f32 %v429, %v801
  %v866 = vmul.f32 %v432, %v802
  %v867 = vmul.f32 %v434, %v803
  %v868 = vmul.f32 %v437, %v804
  %v869 = vmul.f32 %v439, %v805
  %v870 = vmul.f32 %v442, %v806
  %v871 = vmul.f32 %v444, %v807
  %v872 = vmul.f32 %v447, %v808
  %v873 = vmul.f32 %v449, %v809
  %v874 = vmul.f32 %v452, %v810
  %v875 = vmul.f32 %v454, %v811
  %v876 = vmul.f32 %v457, %v812
  %v877 = vmul.f32 %v459, %v813
  %v878 = vmul.f32 %v462, %v814
  %v879 = vmul.f32 %v464, %v815
  %v880 = vmul.f32 %v467, %v816
  %v881 = vmul.f32 %v469, %v817
  %v882 = vmul.f32 %v472, %v818
  %v883 = vmul.f32 %v474, %v819
  %v884 = vmul.f32 %v477, %v820
  %v885 = vmul.f32 %v479, %v821
  %v886 = vmul.f32 %v482, %v822
  %v887 = vmul.f32 %v484, %v823
  %v888 = vmul.f32 %v487, %v824
  %v889 = vmul.f32 %v489, %v825
  %v890 = vmul.f32 %v492, %v826
  %v891 = vmul.f32 %v494, %v827
  %v892 = vmul.f32 %v497, %v828
  %v893 = vmul.f32 %v499, %v829
  %v894 = vmul.f32 %v502, %v830
  %v895 = vmul.f32 %v504, %v831
  %v896 = vmul.f32 %v507, %v832
  %v897 = vmul.f32 %v509, %v833
  %v898 = vmul.f32 %v512, %v834
  %v899 = vmul.f32 %v514, %v835
  %v900 = vld [vmem:[%s0] sm:$0xf]
  %v901 = vld [vmem:[%s0 + $0x4] sm:$0xf]
  %v902 = vld [vmem:[%s0 + $0x8] sm:$0xf]
  %v903 = vld [vmem:[%s0 + $0xc] sm:$0xf]
  %v904 = vld [vmem:[%s0 + $0x10] sm:$0xf]
  %v905 = vld [vmem:[%s0 + $0x14] sm:$0xf]
  %v906 = vld [vmem:[%s0 + $0x18] sm:$0xf]
  %v907 = vld [vmem:[%s0 + $0x1c] sm:$0xf]
  %v908 = vld [vmem:[%s0 + $0x20] sm:$0xf]
  %v909 = vld [vmem:[%s0 + $0x24] sm:$0xf]
  %v910 = vld [vmem:[%s0 + $0x28] sm:$0xf]
  %v911 = vld [vmem:[%s0 + $0x2c] sm:$0xf]
  %v912 = vld [vmem:[%s0 + $0x30] sm:$0xf]
  %v913 = vld [vmem:[%s0 + $0x34] sm:$0xf]
  %v914 = vld [vmem:[%s0 + $0x38] sm:$0xf]
  %v915 = vld [vmem:[%s0 + $0x3c] sm:$0xf]
  %v916 = vld [vmem:[%s0 + $0x40] sm:$0xf]
  %v917 = vld [vmem:[%s0 + $0x44] sm:$0xf]
  %v918 = vld [vmem:[%s0 + $0x48] sm:$0xf]
  %v919 = vld [vmem:[%s0 + $0x4c] sm:$0xf]
  %v920 = vld [vmem:[%s0 + $0x50] sm:$0xf]
  %v921 = vld [vmem:[%s0 + $0x54] sm:$0xf]
  %v922 = vld [vmem:[%s0 + $0x58] sm:$0xf]
  %v923 = vld [vmem:[%s0 + $0x5c] sm:$0xf]
  %v924 = vld [vmem:[%s0 + $0x60] sm:$0xf]
  %v925 = vld [vmem:[%s0 + $0x64] sm:$0xf]
  %v926 = vld [vmem:[%s0 + $0x68] sm:$0xf]
  %v927 = vld [vmem:[%s0 + $0x6c] sm:$0xf]
  %v928 = vld [vmem:[%s0 + $0x70] sm:$0xf]
  %v929 = vld [vmem:[%s0 + $0x74] sm:$0xf]
  %v930 = vld [vmem:[%s0 + $0x78] sm:$0xf]
  %v931 = vld [vmem:[%s0 + $0x7c] sm:$0xf]
  %v932 = vld [vmem:[%s0 + $0x80] sm:$0xf]
  %v933 = vld [vmem:[%s0 + $0x84] sm:$0xf]
  %v934 = vld [vmem:[%s0 + $0x88] sm:$0xf]
  %v935 = vld [vmem:[%s0 + $0x8c] sm:$0xf]
  %v936 = vld [vmem:[%s0 + $0x90] sm:$0xf]
  %v937 = vld [vmem:[%s0 + $0x94] sm:$0xf]
  %v938 = vld [vmem:[%s0 + $0x98] sm:$0xf]
  %v939 = vld [vmem:[%s0 + $0x9c] sm:$0xf]
  %v940 = vld [vmem:[%s0 + $0xa0] sm:$0xf]
  %v941 = vld [vmem:[%s0 + $0xa4] sm:$0xf]
  %v942 = vld [vmem:[%s0 + $0xa8] sm:$0xf]
  %v943 = vld [vmem:[%s0 + $0xac] sm:$0xf]
  %v944 = vld [vmem:[%s0 + $0xb0] sm:$0xf]
  %v945 = vld [vmem:[%s0 + $0xb4] sm:$0xf]
  %v946 = vld [vmem:[%s0 + $0xb8] sm:$0xf]
  %v947 = vld [vmem:[%s0 + $0xbc] sm:$0xf]
  %v948 = vld [vmem:[%s0 + $0xc0] sm:$0xf]
  %v949 = vld [vmem:[%s0 + $0xc4] sm:$0xf]
  %v950 = vld [vmem:[%s0 + $0xc8] sm:$0xf]
  %v951 = vld [vmem:[%s0 + $0xcc] sm:$0xf]
  %v952 = vld [vmem:[%s0 + $0xd0] sm:$0xf]
  %v953 = vld [vmem:[%s0 + $0xd4] sm:$0xf]
  %v954 = vld [vmem:[%s0 + $0xd8] sm:$0xf]
  %v955 = vld [vmem:[%s0 + $0xdc] sm:$0xf]
  %v956 = vld [vmem:[%s0 + $0xe0] sm:$0xf]
  %v957 = vld [vmem:[%s0 + $0xe4] sm:$0xf]
  %v958 = vld [vmem:[%s0 + $0xe8] sm:$0xf]
  %v959 = vld [vmem:[%s0 + $0xec] sm:$0xf]
  %v960 = vld [vmem:[%s0 + $0xf0] sm:$0xf]
  %v961 = vld [vmem:[%s0 + $0xf4] sm:$0xf]
  %v962 = vld [vmem:[%s0 + $0xf8] sm:$0xf]
  %v963 = vld [vmem:[%s0 + $0xfc] sm:$0xf]
  %v964 = vunpack.c.l.bf16 %v900
  %v965 = vunpack.c.l.bf16 %v901
  %v966 = vunpack.c.l.bf16 %v902
  %v967 = vunpack.c.l.bf16 %v903
  %v968 = vunpack.c.l.bf16 %v904
  %v969 = vunpack.c.l.bf16 %v905
  %v970 = vunpack.c.l.bf16 %v906
  %v971 = vunpack.c.l.bf16 %v907
  %v972 = vunpack.c.l.bf16 %v908
  %v973 = vunpack.c.l.bf16 %v909
  %v974 = vunpack.c.l.bf16 %v910
  %v975 = vunpack.c.l.bf16 %v911
  %v976 = vunpack.c.l.bf16 %v912
  %v977 = vunpack.c.l.bf16 %v913
  %v978 = vunpack.c.l.bf16 %v914
  %v979 = vunpack.c.l.bf16 %v915
  %v980 = vunpack.c.l.bf16 %v916
  %v981 = vunpack.c.l.bf16 %v917
  %v982 = vunpack.c.l.bf16 %v918
  %v983 = vunpack.c.l.bf16 %v919
  %v984 = vunpack.c.l.bf16 %v920
  %v985 = vunpack.c.l.bf16 %v921
  %v986 = vunpack.c.l.bf16 %v922
  %v987 = vunpack.c.l.bf16 %v923
  %v988 = vunpack.c.l.bf16 %v924
  %v989 = vunpack.c.l.bf16 %v925
  %v990 = vunpack.c.l.bf16 %v926
  %v991 = vunpack.c.l.bf16 %v927
  %v992 = vunpack.c.l.bf16 %v928
  %v993 = vunpack.c.l.bf16 %v929
  %v994 = vunpack.c.l.bf16 %v930
  %v995 = vunpack.c.l.bf16 %v931
  %v996 = vunpack.c.l.bf16 %v932
  %v997 = vunpack.c.l.bf16 %v933
  %v998 = vunpack.c.l.bf16 %v934
  %v999 = vunpack.c.l.bf16 %v935
  %v1000 = vunpack.c.l.bf16 %v936
  %v1001 = vunpack.c.l.bf16 %v937
  %v1002 = vunpack.c.l.bf16 %v938
  %v1003 = vunpack.c.l.bf16 %v939
  %v1004 = vunpack.c.l.bf16 %v940
  %v1005 = vunpack.c.l.bf16 %v941
  %v1006 = vunpack.c.l.bf16 %v942
  %v1007 = vunpack.c.l.bf16 %v943
  %v1008 = vunpack.c.l.bf16 %v944
  %v1009 = vunpack.c.l.bf16 %v945
  %v1010 = vunpack.c.l.bf16 %v946
  %v1011 = vunpack.c.l.bf16 %v947
  %v1012 = vunpack.c.l.bf16 %v948
  %v1013 = vunpack.c.l.bf16 %v949
  %v1014 = vunpack.c.l.bf16 %v950
  %v1015 = vunpack.c.l.bf16 %v951
  %v1016 = vunpack.c.l.bf16 %v952
  %v1017 = vunpack.c.l.bf16 %v953
  %v1018 = vunpack.c.l.bf16 %v954
  %v1019 = vunpack.c.l.bf16 %v955
  %v1020 = vunpack.c.l.bf16 %v956
  %v1021 = vunpack.c.l.bf16 %v957
  %v1022 = vunpack.c.l.bf16 %v958
  %v1023 = vunpack.c.l.bf16 %v959
  %v1024 = vunpack.c.l.bf16 %v960
  %v1025 = vunpack.c.l.bf16 %v961
  %v1026 = vunpack.c.l.bf16 %v962
  %v1027 = vunpack.c.l.bf16 %v963
  %v1028 = vadd.f32 %v964, %v836
  %v1029 = vadd.f32 %v965, %v837
  %v1030 = vadd.f32 %v966, %v838
  %v1031 = vadd.f32 %v967, %v839
  %v1032 = vadd.f32 %v968, %v840
  %v1033 = vadd.f32 %v969, %v841
  %v1034 = vadd.f32 %v970, %v842
  %v1035 = vadd.f32 %v971, %v843
  %v1036 = vadd.f32 %v972, %v844
  %v1037 = vadd.f32 %v973, %v845
  %v1038 = vadd.f32 %v974, %v846
  %v1039 = vadd.f32 %v975, %v847
  %v1040 = vadd.f32 %v976, %v848
  %v1041 = vadd.f32 %v977, %v849
  %v1042 = vadd.f32 %v978, %v850
  %v1043 = vadd.f32 %v979, %v851
  %v1044 = vadd.f32 %v980, %v852
  %v1045 = vadd.f32 %v981, %v853
  %v1046 = vadd.f32 %v982, %v854
  %v1047 = vadd.f32 %v983, %v855
  %v1048 = vadd.f32 %v984, %v856
  %v1049 = vadd.f32 %v985, %v857
  %v1050 = vadd.f32 %v986, %v858
  %v1051 = vadd.f32 %v987, %v859
  %v1052 = vadd.f32 %v988, %v860
  %v1053 = vadd.f32 %v989, %v861
  %v1054 = vadd.f32 %v990, %v862
  %v1055 = vadd.f32 %v991, %v863
  %v1056 = vadd.f32 %v992, %v864
  %v1057 = vadd.f32 %v993, %v865
  %v1058 = vadd.f32 %v994, %v866
  %v1059 = vadd.f32 %v995, %v867
  %v1060 = vadd.f32 %v996, %v868
  %v1061 = vadd.f32 %v997, %v869
  %v1062 = vadd.f32 %v998, %v870
  %v1063 = vadd.f32 %v999, %v871
  %v1064 = vadd.f32 %v1000, %v872
  %v1065 = vadd.f32 %v1001, %v873
  %v1066 = vadd.f32 %v1002, %v874
  %v1067 = vadd.f32 %v1003, %v875
  %v1068 = vadd.f32 %v1004, %v876
  %v1069 = vadd.f32 %v1005, %v877
  %v1070 = vadd.f32 %v1006, %v878
  %v1071 = vadd.f32 %v1007, %v879
  %v1072 = vadd.f32 %v1008, %v880
  %v1073 = vadd.f32 %v1009, %v881
  %v1074 = vadd.f32 %v1010, %v882
  %v1075 = vadd.f32 %v1011, %v883
  %v1076 = vadd.f32 %v1012, %v884
  %v1077 = vadd.f32 %v1013, %v885
  %v1078 = vadd.f32 %v1014, %v886
  %v1079 = vadd.f32 %v1015, %v887
  %v1080 = vadd.f32 %v1016, %v888
  %v1081 = vadd.f32 %v1017, %v889
  %v1082 = vadd.f32 %v1018, %v890
  %v1083 = vadd.f32 %v1019, %v891
  %v1084 = vadd.f32 %v1020, %v892
  %v1085 = vadd.f32 %v1021, %v893
  %v1086 = vadd.f32 %v1022, %v894
  %v1087 = vadd.f32 %v1023, %v895
  %v1088 = vadd.f32 %v1024, %v896
  %v1089 = vadd.f32 %v1025, %v897
  %v1090 = vadd.f32 %v1026, %v898
  %v1091 = vadd.f32 %v1027, %v899
  %v1092 = vld [vmem:[%s4] sm:$0xf]
  %v1093 = vld [vmem:[%s4 + $0x4] sm:$0xf]
  %v1094 = vld [vmem:[%s4 + $0x8] sm:$0xf]
  %v1095 = vld [vmem:[%s4 + $0xc] sm:$0xf]
  %v1096 = vld [vmem:[%s4 + $0x10] sm:$0xf]
  %v1097 = vld [vmem:[%s4 + $0x14] sm:$0xf]
  %v1098 = vld [vmem:[%s4 + $0x18] sm:$0xf]
  %v1099 = vld [vmem:[%s4 + $0x1c] sm:$0xf]
  %v1100 = vld [vmem:[%s4 + $0x20] sm:$0xf]
  %v1101 = vld [vmem:[%s4 + $0x24] sm:$0xf]
  %v1102 = vld [vmem:[%s4 + $0x28] sm:$0xf]
  %v1103 = vld [vmem:[%s4 + $0x2c] sm:$0xf]
  %v1104 = vld [vmem:[%s4 + $0x30] sm:$0xf]
  %v1105 = vld [vmem:[%s4 + $0x34] sm:$0xf]
  %v1106 = vld [vmem:[%s4 + $0x38] sm:$0xf]
  %v1107 = vld [vmem:[%s4 + $0x3c] sm:$0xf]
  %v1108 = vpack.c.bf16 %v1029, %v1028
  %v1109 = vpack.c.bf16 %v1031, %v1030
  %v1110 = vpack.c.bf16 %v1033, %v1032
  %v1111 = vpack.c.bf16 %v1035, %v1034
  %v1112 = vpack.c.bf16 %v1037, %v1036
  %v1113 = vpack.c.bf16 %v1039, %v1038
  %v1114 = vpack.c.bf16 %v1041, %v1040
  %v1115 = vpack.c.bf16 %v1043, %v1042
  %v1116 = vpack.c.bf16 %v1045, %v1044
  %v1117 = vpack.c.bf16 %v1047, %v1046
  %v1118 = vpack.c.bf16 %v1049, %v1048
  %v1119 = vpack.c.bf16 %v1051, %v1050
  %v1120 = vpack.c.bf16 %v1053, %v1052
  %v1121 = vpack.c.bf16 %v1055, %v1054
  %v1122 = vpack.c.bf16 %v1057, %v1056
  %v1123 = vpack.c.bf16 %v1059, %v1058
  %v1124 = vpack.c.bf16 %v1061, %v1060
  %v1125 = vpack.c.bf16 %v1063, %v1062
  %v1126 = vpack.c.bf16 %v1065, %v1064
  %v1127 = vpack.c.bf16 %v1067, %v1066
  %v1128 = vpack.c.bf16 %v1069, %v1068
  %v1129 = vpack.c.bf16 %v1071, %v1070
  %v1130 = vpack.c.bf16 %v1073, %v1072
  %v1131 = vpack.c.bf16 %v1075, %v1074
  %v1132 = vpack.c.bf16 %v1077, %v1076
  %v1133 = vpack.c.bf16 %v1079, %v1078
  %v1134 = vpack.c.bf16 %v1081, %v1080
  %v1135 = vpack.c.bf16 %v1083, %v1082
  %v1136 = vpack.c.bf16 %v1085, %v1084
  %v1137 = vpack.c.bf16 %v1087, %v1086
  %v1138 = vpack.c.bf16 %v1089, %v1088
  %v1139 = vpack.c.bf16 %v1091, %v1090
  %v1140 = vld [vmem:[%s5] sm:$0x1]
  %v1142 = vperm.slane %v1140, 0
  %v1160 = vunpack.c.l.b16 %v1092
  %v1161 = vunpack.c.l.b16 %v1093
  %v1162 = vunpack.c.l.b16 %v1094
  %v1163 = vunpack.c.l.b16 %v1095
  %v1164 = vunpack.c.l.b16 %v1096
  %v1165 = vunpack.c.l.b16 %v1097
  %v1166 = vunpack.c.l.b16 %v1098
  %v1167 = vunpack.c.l.b16 %v1099
  %v1168 = vunpack.c.l.b16 %v1100
  %v1169 = vunpack.c.l.b16 %v1101
  %v1170 = vunpack.c.l.b16 %v1102
  %v1171 = vunpack.c.l.b16 %v1103
  %v1172 = vunpack.c.l.b16 %v1104
  %v1173 = vunpack.c.l.b16 %v1105
  %v1174 = vunpack.c.l.b16 %v1106
  %v1175 = vunpack.c.l.b16 %v1107
  %v1176 = vpack.c.b16 %v1161, %v1160
  %v1177 = vpack.c.b16 %v1163, %v1162
  %v1178 = vpack.c.b16 %v1165, %v1164
  %v1179 = vpack.c.b16 %v1167, %v1166
  %v1180 = vpack.c.b16 %v1169, %v1168
  %v1181 = vpack.c.b16 %v1171, %v1170
  %v1182 = vpack.c.b16 %v1173, %v1172
  %v1183 = vpack.c.b16 %v1175, %v1174
  %1192 = vmatpush.bf16.msra.mxu0 %v1183
  %1193 = vmatpush.bf16.msra.mxu0 %v1182
  %1194 = vmatpush.bf16.msra.mxu0 %v1181
  %1195 = vmatpush.bf16.msra.mxu0 %v1180
  %1196 = vmatpush.bf16.msra.mxu0 %v1179
  %1197 = vmatpush.bf16.msra.mxu0 %v1178
  %1198 = vmatpush.bf16.msra.mxu0 %v1177
  %1199 = vmatpush.bf16.msra.mxu0 %v1176
  %1200 = vmatmul.bf16.gmra.mxu0 %v1108
  %v1201 = vpop.f32.mrf.mxu0
  %v1202 = vadd.f32 %v1142, %v1201
  %v1203 = vpop.f32.mrf.mxu0
  %v1204 = vadd.f32 %v1142, %v1203
  %1205 = vmatmul.bf16.gmra.mxu0 %v1109
  %v1206 = vpop.f32.mrf.mxu0
  %v1207 = vadd.f32 %v1142, %v1206
  %v1208 = vpop.f32.mrf.mxu0
  %v1209 = vadd.f32 %v1142, %v1208
  %1210 = vmatmul.bf16.gmra.mxu0 %v1110
  %v1211 = vpop.f32.mrf.mxu0
  %v1212 = vadd.f32 %v1142, %v1211
  %v1213 = vpop.f32.mrf.mxu0
  %v1214 = vadd.f32 %v1142, %v1213
  %1215 = vmatmul.bf16.gmra.mxu0 %v1111
  %v1216 = vpop.f32.mrf.mxu0
  %v1217 = vadd.f32 %v1142, %v1216
  %v1218 = vpop.f32.mrf.mxu0
  %v1219 = vadd.f32 %v1142, %v1218
  %1220 = vmatmul.bf16.gmra.mxu0 %v1112
  %v1221 = vpop.f32.mrf.mxu0
  %v1222 = vadd.f32 %v1142, %v1221
  %v1223 = vpop.f32.mrf.mxu0
  %v1224 = vadd.f32 %v1142, %v1223
  %1225 = vmatmul.bf16.gmra.mxu0 %v1113
  %v1226 = vpop.f32.mrf.mxu0
  %v1227 = vadd.f32 %v1142, %v1226
  %v1228 = vpop.f32.mrf.mxu0
  %v1229 = vadd.f32 %v1142, %v1228
  %1230 = vmatmul.bf16.gmra.mxu0 %v1114
  %v1231 = vpop.f32.mrf.mxu0
  %v1232 = vadd.f32 %v1142, %v1231
  %v1233 = vpop.f32.mrf.mxu0
  %v1234 = vadd.f32 %v1142, %v1233
  %1235 = vmatmul.bf16.gmra.mxu0 %v1115
  %v1236 = vpop.f32.mrf.mxu0
  %v1237 = vadd.f32 %v1142, %v1236
  %v1238 = vpop.f32.mrf.mxu0
  %v1239 = vadd.f32 %v1142, %v1238
  %1240 = vmatmul.bf16.gmra.mxu0 %v1116
  %v1241 = vpop.f32.mrf.mxu0
  %v1242 = vadd.f32 %v1142, %v1241
  %v1243 = vpop.f32.mrf.mxu0
  %v1244 = vadd.f32 %v1142, %v1243
  %1245 = vmatmul.bf16.gmra.mxu0 %v1117
  %v1246 = vpop.f32.mrf.mxu0
  %v1247 = vadd.f32 %v1142, %v1246
  %v1248 = vpop.f32.mrf.mxu0
  %v1249 = vadd.f32 %v1142, %v1248
  %1250 = vmatmul.bf16.gmra.mxu0 %v1118
  %v1251 = vpop.f32.mrf.mxu0
  %v1252 = vadd.f32 %v1142, %v1251
  %v1253 = vpop.f32.mrf.mxu0
  %v1254 = vadd.f32 %v1142, %v1253
  %1255 = vmatmul.bf16.gmra.mxu0 %v1119
  %v1256 = vpop.f32.mrf.mxu0
  %v1257 = vadd.f32 %v1142, %v1256
  %v1258 = vpop.f32.mrf.mxu0
  %v1259 = vadd.f32 %v1142, %v1258
  %1260 = vmatmul.bf16.gmra.mxu0 %v1120
  %v1261 = vpop.f32.mrf.mxu0
  %v1262 = vadd.f32 %v1142, %v1261
  %v1263 = vpop.f32.mrf.mxu0
  %v1264 = vadd.f32 %v1142, %v1263
  %1265 = vmatmul.bf16.gmra.mxu0 %v1121
  %v1266 = vpop.f32.mrf.mxu0
  %v1267 = vadd.f32 %v1142, %v1266
  %v1268 = vpop.f32.mrf.mxu0
  %v1269 = vadd.f32 %v1142, %v1268
  %1270 = vmatmul.bf16.gmra.mxu0 %v1122
  %v1271 = vpop.f32.mrf.mxu0
  %v1272 = vadd.f32 %v1142, %v1271
  %v1273 = vpop.f32.mrf.mxu0
  %v1274 = vadd.f32 %v1142, %v1273
  %1275 = vmatmul.bf16.gmra.mxu0 %v1123
  %v1276 = vpop.f32.mrf.mxu0
  %v1277 = vadd.f32 %v1142, %v1276
  %v1278 = vpop.f32.mrf.mxu0
  %v1279 = vadd.f32 %v1142, %v1278
  %1280 = vmatmul.bf16.gmra.mxu0 %v1124
  %v1281 = vpop.f32.mrf.mxu0
  %v1282 = vadd.f32 %v1142, %v1281
  %v1283 = vpop.f32.mrf.mxu0
  %v1284 = vadd.f32 %v1142, %v1283
  %1285 = vmatmul.bf16.gmra.mxu0 %v1125
  %v1286 = vpop.f32.mrf.mxu0
  %v1287 = vadd.f32 %v1142, %v1286
  %v1288 = vpop.f32.mrf.mxu0
  %v1289 = vadd.f32 %v1142, %v1288
  %1290 = vmatmul.bf16.gmra.mxu0 %v1126
  %v1291 = vpop.f32.mrf.mxu0
  %v1292 = vadd.f32 %v1142, %v1291
  %v1293 = vpop.f32.mrf.mxu0
  %v1294 = vadd.f32 %v1142, %v1293
  %1295 = vmatmul.bf16.gmra.mxu0 %v1127
  %v1296 = vpop.f32.mrf.mxu0
  %v1297 = vadd.f32 %v1142, %v1296
  %v1298 = vpop.f32.mrf.mxu0
  %v1299 = vadd.f32 %v1142, %v1298
  %1300 = vmatmul.bf16.gmra.mxu0 %v1128
  %v1301 = vpop.f32.mrf.mxu0
  %v1302 = vadd.f32 %v1142, %v1301
  %v1303 = vpop.f32.mrf.mxu0
  %v1304 = vadd.f32 %v1142, %v1303
  %1305 = vmatmul.bf16.gmra.mxu0 %v1129
  %v1306 = vpop.f32.mrf.mxu0
  %v1307 = vadd.f32 %v1142, %v1306
  %v1308 = vpop.f32.mrf.mxu0
  %v1309 = vadd.f32 %v1142, %v1308
  %1310 = vmatmul.bf16.gmra.mxu0 %v1130
  %v1311 = vpop.f32.mrf.mxu0
  %v1312 = vadd.f32 %v1142, %v1311
  %v1313 = vpop.f32.mrf.mxu0
  %v1314 = vadd.f32 %v1142, %v1313
  %1315 = vmatmul.bf16.gmra.mxu0 %v1131
  %v1316 = vpop.f32.mrf.mxu0
  %v1317 = vadd.f32 %v1142, %v1316
  %v1318 = vpop.f32.mrf.mxu0
  %v1319 = vadd.f32 %v1142, %v1318
  %1320 = vmatmul.bf16.gmra.mxu0 %v1132
  %v1321 = vpop.f32.mrf.mxu0
  %v1322 = vadd.f32 %v1142, %v1321
  %v1323 = vpop.f32.mrf.mxu0
  %v1324 = vadd.f32 %v1142, %v1323
  %1325 = vmatmul.bf16.gmra.mxu0 %v1133
  %v1326 = vpop.f32.mrf.mxu0
  %v1327 = vadd.f32 %v1142, %v1326
  %v1328 = vpop.f32.mrf.mxu0
  %v1329 = vadd.f32 %v1142, %v1328
  %1330 = vmatmul.bf16.gmra.mxu0 %v1134
  %v1331 = vpop.f32.mrf.mxu0
  %v1332 = vadd.f32 %v1142, %v1331
  %v1333 = vpop.f32.mrf.mxu0
  %v1334 = vadd.f32 %v1142, %v1333
  %1335 = vmatmul.bf16.gmra.mxu0 %v1135
  %v1336 = vpop.f32.mrf.mxu0
  %v1337 = vadd.f32 %v1142, %v1336
  %v1338 = vpop.f32.mrf.mxu0
  %v1339 = vadd.f32 %v1142, %v1338
  %1340 = vmatmul.bf16.gmra.mxu0 %v1136
  %v1341 = vpop.f32.mrf.mxu0
  %v1342 = vadd.f32 %v1142, %v1341
  %v1343 = vpop.f32.mrf.mxu0
  %v1344 = vadd.f32 %v1142, %v1343
  %1345 = vmatmul.bf16.gmra.mxu0 %v1137
  %v1346 = vpop.f32.mrf.mxu0
  %v1347 = vadd.f32 %v1142, %v1346
  %v1348 = vpop.f32.mrf.mxu0
  %v1349 = vadd.f32 %v1142, %v1348
  %1350 = vmatmul.bf16.gmra.mxu0 %v1138
  %v1351 = vpop.f32.mrf.mxu0
  %v1352 = vadd.f32 %v1142, %v1351
  %v1353 = vpop.f32.mrf.mxu0
  %v1354 = vadd.f32 %v1142, %v1353
  %1355 = vmatmul.bf16.gmra.mxu0 %v1139
  %v1356 = vpop.f32.mrf.mxu0
  %v1357 = vadd.f32 %v1142, %v1356
  %v1358 = vpop.f32.mrf.mxu0
  %v1359 = vadd.f32 %v1142, %v1358
  %1360 = vdwg.mxu0
  %v1361 = vsub.f32 0.0, %v1202
  %v1362 = vsub.f32 0.0, %v1204
  %v1363 = vsub.f32 0.0, %v1207
  %v1364 = vsub.f32 0.0, %v1209
  %v1365 = vsub.f32 0.0, %v1212
  %v1366 = vsub.f32 0.0, %v1214
  %v1367 = vsub.f32 0.0, %v1217
  %v1368 = vsub.f32 0.0, %v1219
  %v1369 = vsub.f32 0.0, %v1222
  %v1370 = vsub.f32 0.0, %v1224
  %v1371 = vsub.f32 0.0, %v1227
  %v1372 = vsub.f32 0.0, %v1229
  %v1373 = vsub.f32 0.0, %v1232
  %v1374 = vsub.f32 0.0, %v1234
  %v1375 = vsub.f32 0.0, %v1237
  %v1376 = vsub.f32 0.0, %v1239
  %v1377 = vsub.f32 0.0, %v1242
  %v1378 = vsub.f32 0.0, %v1244
  %v1379 = vsub.f32 0.0, %v1247
  %v1380 = vsub.f32 0.0, %v1249
  %v1381 = vsub.f32 0.0, %v1252
  %v1382 = vsub.f32 0.0, %v1254
  %v1383 = vsub.f32 0.0, %v1257
  %v1384 = vsub.f32 0.0, %v1259
  %v1385 = vsub.f32 0.0, %v1262
  %v1386 = vsub.f32 0.0, %v1264
  %v1387 = vsub.f32 0.0, %v1267
  %v1388 = vsub.f32 0.0, %v1269
  %v1389 = vsub.f32 0.0, %v1272
  %v1390 = vsub.f32 0.0, %v1274
  %v1391 = vsub.f32 0.0, %v1277
  %v1392 = vsub.f32 0.0, %v1279
  %v1393 = vsub.f32 0.0, %v1282
  %v1394 = vsub.f32 0.0, %v1284
  %v1395 = vsub.f32 0.0, %v1287
  %v1396 = vsub.f32 0.0, %v1289
  %v1397 = vsub.f32 0.0, %v1292
  %v1398 = vsub.f32 0.0, %v1294
  %v1399 = vsub.f32 0.0, %v1297
  %v1400 = vsub.f32 0.0, %v1299
  %v1401 = vsub.f32 0.0, %v1302
  %v1402 = vsub.f32 0.0, %v1304
  %v1403 = vsub.f32 0.0, %v1307
  %v1404 = vsub.f32 0.0, %v1309
  %v1405 = vsub.f32 0.0, %v1312
  %v1406 = vsub.f32 0.0, %v1314
  %v1407 = vsub.f32 0.0, %v1317
  %v1408 = vsub.f32 0.0, %v1319
  %v1409 = vsub.f32 0.0, %v1322
  %v1410 = vsub.f32 0.0, %v1324
  %v1411 = vsub.f32 0.0, %v1327
  %v1412 = vsub.f32 0.0, %v1329
  %v1413 = vsub.f32 0.0, %v1332
  %v1414 = vsub.f32 0.0, %v1334
  %v1415 = vsub.f32 0.0, %v1337
  %v1416 = vsub.f32 0.0, %v1339
  %v1417 = vsub.f32 0.0, %v1342
  %v1418 = vsub.f32 0.0, %v1344
  %v1419 = vsub.f32 0.0, %v1347
  %v1420 = vsub.f32 0.0, %v1349
  %v1421 = vsub.f32 0.0, %v1352
  %v1422 = vsub.f32 0.0, %v1354
  %v1423 = vsub.f32 0.0, %v1357
  %v1424 = vsub.f32 0.0, %v1359
  %v1425 = vmul.f32 %v1361, 1.442695
  %v1426 = vpow.pop %v1425
  %v1427 = vmul.f32 %v1362, 1.442695
  %v1428 = vpow.pop %v1427
  %v1429 = vmul.f32 %v1363, 1.442695
  %v1430 = vpow.pop %v1429
  %v1431 = vmul.f32 %v1364, 1.442695
  %v1432 = vpow.pop %v1431
  %v1433 = vmul.f32 %v1365, 1.442695
  %v1434 = vpow.pop %v1433
  %v1435 = vmul.f32 %v1366, 1.442695
  %v1436 = vpow.pop %v1435
  %v1437 = vmul.f32 %v1367, 1.442695
  %v1438 = vpow.pop %v1437
  %v1439 = vmul.f32 %v1368, 1.442695
  %v1440 = vpow.pop %v1439
  %v1441 = vmul.f32 %v1369, 1.442695
  %v1442 = vpow.pop %v1441
  %v1443 = vmul.f32 %v1370, 1.442695
  %v1444 = vpow.pop %v1443
  %v1445 = vmul.f32 %v1371, 1.442695
  %v1446 = vpow.pop %v1445
  %v1447 = vmul.f32 %v1372, 1.442695
  %v1448 = vpow.pop %v1447
  %v1449 = vmul.f32 %v1373, 1.442695
  %v1450 = vpow.pop %v1449
  %v1451 = vmul.f32 %v1374, 1.442695
  %v1452 = vpow.pop %v1451
  %v1453 = vmul.f32 %v1375, 1.442695
  %v1454 = vpow.pop %v1453
  %v1455 = vmul.f32 %v1376, 1.442695
  %v1456 = vpow.pop %v1455
  %v1457 = vmul.f32 %v1377, 1.442695
  %v1458 = vpow.pop %v1457
  %v1459 = vmul.f32 %v1378, 1.442695
  %v1460 = vpow.pop %v1459
  %v1461 = vmul.f32 %v1379, 1.442695
  %v1462 = vpow.pop %v1461
  %v1463 = vmul.f32 %v1380, 1.442695
  %v1464 = vpow.pop %v1463
  %v1465 = vmul.f32 %v1381, 1.442695
  %v1466 = vpow.pop %v1465
  %v1467 = vmul.f32 %v1382, 1.442695
  %v1468 = vpow.pop %v1467
  %v1469 = vmul.f32 %v1383, 1.442695
  %v1470 = vpow.pop %v1469
  %v1471 = vmul.f32 %v1384, 1.442695
  %v1472 = vpow.pop %v1471
  %v1473 = vmul.f32 %v1385, 1.442695
  %v1474 = vpow.pop %v1473
  %v1475 = vmul.f32 %v1386, 1.442695
  %v1476 = vpow.pop %v1475
  %v1477 = vmul.f32 %v1387, 1.442695
  %v1478 = vpow.pop %v1477
  %v1479 = vmul.f32 %v1388, 1.442695
  %v1480 = vpow.pop %v1479
  %v1481 = vmul.f32 %v1389, 1.442695
  %v1482 = vpow.pop %v1481
  %v1483 = vmul.f32 %v1390, 1.442695
  %v1484 = vpow.pop %v1483
  %v1485 = vmul.f32 %v1391, 1.442695
  %v1486 = vpow.pop %v1485
  %v1487 = vmul.f32 %v1392, 1.442695
  %v1488 = vpow.pop %v1487
  %v1489 = vmul.f32 %v1393, 1.442695
  %v1490 = vpow.pop %v1489
  %v1491 = vmul.f32 %v1394, 1.442695
  %v1492 = vpow.pop %v1491
  %v1493 = vmul.f32 %v1395, 1.442695
  %v1494 = vpow.pop %v1493
  %v1495 = vmul.f32 %v1396, 1.442695
  %v1496 = vpow.pop %v1495
  %v1497 = vmul.f32 %v1397, 1.442695
  %v1498 = vpow.pop %v1497
  %v1499 = vmul.f32 %v1398, 1.442695
  %v1500 = vpow.pop %v1499
  %v1501 = vmul.f32 %v1399, 1.442695
  %v1502 = vpow.pop %v1501
  %v1503 = vmul.f32 %v1400, 1.442695
  %v1504 = vpow.pop %v1503
  %v1505 = vmul.f32 %v1401, 1.442695
  %v1506 = vpow.pop %v1505
  %v1507 = vmul.f32 %v1402, 1.442695
  %v1508 = vpow.pop %v1507
  %v1509 = vmul.f32 %v1403, 1.442695
  %v1510 = vpow.pop %v1509
  %v1511 = vmul.f32 %v1404, 1.442695
  %v1512 = vpow.pop %v1511
  %v1513 = vmul.f32 %v1405, 1.442695
  %v1514 = vpow.pop %v1513
  %v1515 = vmul.f32 %v1406, 1.442695
  %v1516 = vpow.pop %v1515
  %v1517 = vmul.f32 %v1407, 1.442695
  %v1518 = vpow.pop %v1517
  %v1519 = vmul.f32 %v1408, 1.442695
  %v1520 = vpow.pop %v1519
  %v1521 = vmul.f32 %v1409, 1.442695
  %v1522 = vpow.pop %v1521
  %v1523 = vmul.f32 %v1410, 1.442695
  %v1524 = vpow.pop %v1523
  %v1525 = vmul.f32 %v1411, 1.442695
  %v1526 = vpow.pop %v1525
  %v1527 = vmul.f32 %v1412, 1.442695
  %v1528 = vpow.pop %v1527
  %v1529 = vmul.f32 %v1413, 1.442695
  %v1530 = vpow.pop %v1529
  %v1531 = vmul.f32 %v1414, 1.442695
  %v1532 = vpow.pop %v1531
  %v1533 = vmul.f32 %v1415, 1.442695
  %v1534 = vpow.pop %v1533
  %v1535 = vmul.f32 %v1416, 1.442695
  %v1536 = vpow.pop %v1535
  %v1537 = vmul.f32 %v1417, 1.442695
  %v1538 = vpow.pop %v1537
  %v1539 = vmul.f32 %v1418, 1.442695
  %v1540 = vpow.pop %v1539
  %v1541 = vmul.f32 %v1419, 1.442695
  %v1542 = vpow.pop %v1541
  %v1543 = vmul.f32 %v1420, 1.442695
  %v1544 = vpow.pop %v1543
  %v1545 = vmul.f32 %v1421, 1.442695
  %v1546 = vpow.pop %v1545
  %v1547 = vmul.f32 %v1422, 1.442695
  %v1548 = vpow.pop %v1547
  %v1549 = vmul.f32 %v1423, 1.442695
  %v1550 = vpow.pop %v1549
  %v1551 = vmul.f32 %v1424, 1.442695
  %v1552 = vpow.pop %v1551
  %v1553 = vadd.f32 %v1426, 1.0
  %v1554 = vadd.f32 %v1428, 1.0
  %v1555 = vadd.f32 %v1430, 1.0
  %v1556 = vadd.f32 %v1432, 1.0
  %v1557 = vadd.f32 %v1434, 1.0
  %v1558 = vadd.f32 %v1436, 1.0
  %v1559 = vadd.f32 %v1438, 1.0
  %v1560 = vadd.f32 %v1440, 1.0
  %v1561 = vadd.f32 %v1442, 1.0
  %v1562 = vadd.f32 %v1444, 1.0
  %v1563 = vadd.f32 %v1446, 1.0
  %v1564 = vadd.f32 %v1448, 1.0
  %v1565 = vadd.f32 %v1450, 1.0
  %v1566 = vadd.f32 %v1452, 1.0
  %v1567 = vadd.f32 %v1454, 1.0
  %v1568 = vadd.f32 %v1456, 1.0
  %v1569 = vadd.f32 %v1458, 1.0
  %v1570 = vadd.f32 %v1460, 1.0
  %v1571 = vadd.f32 %v1462, 1.0
  %v1572 = vadd.f32 %v1464, 1.0
  %v1573 = vadd.f32 %v1466, 1.0
  %v1574 = vadd.f32 %v1468, 1.0
  %v1575 = vadd.f32 %v1470, 1.0
  %v1576 = vadd.f32 %v1472, 1.0
  %v1577 = vadd.f32 %v1474, 1.0
  %v1578 = vadd.f32 %v1476, 1.0
  %v1579 = vadd.f32 %v1478, 1.0
  %v1580 = vadd.f32 %v1480, 1.0
  %v1581 = vadd.f32 %v1482, 1.0
  %v1582 = vadd.f32 %v1484, 1.0
  %v1583 = vadd.f32 %v1486, 1.0
  %v1584 = vadd.f32 %v1488, 1.0
  %v1585 = vadd.f32 %v1490, 1.0
  %v1586 = vadd.f32 %v1492, 1.0
  %v1587 = vadd.f32 %v1494, 1.0
  %v1588 = vadd.f32 %v1496, 1.0
  %v1589 = vadd.f32 %v1498, 1.0
  %v1590 = vadd.f32 %v1500, 1.0
  %v1591 = vadd.f32 %v1502, 1.0
  %v1592 = vadd.f32 %v1504, 1.0
  %v1593 = vadd.f32 %v1506, 1.0
  %v1594 = vadd.f32 %v1508, 1.0
  %v1595 = vadd.f32 %v1510, 1.0
  %v1596 = vadd.f32 %v1512, 1.0
  %v1597 = vadd.f32 %v1514, 1.0
  %v1598 = vadd.f32 %v1516, 1.0
  %v1599 = vadd.f32 %v1518, 1.0
  %v1600 = vadd.f32 %v1520, 1.0
  %v1601 = vadd.f32 %v1522, 1.0
  %v1602 = vadd.f32 %v1524, 1.0
  %v1603 = vadd.f32 %v1526, 1.0
  %v1604 = vadd.f32 %v1528, 1.0
  %v1605 = vadd.f32 %v1530, 1.0
  %v1606 = vadd.f32 %v1532, 1.0
  %v1607 = vadd.f32 %v1534, 1.0
  %v1608 = vadd.f32 %v1536, 1.0
  %v1609 = vadd.f32 %v1538, 1.0
  %v1610 = vadd.f32 %v1540, 1.0
  %v1611 = vadd.f32 %v1542, 1.0
  %v1612 = vadd.f32 %v1544, 1.0
  %v1613 = vadd.f32 %v1546, 1.0
  %v1614 = vadd.f32 %v1548, 1.0
  %v1615 = vadd.f32 %v1550, 1.0
  %v1616 = vadd.f32 %v1552, 1.0
  %v1617 = vrcp.pop %v1553
  %v1618 = vrcp.pop %v1554
  %v1619 = vrcp.pop %v1555
  %v1620 = vrcp.pop %v1556
  %v1621 = vrcp.pop %v1557
  %v1622 = vrcp.pop %v1558
  %v1623 = vrcp.pop %v1559
  %v1624 = vrcp.pop %v1560
  %v1625 = vrcp.pop %v1561
  %v1626 = vrcp.pop %v1562
  %v1627 = vrcp.pop %v1563
  %v1628 = vrcp.pop %v1564
  %v1629 = vrcp.pop %v1565
  %v1630 = vrcp.pop %v1566
  %v1631 = vrcp.pop %v1567
  %v1632 = vrcp.pop %v1568
  %v1633 = vrcp.pop %v1569
  %v1634 = vrcp.pop %v1570
  %v1635 = vrcp.pop %v1571
  %v1636 = vrcp.pop %v1572
  %v1637 = vrcp.pop %v1573
  %v1638 = vrcp.pop %v1574
  %v1639 = vrcp.pop %v1575
  %v1640 = vrcp.pop %v1576
  %v1641 = vrcp.pop %v1577
  %v1642 = vrcp.pop %v1578
  %v1643 = vrcp.pop %v1579
  %v1644 = vrcp.pop %v1580
  %v1645 = vrcp.pop %v1581
  %v1646 = vrcp.pop %v1582
  %v1647 = vrcp.pop %v1583
  %v1648 = vrcp.pop %v1584
  %v1649 = vrcp.pop %v1585
  %v1650 = vrcp.pop %v1586
  %v1651 = vrcp.pop %v1587
  %v1652 = vrcp.pop %v1588
  %v1653 = vrcp.pop %v1589
  %v1654 = vrcp.pop %v1590
  %v1655 = vrcp.pop %v1591
  %v1656 = vrcp.pop %v1592
  %v1657 = vrcp.pop %v1593
  %v1658 = vrcp.pop %v1594
  %v1659 = vrcp.pop %v1595
  %v1660 = vrcp.pop %v1596
  %v1661 = vrcp.pop %v1597
  %v1662 = vrcp.pop %v1598
  %v1663 = vrcp.pop %v1599
  %v1664 = vrcp.pop %v1600
  %v1665 = vrcp.pop %v1601
  %v1666 = vrcp.pop %v1602
  %v1667 = vrcp.pop %v1603
  %v1668 = vrcp.pop %v1604
  %v1669 = vrcp.pop %v1605
  %v1670 = vrcp.pop %v1606
  %v1671 = vrcp.pop %v1607
  %v1672 = vrcp.pop %v1608
  %v1673 = vrcp.pop %v1609
  %v1674 = vrcp.pop %v1610
  %v1675 = vrcp.pop %v1611
  %v1676 = vrcp.pop %v1612
  %v1677 = vrcp.pop %v1613
  %v1678 = vrcp.pop %v1614
  %v1679 = vrcp.pop %v1615
  %v1680 = vrcp.pop %v1616
  %v1681 = vmul.f32 %v1202, %v1617
  %v1682 = vmul.f32 %v1204, %v1618
  %v1683 = vmul.f32 %v1207, %v1619
  %v1684 = vmul.f32 %v1209, %v1620
  %v1685 = vmul.f32 %v1212, %v1621
  %v1686 = vmul.f32 %v1214, %v1622
  %v1687 = vmul.f32 %v1217, %v1623
  %v1688 = vmul.f32 %v1219, %v1624
  %v1689 = vmul.f32 %v1222, %v1625
  %v1690 = vmul.f32 %v1224, %v1626
  %v1691 = vmul.f32 %v1227, %v1627
  %v1692 = vmul.f32 %v1229, %v1628
  %v1693 = vmul.f32 %v1232, %v1629
  %v1694 = vmul.f32 %v1234, %v1630
  %v1695 = vmul.f32 %v1237, %v1631
  %v1696 = vmul.f32 %v1239, %v1632
  %v1697 = vmul.f32 %v1242, %v1633
  %v1698 = vmul.f32 %v1244, %v1634
  %v1699 = vmul.f32 %v1247, %v1635
  %v1700 = vmul.f32 %v1249, %v1636
  %v1701 = vmul.f32 %v1252, %v1637
  %v1702 = vmul.f32 %v1254, %v1638
  %v1703 = vmul.f32 %v1257, %v1639
  %v1704 = vmul.f32 %v1259, %v1640
  %v1705 = vmul.f32 %v1262, %v1641
  %v1706 = vmul.f32 %v1264, %v1642
  %v1707 = vmul.f32 %v1267, %v1643
  %v1708 = vmul.f32 %v1269, %v1644
  %v1709 = vmul.f32 %v1272, %v1645
  %v1710 = vmul.f32 %v1274, %v1646
  %v1711 = vmul.f32 %v1277, %v1647
  %v1712 = vmul.f32 %v1279, %v1648
  %v1713 = vmul.f32 %v1282, %v1649
  %v1714 = vmul.f32 %v1284, %v1650
  %v1715 = vmul.f32 %v1287, %v1651
  %v1716 = vmul.f32 %v1289, %v1652
  %v1717 = vmul.f32 %v1292, %v1653
  %v1718 = vmul.f32 %v1294, %v1654
  %v1719 = vmul.f32 %v1297, %v1655
  %v1720 = vmul.f32 %v1299, %v1656
  %v1721 = vmul.f32 %v1302, %v1657
  %v1722 = vmul.f32 %v1304, %v1658
  %v1723 = vmul.f32 %v1307, %v1659
  %v1724 = vmul.f32 %v1309, %v1660
  %v1725 = vmul.f32 %v1312, %v1661
  %v1726 = vmul.f32 %v1314, %v1662
  %v1727 = vmul.f32 %v1317, %v1663
  %v1728 = vmul.f32 %v1319, %v1664
  %v1729 = vmul.f32 %v1322, %v1665
  %v1730 = vmul.f32 %v1324, %v1666
  %v1731 = vmul.f32 %v1327, %v1667
  %v1732 = vmul.f32 %v1329, %v1668
  %v1733 = vmul.f32 %v1332, %v1669
  %v1734 = vmul.f32 %v1334, %v1670
  %v1735 = vmul.f32 %v1337, %v1671
  %v1736 = vmul.f32 %v1339, %v1672
  %v1737 = vmul.f32 %v1342, %v1673
  %v1738 = vmul.f32 %v1344, %v1674
  %v1739 = vmul.f32 %v1347, %v1675
  %v1740 = vmul.f32 %v1349, %v1676
  %v1741 = vmul.f32 %v1352, %v1677
  %v1742 = vmul.f32 %v1354, %v1678
  %v1743 = vmul.f32 %v1357, %v1679
  %v1744 = vmul.f32 %v1359, %v1680
  %v1745 = vpack.c.bf16 %v1681, %v1681
  %v1746 = vpack.c.bf16 %v1682, %v1682
  %v1747 = vpack.c.bf16 %v1683, %v1683
  %v1748 = vpack.c.bf16 %v1684, %v1684
  %v1749 = vpack.c.bf16 %v1685, %v1685
  %v1750 = vpack.c.bf16 %v1686, %v1686
  %v1751 = vpack.c.bf16 %v1687, %v1687
  %v1752 = vpack.c.bf16 %v1688, %v1688
  %v1753 = vpack.c.bf16 %v1689, %v1689
  %v1754 = vpack.c.bf16 %v1690, %v1690
  %v1755 = vpack.c.bf16 %v1691, %v1691
  %v1756 = vpack.c.bf16 %v1692, %v1692
  %v1757 = vpack.c.bf16 %v1693, %v1693
  %v1758 = vpack.c.bf16 %v1694, %v1694
  %v1759 = vpack.c.bf16 %v1695, %v1695
  %v1760 = vpack.c.bf16 %v1696, %v1696
  %v1761 = vpack.c.bf16 %v1697, %v1697
  %v1762 = vpack.c.bf16 %v1698, %v1698
  %v1763 = vpack.c.bf16 %v1699, %v1699
  %v1764 = vpack.c.bf16 %v1700, %v1700
  %v1765 = vpack.c.bf16 %v1701, %v1701
  %v1766 = vpack.c.bf16 %v1702, %v1702
  %v1767 = vpack.c.bf16 %v1703, %v1703
  %v1768 = vpack.c.bf16 %v1704, %v1704
  %v1769 = vpack.c.bf16 %v1705, %v1705
  %v1770 = vpack.c.bf16 %v1706, %v1706
  %v1771 = vpack.c.bf16 %v1707, %v1707
  %v1772 = vpack.c.bf16 %v1708, %v1708
  %v1773 = vpack.c.bf16 %v1709, %v1709
  %v1774 = vpack.c.bf16 %v1710, %v1710
  %v1775 = vpack.c.bf16 %v1711, %v1711
  %v1776 = vpack.c.bf16 %v1712, %v1712
  %v1777 = vpack.c.bf16 %v1713, %v1713
  %v1778 = vpack.c.bf16 %v1714, %v1714
  %v1779 = vpack.c.bf16 %v1715, %v1715
  %v1780 = vpack.c.bf16 %v1716, %v1716
  %v1781 = vpack.c.bf16 %v1717, %v1717
  %v1782 = vpack.c.bf16 %v1718, %v1718
  %v1783 = vpack.c.bf16 %v1719, %v1719
  %v1784 = vpack.c.bf16 %v1720, %v1720
  %v1785 = vpack.c.bf16 %v1721, %v1721
  %v1786 = vpack.c.bf16 %v1722, %v1722
  %v1787 = vpack.c.bf16 %v1723, %v1723
  %v1788 = vpack.c.bf16 %v1724, %v1724
  %v1789 = vpack.c.bf16 %v1725, %v1725
  %v1790 = vpack.c.bf16 %v1726, %v1726
  %v1791 = vpack.c.bf16 %v1727, %v1727
  %v1792 = vpack.c.bf16 %v1728, %v1728
  %v1793 = vpack.c.bf16 %v1729, %v1729
  %v1794 = vpack.c.bf16 %v1730, %v1730
  %v1795 = vpack.c.bf16 %v1731, %v1731
  %v1796 = vpack.c.bf16 %v1732, %v1732
  %v1797 = vpack.c.bf16 %v1733, %v1733
  %v1798 = vpack.c.bf16 %v1734, %v1734
  %v1799 = vpack.c.bf16 %v1735, %v1735
  %v1800 = vpack.c.bf16 %v1736, %v1736
  %v1801 = vpack.c.bf16 %v1737, %v1737
  %v1802 = vpack.c.bf16 %v1738, %v1738
  %v1803 = vpack.c.bf16 %v1739, %v1739
  %v1804 = vpack.c.bf16 %v1740, %v1740
  %v1805 = vpack.c.bf16 %v1741, %v1741
  %v1806 = vpack.c.bf16 %v1742, %v1742
  %v1807 = vpack.c.bf16 %v1743, %v1743
  %v1808 = vpack.c.bf16 %v1744, %v1744
  %1809 = vst [vmem:[%s6] sm:$0xf] %v1745
  %1810 = vst [vmem:[%s6 + $0x4] sm:$0xf] %v1746
  %1811 = vst [vmem:[%s6 + $0x8] sm:$0xf] %v1747
  %1812 = vst [vmem:[%s6 + $0xc] sm:$0xf] %v1748
  %1813 = vst [vmem:[%s6 + $0x10] sm:$0xf] %v1749
  %1814 = vst [vmem:[%s6 + $0x14] sm:$0xf] %v1750
  %1815 = vst [vmem:[%s6 + $0x18] sm:$0xf] %v1751
  %1816 = vst [vmem:[%s6 + $0x1c] sm:$0xf] %v1752
  %1817 = vst [vmem:[%s6 + $0x20] sm:$0xf] %v1753
  %1818 = vst [vmem:[%s6 + $0x24] sm:$0xf] %v1754
  %1819 = vst [vmem:[%s6 + $0x28] sm:$0xf] %v1755
  %1820 = vst [vmem:[%s6 + $0x2c] sm:$0xf] %v1756
  %1821 = vst [vmem:[%s6 + $0x30] sm:$0xf] %v1757
  %1822 = vst [vmem:[%s6 + $0x34] sm:$0xf] %v1758
  %1823 = vst [vmem:[%s6 + $0x38] sm:$0xf] %v1759
  %1824 = vst [vmem:[%s6 + $0x3c] sm:$0xf] %v1760
  %1825 = vst [vmem:[%s6 + $0x40] sm:$0xf] %v1761
  %1826 = vst [vmem:[%s6 + $0x44] sm:$0xf] %v1762
  %1827 = vst [vmem:[%s6 + $0x48] sm:$0xf] %v1763
  %1828 = vst [vmem:[%s6 + $0x4c] sm:$0xf] %v1764
  %1829 = vst [vmem:[%s6 + $0x50] sm:$0xf] %v1765
  %1830 = vst [vmem:[%s6 + $0x54] sm:$0xf] %v1766
  %1831 = vst [vmem:[%s6 + $0x58] sm:$0xf] %v1767
  %1832 = vst [vmem:[%s6 + $0x5c] sm:$0xf] %v1768
  %1833 = vst [vmem:[%s6 + $0x60] sm:$0xf] %v1769
  %1834 = vst [vmem:[%s6 + $0x64] sm:$0xf] %v1770
  %1835 = vst [vmem:[%s6 + $0x68] sm:$0xf] %v1771
  %1836 = vst [vmem:[%s6 + $0x6c] sm:$0xf] %v1772
  %1837 = vst [vmem:[%s6 + $0x70] sm:$0xf] %v1773
  %1838 = vst [vmem:[%s6 + $0x74] sm:$0xf] %v1774
  %1839 = vst [vmem:[%s6 + $0x78] sm:$0xf] %v1775
  %1840 = vst [vmem:[%s6 + $0x7c] sm:$0xf] %v1776
  %1841 = vst [vmem:[%s6 + $0x80] sm:$0xf] %v1777
  %1842 = vst [vmem:[%s6 + $0x84] sm:$0xf] %v1778
  %1843 = vst [vmem:[%s6 + $0x88] sm:$0xf] %v1779
  %1844 = vst [vmem:[%s6 + $0x8c] sm:$0xf] %v1780
  %1845 = vst [vmem:[%s6 + $0x90] sm:$0xf] %v1781
  %1846 = vst [vmem:[%s6 + $0x94] sm:$0xf] %v1782
  %1847 = vst [vmem:[%s6 + $0x98] sm:$0xf] %v1783
  %1848 = vst [vmem:[%s6 + $0x9c] sm:$0xf] %v1784
  %1849 = vst [vmem:[%s6 + $0xa0] sm:$0xf] %v1785
  %1850 = vst [vmem:[%s6 + $0xa4] sm:$0xf] %v1786
  %1851 = vst [vmem:[%s6 + $0xa8] sm:$0xf] %v1787
  %1852 = vst [vmem:[%s6 + $0xac] sm:$0xf] %v1788
  %1853 = vst [vmem:[%s6 + $0xb0] sm:$0xf] %v1789
  %1854 = vst [vmem:[%s6 + $0xb4] sm:$0xf] %v1790
  %1855 = vst [vmem:[%s6 + $0xb8] sm:$0xf] %v1791
  %1856 = vst [vmem:[%s6 + $0xbc] sm:$0xf] %v1792
  %1857 = vst [vmem:[%s6 + $0xc0] sm:$0xf] %v1793
  %1858 = vst [vmem:[%s6 + $0xc4] sm:$0xf] %v1794
  %1859 = vst [vmem:[%s6 + $0xc8] sm:$0xf] %v1795
  %1860 = vst [vmem:[%s6 + $0xcc] sm:$0xf] %v1796
  %1861 = vst [vmem:[%s6 + $0xd0] sm:$0xf] %v1797
  %1862 = vst [vmem:[%s6 + $0xd4] sm:$0xf] %v1798
  %1863 = vst [vmem:[%s6 + $0xd8] sm:$0xf] %v1799
  %1864 = vst [vmem:[%s6 + $0xdc] sm:$0xf] %v1800
  %1865 = vst [vmem:[%s6 + $0xe0] sm:$0xf] %v1801
  %1866 = vst [vmem:[%s6 + $0xe4] sm:$0xf] %v1802
  %1867 = vst [vmem:[%s6 + $0xe8] sm:$0xf] %v1803
  %1868 = vst [vmem:[%s6 + $0xec] sm:$0xf] %v1804
  %1869 = vst [vmem:[%s6 + $0xf0] sm:$0xf] %v1805
  %1870 = vst [vmem:[%s6 + $0xf4] sm:$0xf] %v1806
  %1871 = vst [vmem:[%s6 + $0xf8] sm:$0xf] %v1807
  %1872 = vst [vmem:[%s6 + $0xfc] sm:$0xf] %v1808
  // Predicated region
  $region26: #{dimenet_forward.8} parent=0 // pred_check
    _
  $region27: #{dimenet_forward.8} parent=0 // pred_check_branch
    %1874 = sbr.rel (0) target = $region29
  $region28: #{dimenet_forward.8} parent=0 // pred_region
    _
  $region29: #{dimenet_forward.8} parent=0 // pred_fallthru
    _
  // Predicated region
  $region30: #{dimenet_forward.8} parent=0 // pred_check
    _
  $region31: #{dimenet_forward.8} parent=0 // pred_check_branch
    %1876 = sbr.rel (0) target = $region33
  $region32: #{dimenet_forward.8} parent=0 // pred_region
    _
  $region33: #{dimenet_forward.8} parent=0 // pred_fallthru
    _

// kernel: dimenet_forward.10
$region0: #{dimenet_forward.10}
  #allocation0 [shape = 'u32[]', space=smem, size = 0x4, offset = 0x4, fixed_abs, tag = 'smem constant byte address 0x4 - core index']
  #allocation1 [shape = 'u32[72,128]{1,0:T(1,128)}', space=vmem, size = 0x9000, scoped, tag = 'internal scratch']
  %s0 = inlined_call_operand.vmem [shape: bf16[512,128], index: 0, kind: input, shape index: {}]
  %s1 = inlined_call_operand.vmem [shape: bf16[512,128], index: 1, kind: input, shape index: {}]
  %s2 = inlined_call_operand.vmem [shape: bf16[3,128,128], index: 2, kind: input, shape index: {}]
  %s3 = inlined_call_operand.vmem [shape: f32[8,128], index: 3, kind: input, shape index: {}]
  %s4 = inlined_call_operand.vmem [shape: bf16[512,128], index: 4, kind: output, shape index: {0}]
  %s5 = inlined_call_operand.vmem [shape: bf16[512,128], index: 5, kind: output, shape index: {1}]
  %6 = xla_tuple %s4, %s5
  %s7 = sld [smem:[#allocation0]]
  $region34: #{dimenet_forward.10} parent=0
    _
  %s9 = ssub.s32 1, %s7
  %s10 = scalar_select 0, %s9, %s7
  // Predicated region
  $region2: #{dimenet_forward.10} parent=0 // pred_check
    _
  $region3: #{dimenet_forward.10} parent=0 // pred_check_branch
    %12 = sbr.rel (0) target = $region5
  $region4: #{dimenet_forward.10} parent=0 // pred_region
    _
  $region5: #{dimenet_forward.10} parent=0 // pred_fallthru
    _
  // Predicated region
  $region6: #{dimenet_forward.10} parent=0 // pred_check
    _
  $region7: #{dimenet_forward.10} parent=0 // pred_check_branch
    %14 = sbr.rel (0) target = $region9
  $region8: #{dimenet_forward.10} parent=0 // pred_region
    _
  $region9: #{dimenet_forward.10} parent=0 // pred_fallthru
    _
  // Predicated region
  $region10: #{dimenet_forward.10} parent=0 // pred_check
    _
  $region11: #{dimenet_forward.10} parent=0 // pred_check_branch
    %16 = sbr.rel (0) target = $region13
  $region12: #{dimenet_forward.10} parent=0 // pred_region
    _
  $region13: #{dimenet_forward.10} parent=0 // pred_fallthru
    _
  // Predicated region
  $region14: #{dimenet_forward.10} parent=0 // pred_check
    _
  $region15: #{dimenet_forward.10} parent=0 // pred_check_branch
    %18 = sbr.rel (0) target = $region17
  $region16: #{dimenet_forward.10} parent=0 // pred_region
    _
  $region17: #{dimenet_forward.10} parent=0 // pred_fallthru
    _
  %v19 = vld [vmem:[%s0] sm:$0xf]
  %v20 = vld [vmem:[%s0 + $0x4] sm:$0xf]
  %v21 = vld [vmem:[%s0 + $0x8] sm:$0xf]
  %v22 = vld [vmem:[%s0 + $0xc] sm:$0xf]
  %v23 = vld [vmem:[%s0 + $0x10] sm:$0xf]
  %v24 = vld [vmem:[%s0 + $0x14] sm:$0xf]
  %v25 = vld [vmem:[%s0 + $0x18] sm:$0xf]
  %v26 = vld [vmem:[%s0 + $0x1c] sm:$0xf]
  %v27 = vld [vmem:[%s0 + $0x20] sm:$0xf]
  %v28 = vld [vmem:[%s0 + $0x24] sm:$0xf]
  %v29 = vld [vmem:[%s0 + $0x28] sm:$0xf]
  %v30 = vld [vmem:[%s0 + $0x2c] sm:$0xf]
  %v31 = vld [vmem:[%s0 + $0x30] sm:$0xf]
  %v32 = vld [vmem:[%s0 + $0x34] sm:$0xf]
  %v33 = vld [vmem:[%s0 + $0x38] sm:$0xf]
  %v34 = vld [vmem:[%s0 + $0x3c] sm:$0xf]
  %v35 = vld [vmem:[%s0 + $0x40] sm:$0xf]
  %v36 = vld [vmem:[%s0 + $0x44] sm:$0xf]
  %v37 = vld [vmem:[%s0 + $0x48] sm:$0xf]
  %v38 = vld [vmem:[%s0 + $0x4c] sm:$0xf]
  %v39 = vld [vmem:[%s0 + $0x50] sm:$0xf]
  %v40 = vld [vmem:[%s0 + $0x54] sm:$0xf]
  %v41 = vld [vmem:[%s0 + $0x58] sm:$0xf]
  %v42 = vld [vmem:[%s0 + $0x5c] sm:$0xf]
  %v43 = vld [vmem:[%s0 + $0x60] sm:$0xf]
  %v44 = vld [vmem:[%s0 + $0x64] sm:$0xf]
  %v45 = vld [vmem:[%s0 + $0x68] sm:$0xf]
  %v46 = vld [vmem:[%s0 + $0x6c] sm:$0xf]
  %v47 = vld [vmem:[%s0 + $0x70] sm:$0xf]
  %v48 = vld [vmem:[%s0 + $0x74] sm:$0xf]
  %v49 = vld [vmem:[%s0 + $0x78] sm:$0xf]
  %v50 = vld [vmem:[%s0 + $0x7c] sm:$0xf]
  %v51 = vld [vmem:[%s0 + $0x80] sm:$0xf]
  %v52 = vld [vmem:[%s0 + $0x84] sm:$0xf]
  %v53 = vld [vmem:[%s0 + $0x88] sm:$0xf]
  %v54 = vld [vmem:[%s0 + $0x8c] sm:$0xf]
  %v55 = vld [vmem:[%s0 + $0x90] sm:$0xf]
  %v56 = vld [vmem:[%s0 + $0x94] sm:$0xf]
  %v57 = vld [vmem:[%s0 + $0x98] sm:$0xf]
  %v58 = vld [vmem:[%s0 + $0x9c] sm:$0xf]
  %v59 = vld [vmem:[%s0 + $0xa0] sm:$0xf]
  %v60 = vld [vmem:[%s0 + $0xa4] sm:$0xf]
  %v61 = vld [vmem:[%s0 + $0xa8] sm:$0xf]
  %v62 = vld [vmem:[%s0 + $0xac] sm:$0xf]
  %v63 = vld [vmem:[%s0 + $0xb0] sm:$0xf]
  %v64 = vld [vmem:[%s0 + $0xb4] sm:$0xf]
  %v65 = vld [vmem:[%s0 + $0xb8] sm:$0xf]
  %v66 = vld [vmem:[%s0 + $0xbc] sm:$0xf]
  %v67 = vld [vmem:[%s0 + $0xc0] sm:$0xf]
  %v68 = vld [vmem:[%s0 + $0xc4] sm:$0xf]
  %v69 = vld [vmem:[%s0 + $0xc8] sm:$0xf]
  %v70 = vld [vmem:[%s0 + $0xcc] sm:$0xf]
  %v71 = vld [vmem:[%s0 + $0xd0] sm:$0xf]
  %v72 = vld [vmem:[%s0 + $0xd4] sm:$0xf]
  %v73 = vld [vmem:[%s0 + $0xd8] sm:$0xf]
  %v74 = vld [vmem:[%s0 + $0xdc] sm:$0xf]
  %v75 = vld [vmem:[%s0 + $0xe0] sm:$0xf]
  %v76 = vld [vmem:[%s0 + $0xe4] sm:$0xf]
  %v77 = vld [vmem:[%s0 + $0xe8] sm:$0xf]
  %v78 = vld [vmem:[%s0 + $0xec] sm:$0xf]
  %v79 = vld [vmem:[%s0 + $0xf0] sm:$0xf]
  %v80 = vld [vmem:[%s0 + $0xf4] sm:$0xf]
  %v81 = vld [vmem:[%s0 + $0xf8] sm:$0xf]
  %v82 = vld [vmem:[%s0 + $0xfc] sm:$0xf]
  %v83 = vld [vmem:[%s2] sm:$0xf]
  %v84 = vld [vmem:[%s2 + $0x4] sm:$0xf]
  %v85 = vld [vmem:[%s2 + $0x8] sm:$0xf]
  %v86 = vld [vmem:[%s2 + $0xc] sm:$0xf]
  %v87 = vld [vmem:[%s2 + $0x10] sm:$0xf]
  %v88 = vld [vmem:[%s2 + $0x14] sm:$0xf]
  %v89 = vld [vmem:[%s2 + $0x18] sm:$0xf]
  %v90 = vld [vmem:[%s2 + $0x1c] sm:$0xf]
  %v91 = vld [vmem:[%s2 + $0x20] sm:$0xf]
  %v92 = vld [vmem:[%s2 + $0x24] sm:$0xf]
  %v93 = vld [vmem:[%s2 + $0x28] sm:$0xf]
  %v94 = vld [vmem:[%s2 + $0x2c] sm:$0xf]
  %v95 = vld [vmem:[%s2 + $0x30] sm:$0xf]
  %v96 = vld [vmem:[%s2 + $0x34] sm:$0xf]
  %v97 = vld [vmem:[%s2 + $0x38] sm:$0xf]
  %v98 = vld [vmem:[%s2 + $0x3c] sm:$0xf]
  %v99 = vld [vmem:[%s3] sm:$0x1]
  %v100 = vperm.slane %v99, 0
  %v165 = vunpack.c.l.b16 %v19
  %v166 = vunpack.c.l.b16 %v20
  %v167 = vunpack.c.l.b16 %v21
  %v168 = vunpack.c.l.b16 %v22
  %v169 = vunpack.c.l.b16 %v23
  %v170 = vunpack.c.l.b16 %v24
  %v171 = vunpack.c.l.b16 %v25
  %v172 = vunpack.c.l.b16 %v26
  %v173 = vunpack.c.l.b16 %v27
  %v174 = vunpack.c.l.b16 %v28
  %v175 = vunpack.c.l.b16 %v29
  %v176 = vunpack.c.l.b16 %v30
  %v177 = vunpack.c.l.b16 %v31
  %v178 = vunpack.c.l.b16 %v32
  %v179 = vunpack.c.l.b16 %v33
  %v180 = vunpack.c.l.b16 %v34
  %v181 = vunpack.c.l.b16 %v35
  %v182 = vunpack.c.l.b16 %v36
  %v183 = vunpack.c.l.b16 %v37
  %v184 = vunpack.c.l.b16 %v38
  %v185 = vunpack.c.l.b16 %v39
  %v186 = vunpack.c.l.b16 %v40
  %v187 = vunpack.c.l.b16 %v41
  %v188 = vunpack.c.l.b16 %v42
  %v189 = vunpack.c.l.b16 %v43
  %v190 = vunpack.c.l.b16 %v44
  %v191 = vunpack.c.l.b16 %v45
  %v192 = vunpack.c.l.b16 %v46
  %v193 = vunpack.c.l.b16 %v47
  %v194 = vunpack.c.l.b16 %v48
  %v195 = vunpack.c.l.b16 %v49
  %v196 = vunpack.c.l.b16 %v50
  %v197 = vunpack.c.l.b16 %v51
  %v198 = vunpack.c.l.b16 %v52
  %v199 = vunpack.c.l.b16 %v53
  %v200 = vunpack.c.l.b16 %v54
  %v201 = vunpack.c.l.b16 %v55
  %v202 = vunpack.c.l.b16 %v56
  %v203 = vunpack.c.l.b16 %v57
  %v204 = vunpack.c.l.b16 %v58
  %v205 = vunpack.c.l.b16 %v59
  %v206 = vunpack.c.l.b16 %v60
  %v207 = vunpack.c.l.b16 %v61
  %v208 = vunpack.c.l.b16 %v62
  %v209 = vunpack.c.l.b16 %v63
  %v210 = vunpack.c.l.b16 %v64
  %v211 = vunpack.c.l.b16 %v65
  %v212 = vunpack.c.l.b16 %v66
  %v213 = vunpack.c.l.b16 %v67
  %v214 = vunpack.c.l.b16 %v68
  %v215 = vunpack.c.l.b16 %v69
  %v216 = vunpack.c.l.b16 %v70
  %v217 = vunpack.c.l.b16 %v71
  %v218 = vunpack.c.l.b16 %v72
  %v219 = vunpack.c.l.b16 %v73
  %v220 = vunpack.c.l.b16 %v74
  %v221 = vunpack.c.l.b16 %v75
  %v222 = vunpack.c.l.b16 %v76
  %v223 = vunpack.c.l.b16 %v77
  %v224 = vunpack.c.l.b16 %v78
  %v225 = vunpack.c.l.b16 %v79
  %v226 = vunpack.c.l.b16 %v80
  %v227 = vunpack.c.l.b16 %v81
  %v228 = vunpack.c.l.b16 %v82
  %v229 = vpack.c.b16 %v166, %v165
  %v230 = vpack.c.b16 %v168, %v167
  %v231 = vpack.c.b16 %v170, %v169
  %v232 = vpack.c.b16 %v172, %v171
  %v233 = vpack.c.b16 %v174, %v173
  %v234 = vpack.c.b16 %v176, %v175
  %v235 = vpack.c.b16 %v178, %v177
  %v236 = vpack.c.b16 %v180, %v179
  %v237 = vpack.c.b16 %v182, %v181
  %v238 = vpack.c.b16 %v184, %v183
  %v239 = vpack.c.b16 %v186, %v185
  %v240 = vpack.c.b16 %v188, %v187
  %v241 = vpack.c.b16 %v190, %v189
  %v242 = vpack.c.b16 %v192, %v191
  %v243 = vpack.c.b16 %v194, %v193
  %v244 = vpack.c.b16 %v196, %v195
  %v245 = vpack.c.b16 %v198, %v197
  %v246 = vpack.c.b16 %v200, %v199
  %v247 = vpack.c.b16 %v202, %v201
  %v248 = vpack.c.b16 %v204, %v203
  %v249 = vpack.c.b16 %v206, %v205
  %v250 = vpack.c.b16 %v208, %v207
  %v251 = vpack.c.b16 %v210, %v209
  %v252 = vpack.c.b16 %v212, %v211
  %v253 = vpack.c.b16 %v214, %v213
  %v254 = vpack.c.b16 %v216, %v215
  %v255 = vpack.c.b16 %v218, %v217
  %v256 = vpack.c.b16 %v220, %v219
  %v257 = vpack.c.b16 %v222, %v221
  %v258 = vpack.c.b16 %v224, %v223
  %v259 = vpack.c.b16 %v226, %v225
  %v260 = vpack.c.b16 %v228, %v227
  %v309 = vunpack.c.l.b16 %v83
  %v310 = vunpack.c.l.b16 %v84
  %v311 = vunpack.c.l.b16 %v85
  %v312 = vunpack.c.l.b16 %v86
  %v313 = vunpack.c.l.b16 %v87
  %v314 = vunpack.c.l.b16 %v88
  %v315 = vunpack.c.l.b16 %v89
  %v316 = vunpack.c.l.b16 %v90
  %v317 = vunpack.c.l.b16 %v91
  %v318 = vunpack.c.l.b16 %v92
  %v319 = vunpack.c.l.b16 %v93
  %v320 = vunpack.c.l.b16 %v94
  %v321 = vunpack.c.l.b16 %v95
  %v322 = vunpack.c.l.b16 %v96
  %v323 = vunpack.c.l.b16 %v97
  %v324 = vunpack.c.l.b16 %v98
  %v325 = vpack.c.b16 %v310, %v309
  %v326 = vpack.c.b16 %v312, %v311
  %v327 = vpack.c.b16 %v314, %v313
  %v328 = vpack.c.b16 %v316, %v315
  %v329 = vpack.c.b16 %v318, %v317
  %v330 = vpack.c.b16 %v320, %v319
  %v331 = vpack.c.b16 %v322, %v321
  %v332 = vpack.c.b16 %v324, %v323
  %341 = vmatpush.bf16.msra.mxu0 %v332
  %342 = vmatpush.bf16.msra.mxu0 %v331
  %343 = vmatpush.bf16.msra.mxu0 %v330
  %344 = vmatpush.bf16.msra.mxu0 %v329
  %345 = vmatpush.bf16.msra.mxu0 %v328
  %346 = vmatpush.bf16.msra.mxu0 %v327
  %347 = vmatpush.bf16.msra.mxu0 %v326
  %348 = vmatpush.bf16.msra.mxu0 %v325
  %349 = vmatmul.bf16.gmra.mxu0 %v229
  %v350 = vpop.f32.mrf.mxu0
  %v351 = vadd.f32 %v100, %v350
  %v352 = vpop.f32.mrf.mxu0
  %v353 = vadd.f32 %v100, %v352
  %354 = vmatmul.bf16.gmra.mxu0 %v230
  %v355 = vpop.f32.mrf.mxu0
  %v356 = vadd.f32 %v100, %v355
  %v357 = vpop.f32.mrf.mxu0
  %v358 = vadd.f32 %v100, %v357
  %359 = vmatmul.bf16.gmra.mxu0 %v231
  %v360 = vpop.f32.mrf.mxu0
  %v361 = vadd.f32 %v100, %v360
  %v362 = vpop.f32.mrf.mxu0
  %v363 = vadd.f32 %v100, %v362
  %364 = vmatmul.bf16.gmra.mxu0 %v232
  %v365 = vpop.f32.mrf.mxu0
  %v366 = vadd.f32 %v100, %v365
  %v367 = vpop.f32.mrf.mxu0
  %v368 = vadd.f32 %v100, %v367
  %369 = vmatmul.bf16.gmra.mxu0 %v233
  %v370 = vpop.f32.mrf.mxu0
  %v371 = vadd.f32 %v100, %v370
  %v372 = vpop.f32.mrf.mxu0
  %v373 = vadd.f32 %v100, %v372
  %374 = vmatmul.bf16.gmra.mxu0 %v234
  %v375 = vpop.f32.mrf.mxu0
  %v376 = vadd.f32 %v100, %v375
  %v377 = vpop.f32.mrf.mxu0
  %v378 = vadd.f32 %v100, %v377
  %379 = vmatmul.bf16.gmra.mxu0 %v235
  %v380 = vpop.f32.mrf.mxu0
  %v381 = vadd.f32 %v100, %v380
  %v382 = vpop.f32.mrf.mxu0
  %v383 = vadd.f32 %v100, %v382
  %384 = vmatmul.bf16.gmra.mxu0 %v236
  %v385 = vpop.f32.mrf.mxu0
  %v386 = vadd.f32 %v100, %v385
  %v387 = vpop.f32.mrf.mxu0
  %v388 = vadd.f32 %v100, %v387
  %389 = vmatmul.bf16.gmra.mxu0 %v237
  %v390 = vpop.f32.mrf.mxu0
  %v391 = vadd.f32 %v100, %v390
  %v392 = vpop.f32.mrf.mxu0
  %v393 = vadd.f32 %v100, %v392
  %394 = vmatmul.bf16.gmra.mxu0 %v238
  %v395 = vpop.f32.mrf.mxu0
  %v396 = vadd.f32 %v100, %v395
  %v397 = vpop.f32.mrf.mxu0
  %v398 = vadd.f32 %v100, %v397
  %399 = vmatmul.bf16.gmra.mxu0 %v239
  %v400 = vpop.f32.mrf.mxu0
  %v401 = vadd.f32 %v100, %v400
  %v402 = vpop.f32.mrf.mxu0
  %v403 = vadd.f32 %v100, %v402
  %404 = vmatmul.bf16.gmra.mxu0 %v240
  %v405 = vpop.f32.mrf.mxu0
  %v406 = vadd.f32 %v100, %v405
  %v407 = vpop.f32.mrf.mxu0
  %v408 = vadd.f32 %v100, %v407
  %409 = vmatmul.bf16.gmra.mxu0 %v241
  %v410 = vpop.f32.mrf.mxu0
  %v411 = vadd.f32 %v100, %v410
  %v412 = vpop.f32.mrf.mxu0
  %v413 = vadd.f32 %v100, %v412
  %414 = vmatmul.bf16.gmra.mxu0 %v242
  %v415 = vpop.f32.mrf.mxu0
  %v416 = vadd.f32 %v100, %v415
  %v417 = vpop.f32.mrf.mxu0
  %v418 = vadd.f32 %v100, %v417
  %419 = vmatmul.bf16.gmra.mxu0 %v243
  %v420 = vpop.f32.mrf.mxu0
  %v421 = vadd.f32 %v100, %v420
  %v422 = vpop.f32.mrf.mxu0
  %v423 = vadd.f32 %v100, %v422
  %424 = vmatmul.bf16.gmra.mxu0 %v244
  %v425 = vpop.f32.mrf.mxu0
  %v426 = vadd.f32 %v100, %v425
  %v427 = vpop.f32.mrf.mxu0
  %v428 = vadd.f32 %v100, %v427
  %429 = vmatmul.bf16.gmra.mxu0 %v245
  %v430 = vpop.f32.mrf.mxu0
  %v431 = vadd.f32 %v100, %v430
  %v432 = vpop.f32.mrf.mxu0
  %v433 = vadd.f32 %v100, %v432
  %434 = vmatmul.bf16.gmra.mxu0 %v246
  %v435 = vpop.f32.mrf.mxu0
  %v436 = vadd.f32 %v100, %v435
  %v437 = vpop.f32.mrf.mxu0
  %v438 = vadd.f32 %v100, %v437
  %439 = vmatmul.bf16.gmra.mxu0 %v247
  %v440 = vpop.f32.mrf.mxu0
  %v441 = vadd.f32 %v100, %v440
  %v442 = vpop.f32.mrf.mxu0
  %v443 = vadd.f32 %v100, %v442
  %444 = vmatmul.bf16.gmra.mxu0 %v248
  %v445 = vpop.f32.mrf.mxu0
  %v446 = vadd.f32 %v100, %v445
  %v447 = vpop.f32.mrf.mxu0
  %v448 = vadd.f32 %v100, %v447
  %449 = vmatmul.bf16.gmra.mxu0 %v249
  %v450 = vpop.f32.mrf.mxu0
  %v451 = vadd.f32 %v100, %v450
  %v452 = vpop.f32.mrf.mxu0
  %v453 = vadd.f32 %v100, %v452
  %454 = vmatmul.bf16.gmra.mxu0 %v250
  %v455 = vpop.f32.mrf.mxu0
  %v456 = vadd.f32 %v100, %v455
  %v457 = vpop.f32.mrf.mxu0
  %v458 = vadd.f32 %v100, %v457
  %459 = vmatmul.bf16.gmra.mxu0 %v251
  %v460 = vpop.f32.mrf.mxu0
  %v461 = vadd.f32 %v100, %v460
  %v462 = vpop.f32.mrf.mxu0
  %v463 = vadd.f32 %v100, %v462
  %464 = vmatmul.bf16.gmra.mxu0 %v252
  %v465 = vpop.f32.mrf.mxu0
  %v466 = vadd.f32 %v100, %v465
  %v467 = vpop.f32.mrf.mxu0
  %v468 = vadd.f32 %v100, %v467
  %469 = vmatmul.bf16.gmra.mxu0 %v253
  %v470 = vpop.f32.mrf.mxu0
  %v471 = vadd.f32 %v100, %v470
  %v472 = vpop.f32.mrf.mxu0
  %v473 = vadd.f32 %v100, %v472
  %474 = vmatmul.bf16.gmra.mxu0 %v254
  %v475 = vpop.f32.mrf.mxu0
  %v476 = vadd.f32 %v100, %v475
  %v477 = vpop.f32.mrf.mxu0
  %v478 = vadd.f32 %v100, %v477
  %479 = vmatmul.bf16.gmra.mxu0 %v255
  %v480 = vpop.f32.mrf.mxu0
  %v481 = vadd.f32 %v100, %v480
  %v482 = vpop.f32.mrf.mxu0
  %v483 = vadd.f32 %v100, %v482
  %484 = vmatmul.bf16.gmra.mxu0 %v256
  %v485 = vpop.f32.mrf.mxu0
  %v486 = vadd.f32 %v100, %v485
  %v487 = vpop.f32.mrf.mxu0
  %v488 = vadd.f32 %v100, %v487
  %489 = vmatmul.bf16.gmra.mxu0 %v257
  %v490 = vpop.f32.mrf.mxu0
  %v491 = vadd.f32 %v100, %v490
  %v492 = vpop.f32.mrf.mxu0
  %v493 = vadd.f32 %v100, %v492
  %494 = vmatmul.bf16.gmra.mxu0 %v258
  %v495 = vpop.f32.mrf.mxu0
  %v496 = vadd.f32 %v100, %v495
  %v497 = vpop.f32.mrf.mxu0
  %v498 = vadd.f32 %v100, %v497
  %499 = vmatmul.bf16.gmra.mxu0 %v259
  %v500 = vpop.f32.mrf.mxu0
  %v501 = vadd.f32 %v100, %v500
  %v502 = vpop.f32.mrf.mxu0
  %v503 = vadd.f32 %v100, %v502
  %504 = vmatmul.bf16.gmra.mxu0 %v260
  %v505 = vpop.f32.mrf.mxu0
  %v506 = vadd.f32 %v100, %v505
  %v507 = vpop.f32.mrf.mxu0
  %v508 = vadd.f32 %v100, %v507
  %509 = vdwg.mxu0
  %v510 = vsub.f32 0.0, %v351
  %v511 = vsub.f32 0.0, %v353
  %v512 = vsub.f32 0.0, %v356
  %v513 = vsub.f32 0.0, %v358
  %v514 = vsub.f32 0.0, %v361
  %v515 = vsub.f32 0.0, %v363
  %v516 = vsub.f32 0.0, %v366
  %v517 = vsub.f32 0.0, %v368
  %v518 = vsub.f32 0.0, %v371
  %v519 = vsub.f32 0.0, %v373
  %v520 = vsub.f32 0.0, %v376
  %v521 = vsub.f32 0.0, %v378
  %v522 = vsub.f32 0.0, %v381
  %v523 = vsub.f32 0.0, %v383
  %v524 = vsub.f32 0.0, %v386
  %v525 = vsub.f32 0.0, %v388
  %v526 = vsub.f32 0.0, %v391
  %v527 = vsub.f32 0.0, %v393
  %v528 = vsub.f32 0.0, %v396
  %v529 = vsub.f32 0.0, %v398
  %v530 = vsub.f32 0.0, %v401
  %v531 = vsub.f32 0.0, %v403
  %v532 = vsub.f32 0.0, %v406
  %v533 = vsub.f32 0.0, %v408
  %v534 = vsub.f32 0.0, %v411
  %v535 = vsub.f32 0.0, %v413
  %v536 = vsub.f32 0.0, %v416
  %v537 = vsub.f32 0.0, %v418
  %v538 = vsub.f32 0.0, %v421
  %v539 = vsub.f32 0.0, %v423
  %v540 = vsub.f32 0.0, %v426
  %v541 = vsub.f32 0.0, %v428
  %v542 = vsub.f32 0.0, %v431
  %v543 = vsub.f32 0.0, %v433
  %v544 = vsub.f32 0.0, %v436
  %v545 = vsub.f32 0.0, %v438
  %v546 = vsub.f32 0.0, %v441
  %v547 = vsub.f32 0.0, %v443
  %v548 = vsub.f32 0.0, %v446
  %v549 = vsub.f32 0.0, %v448
  %v550 = vsub.f32 0.0, %v451
  %v551 = vsub.f32 0.0, %v453
  %v552 = vsub.f32 0.0, %v456
  %v553 = vsub.f32 0.0, %v458
  %v554 = vsub.f32 0.0, %v461
  %v555 = vsub.f32 0.0, %v463
  %v556 = vsub.f32 0.0, %v466
  %v557 = vsub.f32 0.0, %v468
  %v558 = vsub.f32 0.0, %v471
  %v559 = vsub.f32 0.0, %v473
  %v560 = vsub.f32 0.0, %v476
  %v561 = vsub.f32 0.0, %v478
  %v562 = vsub.f32 0.0, %v481
  %v563 = vsub.f32 0.0, %v483
  %v564 = vsub.f32 0.0, %v486
  %v565 = vsub.f32 0.0, %v488
  %v566 = vsub.f32 0.0, %v491
  %v567 = vsub.f32 0.0, %v493
  %v568 = vsub.f32 0.0, %v496
  %v569 = vsub.f32 0.0, %v498
  %v570 = vsub.f32 0.0, %v501
  %v571 = vsub.f32 0.0, %v503
  %v572 = vsub.f32 0.0, %v506
  %v573 = vsub.f32 0.0, %v508
  %v574 = vmul.f32 %v510, 1.442695
  %v575 = vpow.pop %v574
  %v576 = vmul.f32 %v511, 1.442695
  %v577 = vpow.pop %v576
  %v578 = vmul.f32 %v512, 1.442695
  %v579 = vpow.pop %v578
  %v580 = vmul.f32 %v513, 1.442695
  %v581 = vpow.pop %v580
  %v582 = vmul.f32 %v514, 1.442695
  %v583 = vpow.pop %v582
  %v584 = vmul.f32 %v515, 1.442695
  %v585 = vpow.pop %v584
  %v586 = vmul.f32 %v516, 1.442695
  %v587 = vpow.pop %v586
  %v588 = vmul.f32 %v517, 1.442695
  %v589 = vpow.pop %v588
  %v590 = vmul.f32 %v518, 1.442695
  %v591 = vpow.pop %v590
  %v592 = vmul.f32 %v519, 1.442695
  %v593 = vpow.pop %v592
  %v594 = vmul.f32 %v520, 1.442695
  %v595 = vpow.pop %v594
  %v596 = vmul.f32 %v521, 1.442695
  %v597 = vpow.pop %v596
  %v598 = vmul.f32 %v522, 1.442695
  %v599 = vpow.pop %v598
  %v600 = vmul.f32 %v523, 1.442695
  %v601 = vpow.pop %v600
  %v602 = vmul.f32 %v524, 1.442695
  %v603 = vpow.pop %v602
  %v604 = vmul.f32 %v525, 1.442695
  %v605 = vpow.pop %v604
  %v606 = vmul.f32 %v526, 1.442695
  %v607 = vpow.pop %v606
  %v608 = vmul.f32 %v527, 1.442695
  %v609 = vpow.pop %v608
  %v610 = vmul.f32 %v528, 1.442695
  %v611 = vpow.pop %v610
  %v612 = vmul.f32 %v529, 1.442695
  %v613 = vpow.pop %v612
  %v614 = vmul.f32 %v530, 1.442695
  %v615 = vpow.pop %v614
  %v616 = vmul.f32 %v531, 1.442695
  %v617 = vpow.pop %v616
  %v618 = vmul.f32 %v532, 1.442695
  %v619 = vpow.pop %v618
  %v620 = vmul.f32 %v533, 1.442695
  %v621 = vpow.pop %v620
  %v622 = vmul.f32 %v534, 1.442695
  %v623 = vpow.pop %v622
  %v624 = vmul.f32 %v535, 1.442695
  %v625 = vpow.pop %v624
  %v626 = vmul.f32 %v536, 1.442695
  %v627 = vpow.pop %v626
  %v628 = vmul.f32 %v537, 1.442695
  %v629 = vpow.pop %v628
  %v630 = vmul.f32 %v538, 1.442695
  %v631 = vpow.pop %v630
  %v632 = vmul.f32 %v539, 1.442695
  %v633 = vpow.pop %v632
  %v634 = vmul.f32 %v540, 1.442695
  %v635 = vpow.pop %v634
  %v636 = vmul.f32 %v541, 1.442695
  %v637 = vpow.pop %v636
  %v638 = vmul.f32 %v542, 1.442695
  %v639 = vpow.pop %v638
  %v640 = vmul.f32 %v543, 1.442695
  %v641 = vpow.pop %v640
  %v642 = vmul.f32 %v544, 1.442695
  %v643 = vpow.pop %v642
  %v644 = vmul.f32 %v545, 1.442695
  %v645 = vpow.pop %v644
  %v646 = vmul.f32 %v546, 1.442695
  %v647 = vpow.pop %v646
  %v648 = vmul.f32 %v547, 1.442695
  %v649 = vpow.pop %v648
  %v650 = vmul.f32 %v548, 1.442695
  %v651 = vpow.pop %v650
  %v652 = vmul.f32 %v549, 1.442695
  %v653 = vpow.pop %v652
  %v654 = vmul.f32 %v550, 1.442695
  %v655 = vpow.pop %v654
  %v656 = vmul.f32 %v551, 1.442695
  %v657 = vpow.pop %v656
  %v658 = vmul.f32 %v552, 1.442695
  %v659 = vpow.pop %v658
  %v660 = vmul.f32 %v553, 1.442695
  %v661 = vpow.pop %v660
  %v662 = vmul.f32 %v554, 1.442695
  %v663 = vpow.pop %v662
  %v664 = vmul.f32 %v555, 1.442695
  %v665 = vpow.pop %v664
  %v666 = vmul.f32 %v556, 1.442695
  %v667 = vpow.pop %v666
  %v668 = vmul.f32 %v557, 1.442695
  %v669 = vpow.pop %v668
  %v670 = vmul.f32 %v558, 1.442695
  %v671 = vpow.pop %v670
  %v672 = vmul.f32 %v559, 1.442695
  %v673 = vpow.pop %v672
  %v674 = vmul.f32 %v560, 1.442695
  %v675 = vpow.pop %v674
  %v676 = vmul.f32 %v561, 1.442695
  %v677 = vpow.pop %v676
  %v678 = vmul.f32 %v562, 1.442695
  %v679 = vpow.pop %v678
  %v680 = vmul.f32 %v563, 1.442695
  %v681 = vpow.pop %v680
  %v682 = vmul.f32 %v564, 1.442695
  %v683 = vpow.pop %v682
  %v684 = vmul.f32 %v565, 1.442695
  %v685 = vpow.pop %v684
  %v686 = vmul.f32 %v566, 1.442695
  %v687 = vpow.pop %v686
  %v688 = vmul.f32 %v567, 1.442695
  %v689 = vpow.pop %v688
  %v690 = vmul.f32 %v568, 1.442695
  %v691 = vpow.pop %v690
  %v692 = vmul.f32 %v569, 1.442695
  %v693 = vpow.pop %v692
  %v694 = vmul.f32 %v570, 1.442695
  %v695 = vpow.pop %v694
  %v696 = vmul.f32 %v571, 1.442695
  %v697 = vpow.pop %v696
  %v698 = vmul.f32 %v572, 1.442695
  %v699 = vpow.pop %v698
  %v700 = vmul.f32 %v573, 1.442695
  %v701 = vpow.pop %v700
  %v702 = vadd.f32 %v575, 1.0
  %v703 = vadd.f32 %v577, 1.0
  %v704 = vadd.f32 %v579, 1.0
  %v705 = vadd.f32 %v581, 1.0
  %v706 = vadd.f32 %v583, 1.0
  %v707 = vadd.f32 %v585, 1.0
  %v708 = vadd.f32 %v587, 1.0
  %v709 = vadd.f32 %v589, 1.0
  %v710 = vadd.f32 %v591, 1.0
  %v711 = vadd.f32 %v593, 1.0
  %v712 = vadd.f32 %v595, 1.0
  %v713 = vadd.f32 %v597, 1.0
  %v714 = vadd.f32 %v599, 1.0
  %v715 = vadd.f32 %v601, 1.0
  %v716 = vadd.f32 %v603, 1.0
  %v717 = vadd.f32 %v605, 1.0
  %v718 = vadd.f32 %v607, 1.0
  %v719 = vadd.f32 %v609, 1.0
  %v720 = vadd.f32 %v611, 1.0
  %v721 = vadd.f32 %v613, 1.0
  %v722 = vadd.f32 %v615, 1.0
  %v723 = vadd.f32 %v617, 1.0
  %v724 = vadd.f32 %v619, 1.0
  %v725 = vadd.f32 %v621, 1.0
  %v726 = vadd.f32 %v623, 1.0
  %v727 = vadd.f32 %v625, 1.0
  %v728 = vadd.f32 %v627, 1.0
  %v729 = vadd.f32 %v629, 1.0
  %v730 = vadd.f32 %v631, 1.0
  %v731 = vadd.f32 %v633, 1.0
  %v732 = vadd.f32 %v635, 1.0
  %v733 = vadd.f32 %v637, 1.0
  %v734 = vadd.f32 %v639, 1.0
  %v735 = vadd.f32 %v641, 1.0
  %v736 = vadd.f32 %v643, 1.0
  %v737 = vadd.f32 %v645, 1.0
  %v738 = vadd.f32 %v647, 1.0
  %v739 = vadd.f32 %v649, 1.0
  %v740 = vadd.f32 %v651, 1.0
  %v741 = vadd.f32 %v653, 1.0
  %v742 = vadd.f32 %v655, 1.0
  %v743 = vadd.f32 %v657, 1.0
  %v744 = vadd.f32 %v659, 1.0
  %v745 = vadd.f32 %v661, 1.0
  %v746 = vadd.f32 %v663, 1.0
  %v747 = vadd.f32 %v665, 1.0
  %v748 = vadd.f32 %v667, 1.0
  %v749 = vadd.f32 %v669, 1.0
  %v750 = vadd.f32 %v671, 1.0
  %v751 = vadd.f32 %v673, 1.0
  %v752 = vadd.f32 %v675, 1.0
  %v753 = vadd.f32 %v677, 1.0
  %v754 = vadd.f32 %v679, 1.0
  %v755 = vadd.f32 %v681, 1.0
  %v756 = vadd.f32 %v683, 1.0
  %v757 = vadd.f32 %v685, 1.0
  %v758 = vadd.f32 %v687, 1.0
  %v759 = vadd.f32 %v689, 1.0
  %v760 = vadd.f32 %v691, 1.0
  %v761 = vadd.f32 %v693, 1.0
  %v762 = vadd.f32 %v695, 1.0
  %v763 = vadd.f32 %v697, 1.0
  %v764 = vadd.f32 %v699, 1.0
  %v765 = vadd.f32 %v701, 1.0
  %v766 = vrcp.pop %v702
  %v767 = vrcp.pop %v703
  %v768 = vrcp.pop %v704
  %v769 = vrcp.pop %v705
  %v770 = vrcp.pop %v706
  %v771 = vrcp.pop %v707
  %v772 = vrcp.pop %v708
  %v773 = vrcp.pop %v709
  %v774 = vrcp.pop %v710
  %v775 = vrcp.pop %v711
  %v776 = vrcp.pop %v712
  %v777 = vrcp.pop %v713
  %v778 = vrcp.pop %v714
  %v779 = vrcp.pop %v715
  %v780 = vrcp.pop %v716
  %v781 = vrcp.pop %v717
  %v782 = vrcp.pop %v718
  %v783 = vrcp.pop %v719
  %v784 = vrcp.pop %v720
  %v785 = vrcp.pop %v721
  %v786 = vrcp.pop %v722
  %v787 = vrcp.pop %v723
  %v788 = vrcp.pop %v724
  %v789 = vrcp.pop %v725
  %v790 = vrcp.pop %v726
  %v791 = vrcp.pop %v727
  %v792 = vrcp.pop %v728
  %v793 = vrcp.pop %v729
  %v794 = vrcp.pop %v730
  %v795 = vrcp.pop %v731
  %v796 = vrcp.pop %v732
  %v797 = vrcp.pop %v733
  %v798 = vrcp.pop %v734
  %v799 = vrcp.pop %v735
  %v800 = vrcp.pop %v736
  %v801 = vrcp.pop %v737
  %v802 = vrcp.pop %v738
  %v803 = vrcp.pop %v739
  %v804 = vrcp.pop %v740
  %v805 = vrcp.pop %v741
  %v806 = vrcp.pop %v742
  %v807 = vrcp.pop %v743
  %v808 = vrcp.pop %v744
  %v809 = vrcp.pop %v745
  %v810 = vrcp.pop %v746
  %v811 = vrcp.pop %v747
  %v812 = vrcp.pop %v748
  %v813 = vrcp.pop %v749
  %v814 = vrcp.pop %v750
  %v815 = vrcp.pop %v751
  %v816 = vrcp.pop %v752
  %v817 = vrcp.pop %v753
  %v818 = vrcp.pop %v754
  %v819 = vrcp.pop %v755
  %v820 = vrcp.pop %v756
  %v821 = vrcp.pop %v757
  %v822 = vrcp.pop %v758
  %v823 = vrcp.pop %v759
  %v824 = vrcp.pop %v760
  %v825 = vrcp.pop %v761
  %v826 = vrcp.pop %v762
  %v827 = vrcp.pop %v763
  %v828 = vrcp.pop %v764
  %v829 = vrcp.pop %v765
  %v830 = vmul.f32 %v351, %v766
  %v831 = vmul.f32 %v353, %v767
  %v832 = vmul.f32 %v356, %v768
  %v833 = vmul.f32 %v358, %v769
  %v834 = vmul.f32 %v361, %v770
  %v835 = vmul.f32 %v363, %v771
  %v836 = vmul.f32 %v366, %v772
  %v837 = vmul.f32 %v368, %v773
  %v838 = vmul.f32 %v371, %v774
  %v839 = vmul.f32 %v373, %v775
  %v840 = vmul.f32 %v376, %v776
  %v841 = vmul.f32 %v378, %v777
  %v842 = vmul.f32 %v381, %v778
  %v843 = vmul.f32 %v383, %v779
  %v844 = vmul.f32 %v386, %v780
  %v845 = vmul.f32 %v388, %v781
  %v846 = vmul.f32 %v391, %v782
  %v847 = vmul.f32 %v393, %v783
  %v848 = vmul.f32 %v396, %v784
  %v849 = vmul.f32 %v398, %v785
  %v850 = vmul.f32 %v401, %v786
  %v851 = vmul.f32 %v403, %v787
  %v852 = vmul.f32 %v406, %v788
  %v853 = vmul.f32 %v408, %v789
  %v854 = vmul.f32 %v411, %v790
  %v855 = vmul.f32 %v413, %v791
  %v856 = vmul.f32 %v416, %v792
  %v857 = vmul.f32 %v418, %v793
  %v858 = vmul.f32 %v421, %v794
  %v859 = vmul.f32 %v423, %v795
  %v860 = vmul.f32 %v426, %v796
  %v861 = vmul.f32 %v428, %v797
  %v862 = vmul.f32 %v431, %v798
  %v863 = vmul.f32 %v433, %v799
  %v864 = vmul.f32 %v436, %v800
  %v865 = vmul.f32 %v438, %v801
  %v866 = vmul.f32 %v441, %v802
  %v867 = vmul.f32 %v443, %v803
  %v868 = vmul.f32 %v446, %v804
  %v869 = vmul.f32 %v448, %v805
  %v870 = vmul.f32 %v451, %v806
  %v871 = vmul.f32 %v453, %v807
  %v872 = vmul.f32 %v456, %v808
  %v873 = vmul.f32 %v458, %v809
  %v874 = vmul.f32 %v461, %v810
  %v875 = vmul.f32 %v463, %v811
  %v876 = vmul.f32 %v466, %v812
  %v877 = vmul.f32 %v468, %v813
  %v878 = vmul.f32 %v471, %v814
  %v879 = vmul.f32 %v473, %v815
  %v880 = vmul.f32 %v476, %v816
  %v881 = vmul.f32 %v478, %v817
  %v882 = vmul.f32 %v481, %v818
  %v883 = vmul.f32 %v483, %v819
  %v884 = vmul.f32 %v486, %v820
  %v885 = vmul.f32 %v488, %v821
  %v886 = vmul.f32 %v491, %v822
  %v887 = vmul.f32 %v493, %v823
  %v888 = vmul.f32 %v496, %v824
  %v889 = vmul.f32 %v498, %v825
  %v890 = vmul.f32 %v501, %v826
  %v891 = vmul.f32 %v503, %v827
  %v892 = vmul.f32 %v506, %v828
  %v893 = vmul.f32 %v508, %v829
  %v894 = vlaneseq
  %v895 = vand.u32 %v894, 127
  %vm896 = vcmp.lt.s32.totalorder %v895, 16
  %v897 = vsel %vm896, %v830, 0.0
  %v898 = vsel %vm896, %v831, 0.0
  %v899 = vsel %vm896, %v832, 0.0
  %v900 = vsel %vm896, %v833, 0.0
  %v901 = vsel %vm896, %v834, 0.0
  %v902 = vsel %vm896, %v835, 0.0
  %v903 = vsel %vm896, %v836, 0.0
  %v904 = vsel %vm896, %v837, 0.0
  %v905 = vsel %vm896, %v838, 0.0
  %v906 = vsel %vm896, %v839, 0.0
  %v907 = vsel %vm896, %v840, 0.0
  %v908 = vsel %vm896, %v841, 0.0
  %v909 = vsel %vm896, %v842, 0.0
  %v910 = vsel %vm896, %v843, 0.0
  %v911 = vsel %vm896, %v844, 0.0
  %v912 = vsel %vm896, %v845, 0.0
  %v913 = vsel %vm896, %v846, 0.0
  %v914 = vsel %vm896, %v847, 0.0
  %v915 = vsel %vm896, %v848, 0.0
  %v916 = vsel %vm896, %v849, 0.0
  %v917 = vsel %vm896, %v850, 0.0
  %v918 = vsel %vm896, %v851, 0.0
  %v919 = vsel %vm896, %v852, 0.0
  %v920 = vsel %vm896, %v853, 0.0
  %v921 = vsel %vm896, %v854, 0.0
  %v922 = vsel %vm896, %v855, 0.0
  %v923 = vsel %vm896, %v856, 0.0
  %v924 = vsel %vm896, %v857, 0.0
  %v925 = vsel %vm896, %v858, 0.0
  %v926 = vsel %vm896, %v859, 0.0
  %v927 = vsel %vm896, %v860, 0.0
  %v928 = vsel %vm896, %v861, 0.0
  %v929 = vsel %vm896, %v862, 0.0
  %v930 = vsel %vm896, %v863, 0.0
  %v931 = vsel %vm896, %v864, 0.0
  %v932 = vsel %vm896, %v865, 0.0
  %v933 = vsel %vm896, %v866, 0.0
  %v934 = vsel %vm896, %v867, 0.0
  %v935 = vsel %vm896, %v868, 0.0
  %v936 = vsel %vm896, %v869, 0.0
  %v937 = vsel %vm896, %v870, 0.0
  %v938 = vsel %vm896, %v871, 0.0
  %v939 = vsel %vm896, %v872, 0.0
  %v940 = vsel %vm896, %v873, 0.0
  %v941 = vsel %vm896, %v874, 0.0
  %v942 = vsel %vm896, %v875, 0.0
  %v943 = vsel %vm896, %v876, 0.0
  %v944 = vsel %vm896, %v877, 0.0
  %v945 = vsel %vm896, %v878, 0.0
  %v946 = vsel %vm896, %v879, 0.0
  %v947 = vsel %vm896, %v880, 0.0
  %v948 = vsel %vm896, %v881, 0.0
  %v949 = vsel %vm896, %v882, 0.0
  %v950 = vsel %vm896, %v883, 0.0
  %v951 = vsel %vm896, %v884, 0.0
  %v952 = vsel %vm896, %v885, 0.0
  %v953 = vsel %vm896, %v886, 0.0
  %v954 = vsel %vm896, %v887, 0.0
  %v955 = vsel %vm896, %v888, 0.0
  %v956 = vsel %vm896, %v889, 0.0
  %v957 = vsel %vm896, %v890, 0.0
  %v958 = vsel %vm896, %v891, 0.0
  %v959 = vsel %vm896, %v892, 0.0
  %v960 = vsel %vm896, %v893, 0.0
  %v961 = vpack.c.bf16 %v897, %v897
  %v962 = vpack.c.bf16 %v898, %v898
  %v963 = vpack.c.bf16 %v899, %v899
  %v964 = vpack.c.bf16 %v900, %v900
  %v965 = vpack.c.bf16 %v901, %v901
  %v966 = vpack.c.bf16 %v902, %v902
  %v967 = vpack.c.bf16 %v903, %v903
  %v968 = vpack.c.bf16 %v904, %v904
  %v969 = vpack.c.bf16 %v905, %v905
  %v970 = vpack.c.bf16 %v906, %v906
  %v971 = vpack.c.bf16 %v907, %v907
  %v972 = vpack.c.bf16 %v908, %v908
  %v973 = vpack.c.bf16 %v909, %v909
  %v974 = vpack.c.bf16 %v910, %v910
  %v975 = vpack.c.bf16 %v911, %v911
  %v976 = vpack.c.bf16 %v912, %v912
  %v977 = vpack.c.bf16 %v913, %v913
  %v978 = vpack.c.bf16 %v914, %v914
  %v979 = vpack.c.bf16 %v915, %v915
  %v980 = vpack.c.bf16 %v916, %v916
  %v981 = vpack.c.bf16 %v917, %v917
  %v982 = vpack.c.bf16 %v918, %v918
  %v983 = vpack.c.bf16 %v919, %v919
  %v984 = vpack.c.bf16 %v920, %v920
  %v985 = vpack.c.bf16 %v921, %v921
  %v986 = vpack.c.bf16 %v922, %v922
  %v987 = vpack.c.bf16 %v923, %v923
  %v988 = vpack.c.bf16 %v924, %v924
  %v989 = vpack.c.bf16 %v925, %v925
  %v990 = vpack.c.bf16 %v926, %v926
  %v991 = vpack.c.bf16 %v927, %v927
  %v992 = vpack.c.bf16 %v928, %v928
  %v993 = vpack.c.bf16 %v929, %v929
  %v994 = vpack.c.bf16 %v930, %v930
  %v995 = vpack.c.bf16 %v931, %v931
  %v996 = vpack.c.bf16 %v932, %v932
  %v997 = vpack.c.bf16 %v933, %v933
  %v998 = vpack.c.bf16 %v934, %v934
  %v999 = vpack.c.bf16 %v935, %v935
  %v1000 = vpack.c.bf16 %v936, %v936
  %v1001 = vpack.c.bf16 %v937, %v937
  %v1002 = vpack.c.bf16 %v938, %v938
  %v1003 = vpack.c.bf16 %v939, %v939
  %v1004 = vpack.c.bf16 %v940, %v940
  %v1005 = vpack.c.bf16 %v941, %v941
  %v1006 = vpack.c.bf16 %v942, %v942
  %v1007 = vpack.c.bf16 %v943, %v943
  %v1008 = vpack.c.bf16 %v944, %v944
  %v1009 = vpack.c.bf16 %v945, %v945
  %v1010 = vpack.c.bf16 %v946, %v946
  %v1011 = vpack.c.bf16 %v947, %v947
  %v1012 = vpack.c.bf16 %v948, %v948
  %v1013 = vpack.c.bf16 %v949, %v949
  %v1014 = vpack.c.bf16 %v950, %v950
  %v1015 = vpack.c.bf16 %v951, %v951
  %v1016 = vpack.c.bf16 %v952, %v952
  %v1017 = vpack.c.bf16 %v953, %v953
  %v1018 = vpack.c.bf16 %v954, %v954
  %v1019 = vpack.c.bf16 %v955, %v955
  %v1020 = vpack.c.bf16 %v956, %v956
  %v1021 = vpack.c.bf16 %v957, %v957
  %v1022 = vpack.c.bf16 %v958, %v958
  %v1023 = vpack.c.bf16 %v959, %v959
  %v1024 = vpack.c.bf16 %v960, %v960
  %1025 = vst [vmem:[%s4] sm:$0xf] %v961
  %1026 = vst [vmem:[%s4 + $0x4] sm:$0xf] %v962
  %1027 = vst [vmem:[%s4 + $0x8] sm:$0xf] %v963
  %1028 = vst [vmem:[%s4 + $0xc] sm:$0xf] %v964
  %1029 = vst [vmem:[%s4 + $0x10] sm:$0xf] %v965
  %1030 = vst [vmem:[%s4 + $0x14] sm:$0xf] %v966
  %1031 = vst [vmem:[%s4 + $0x18] sm:$0xf] %v967
  %1032 = vst [vmem:[%s4 + $0x1c] sm:$0xf] %v968
  %1033 = vst [vmem:[%s4 + $0x20] sm:$0xf] %v969
  %1034 = vst [vmem:[%s4 + $0x24] sm:$0xf] %v970
  %1035 = vst [vmem:[%s4 + $0x28] sm:$0xf] %v971
  %1036 = vst [vmem:[%s4 + $0x2c] sm:$0xf] %v972
  %1037 = vst [vmem:[%s4 + $0x30] sm:$0xf] %v973
  %1038 = vst [vmem:[%s4 + $0x34] sm:$0xf] %v974
  %1039 = vst [vmem:[%s4 + $0x38] sm:$0xf] %v975
  %1040 = vst [vmem:[%s4 + $0x3c] sm:$0xf] %v976
  %1041 = vst [vmem:[%s4 + $0x40] sm:$0xf] %v977
  %1042 = vst [vmem:[%s4 + $0x44] sm:$0xf] %v978
  %1043 = vst [vmem:[%s4 + $0x48] sm:$0xf] %v979
  %1044 = vst [vmem:[%s4 + $0x4c] sm:$0xf] %v980
  %1045 = vst [vmem:[%s4 + $0x50] sm:$0xf] %v981
  %1046 = vst [vmem:[%s4 + $0x54] sm:$0xf] %v982
  %1047 = vst [vmem:[%s4 + $0x58] sm:$0xf] %v983
  %1048 = vst [vmem:[%s4 + $0x5c] sm:$0xf] %v984
  %1049 = vst [vmem:[%s4 + $0x60] sm:$0xf] %v985
  %1050 = vst [vmem:[%s4 + $0x64] sm:$0xf] %v986
  %1051 = vst [vmem:[%s4 + $0x68] sm:$0xf] %v987
  %1052 = vst [vmem:[%s4 + $0x6c] sm:$0xf] %v988
  %1053 = vst [vmem:[%s4 + $0x70] sm:$0xf] %v989
  %1054 = vst [vmem:[%s4 + $0x74] sm:$0xf] %v990
  %1055 = vst [vmem:[%s4 + $0x78] sm:$0xf] %v991
  %1056 = vst [vmem:[%s4 + $0x7c] sm:$0xf] %v992
  %1057 = vst [vmem:[%s4 + $0x80] sm:$0xf] %v993
  %1058 = vst [vmem:[%s4 + $0x84] sm:$0xf] %v994
  %1059 = vst [vmem:[%s4 + $0x88] sm:$0xf] %v995
  %1060 = vst [vmem:[%s4 + $0x8c] sm:$0xf] %v996
  %1061 = vst [vmem:[%s4 + $0x90] sm:$0xf] %v997
  %1062 = vst [vmem:[%s4 + $0x94] sm:$0xf] %v998
  %1063 = vst [vmem:[%s4 + $0x98] sm:$0xf] %v999
  %1064 = vst [vmem:[%s4 + $0x9c] sm:$0xf] %v1000
  %1065 = vst [vmem:[%s4 + $0xa0] sm:$0xf] %v1001
  %1066 = vst [vmem:[%s4 + $0xa4] sm:$0xf] %v1002
  %1067 = vst [vmem:[%s4 + $0xa8] sm:$0xf] %v1003
  %1068 = vst [vmem:[%s4 + $0xac] sm:$0xf] %v1004
  %1069 = vst [vmem:[%s4 + $0xb0] sm:$0xf] %v1005
  %1070 = vst [vmem:[%s4 + $0xb4] sm:$0xf] %v1006
  %1071 = vst [vmem:[%s4 + $0xb8] sm:$0xf] %v1007
  %1072 = vst [vmem:[%s4 + $0xbc] sm:$0xf] %v1008
  %1073 = vst [vmem:[%s4 + $0xc0] sm:$0xf] %v1009
  %1074 = vst [vmem:[%s4 + $0xc4] sm:$0xf] %v1010
  %1075 = vst [vmem:[%s4 + $0xc8] sm:$0xf] %v1011
  %1076 = vst [vmem:[%s4 + $0xcc] sm:$0xf] %v1012
  %1077 = vst [vmem:[%s4 + $0xd0] sm:$0xf] %v1013
  %1078 = vst [vmem:[%s4 + $0xd4] sm:$0xf] %v1014
  %1079 = vst [vmem:[%s4 + $0xd8] sm:$0xf] %v1015
  %1080 = vst [vmem:[%s4 + $0xdc] sm:$0xf] %v1016
  %1081 = vst [vmem:[%s4 + $0xe0] sm:$0xf] %v1017
  %1082 = vst [vmem:[%s4 + $0xe4] sm:$0xf] %v1018
  %1083 = vst [vmem:[%s4 + $0xe8] sm:$0xf] %v1019
  %1084 = vst [vmem:[%s4 + $0xec] sm:$0xf] %v1020
  %1085 = vst [vmem:[%s4 + $0xf0] sm:$0xf] %v1021
  %1086 = vst [vmem:[%s4 + $0xf4] sm:$0xf] %v1022
  %1087 = vst [vmem:[%s4 + $0xf8] sm:$0xf] %v1023
  %1088 = vst [vmem:[%s4 + $0xfc] sm:$0xf] %v1024
  %v1089 = vld [vmem:[%s1] sm:$0xf]
  %v1090 = vld [vmem:[%s1 + $0x4] sm:$0xf]
  %v1091 = vld [vmem:[%s1 + $0x8] sm:$0xf]
  %v1092 = vld [vmem:[%s1 + $0xc] sm:$0xf]
  %v1093 = vld [vmem:[%s1 + $0x10] sm:$0xf]
  %v1094 = vld [vmem:[%s1 + $0x14] sm:$0xf]
  %v1095 = vld [vmem:[%s1 + $0x18] sm:$0xf]
  %v1096 = vld [vmem:[%s1 + $0x1c] sm:$0xf]
  %v1097 = vld [vmem:[%s1 + $0x20] sm:$0xf]
  %v1098 = vld [vmem:[%s1 + $0x24] sm:$0xf]
  %v1099 = vld [vmem:[%s1 + $0x28] sm:$0xf]
  %v1100 = vld [vmem:[%s1 + $0x2c] sm:$0xf]
  %v1101 = vld [vmem:[%s1 + $0x30] sm:$0xf]
  %v1102 = vld [vmem:[%s1 + $0x34] sm:$0xf]
  %v1103 = vld [vmem:[%s1 + $0x38] sm:$0xf]
  %v1104 = vld [vmem:[%s1 + $0x3c] sm:$0xf]
  %v1105 = vld [vmem:[%s1 + $0x40] sm:$0xf]
  %v1106 = vld [vmem:[%s1 + $0x44] sm:$0xf]
  %v1107 = vld [vmem:[%s1 + $0x48] sm:$0xf]
  %v1108 = vld [vmem:[%s1 + $0x4c] sm:$0xf]
  %v1109 = vld [vmem:[%s1 + $0x50] sm:$0xf]
  %v1110 = vld [vmem:[%s1 + $0x54] sm:$0xf]
  %v1111 = vld [vmem:[%s1 + $0x58] sm:$0xf]
  %v1112 = vld [vmem:[%s1 + $0x5c] sm:$0xf]
  %v1113 = vld [vmem:[%s1 + $0x60] sm:$0xf]
  %v1114 = vld [vmem:[%s1 + $0x64] sm:$0xf]
  %v1115 = vld [vmem:[%s1 + $0x68] sm:$0xf]
  %v1116 = vld [vmem:[%s1 + $0x6c] sm:$0xf]
  %v1117 = vld [vmem:[%s1 + $0x70] sm:$0xf]
  %v1118 = vld [vmem:[%s1 + $0x74] sm:$0xf]
  %v1119 = vld [vmem:[%s1 + $0x78] sm:$0xf]
  %v1120 = vld [vmem:[%s1 + $0x7c] sm:$0xf]
  %v1121 = vld [vmem:[%s1 + $0x80] sm:$0xf]
  %v1122 = vld [vmem:[%s1 + $0x84] sm:$0xf]
  %v1123 = vld [vmem:[%s1 + $0x88] sm:$0xf]
  %v1124 = vld [vmem:[%s1 + $0x8c] sm:$0xf]
  %v1125 = vld [vmem:[%s1 + $0x90] sm:$0xf]
  %v1126 = vld [vmem:[%s1 + $0x94] sm:$0xf]
  %v1127 = vld [vmem:[%s1 + $0x98] sm:$0xf]
  %v1128 = vld [vmem:[%s1 + $0x9c] sm:$0xf]
  %v1129 = vld [vmem:[%s1 + $0xa0] sm:$0xf]
  %v1130 = vld [vmem:[%s1 + $0xa4] sm:$0xf]
  %v1131 = vld [vmem:[%s1 + $0xa8] sm:$0xf]
  %v1132 = vld [vmem:[%s1 + $0xac] sm:$0xf]
  %v1133 = vld [vmem:[%s1 + $0xb0] sm:$0xf]
  %v1134 = vld [vmem:[%s1 + $0xb4] sm:$0xf]
  %v1135 = vld [vmem:[%s1 + $0xb8] sm:$0xf]
  %v1136 = vld [vmem:[%s1 + $0xbc] sm:$0xf]
  %v1137 = vld [vmem:[%s1 + $0xc0] sm:$0xf]
  %v1138 = vld [vmem:[%s1 + $0xc4] sm:$0xf]
  %v1139 = vld [vmem:[%s1 + $0xc8] sm:$0xf]
  %v1140 = vld [vmem:[%s1 + $0xcc] sm:$0xf]
  %v1141 = vld [vmem:[%s1 + $0xd0] sm:$0xf]
  %v1142 = vld [vmem:[%s1 + $0xd4] sm:$0xf]
  %v1143 = vld [vmem:[%s1 + $0xd8] sm:$0xf]
  %v1144 = vld [vmem:[%s1 + $0xdc] sm:$0xf]
  %v1145 = vld [vmem:[%s1 + $0xe0] sm:$0xf]
  %v1146 = vld [vmem:[%s1 + $0xe4] sm:$0xf]
  %v1147 = vld [vmem:[%s1 + $0xe8] sm:$0xf]
  %v1148 = vld [vmem:[%s1 + $0xec] sm:$0xf]
  %v1149 = vld [vmem:[%s1 + $0xf0] sm:$0xf]
  %v1150 = vld [vmem:[%s1 + $0xf4] sm:$0xf]
  %v1151 = vld [vmem:[%s1 + $0xf8] sm:$0xf]
  %v1152 = vld [vmem:[%s1 + $0xfc] sm:$0xf]
  %s1153 = scalar_lea.vmem %s2, 64
  %v1154 = vld [vmem:[%s1153] sm:$0xf]
  %v1155 = vld [vmem:[%s1153 + $0x4] sm:$0xf]
  %v1156 = vld [vmem:[%s1153 + $0x8] sm:$0xf]
  %v1157 = vld [vmem:[%s1153 + $0xc] sm:$0xf]
  %v1158 = vld [vmem:[%s1153 + $0x10] sm:$0xf]
  %v1159 = vld [vmem:[%s1153 + $0x14] sm:$0xf]
  %v1160 = vld [vmem:[%s1153 + $0x18] sm:$0xf]
  %v1161 = vld [vmem:[%s1153 + $0x1c] sm:$0xf]
  %v1162 = vld [vmem:[%s1153 + $0x20] sm:$0xf]
  %v1163 = vld [vmem:[%s1153 + $0x24] sm:$0xf]
  %v1164 = vld [vmem:[%s1153 + $0x28] sm:$0xf]
  %v1165 = vld [vmem:[%s1153 + $0x2c] sm:$0xf]
  %v1166 = vld [vmem:[%s1153 + $0x30] sm:$0xf]
  %v1167 = vld [vmem:[%s1153 + $0x34] sm:$0xf]
  %v1168 = vld [vmem:[%s1153 + $0x38] sm:$0xf]
  %v1169 = vld [vmem:[%s1153 + $0x3c] sm:$0xf]
  %v1234 = vunpack.c.l.b16 %v1089
  %v1235 = vunpack.c.l.b16 %v1090
  %v1236 = vunpack.c.l.b16 %v1091
  %v1237 = vunpack.c.l.b16 %v1092
  %v1238 = vunpack.c.l.b16 %v1093
  %v1239 = vunpack.c.l.b16 %v1094
  %v1240 = vunpack.c.l.b16 %v1095
  %v1241 = vunpack.c.l.b16 %v1096
  %v1242 = vunpack.c.l.b16 %v1097
  %v1243 = vunpack.c.l.b16 %v1098
  %v1244 = vunpack.c.l.b16 %v1099
  %v1245 = vunpack.c.l.b16 %v1100
  %v1246 = vunpack.c.l.b16 %v1101
  %v1247 = vunpack.c.l.b16 %v1102
  %v1248 = vunpack.c.l.b16 %v1103
  %v1249 = vunpack.c.l.b16 %v1104
  %v1250 = vunpack.c.l.b16 %v1105
  %v1251 = vunpack.c.l.b16 %v1106
  %v1252 = vunpack.c.l.b16 %v1107
  %v1253 = vunpack.c.l.b16 %v1108
  %v1254 = vunpack.c.l.b16 %v1109
  %v1255 = vunpack.c.l.b16 %v1110
  %v1256 = vunpack.c.l.b16 %v1111
  %v1257 = vunpack.c.l.b16 %v1112
  %v1258 = vunpack.c.l.b16 %v1113
  %v1259 = vunpack.c.l.b16 %v1114
  %v1260 = vunpack.c.l.b16 %v1115
  %v1261 = vunpack.c.l.b16 %v1116
  %v1262 = vunpack.c.l.b16 %v1117
  %v1263 = vunpack.c.l.b16 %v1118
  %v1264 = vunpack.c.l.b16 %v1119
  %v1265 = vunpack.c.l.b16 %v1120
  %v1266 = vunpack.c.l.b16 %v1121
  %v1267 = vunpack.c.l.b16 %v1122
  %v1268 = vunpack.c.l.b16 %v1123
  %v1269 = vunpack.c.l.b16 %v1124
  %v1270 = vunpack.c.l.b16 %v1125
  %v1271 = vunpack.c.l.b16 %v1126
  %v1272 = vunpack.c.l.b16 %v1127
  %v1273 = vunpack.c.l.b16 %v1128
  %v1274 = vunpack.c.l.b16 %v1129
  %v1275 = vunpack.c.l.b16 %v1130
  %v1276 = vunpack.c.l.b16 %v1131
  %v1277 = vunpack.c.l.b16 %v1132
  %v1278 = vunpack.c.l.b16 %v1133
  %v1279 = vunpack.c.l.b16 %v1134
  %v1280 = vunpack.c.l.b16 %v1135
  %v1281 = vunpack.c.l.b16 %v1136
  %v1282 = vunpack.c.l.b16 %v1137
  %v1283 = vunpack.c.l.b16 %v1138
  %v1284 = vunpack.c.l.b16 %v1139
  %v1285 = vunpack.c.l.b16 %v1140
  %v1286 = vunpack.c.l.b16 %v1141
  %v1287 = vunpack.c.l.b16 %v1142
  %v1288 = vunpack.c.l.b16 %v1143
  %v1289 = vunpack.c.l.b16 %v1144
  %v1290 = vunpack.c.l.b16 %v1145
  %v1291 = vunpack.c.l.b16 %v1146
  %v1292 = vunpack.c.l.b16 %v1147
  %v1293 = vunpack.c.l.b16 %v1148
  %v1294 = vunpack.c.l.b16 %v1149
  %v1295 = vunpack.c.l.b16 %v1150
  %v1296 = vunpack.c.l.b16 %v1151
  %v1297 = vunpack.c.l.b16 %v1152
  %v1298 = vpack.c.b16 %v1235, %v1234
  %v1299 = vpack.c.b16 %v1237, %v1236
  %v1300 = vpack.c.b16 %v1239, %v1238
  %v1301 = vpack.c.b16 %v1241, %v1240
  %v1302 = vpack.c.b16 %v1243, %v1242
  %v1303 = vpack.c.b16 %v1245, %v1244
  %v1304 = vpack.c.b16 %v1247, %v1246
  %v1305 = vpack.c.b16 %v1249, %v1248
  %v1306 = vpack.c.b16 %v1251, %v1250
  %v1307 = vpack.c.b16 %v1253, %v1252
  %v1308 = vpack.c.b16 %v1255, %v1254
  %v1309 = vpack.c.b16 %v1257, %v1256
  %v1310 = vpack.c.b16 %v1259, %v1258
  %v1311 = vpack.c.b16 %v1261, %v1260
  %v1312 = vpack.c.b16 %v1263, %v1262
  %v1313 = vpack.c.b16 %v1265, %v1264
  %v1314 = vpack.c.b16 %v1267, %v1266
  %v1315 = vpack.c.b16 %v1269, %v1268
  %v1316 = vpack.c.b16 %v1271, %v1270
  %v1317 = vpack.c.b16 %v1273, %v1272
  %v1318 = vpack.c.b16 %v1275, %v1274
  %v1319 = vpack.c.b16 %v1277, %v1276
  %v1320 = vpack.c.b16 %v1279, %v1278
  %v1321 = vpack.c.b16 %v1281, %v1280
  %v1322 = vpack.c.b16 %v1283, %v1282
  %v1323 = vpack.c.b16 %v1285, %v1284
  %v1324 = vpack.c.b16 %v1287, %v1286
  %v1325 = vpack.c.b16 %v1289, %v1288
  %v1326 = vpack.c.b16 %v1291, %v1290
  %v1327 = vpack.c.b16 %v1293, %v1292
  %v1328 = vpack.c.b16 %v1295, %v1294
  %v1329 = vpack.c.b16 %v1297, %v1296
  %v1378 = vunpack.c.l.b16 %v1154
  %v1379 = vunpack.c.l.b16 %v1155
  %v1380 = vunpack.c.l.b16 %v1156
  %v1381 = vunpack.c.l.b16 %v1157
  %v1382 = vunpack.c.l.b16 %v1158
  %v1383 = vunpack.c.l.b16 %v1159
  %v1384 = vunpack.c.l.b16 %v1160
  %v1385 = vunpack.c.l.b16 %v1161
  %v1386 = vunpack.c.l.b16 %v1162
  %v1387 = vunpack.c.l.b16 %v1163
  %v1388 = vunpack.c.l.b16 %v1164
  %v1389 = vunpack.c.l.b16 %v1165
  %v1390 = vunpack.c.l.b16 %v1166
  %v1391 = vunpack.c.l.b16 %v1167
  %v1392 = vunpack.c.l.b16 %v1168
  %v1393 = vunpack.c.l.b16 %v1169
  %v1394 = vpack.c.b16 %v1379, %v1378
  %v1395 = vpack.c.b16 %v1381, %v1380
  %v1396 = vpack.c.b16 %v1383, %v1382
  %v1397 = vpack.c.b16 %v1385, %v1384
  %v1398 = vpack.c.b16 %v1387, %v1386
  %v1399 = vpack.c.b16 %v1389, %v1388
  %v1400 = vpack.c.b16 %v1391, %v1390
  %v1401 = vpack.c.b16 %v1393, %v1392
  %1410 = vmatpush.bf16.msra.mxu0 %v1401
  %1411 = vmatpush.bf16.msra.mxu0 %v1400
  %1412 = vmatpush.bf16.msra.mxu0 %v1399
  %1413 = vmatpush.bf16.msra.mxu0 %v1398
  %1414 = vmatpush.bf16.msra.mxu0 %v1397
  %1415 = vmatpush.bf16.msra.mxu0 %v1396
  %1416 = vmatpush.bf16.msra.mxu0 %v1395
  %1417 = vmatpush.bf16.msra.mxu0 %v1394
  %1418 = vmatmul.bf16.gmra.mxu0 %v1298
  %v1419 = vpop.f32.mrf.mxu0
  %v1420 = vadd.f32 0.0, %v1419
  %v1421 = vpop.f32.mrf.mxu0
  %v1422 = vadd.f32 0.0, %v1421
  %1423 = vmatmul.bf16.gmra.mxu0 %v1299
  %v1424 = vpop.f32.mrf.mxu0
  %v1425 = vadd.f32 0.0, %v1424
  %v1426 = vpop.f32.mrf.mxu0
  %v1427 = vadd.f32 0.0, %v1426
  %1428 = vmatmul.bf16.gmra.mxu0 %v1300
  %v1429 = vpop.f32.mrf.mxu0
  %v1430 = vadd.f32 0.0, %v1429
  %v1431 = vpop.f32.mrf.mxu0
  %v1432 = vadd.f32 0.0, %v1431
  %1433 = vmatmul.bf16.gmra.mxu0 %v1301
  %v1434 = vpop.f32.mrf.mxu0
  %v1435 = vadd.f32 0.0, %v1434
  %v1436 = vpop.f32.mrf.mxu0
  %v1437 = vadd.f32 0.0, %v1436
  %1438 = vmatmul.bf16.gmra.mxu0 %v1302
  %v1439 = vpop.f32.mrf.mxu0
  %v1440 = vadd.f32 0.0, %v1439
  %v1441 = vpop.f32.mrf.mxu0
  %v1442 = vadd.f32 0.0, %v1441
  %1443 = vmatmul.bf16.gmra.mxu0 %v1303
  %v1444 = vpop.f32.mrf.mxu0
  %v1445 = vadd.f32 0.0, %v1444
  %v1446 = vpop.f32.mrf.mxu0
  %v1447 = vadd.f32 0.0, %v1446
  %1448 = vmatmul.bf16.gmra.mxu0 %v1304
  %v1449 = vpop.f32.mrf.mxu0
  %v1450 = vadd.f32 0.0, %v1449
  %v1451 = vpop.f32.mrf.mxu0
  %v1452 = vadd.f32 0.0, %v1451
  %1453 = vmatmul.bf16.gmra.mxu0 %v1305
  %v1454 = vpop.f32.mrf.mxu0
  %v1455 = vadd.f32 0.0, %v1454
  %v1456 = vpop.f32.mrf.mxu0
  %v1457 = vadd.f32 0.0, %v1456
  %1458 = vmatmul.bf16.gmra.mxu0 %v1306
  %v1459 = vpop.f32.mrf.mxu0
  %v1460 = vadd.f32 0.0, %v1459
  %v1461 = vpop.f32.mrf.mxu0
  %v1462 = vadd.f32 0.0, %v1461
  %1463 = vmatmul.bf16.gmra.mxu0 %v1307
  %v1464 = vpop.f32.mrf.mxu0
  %v1465 = vadd.f32 0.0, %v1464
  %v1466 = vpop.f32.mrf.mxu0
  %v1467 = vadd.f32 0.0, %v1466
  %1468 = vmatmul.bf16.gmra.mxu0 %v1308
  %v1469 = vpop.f32.mrf.mxu0
  %v1470 = vadd.f32 0.0, %v1469
  %v1471 = vpop.f32.mrf.mxu0
  %v1472 = vadd.f32 0.0, %v1471
  %1473 = vmatmul.bf16.gmra.mxu0 %v1309
  %v1474 = vpop.f32.mrf.mxu0
  %v1475 = vadd.f32 0.0, %v1474
  %v1476 = vpop.f32.mrf.mxu0
  %v1477 = vadd.f32 0.0, %v1476
  %1478 = vmatmul.bf16.gmra.mxu0 %v1310
  %v1479 = vpop.f32.mrf.mxu0
  %v1480 = vadd.f32 0.0, %v1479
  %v1481 = vpop.f32.mrf.mxu0
  %v1482 = vadd.f32 0.0, %v1481
  %1483 = vmatmul.bf16.gmra.mxu0 %v1311
  %v1484 = vpop.f32.mrf.mxu0
  %v1485 = vadd.f32 0.0, %v1484
  %v1486 = vpop.f32.mrf.mxu0
  %v1487 = vadd.f32 0.0, %v1486
  %1488 = vmatmul.bf16.gmra.mxu0 %v1312
  %v1489 = vpop.f32.mrf.mxu0
  %v1490 = vadd.f32 0.0, %v1489
  %v1491 = vpop.f32.mrf.mxu0
  %v1492 = vadd.f32 0.0, %v1491
  %1493 = vmatmul.bf16.gmra.mxu0 %v1313
  %v1494 = vpop.f32.mrf.mxu0
  %v1495 = vadd.f32 0.0, %v1494
  %v1496 = vpop.f32.mrf.mxu0
  %v1497 = vadd.f32 0.0, %v1496
  %1498 = vmatmul.bf16.gmra.mxu0 %v1314
  %v1499 = vpop.f32.mrf.mxu0
  %v1500 = vadd.f32 0.0, %v1499
  %v1501 = vpop.f32.mrf.mxu0
  %v1502 = vadd.f32 0.0, %v1501
  %1503 = vmatmul.bf16.gmra.mxu0 %v1315
  %v1504 = vpop.f32.mrf.mxu0
  %v1505 = vadd.f32 0.0, %v1504
  %v1506 = vpop.f32.mrf.mxu0
  %v1507 = vadd.f32 0.0, %v1506
  %1508 = vmatmul.bf16.gmra.mxu0 %v1316
  %v1509 = vpop.f32.mrf.mxu0
  %v1510 = vadd.f32 0.0, %v1509
  %v1511 = vpop.f32.mrf.mxu0
  %v1512 = vadd.f32 0.0, %v1511
  %1513 = vmatmul.bf16.gmra.mxu0 %v1317
  %v1514 = vpop.f32.mrf.mxu0
  %v1515 = vadd.f32 0.0, %v1514
  %v1516 = vpop.f32.mrf.mxu0
  %v1517 = vadd.f32 0.0, %v1516
  %1518 = vmatmul.bf16.gmra.mxu0 %v1318
  %v1519 = vpop.f32.mrf.mxu0
  %v1520 = vadd.f32 0.0, %v1519
  %v1521 = vpop.f32.mrf.mxu0
  %v1522 = vadd.f32 0.0, %v1521
  %1523 = vmatmul.bf16.gmra.mxu0 %v1319
  %v1524 = vpop.f32.mrf.mxu0
  %v1525 = vadd.f32 0.0, %v1524
  %v1526 = vpop.f32.mrf.mxu0
  %v1527 = vadd.f32 0.0, %v1526
  %1528 = vmatmul.bf16.gmra.mxu0 %v1320
  %v1529 = vpop.f32.mrf.mxu0
  %v1530 = vadd.f32 0.0, %v1529
  %v1531 = vpop.f32.mrf.mxu0
  %v1532 = vadd.f32 0.0, %v1531
  %1533 = vmatmul.bf16.gmra.mxu0 %v1321
  %v1534 = vpop.f32.mrf.mxu0
  %v1535 = vadd.f32 0.0, %v1534
  %v1536 = vpop.f32.mrf.mxu0
  %v1537 = vadd.f32 0.0, %v1536
  %1538 = vmatmul.bf16.gmra.mxu0 %v1322
  %v1539 = vpop.f32.mrf.mxu0
  %v1540 = vadd.f32 0.0, %v1539
  %v1541 = vpop.f32.mrf.mxu0
  %v1542 = vadd.f32 0.0, %v1541
  %1543 = vmatmul.bf16.gmra.mxu0 %v1323
  %v1544 = vpop.f32.mrf.mxu0
  %v1545 = vadd.f32 0.0, %v1544
  %v1546 = vpop.f32.mrf.mxu0
  %v1547 = vadd.f32 0.0, %v1546
  %1548 = vmatmul.bf16.gmra.mxu0 %v1324
  %v1549 = vpop.f32.mrf.mxu0
  %v1550 = vadd.f32 0.0, %v1549
  %v1551 = vpop.f32.mrf.mxu0
  %v1552 = vadd.f32 0.0, %v1551
  %1553 = vmatmul.bf16.gmra.mxu0 %v1325
  %v1554 = vpop.f32.mrf.mxu0
  %v1555 = vadd.f32 0.0, %v1554
  %v1556 = vpop.f32.mrf.mxu0
  %v1557 = vadd.f32 0.0, %v1556
  %1558 = vmatmul.bf16.gmra.mxu0 %v1326
  %v1559 = vpop.f32.mrf.mxu0
  %v1560 = vadd.f32 0.0, %v1559
  %v1561 = vpop.f32.mrf.mxu0
  %v1562 = vadd.f32 0.0, %v1561
  %1563 = vmatmul.bf16.gmra.mxu0 %v1327
  %v1564 = vpop.f32.mrf.mxu0
  %v1565 = vadd.f32 0.0, %v1564
  %v1566 = vpop.f32.mrf.mxu0
  %v1567 = vadd.f32 0.0, %v1566
  %1568 = vmatmul.bf16.gmra.mxu0 %v1328
  %v1569 = vpop.f32.mrf.mxu0
  %v1570 = vadd.f32 0.0, %v1569
  %v1571 = vpop.f32.mrf.mxu0
  %v1572 = vadd.f32 0.0, %v1571
  %1573 = vmatmul.bf16.gmra.mxu0 %v1329
  %v1574 = vpop.f32.mrf.mxu0
  %v1575 = vadd.f32 0.0, %v1574
  %v1576 = vpop.f32.mrf.mxu0
  %v1577 = vadd.f32 0.0, %v1576
  %1578 = vdwg.mxu0
  %v1579 = vmul.f32 %v830, %v1420
  %v1580 = vmul.f32 %v831, %v1422
  %v1581 = vmul.f32 %v832, %v1425
  %v1582 = vmul.f32 %v833, %v1427
  %v1583 = vmul.f32 %v834, %v1430
  %v1584 = vmul.f32 %v835, %v1432
  %v1585 = vmul.f32 %v836, %v1435
  %v1586 = vmul.f32 %v837, %v1437
  %v1587 = vmul.f32 %v838, %v1440
  %v1588 = vmul.f32 %v839, %v1442
  %v1589 = vmul.f32 %v840, %v1445
  %v1590 = vmul.f32 %v841, %v1447
  %v1591 = vmul.f32 %v842, %v1450
  %v1592 = vmul.f32 %v843, %v1452
  %v1593 = vmul.f32 %v844, %v1455
  %v1594 = vmul.f32 %v845, %v1457
  %v1595 = vmul.f32 %v846, %v1460
  %v1596 = vmul.f32 %v847, %v1462
  %v1597 = vmul.f32 %v848, %v1465
  %v1598 = vmul.f32 %v849, %v1467
  %v1599 = vmul.f32 %v850, %v1470
  %v1600 = vmul.f32 %v851, %v1472
  %v1601 = vmul.f32 %v852, %v1475
  %v1602 = vmul.f32 %v853, %v1477
  %v1603 = vmul.f32 %v854, %v1480
  %v1604 = vmul.f32 %v855, %v1482
  %v1605 = vmul.f32 %v856, %v1485
  %v1606 = vmul.f32 %v857, %v1487
  %v1607 = vmul.f32 %v858, %v1490
  %v1608 = vmul.f32 %v859, %v1492
  %v1609 = vmul.f32 %v860, %v1495
  %v1610 = vmul.f32 %v861, %v1497
  %v1611 = vmul.f32 %v862, %v1500
  %v1612 = vmul.f32 %v863, %v1502
  %v1613 = vmul.f32 %v864, %v1505
  %v1614 = vmul.f32 %v865, %v1507
  %v1615 = vmul.f32 %v866, %v1510
  %v1616 = vmul.f32 %v867, %v1512
  %v1617 = vmul.f32 %v868, %v1515
  %v1618 = vmul.f32 %v869, %v1517
  %v1619 = vmul.f32 %v870, %v1520
  %v1620 = vmul.f32 %v871, %v1522
  %v1621 = vmul.f32 %v872, %v1525
  %v1622 = vmul.f32 %v873, %v1527
  %v1623 = vmul.f32 %v874, %v1530
  %v1624 = vmul.f32 %v875, %v1532
  %v1625 = vmul.f32 %v876, %v1535
  %v1626 = vmul.f32 %v877, %v1537
  %v1627 = vmul.f32 %v878, %v1540
  %v1628 = vmul.f32 %v879, %v1542
  %v1629 = vmul.f32 %v880, %v1545
  %v1630 = vmul.f32 %v881, %v1547
  %v1631 = vmul.f32 %v882, %v1550
  %v1632 = vmul.f32 %v883, %v1552
  %v1633 = vmul.f32 %v884, %v1555
  %v1634 = vmul.f32 %v885, %v1557
  %v1635 = vmul.f32 %v886, %v1560
  %v1636 = vmul.f32 %v887, %v1562
  %v1637 = vmul.f32 %v888, %v1565
  %v1638 = vmul.f32 %v889, %v1567
  %v1639 = vmul.f32 %v890, %v1570
  %v1640 = vmul.f32 %v891, %v1572
  %v1641 = vmul.f32 %v892, %v1575
  %v1642 = vmul.f32 %v893, %v1577
  %s1643 = scalar_lea.vmem %s2, 128
  %v1644 = vld [vmem:[%s1643] sm:$0xf]
  %v1645 = vld [vmem:[%s1643 + $0x4] sm:$0xf]
  %v1646 = vld [vmem:[%s1643 + $0x8] sm:$0xf]
  %v1647 = vld [vmem:[%s1643 + $0xc] sm:$0xf]
  %v1648 = vld [vmem:[%s1643 + $0x10] sm:$0xf]
  %v1649 = vld [vmem:[%s1643 + $0x14] sm:$0xf]
  %v1650 = vld [vmem:[%s1643 + $0x18] sm:$0xf]
  %v1651 = vld [vmem:[%s1643 + $0x1c] sm:$0xf]
  %v1652 = vld [vmem:[%s1643 + $0x20] sm:$0xf]
  %v1653 = vld [vmem:[%s1643 + $0x24] sm:$0xf]
  %v1654 = vld [vmem:[%s1643 + $0x28] sm:$0xf]
  %v1655 = vld [vmem:[%s1643 + $0x2c] sm:$0xf]
  %v1656 = vld [vmem:[%s1643 + $0x30] sm:$0xf]
  %v1657 = vld [vmem:[%s1643 + $0x34] sm:$0xf]
  %v1658 = vld [vmem:[%s1643 + $0x38] sm:$0xf]
  %v1659 = vld [vmem:[%s1643 + $0x3c] sm:$0xf]
  %v1660 = vpack.c.bf16 %v1580, %v1579
  %v1661 = vpack.c.bf16 %v1582, %v1581
  %v1662 = vpack.c.bf16 %v1584, %v1583
  %v1663 = vpack.c.bf16 %v1586, %v1585
  %v1664 = vpack.c.bf16 %v1588, %v1587
  %v1665 = vpack.c.bf16 %v1590, %v1589
  %v1666 = vpack.c.bf16 %v1592, %v1591
  %v1667 = vpack.c.bf16 %v1594, %v1593
  %v1668 = vpack.c.bf16 %v1596, %v1595
  %v1669 = vpack.c.bf16 %v1598, %v1597
  %v1670 = vpack.c.bf16 %v1600, %v1599
  %v1671 = vpack.c.bf16 %v1602, %v1601
  %v1672 = vpack.c.bf16 %v1604, %v1603
  %v1673 = vpack.c.bf16 %v1606, %v1605
  %v1674 = vpack.c.bf16 %v1608, %v1607
  %v1675 = vpack.c.bf16 %v1610, %v1609
  %v1676 = vpack.c.bf16 %v1612, %v1611
  %v1677 = vpack.c.bf16 %v1614, %v1613
  %v1678 = vpack.c.bf16 %v1616, %v1615
  %v1679 = vpack.c.bf16 %v1618, %v1617
  %v1680 = vpack.c.bf16 %v1620, %v1619
  %v1681 = vpack.c.bf16 %v1622, %v1621
  %v1682 = vpack.c.bf16 %v1624, %v1623
  %v1683 = vpack.c.bf16 %v1626, %v1625
  %v1684 = vpack.c.bf16 %v1628, %v1627
  %v1685 = vpack.c.bf16 %v1630, %v1629
  %v1686 = vpack.c.bf16 %v1632, %v1631
  %v1687 = vpack.c.bf16 %v1634, %v1633
  %v1688 = vpack.c.bf16 %v1636, %v1635
  %v1689 = vpack.c.bf16 %v1638, %v1637
  %v1690 = vpack.c.bf16 %v1640, %v1639
  %v1691 = vpack.c.bf16 %v1642, %v1641
  %v1708 = vunpack.c.l.b16 %v1644
  %v1709 = vunpack.c.l.b16 %v1645
  %v1710 = vunpack.c.l.b16 %v1646
  %v1711 = vunpack.c.l.b16 %v1647
  %v1712 = vunpack.c.l.b16 %v1648
  %v1713 = vunpack.c.l.b16 %v1649
  %v1714 = vunpack.c.l.b16 %v1650
  %v1715 = vunpack.c.l.b16 %v1651
  %v1716 = vunpack.c.l.b16 %v1652
  %v1717 = vunpack.c.l.b16 %v1653
  %v1718 = vunpack.c.l.b16 %v1654
  %v1719 = vunpack.c.l.b16 %v1655
  %v1720 = vunpack.c.l.b16 %v1656
  %v1721 = vunpack.c.l.b16 %v1657
  %v1722 = vunpack.c.l.b16 %v1658
  %v1723 = vunpack.c.l.b16 %v1659
  %v1724 = vpack.c.b16 %v1709, %v1708
  %v1725 = vpack.c.b16 %v1711, %v1710
  %v1726 = vpack.c.b16 %v1713, %v1712
  %v1727 = vpack.c.b16 %v1715, %v1714
  %v1728 = vpack.c.b16 %v1717, %v1716
  %v1729 = vpack.c.b16 %v1719, %v1718
  %v1730 = vpack.c.b16 %v1721, %v1720
  %v1731 = vpack.c.b16 %v1723, %v1722
  %1740 = vmatpush.bf16.msra.mxu0 %v1731
  %1741 = vmatpush.bf16.msra.mxu0 %v1730
  %1742 = vmatpush.bf16.msra.mxu0 %v1729
  %1743 = vmatpush.bf16.msra.mxu0 %v1728
  %1744 = vmatpush.bf16.msra.mxu0 %v1727
  %1745 = vmatpush.bf16.msra.mxu0 %v1726
  %1746 = vmatpush.bf16.msra.mxu0 %v1725
  %1747 = vmatpush.bf16.msra.mxu0 %v1724
  %1748 = vmatmul.bf16.gmra.mxu0 %v1660
  %v1749 = vpop.f32.mrf.mxu0
  %v1750 = vadd.f32 0.0, %v1749
  %v1751 = vpop.f32.mrf.mxu0
  %v1752 = vadd.f32 0.0, %v1751
  %1753 = vmatmul.bf16.gmra.mxu0 %v1661
  %v1754 = vpop.f32.mrf.mxu0
  %v1755 = vadd.f32 0.0, %v1754
  %v1756 = vpop.f32.mrf.mxu0
  %v1757 = vadd.f32 0.0, %v1756
  %1758 = vmatmul.bf16.gmra.mxu0 %v1662
  %v1759 = vpop.f32.mrf.mxu0
  %v1760 = vadd.f32 0.0, %v1759
  %v1761 = vpop.f32.mrf.mxu0
  %v1762 = vadd.f32 0.0, %v1761
  %1763 = vmatmul.bf16.gmra.mxu0 %v1663
  %v1764 = vpop.f32.mrf.mxu0
  %v1765 = vadd.f32 0.0, %v1764
  %v1766 = vpop.f32.mrf.mxu0
  %v1767 = vadd.f32 0.0, %v1766
  %1768 = vmatmul.bf16.gmra.mxu0 %v1664
  %v1769 = vpop.f32.mrf.mxu0
  %v1770 = vadd.f32 0.0, %v1769
  %v1771 = vpop.f32.mrf.mxu0
  %v1772 = vadd.f32 0.0, %v1771
  %1773 = vmatmul.bf16.gmra.mxu0 %v1665
  %v1774 = vpop.f32.mrf.mxu0
  %v1775 = vadd.f32 0.0, %v1774
  %v1776 = vpop.f32.mrf.mxu0
  %v1777 = vadd.f32 0.0, %v1776
  %1778 = vmatmul.bf16.gmra.mxu0 %v1666
  %v1779 = vpop.f32.mrf.mxu0
  %v1780 = vadd.f32 0.0, %v1779
  %v1781 = vpop.f32.mrf.mxu0
  %v1782 = vadd.f32 0.0, %v1781
  %1783 = vmatmul.bf16.gmra.mxu0 %v1667
  %v1784 = vpop.f32.mrf.mxu0
  %v1785 = vadd.f32 0.0, %v1784
  %v1786 = vpop.f32.mrf.mxu0
  %v1787 = vadd.f32 0.0, %v1786
  %1788 = vmatmul.bf16.gmra.mxu0 %v1668
  %v1789 = vpop.f32.mrf.mxu0
  %v1790 = vadd.f32 0.0, %v1789
  %v1791 = vpop.f32.mrf.mxu0
  %v1792 = vadd.f32 0.0, %v1791
  %1793 = vmatmul.bf16.gmra.mxu0 %v1669
  %v1794 = vpop.f32.mrf.mxu0
  %v1795 = vadd.f32 0.0, %v1794
  %v1796 = vpop.f32.mrf.mxu0
  %v1797 = vadd.f32 0.0, %v1796
  %1798 = vmatmul.bf16.gmra.mxu0 %v1670
  %v1799 = vpop.f32.mrf.mxu0
  %v1800 = vadd.f32 0.0, %v1799
  %v1801 = vpop.f32.mrf.mxu0
  %v1802 = vadd.f32 0.0, %v1801
  %1803 = vmatmul.bf16.gmra.mxu0 %v1671
  %v1804 = vpop.f32.mrf.mxu0
  %v1805 = vadd.f32 0.0, %v1804
  %v1806 = vpop.f32.mrf.mxu0
  %v1807 = vadd.f32 0.0, %v1806
  %1808 = vmatmul.bf16.gmra.mxu0 %v1672
  %v1809 = vpop.f32.mrf.mxu0
  %v1810 = vadd.f32 0.0, %v1809
  %v1811 = vpop.f32.mrf.mxu0
  %v1812 = vadd.f32 0.0, %v1811
  %1813 = vmatmul.bf16.gmra.mxu0 %v1673
  %v1814 = vpop.f32.mrf.mxu0
  %v1815 = vadd.f32 0.0, %v1814
  %v1816 = vpop.f32.mrf.mxu0
  %v1817 = vadd.f32 0.0, %v1816
  %1818 = vmatmul.bf16.gmra.mxu0 %v1674
  %v1819 = vpop.f32.mrf.mxu0
  %v1820 = vadd.f32 0.0, %v1819
  %v1821 = vpop.f32.mrf.mxu0
  %v1822 = vadd.f32 0.0, %v1821
  %1823 = vmatmul.bf16.gmra.mxu0 %v1675
  %v1824 = vpop.f32.mrf.mxu0
  %v1825 = vadd.f32 0.0, %v1824
  %v1826 = vpop.f32.mrf.mxu0
  %v1827 = vadd.f32 0.0, %v1826
  %1828 = vmatmul.bf16.gmra.mxu0 %v1676
  %v1829 = vpop.f32.mrf.mxu0
  %v1830 = vadd.f32 0.0, %v1829
  %v1831 = vpop.f32.mrf.mxu0
  %v1832 = vadd.f32 0.0, %v1831
  %1833 = vmatmul.bf16.gmra.mxu0 %v1677
  %v1834 = vpop.f32.mrf.mxu0
  %v1835 = vadd.f32 0.0, %v1834
  %v1836 = vpop.f32.mrf.mxu0
  %v1837 = vadd.f32 0.0, %v1836
  %1838 = vmatmul.bf16.gmra.mxu0 %v1678
  %v1839 = vpop.f32.mrf.mxu0
  %v1840 = vadd.f32 0.0, %v1839
  %v1841 = vpop.f32.mrf.mxu0
  %v1842 = vadd.f32 0.0, %v1841
  %1843 = vmatmul.bf16.gmra.mxu0 %v1679
  %v1844 = vpop.f32.mrf.mxu0
  %v1845 = vadd.f32 0.0, %v1844
  %v1846 = vpop.f32.mrf.mxu0
  %v1847 = vadd.f32 0.0, %v1846
  %1848 = vmatmul.bf16.gmra.mxu0 %v1680
  %v1849 = vpop.f32.mrf.mxu0
  %v1850 = vadd.f32 0.0, %v1849
  %v1851 = vpop.f32.mrf.mxu0
  %v1852 = vadd.f32 0.0, %v1851
  %1853 = vmatmul.bf16.gmra.mxu0 %v1681
  %v1854 = vpop.f32.mrf.mxu0
  %v1855 = vadd.f32 0.0, %v1854
  %v1856 = vpop.f32.mrf.mxu0
  %v1857 = vadd.f32 0.0, %v1856
  %1858 = vmatmul.bf16.gmra.mxu0 %v1682
  %v1859 = vpop.f32.mrf.mxu0
  %v1860 = vadd.f32 0.0, %v1859
  %v1861 = vpop.f32.mrf.mxu0
  %v1862 = vadd.f32 0.0, %v1861
  %1863 = vmatmul.bf16.gmra.mxu0 %v1683
  %v1864 = vpop.f32.mrf.mxu0
  %v1865 = vadd.f32 0.0, %v1864
  %v1866 = vpop.f32.mrf.mxu0
  %v1867 = vadd.f32 0.0, %v1866
  %1868 = vmatmul.bf16.gmra.mxu0 %v1684
  %v1869 = vpop.f32.mrf.mxu0
  %v1870 = vadd.f32 0.0, %v1869
  %v1871 = vpop.f32.mrf.mxu0
  %v1872 = vadd.f32 0.0, %v1871
  %1873 = vmatmul.bf16.gmra.mxu0 %v1685
  %v1874 = vpop.f32.mrf.mxu0
  %v1875 = vadd.f32 0.0, %v1874
  %v1876 = vpop.f32.mrf.mxu0
  %v1877 = vadd.f32 0.0, %v1876
  %1878 = vmatmul.bf16.gmra.mxu0 %v1686
  %v1879 = vpop.f32.mrf.mxu0
  %v1880 = vadd.f32 0.0, %v1879
  %v1881 = vpop.f32.mrf.mxu0
  %v1882 = vadd.f32 0.0, %v1881
  %1883 = vmatmul.bf16.gmra.mxu0 %v1687
  %v1884 = vpop.f32.mrf.mxu0
  %v1885 = vadd.f32 0.0, %v1884
  %v1886 = vpop.f32.mrf.mxu0
  %v1887 = vadd.f32 0.0, %v1886
  %1888 = vmatmul.bf16.gmra.mxu0 %v1688
  %v1889 = vpop.f32.mrf.mxu0
  %v1890 = vadd.f32 0.0, %v1889
  %v1891 = vpop.f32.mrf.mxu0
  %v1892 = vadd.f32 0.0, %v1891
  %1893 = vmatmul.bf16.gmra.mxu0 %v1689
  %v1894 = vpop.f32.mrf.mxu0
  %v1895 = vadd.f32 0.0, %v1894
  %v1896 = vpop.f32.mrf.mxu0
  %v1897 = vadd.f32 0.0, %v1896
  %1898 = vmatmul.bf16.gmra.mxu0 %v1690
  %v1899 = vpop.f32.mrf.mxu0
  %v1900 = vadd.f32 0.0, %v1899
  %v1901 = vpop.f32.mrf.mxu0
  %v1902 = vadd.f32 0.0, %v1901
  %1903 = vmatmul.bf16.gmra.mxu0 %v1691
  %v1904 = vpop.f32.mrf.mxu0
  %v1905 = vadd.f32 0.0, %v1904
  %v1906 = vpop.f32.mrf.mxu0
  %v1907 = vadd.f32 0.0, %v1906
  %1908 = vdwg.mxu0
  %v1909 = vsub.f32 0.0, %v1750
  %v1910 = vsub.f32 0.0, %v1752
  %v1911 = vsub.f32 0.0, %v1755
  %v1912 = vsub.f32 0.0, %v1757
  %v1913 = vsub.f32 0.0, %v1760
  %v1914 = vsub.f32 0.0, %v1762
  %v1915 = vsub.f32 0.0, %v1765
  %v1916 = vsub.f32 0.0, %v1767
  %v1917 = vsub.f32 0.0, %v1770
  %v1918 = vsub.f32 0.0, %v1772
  %v1919 = vsub.f32 0.0, %v1775
  %v1920 = vsub.f32 0.0, %v1777
  %v1921 = vsub.f32 0.0, %v1780
  %v1922 = vsub.f32 0.0, %v1782
  %v1923 = vsub.f32 0.0, %v1785
  %v1924 = vsub.f32 0.0, %v1787
  %v1925 = vsub.f32 0.0, %v1790
  %v1926 = vsub.f32 0.0, %v1792
  %v1927 = vsub.f32 0.0, %v1795
  %v1928 = vsub.f32 0.0, %v1797
  %v1929 = vsub.f32 0.0, %v1800
  %v1930 = vsub.f32 0.0, %v1802
  %v1931 = vsub.f32 0.0, %v1805
  %v1932 = vsub.f32 0.0, %v1807
  %v1933 = vsub.f32 0.0, %v1810
  %v1934 = vsub.f32 0.0, %v1812
  %v1935 = vsub.f32 0.0, %v1815
  %v1936 = vsub.f32 0.0, %v1817
  %v1937 = vsub.f32 0.0, %v1820
  %v1938 = vsub.f32 0.0, %v1822
  %v1939 = vsub.f32 0.0, %v1825
  %v1940 = vsub.f32 0.0, %v1827
  %v1941 = vsub.f32 0.0, %v1830
  %v1942 = vsub.f32 0.0, %v1832
  %v1943 = vsub.f32 0.0, %v1835
  %v1944 = vsub.f32 0.0, %v1837
  %v1945 = vsub.f32 0.0, %v1840
  %v1946 = vsub.f32 0.0, %v1842
  %v1947 = vsub.f32 0.0, %v1845
  %v1948 = vsub.f32 0.0, %v1847
  %v1949 = vsub.f32 0.0, %v1850
  %v1950 = vsub.f32 0.0, %v1852
  %v1951 = vsub.f32 0.0, %v1855
  %v1952 = vsub.f32 0.0, %v1857
  %v1953 = vsub.f32 0.0, %v1860
  %v1954 = vsub.f32 0.0, %v1862
  %v1955 = vsub.f32 0.0, %v1865
  %v1956 = vsub.f32 0.0, %v1867
  %v1957 = vsub.f32 0.0, %v1870
  %v1958 = vsub.f32 0.0, %v1872
  %v1959 = vsub.f32 0.0, %v1875
  %v1960 = vsub.f32 0.0, %v1877
  %v1961 = vsub.f32 0.0, %v1880
  %v1962 = vsub.f32 0.0, %v1882
  %v1963 = vsub.f32 0.0, %v1885
  %v1964 = vsub.f32 0.0, %v1887
  %v1965 = vsub.f32 0.0, %v1890
  %v1966 = vsub.f32 0.0, %v1892
  %v1967 = vsub.f32 0.0, %v1895
  %v1968 = vsub.f32 0.0, %v1897
  %v1969 = vsub.f32 0.0, %v1900
  %v1970 = vsub.f32 0.0, %v1902
  %v1971 = vsub.f32 0.0, %v1905
  %v1972 = vsub.f32 0.0, %v1907
  %v1973 = vmul.f32 %v1909, 1.442695
  %v1974 = vpow.pop %v1973
  %v1975 = vmul.f32 %v1910, 1.442695
  %v1976 = vpow.pop %v1975
  %v1977 = vmul.f32 %v1911, 1.442695
  %v1978 = vpow.pop %v1977
  %v1979 = vmul.f32 %v1912, 1.442695
  %v1980 = vpow.pop %v1979
  %v1981 = vmul.f32 %v1913, 1.442695
  %v1982 = vpow.pop %v1981
  %v1983 = vmul.f32 %v1914, 1.442695
  %v1984 = vpow.pop %v1983
  %v1985 = vmul.f32 %v1915, 1.442695
  %v1986 = vpow.pop %v1985
  %v1987 = vmul.f32 %v1916, 1.442695
  %v1988 = vpow.pop %v1987
  %v1989 = vmul.f32 %v1917, 1.442695
  %v1990 = vpow.pop %v1989
  %v1991 = vmul.f32 %v1918, 1.442695
  %v1992 = vpow.pop %v1991
  %v1993 = vmul.f32 %v1919, 1.442695
  %v1994 = vpow.pop %v1993
  %v1995 = vmul.f32 %v1920, 1.442695
  %v1996 = vpow.pop %v1995
  %v1997 = vmul.f32 %v1921, 1.442695
  %v1998 = vpow.pop %v1997
  %v1999 = vmul.f32 %v1922, 1.442695
  %v2000 = vpow.pop %v1999
  %v2001 = vmul.f32 %v1923, 1.442695
  %v2002 = vpow.pop %v2001
  %v2003 = vmul.f32 %v1924, 1.442695
  %v2004 = vpow.pop %v2003
  %v2005 = vmul.f32 %v1925, 1.442695
  %v2006 = vpow.pop %v2005
  %v2007 = vmul.f32 %v1926, 1.442695
  %v2008 = vpow.pop %v2007
  %v2009 = vmul.f32 %v1927, 1.442695
  %v2010 = vpow.pop %v2009
  %v2011 = vmul.f32 %v1928, 1.442695
  %v2012 = vpow.pop %v2011
  %v2013 = vmul.f32 %v1929, 1.442695
  %v2014 = vpow.pop %v2013
  %v2015 = vmul.f32 %v1930, 1.442695
  %v2016 = vpow.pop %v2015
  %v2017 = vmul.f32 %v1931, 1.442695
  %v2018 = vpow.pop %v2017
  %v2019 = vmul.f32 %v1932, 1.442695
  %v2020 = vpow.pop %v2019
  %v2021 = vmul.f32 %v1933, 1.442695
  %v2022 = vpow.pop %v2021
  %v2023 = vmul.f32 %v1934, 1.442695
  %v2024 = vpow.pop %v2023
  %v2025 = vmul.f32 %v1935, 1.442695
  %v2026 = vpow.pop %v2025
  %v2027 = vmul.f32 %v1936, 1.442695
  %v2028 = vpow.pop %v2027
  %v2029 = vmul.f32 %v1937, 1.442695
  %v2030 = vpow.pop %v2029
  %v2031 = vmul.f32 %v1938, 1.442695
  %v2032 = vpow.pop %v2031
  %v2033 = vmul.f32 %v1939, 1.442695
  %v2034 = vpow.pop %v2033
  %v2035 = vmul.f32 %v1940, 1.442695
  %v2036 = vpow.pop %v2035
  %v2037 = vmul.f32 %v1941, 1.442695
  %v2038 = vpow.pop %v2037
  %v2039 = vmul.f32 %v1942, 1.442695
  %v2040 = vpow.pop %v2039
  %v2041 = vmul.f32 %v1943, 1.442695
  %v2042 = vpow.pop %v2041
  %v2043 = vmul.f32 %v1944, 1.442695
  %v2044 = vpow.pop %v2043
  %v2045 = vmul.f32 %v1945, 1.442695
  %v2046 = vpow.pop %v2045
  %v2047 = vmul.f32 %v1946, 1.442695
  %v2048 = vpow.pop %v2047
  %v2049 = vmul.f32 %v1947, 1.442695
  %v2050 = vpow.pop %v2049
  %v2051 = vmul.f32 %v1948, 1.442695
  %v2052 = vpow.pop %v2051
  %v2053 = vmul.f32 %v1949, 1.442695
  %v2054 = vpow.pop %v2053
  %v2055 = vmul.f32 %v1950, 1.442695
  %v2056 = vpow.pop %v2055
  %v2057 = vmul.f32 %v1951, 1.442695
  %v2058 = vpow.pop %v2057
  %v2059 = vmul.f32 %v1952, 1.442695
  %v2060 = vpow.pop %v2059
  %v2061 = vmul.f32 %v1953, 1.442695
  %v2062 = vpow.pop %v2061
  %v2063 = vmul.f32 %v1954, 1.442695
  %v2064 = vpow.pop %v2063
  %v2065 = vmul.f32 %v1955, 1.442695
  %v2066 = vpow.pop %v2065
  %v2067 = vmul.f32 %v1956, 1.442695
  %v2068 = vpow.pop %v2067
  %v2069 = vmul.f32 %v1957, 1.442695
  %v2070 = vpow.pop %v2069
  %v2071 = vmul.f32 %v1958, 1.442695
  %v2072 = vpow.pop %v2071
  %v2073 = vmul.f32 %v1959, 1.442695
  %v2074 = vpow.pop %v2073
  %v2075 = vmul.f32 %v1960, 1.442695
  %v2076 = vpow.pop %v2075
  %v2077 = vmul.f32 %v1961, 1.442695
  %v2078 = vpow.pop %v2077
  %v2079 = vmul.f32 %v1962, 1.442695
  %v2080 = vpow.pop %v2079
  %v2081 = vmul.f32 %v1963, 1.442695
  %v2082 = vpow.pop %v2081
  %v2083 = vmul.f32 %v1964, 1.442695
  %v2084 = vpow.pop %v2083
  %v2085 = vmul.f32 %v1965, 1.442695
  %v2086 = vpow.pop %v2085
  %v2087 = vmul.f32 %v1966, 1.442695
  %v2088 = vpow.pop %v2087
  %v2089 = vmul.f32 %v1967, 1.442695
  %v2090 = vpow.pop %v2089
  %v2091 = vmul.f32 %v1968, 1.442695
  %v2092 = vpow.pop %v2091
  %v2093 = vmul.f32 %v1969, 1.442695
  %v2094 = vpow.pop %v2093
  %v2095 = vmul.f32 %v1970, 1.442695
  %v2096 = vpow.pop %v2095
  %v2097 = vmul.f32 %v1971, 1.442695
  %v2098 = vpow.pop %v2097
  %v2099 = vmul.f32 %v1972, 1.442695
  %v2100 = vpow.pop %v2099
  %v2101 = vadd.f32 %v1974, 1.0
  %v2102 = vadd.f32 %v1976, 1.0
  %v2103 = vadd.f32 %v1978, 1.0
  %v2104 = vadd.f32 %v1980, 1.0
  %v2105 = vadd.f32 %v1982, 1.0
  %v2106 = vadd.f32 %v1984, 1.0
  %v2107 = vadd.f32 %v1986, 1.0
  %v2108 = vadd.f32 %v1988, 1.0
  %v2109 = vadd.f32 %v1990, 1.0
  %v2110 = vadd.f32 %v1992, 1.0
  %v2111 = vadd.f32 %v1994, 1.0
  %v2112 = vadd.f32 %v1996, 1.0
  %v2113 = vadd.f32 %v1998, 1.0
  %v2114 = vadd.f32 %v2000, 1.0
  %v2115 = vadd.f32 %v2002, 1.0
  %v2116 = vadd.f32 %v2004, 1.0
  %v2117 = vadd.f32 %v2006, 1.0
  %v2118 = vadd.f32 %v2008, 1.0
  %v2119 = vadd.f32 %v2010, 1.0
  %v2120 = vadd.f32 %v2012, 1.0
  %v2121 = vadd.f32 %v2014, 1.0
  %v2122 = vadd.f32 %v2016, 1.0
  %v2123 = vadd.f32 %v2018, 1.0
  %v2124 = vadd.f32 %v2020, 1.0
  %v2125 = vadd.f32 %v2022, 1.0
  %v2126 = vadd.f32 %v2024, 1.0
  %v2127 = vadd.f32 %v2026, 1.0
  %v2128 = vadd.f32 %v2028, 1.0
  %v2129 = vadd.f32 %v2030, 1.0
  %v2130 = vadd.f32 %v2032, 1.0
  %v2131 = vadd.f32 %v2034, 1.0
  %v2132 = vadd.f32 %v2036, 1.0
  %v2133 = vadd.f32 %v2038, 1.0
  %v2134 = vadd.f32 %v2040, 1.0
  %v2135 = vadd.f32 %v2042, 1.0
  %v2136 = vadd.f32 %v2044, 1.0
  %v2137 = vadd.f32 %v2046, 1.0
  %v2138 = vadd.f32 %v2048, 1.0
  %v2139 = vadd.f32 %v2050, 1.0
  %v2140 = vadd.f32 %v2052, 1.0
  %v2141 = vadd.f32 %v2054, 1.0
  %v2142 = vadd.f32 %v2056, 1.0
  %v2143 = vadd.f32 %v2058, 1.0
  %v2144 = vadd.f32 %v2060, 1.0
  %v2145 = vadd.f32 %v2062, 1.0
  %v2146 = vadd.f32 %v2064, 1.0
  %v2147 = vadd.f32 %v2066, 1.0
  %v2148 = vadd.f32 %v2068, 1.0
  %v2149 = vadd.f32 %v2070, 1.0
  %v2150 = vadd.f32 %v2072, 1.0
  %v2151 = vadd.f32 %v2074, 1.0
  %v2152 = vadd.f32 %v2076, 1.0
  %v2153 = vadd.f32 %v2078, 1.0
  %v2154 = vadd.f32 %v2080, 1.0
  %v2155 = vadd.f32 %v2082, 1.0
  %v2156 = vadd.f32 %v2084, 1.0
  %v2157 = vadd.f32 %v2086, 1.0
  %v2158 = vadd.f32 %v2088, 1.0
  %v2159 = vadd.f32 %v2090, 1.0
  %v2160 = vadd.f32 %v2092, 1.0
  %v2161 = vadd.f32 %v2094, 1.0
  %v2162 = vadd.f32 %v2096, 1.0
  %v2163 = vadd.f32 %v2098, 1.0
  %v2164 = vadd.f32 %v2100, 1.0
  %v2165 = vrcp.pop %v2101
  %v2166 = vrcp.pop %v2102
  %v2167 = vrcp.pop %v2103
  %v2168 = vrcp.pop %v2104
  %v2169 = vrcp.pop %v2105
  %v2170 = vrcp.pop %v2106
  %v2171 = vrcp.pop %v2107
  %v2172 = vrcp.pop %v2108
  %v2173 = vrcp.pop %v2109
  %v2174 = vrcp.pop %v2110
  %v2175 = vrcp.pop %v2111
  %v2176 = vrcp.pop %v2112
  %v2177 = vrcp.pop %v2113
  %v2178 = vrcp.pop %v2114
  %v2179 = vrcp.pop %v2115
  %v2180 = vrcp.pop %v2116
  %v2181 = vrcp.pop %v2117
  %v2182 = vrcp.pop %v2118
  %v2183 = vrcp.pop %v2119
  %v2184 = vrcp.pop %v2120
  %v2185 = vrcp.pop %v2121
  %v2186 = vrcp.pop %v2122
  %v2187 = vrcp.pop %v2123
  %v2188 = vrcp.pop %v2124
  %v2189 = vrcp.pop %v2125
  %v2190 = vrcp.pop %v2126
  %v2191 = vrcp.pop %v2127
  %v2192 = vrcp.pop %v2128
  %v2193 = vrcp.pop %v2129
  %v2194 = vrcp.pop %v2130
  %v2195 = vrcp.pop %v2131
  %v2196 = vrcp.pop %v2132
  %v2197 = vrcp.pop %v2133
  %v2198 = vrcp.pop %v2134
  %v2199 = vrcp.pop %v2135
  %v2200 = vrcp.pop %v2136
  %v2201 = vrcp.pop %v2137
  %v2202 = vrcp.pop %v2138
  %v2203 = vrcp.pop %v2139
  %v2204 = vrcp.pop %v2140
  %v2205 = vrcp.pop %v2141
  %v2206 = vrcp.pop %v2142
  %v2207 = vrcp.pop %v2143
  %v2208 = vrcp.pop %v2144
  %v2209 = vrcp.pop %v2145
  %v2210 = vrcp.pop %v2146
  %v2211 = vrcp.pop %v2147
  %v2212 = vrcp.pop %v2148
  %v2213 = vrcp.pop %v2149
  %v2214 = vrcp.pop %v2150
  %v2215 = vrcp.pop %v2151
  %v2216 = vrcp.pop %v2152
  %v2217 = vrcp.pop %v2153
  %v2218 = vrcp.pop %v2154
  %v2219 = vrcp.pop %v2155
  %v2220 = vrcp.pop %v2156
  %v2221 = vrcp.pop %v2157
  %v2222 = vrcp.pop %v2158
  %v2223 = vrcp.pop %v2159
  %v2224 = vrcp.pop %v2160
  %v2225 = vrcp.pop %v2161
  %v2226 = vrcp.pop %v2162
  %v2227 = vrcp.pop %v2163
  %v2228 = vrcp.pop %v2164
  %v2229 = vmul.f32 %v1750, %v2165
  %v2230 = vmul.f32 %v1752, %v2166
  %v2231 = vmul.f32 %v1755, %v2167
  %v2232 = vmul.f32 %v1757, %v2168
  %v2233 = vmul.f32 %v1760, %v2169
  %v2234 = vmul.f32 %v1762, %v2170
  %v2235 = vmul.f32 %v1765, %v2171
  %v2236 = vmul.f32 %v1767, %v2172
  %v2237 = vmul.f32 %v1770, %v2173
  %v2238 = vmul.f32 %v1772, %v2174
  %v2239 = vmul.f32 %v1775, %v2175
  %v2240 = vmul.f32 %v1777, %v2176
  %v2241 = vmul.f32 %v1780, %v2177
  %v2242 = vmul.f32 %v1782, %v2178
  %v2243 = vmul.f32 %v1785, %v2179
  %v2244 = vmul.f32 %v1787, %v2180
  %v2245 = vmul.f32 %v1790, %v2181
  %v2246 = vmul.f32 %v1792, %v2182
  %v2247 = vmul.f32 %v1795, %v2183
  %v2248 = vmul.f32 %v1797, %v2184
  %v2249 = vmul.f32 %v1800, %v2185
  %v2250 = vmul.f32 %v1802, %v2186
  %v2251 = vmul.f32 %v1805, %v2187
  %v2252 = vmul.f32 %v1807, %v2188
  %v2253 = vmul.f32 %v1810, %v2189
  %v2254 = vmul.f32 %v1812, %v2190
  %v2255 = vmul.f32 %v1815, %v2191
  %v2256 = vmul.f32 %v1817, %v2192
  %v2257 = vmul.f32 %v1820, %v2193
  %v2258 = vmul.f32 %v1822, %v2194
  %v2259 = vmul.f32 %v1825, %v2195
  %v2260 = vmul.f32 %v1827, %v2196
  %v2261 = vmul.f32 %v1830, %v2197
  %v2262 = vmul.f32 %v1832, %v2198
  %v2263 = vmul.f32 %v1835, %v2199
  %v2264 = vmul.f32 %v1837, %v2200
  %v2265 = vmul.f32 %v1840, %v2201
  %v2266 = vmul.f32 %v1842, %v2202
  %v2267 = vmul.f32 %v1845, %v2203
  %v2268 = vmul.f32 %v1847, %v2204
  %v2269 = vmul.f32 %v1850, %v2205
  %v2270 = vmul.f32 %v1852, %v2206
  %v2271 = vmul.f32 %v1855, %v2207
  %v2272 = vmul.f32 %v1857, %v2208
  %v2273 = vmul.f32 %v1860, %v2209
  %v2274 = vmul.f32 %v1862, %v2210
  %v2275 = vmul.f32 %v1865, %v2211
  %v2276 = vmul.f32 %v1867, %v2212
  %v2277 = vmul.f32 %v1870, %v2213
  %v2278 = vmul.f32 %v1872, %v2214
  %v2279 = vmul.f32 %v1875, %v2215
  %v2280 = vmul.f32 %v1877, %v2216
  %v2281 = vmul.f32 %v1880, %v2217
  %v2282 = vmul.f32 %v1882, %v2218
  %v2283 = vmul.f32 %v1885, %v2219
  %v2284 = vmul.f32 %v1887, %v2220
  %v2285 = vmul.f32 %v1890, %v2221
  %v2286 = vmul.f32 %v1892, %v2222
  %v2287 = vmul.f32 %v1895, %v2223
  %v2288 = vmul.f32 %v1897, %v2224
  %v2289 = vmul.f32 %v1900, %v2225
  %v2290 = vmul.f32 %v1902, %v2226
  %v2291 = vmul.f32 %v1905, %v2227
  %v2292 = vmul.f32 %v1907, %v2228
  %v2293 = vpack.c.bf16 %v2229, %v2229
  %v2294 = vpack.c.bf16 %v2230, %v2230
  %v2295 = vpack.c.bf16 %v2231, %v2231
  %v2296 = vpack.c.bf16 %v2232, %v2232
  %v2297 = vpack.c.bf16 %v2233, %v2233
  %v2298 = vpack.c.bf16 %v2234, %v2234
  %v2299 = vpack.c.bf16 %v2235, %v2235
  %v2300 = vpack.c.bf16 %v2236, %v2236
  %v2301 = vpack.c.bf16 %v2237, %v2237
  %v2302 = vpack.c.bf16 %v2238, %v2238
  %v2303 = vpack.c.bf16 %v2239, %v2239
  %v2304 = vpack.c.bf16 %v2240, %v2240
  %v2305 = vpack.c.bf16 %v2241, %v2241
  %v2306 = vpack.c.bf16 %v2242, %v2242
  %v2307 = vpack.c.bf16 %v2243, %v2243
  %v2308 = vpack.c.bf16 %v2244, %v2244
  %v2309 = vpack.c.bf16 %v2245, %v2245
  %v2310 = vpack.c.bf16 %v2246, %v2246
  %v2311 = vpack.c.bf16 %v2247, %v2247
  %v2312 = vpack.c.bf16 %v2248, %v2248
  %v2313 = vpack.c.bf16 %v2249, %v2249
  %v2314 = vpack.c.bf16 %v2250, %v2250
  %v2315 = vpack.c.bf16 %v2251, %v2251
  %v2316 = vpack.c.bf16 %v2252, %v2252
  %v2317 = vpack.c.bf16 %v2253, %v2253
  %v2318 = vpack.c.bf16 %v2254, %v2254
  %v2319 = vpack.c.bf16 %v2255, %v2255
  %v2320 = vpack.c.bf16 %v2256, %v2256
  %v2321 = vpack.c.bf16 %v2257, %v2257
  %v2322 = vpack.c.bf16 %v2258, %v2258
  %v2323 = vpack.c.bf16 %v2259, %v2259
  %v2324 = vpack.c.bf16 %v2260, %v2260
  %v2325 = vpack.c.bf16 %v2261, %v2261
  %v2326 = vpack.c.bf16 %v2262, %v2262
  %v2327 = vpack.c.bf16 %v2263, %v2263
  %v2328 = vpack.c.bf16 %v2264, %v2264
  %v2329 = vpack.c.bf16 %v2265, %v2265
  %v2330 = vpack.c.bf16 %v2266, %v2266
  %v2331 = vpack.c.bf16 %v2267, %v2267
  %v2332 = vpack.c.bf16 %v2268, %v2268
  %v2333 = vpack.c.bf16 %v2269, %v2269
  %v2334 = vpack.c.bf16 %v2270, %v2270
  %v2335 = vpack.c.bf16 %v2271, %v2271
  %v2336 = vpack.c.bf16 %v2272, %v2272
  %v2337 = vpack.c.bf16 %v2273, %v2273
  %v2338 = vpack.c.bf16 %v2274, %v2274
  %v2339 = vpack.c.bf16 %v2275, %v2275
  %v2340 = vpack.c.bf16 %v2276, %v2276
  %v2341 = vpack.c.bf16 %v2277, %v2277
  %v2342 = vpack.c.bf16 %v2278, %v2278
  %v2343 = vpack.c.bf16 %v2279, %v2279
  %v2344 = vpack.c.bf16 %v2280, %v2280
  %v2345 = vpack.c.bf16 %v2281, %v2281
  %v2346 = vpack.c.bf16 %v2282, %v2282
  %v2347 = vpack.c.bf16 %v2283, %v2283
  %v2348 = vpack.c.bf16 %v2284, %v2284
  %v2349 = vpack.c.bf16 %v2285, %v2285
  %v2350 = vpack.c.bf16 %v2286, %v2286
  %v2351 = vpack.c.bf16 %v2287, %v2287
  %v2352 = vpack.c.bf16 %v2288, %v2288
  %v2353 = vpack.c.bf16 %v2289, %v2289
  %v2354 = vpack.c.bf16 %v2290, %v2290
  %v2355 = vpack.c.bf16 %v2291, %v2291
  %v2356 = vpack.c.bf16 %v2292, %v2292
  %2357 = vst [vmem:[%s5] sm:$0xf] %v2293
  %2358 = vst [vmem:[%s5 + $0x4] sm:$0xf] %v2294
  %2359 = vst [vmem:[%s5 + $0x8] sm:$0xf] %v2295
  %2360 = vst [vmem:[%s5 + $0xc] sm:$0xf] %v2296
  %2361 = vst [vmem:[%s5 + $0x10] sm:$0xf] %v2297
  %2362 = vst [vmem:[%s5 + $0x14] sm:$0xf] %v2298
  %2363 = vst [vmem:[%s5 + $0x18] sm:$0xf] %v2299
  %2364 = vst [vmem:[%s5 + $0x1c] sm:$0xf] %v2300
  %2365 = vst [vmem:[%s5 + $0x20] sm:$0xf] %v2301
  %2366 = vst [vmem:[%s5 + $0x24] sm:$0xf] %v2302
  %2367 = vst [vmem:[%s5 + $0x28] sm:$0xf] %v2303
  %2368 = vst [vmem:[%s5 + $0x2c] sm:$0xf] %v2304
  %2369 = vst [vmem:[%s5 + $0x30] sm:$0xf] %v2305
  %2370 = vst [vmem:[%s5 + $0x34] sm:$0xf] %v2306
  %2371 = vst [vmem:[%s5 + $0x38] sm:$0xf] %v2307
  %2372 = vst [vmem:[%s5 + $0x3c] sm:$0xf] %v2308
  %2373 = vst [vmem:[%s5 + $0x40] sm:$0xf] %v2309
  %2374 = vst [vmem:[%s5 + $0x44] sm:$0xf] %v2310
  %2375 = vst [vmem:[%s5 + $0x48] sm:$0xf] %v2311
  %2376 = vst [vmem:[%s5 + $0x4c] sm:$0xf] %v2312
  %2377 = vst [vmem:[%s5 + $0x50] sm:$0xf] %v2313
  %2378 = vst [vmem:[%s5 + $0x54] sm:$0xf] %v2314
  %2379 = vst [vmem:[%s5 + $0x58] sm:$0xf] %v2315
  %2380 = vst [vmem:[%s5 + $0x5c] sm:$0xf] %v2316
  %2381 = vst [vmem:[%s5 + $0x60] sm:$0xf] %v2317
  %2382 = vst [vmem:[%s5 + $0x64] sm:$0xf] %v2318
  %2383 = vst [vmem:[%s5 + $0x68] sm:$0xf] %v2319
  %2384 = vst [vmem:[%s5 + $0x6c] sm:$0xf] %v2320
  %2385 = vst [vmem:[%s5 + $0x70] sm:$0xf] %v2321
  %2386 = vst [vmem:[%s5 + $0x74] sm:$0xf] %v2322
  %2387 = vst [vmem:[%s5 + $0x78] sm:$0xf] %v2323
  %2388 = vst [vmem:[%s5 + $0x7c] sm:$0xf] %v2324
  %2389 = vst [vmem:[%s5 + $0x80] sm:$0xf] %v2325
  %2390 = vst [vmem:[%s5 + $0x84] sm:$0xf] %v2326
  %2391 = vst [vmem:[%s5 + $0x88] sm:$0xf] %v2327
  %2392 = vst [vmem:[%s5 + $0x8c] sm:$0xf] %v2328
  %2393 = vst [vmem:[%s5 + $0x90] sm:$0xf] %v2329
  %2394 = vst [vmem:[%s5 + $0x94] sm:$0xf] %v2330
  %2395 = vst [vmem:[%s5 + $0x98] sm:$0xf] %v2331
  %2396 = vst [vmem:[%s5 + $0x9c] sm:$0xf] %v2332
  %2397 = vst [vmem:[%s5 + $0xa0] sm:$0xf] %v2333
  %2398 = vst [vmem:[%s5 + $0xa4] sm:$0xf] %v2334
  %2399 = vst [vmem:[%s5 + $0xa8] sm:$0xf] %v2335
  %2400 = vst [vmem:[%s5 + $0xac] sm:$0xf] %v2336
  %2401 = vst [vmem:[%s5 + $0xb0] sm:$0xf] %v2337
  %2402 = vst [vmem:[%s5 + $0xb4] sm:$0xf] %v2338
  %2403 = vst [vmem:[%s5 + $0xb8] sm:$0xf] %v2339
  %2404 = vst [vmem:[%s5 + $0xbc] sm:$0xf] %v2340
  %2405 = vst [vmem:[%s5 + $0xc0] sm:$0xf] %v2341
  %2406 = vst [vmem:[%s5 + $0xc4] sm:$0xf] %v2342
  %2407 = vst [vmem:[%s5 + $0xc8] sm:$0xf] %v2343
  %2408 = vst [vmem:[%s5 + $0xcc] sm:$0xf] %v2344
  %2409 = vst [vmem:[%s5 + $0xd0] sm:$0xf] %v2345
  %2410 = vst [vmem:[%s5 + $0xd4] sm:$0xf] %v2346
  %2411 = vst [vmem:[%s5 + $0xd8] sm:$0xf] %v2347
  %2412 = vst [vmem:[%s5 + $0xdc] sm:$0xf] %v2348
  %2413 = vst [vmem:[%s5 + $0xe0] sm:$0xf] %v2349
  %2414 = vst [vmem:[%s5 + $0xe4] sm:$0xf] %v2350
  %2415 = vst [vmem:[%s5 + $0xe8] sm:$0xf] %v2351
  %2416 = vst [vmem:[%s5 + $0xec] sm:$0xf] %v2352
  %2417 = vst [vmem:[%s5 + $0xf0] sm:$0xf] %v2353
  %2418 = vst [vmem:[%s5 + $0xf4] sm:$0xf] %v2354
  %2419 = vst [vmem:[%s5 + $0xf8] sm:$0xf] %v2355
  %2420 = vst [vmem:[%s5 + $0xfc] sm:$0xf] %v2356
  // Predicated region
  $region18: #{dimenet_forward.10} parent=0 // pred_check
    _
  $region19: #{dimenet_forward.10} parent=0 // pred_check_branch
    %2422 = sbr.rel (0) target = $region21
  $region20: #{dimenet_forward.10} parent=0 // pred_region
    _
  $region21: #{dimenet_forward.10} parent=0 // pred_fallthru
    _
  // Predicated region
  $region22: #{dimenet_forward.10} parent=0 // pred_check
    _
  $region23: #{dimenet_forward.10} parent=0 // pred_check_branch
    %2424 = sbr.rel (0) target = $region25
  $region24: #{dimenet_forward.10} parent=0 // pred_region
    _
  $region25: #{dimenet_forward.10} parent=0 // pred_fallthru
    _
  // Predicated region
  $region26: #{dimenet_forward.10} parent=0 // pred_check
    _
  $region27: #{dimenet_forward.10} parent=0 // pred_check_branch
    %2426 = sbr.rel (0) target = $region29
  $region28: #{dimenet_forward.10} parent=0 // pred_region
    _
  $region29: #{dimenet_forward.10} parent=0 // pred_fallthru
    _
  // Predicated region
  $region30: #{dimenet_forward.10} parent=0 // pred_check
    _
  $region31: #{dimenet_forward.10} parent=0 // pred_check_branch
    %2428 = sbr.rel (0) target = $region33
  $region32: #{dimenet_forward.10} parent=0 // pred_region
    _
  $region33: #{dimenet_forward.10} parent=0 // pred_fallthru
    _

// kernel: dimenet_forward.11
$region0: #{dimenet_forward.11}
  #allocation0 [shape = 'u32[]', space=smem, size = 0x4, offset = 0x4, fixed_abs, tag = 'smem constant byte address 0x4 - core index']
  #allocation1 [shape = 'u32[72,128]{1,0:T(1,128)}', space=vmem, size = 0x9000, scoped, tag = 'internal scratch']
  #allocation2 [shape = 'f32[512,128]{1,0:T(8,128)}', space=vmem, size = 0x40000, scoped, tag = 'scratch operand']
  %s0 = inlined_call_operand.vmem [shape: bf16[256,128], index: 0, kind: input, shape index: {}]
  %s1 = inlined_call_operand.vmem [shape: bf16[256,128], index: 1, kind: input, shape index: {}]
  %s2 = inlined_call_operand.vmem [shape: s32[1,256], index: 2, kind: input, shape index: {}]
  %s3 = inlined_call_operand.vmem [shape: bf16[512,128], index: 3, kind: input, shape index: {}]
  %s4 = inlined_call_operand.vmem [shape: bf16[512,128], index: 4, kind: input, shape index: {}]
  %s5 = inlined_call_operand.vmem [shape: bf16[7,128,128], index: 5, kind: input, shape index: {}]
  %s6 = inlined_call_operand.vmem [shape: f32[8,128], index: 6, kind: input, shape index: {}]
  %s7 = inlined_call_operand.vmem [shape: bf16[512,128], index: 7, kind: output, shape index: {}]
  %s8 = sld [smem:[#allocation0]]
  $region46: #{dimenet_forward.11} parent=0
    _
  %s10 = ssub.s32 1, %s8
  %s11 = scalar_select 0, %s10, %s8
  // Predicated region
  $region2: #{dimenet_forward.11} parent=0 // pred_check
    _
  $region3: #{dimenet_forward.11} parent=0 // pred_check_branch
    %13 = sbr.rel (0) target = $region5
  $region4: #{dimenet_forward.11} parent=0 // pred_region
    _
  $region5: #{dimenet_forward.11} parent=0 // pred_fallthru
    _
  // Predicated region
  $region6: #{dimenet_forward.11} parent=0 // pred_check
    _
  $region7: #{dimenet_forward.11} parent=0 // pred_check_branch
    %15 = sbr.rel (0) target = $region9
  $region8: #{dimenet_forward.11} parent=0 // pred_region
    _
  $region9: #{dimenet_forward.11} parent=0 // pred_fallthru
    _
  // Predicated region
  $region10: #{dimenet_forward.11} parent=0 // pred_check
    _
  $region11: #{dimenet_forward.11} parent=0 // pred_check_branch
    %17 = sbr.rel (0) target = $region13
  $region12: #{dimenet_forward.11} parent=0 // pred_region
    _
  $region13: #{dimenet_forward.11} parent=0 // pred_fallthru
    _
  // Predicated region
  $region14: #{dimenet_forward.11} parent=0 // pred_check
    _
  $region15: #{dimenet_forward.11} parent=0 // pred_check_branch
    %19 = sbr.rel (0) target = $region17
  $region16: #{dimenet_forward.11} parent=0 // pred_region
    _
  $region17: #{dimenet_forward.11} parent=0 // pred_fallthru
    _
  // Predicated region
  $region18: #{dimenet_forward.11} parent=0 // pred_check
    _
  $region19: #{dimenet_forward.11} parent=0 // pred_check_branch
    %21 = sbr.rel (0) target = $region21
  $region20: #{dimenet_forward.11} parent=0 // pred_region
    _
  $region21: #{dimenet_forward.11} parent=0 // pred_fallthru
    _
  // Predicated region
  $region22: #{dimenet_forward.11} parent=0 // pred_check
    _
  $region23: #{dimenet_forward.11} parent=0 // pred_check_branch
    %23 = sbr.rel (0) target = $region25
  $region24: #{dimenet_forward.11} parent=0 // pred_region
    _
  $region25: #{dimenet_forward.11} parent=0 // pred_fallthru
    _
  // Predicated region
  $region26: #{dimenet_forward.11} parent=0 // pred_check
    _
  $region27: #{dimenet_forward.11} parent=0 // pred_check_branch
    %25 = sbr.rel (0) target = $region29
  $region28: #{dimenet_forward.11} parent=0 // pred_region
    _
  $region29: #{dimenet_forward.11} parent=0 // pred_fallthru
    _
  %p26 = scmp.eq.s32.totalorder 0, 0
  // Predicated region
  $region30: #{dimenet_forward.11} parent=0 // pred_check
    %p27 = pneg %p26
  $region31: #{dimenet_forward.11} parent=0 // pred_check_branch
    %29 = sbr.rel (%p27) target = $region33
  $region32: #{dimenet_forward.11} parent=0 // pred_region
    %30 = vst [vmem:[#allocation2] sm:$0xff] 0.0
    %31 = vst [vmem:[#allocation2 + $0x8] sm:$0xff] 0.0
    %32 = vst [vmem:[#allocation2 + $0x10] sm:$0xff] 0.0
    %33 = vst [vmem:[#allocation2 + $0x18] sm:$0xff] 0.0
    %34 = vst [vmem:[#allocation2 + $0x20] sm:$0xff] 0.0
    %35 = vst [vmem:[#allocation2 + $0x28] sm:$0xff] 0.0
    %36 = vst [vmem:[#allocation2 + $0x30] sm:$0xff] 0.0
    %37 = vst [vmem:[#allocation2 + $0x38] sm:$0xff] 0.0
    %38 = vst [vmem:[#allocation2 + $0x40] sm:$0xff] 0.0
    %39 = vst [vmem:[#allocation2 + $0x48] sm:$0xff] 0.0
    %40 = vst [vmem:[#allocation2 + $0x50] sm:$0xff] 0.0
    %41 = vst [vmem:[#allocation2 + $0x58] sm:$0xff] 0.0
    %42 = vst [vmem:[#allocation2 + $0x60] sm:$0xff] 0.0
    %43 = vst [vmem:[#allocation2 + $0x68] sm:$0xff] 0.0
    %44 = vst [vmem:[#allocation2 + $0x70] sm:$0xff] 0.0
    %45 = vst [vmem:[#allocation2 + $0x78] sm:$0xff] 0.0
    %46 = vst [vmem:[#allocation2 + $0x80] sm:$0xff] 0.0
    %47 = vst [vmem:[#allocation2 + $0x88] sm:$0xff] 0.0
    %48 = vst [vmem:[#allocation2 + $0x90] sm:$0xff] 0.0
    %49 = vst [vmem:[#allocation2 + $0x98] sm:$0xff] 0.0
    %50 = vst [vmem:[#allocation2 + $0xa0] sm:$0xff] 0.0
    %51 = vst [vmem:[#allocation2 + $0xa8] sm:$0xff] 0.0
    %52 = vst [vmem:[#allocation2 + $0xb0] sm:$0xff] 0.0
    %53 = vst [vmem:[#allocation2 + $0xb8] sm:$0xff] 0.0
    %54 = vst [vmem:[#allocation2 + $0xc0] sm:$0xff] 0.0
    %55 = vst [vmem:[#allocation2 + $0xc8] sm:$0xff] 0.0
    %56 = vst [vmem:[#allocation2 + $0xd0] sm:$0xff] 0.0
    %57 = vst [vmem:[#allocation2 + $0xd8] sm:$0xff] 0.0
    %58 = vst [vmem:[#allocation2 + $0xe0] sm:$0xff] 0.0
    %59 = vst [vmem:[#allocation2 + $0xe8] sm:$0xff] 0.0
    %60 = vst [vmem:[#allocation2 + $0xf0] sm:$0xff] 0.0
    %61 = vst [vmem:[#allocation2 + $0xf8] sm:$0xff] 0.0
    %62 = vst [vmem:[#allocation2 + $0x100] sm:$0xff] 0.0
    %63 = vst [vmem:[#allocation2 + $0x108] sm:$0xff] 0.0
    %64 = vst [vmem:[#allocation2 + $0x110] sm:$0xff] 0.0
    %65 = vst [vmem:[#allocation2 + $0x118] sm:$0xff] 0.0
    %66 = vst [vmem:[#allocation2 + $0x120] sm:$0xff] 0.0
    %67 = vst [vmem:[#allocation2 + $0x128] sm:$0xff] 0.0
    %68 = vst [vmem:[#allocation2 + $0x130] sm:$0xff] 0.0
    %69 = vst [vmem:[#allocation2 + $0x138] sm:$0xff] 0.0
    %70 = vst [vmem:[#allocation2 + $0x140] sm:$0xff] 0.0
    %71 = vst [vmem:[#allocation2 + $0x148] sm:$0xff] 0.0
    %72 = vst [vmem:[#allocation2 + $0x150] sm:$0xff] 0.0
    %73 = vst [vmem:[#allocation2 + $0x158] sm:$0xff] 0.0
    %74 = vst [vmem:[#allocation2 + $0x160] sm:$0xff] 0.0
    %75 = vst [vmem:[#allocation2 + $0x168] sm:$0xff] 0.0
    %76 = vst [vmem:[#allocation2 + $0x170] sm:$0xff] 0.0
    %77 = vst [vmem:[#allocation2 + $0x178] sm:$0xff] 0.0
    %78 = vst [vmem:[#allocation2 + $0x180] sm:$0xff] 0.0
    %79 = vst [vmem:[#allocation2 + $0x188] sm:$0xff] 0.0
    %80 = vst [vmem:[#allocation2 + $0x190] sm:$0xff] 0.0
    %81 = vst [vmem:[#allocation2 + $0x198] sm:$0xff] 0.0
    %82 = vst [vmem:[#allocation2 + $0x1a0] sm:$0xff] 0.0
    %83 = vst [vmem:[#allocation2 + $0x1a8] sm:$0xff] 0.0
    %84 = vst [vmem:[#allocation2 + $0x1b0] sm:$0xff] 0.0
    %85 = vst [vmem:[#allocation2 + $0x1b8] sm:$0xff] 0.0
    %86 = vst [vmem:[#allocation2 + $0x1c0] sm:$0xff] 0.0
    %87 = vst [vmem:[#allocation2 + $0x1c8] sm:$0xff] 0.0
    %88 = vst [vmem:[#allocation2 + $0x1d0] sm:$0xff] 0.0
    %89 = vst [vmem:[#allocation2 + $0x1d8] sm:$0xff] 0.0
    %90 = vst [vmem:[#allocation2 + $0x1e0] sm:$0xff] 0.0
    %91 = vst [vmem:[#allocation2 + $0x1e8] sm:$0xff] 0.0
    %92 = vst [vmem:[#allocation2 + $0x1f0] sm:$0xff] 0.0
    %93 = vst [vmem:[#allocation2 + $0x1f8] sm:$0xff] 0.0
  $region33: #{dimenet_forward.11} parent=0 // pred_fallthru
    _
  %v94 = vld [vmem:[%s1] sm:$0xf]
  %v95 = vld [vmem:[%s1 + $0x4] sm:$0xf]
  %v96 = vld [vmem:[%s1 + $0x8] sm:$0xf]
  %v97 = vld [vmem:[%s1 + $0xc] sm:$0xf]
  %v98 = vld [vmem:[%s1 + $0x10] sm:$0xf]
  %v99 = vld [vmem:[%s1 + $0x14] sm:$0xf]
  %v100 = vld [vmem:[%s1 + $0x18] sm:$0xf]
  %v101 = vld [vmem:[%s1 + $0x1c] sm:$0xf]
  %v102 = vld [vmem:[%s1 + $0x20] sm:$0xf]
  %v103 = vld [vmem:[%s1 + $0x24] sm:$0xf]
  %v104 = vld [vmem:[%s1 + $0x28] sm:$0xf]
  %v105 = vld [vmem:[%s1 + $0x2c] sm:$0xf]
  %v106 = vld [vmem:[%s1 + $0x30] sm:$0xf]
  %v107 = vld [vmem:[%s1 + $0x34] sm:$0xf]
  %v108 = vld [vmem:[%s1 + $0x38] sm:$0xf]
  %v109 = vld [vmem:[%s1 + $0x3c] sm:$0xf]
  %v110 = vld [vmem:[%s1 + $0x40] sm:$0xf]
  %v111 = vld [vmem:[%s1 + $0x44] sm:$0xf]
  %v112 = vld [vmem:[%s1 + $0x48] sm:$0xf]
  %v113 = vld [vmem:[%s1 + $0x4c] sm:$0xf]
  %v114 = vld [vmem:[%s1 + $0x50] sm:$0xf]
  %v115 = vld [vmem:[%s1 + $0x54] sm:$0xf]
  %v116 = vld [vmem:[%s1 + $0x58] sm:$0xf]
  %v117 = vld [vmem:[%s1 + $0x5c] sm:$0xf]
  %v118 = vld [vmem:[%s1 + $0x60] sm:$0xf]
  %v119 = vld [vmem:[%s1 + $0x64] sm:$0xf]
  %v120 = vld [vmem:[%s1 + $0x68] sm:$0xf]
  %v121 = vld [vmem:[%s1 + $0x6c] sm:$0xf]
  %v122 = vld [vmem:[%s1 + $0x70] sm:$0xf]
  %v123 = vld [vmem:[%s1 + $0x74] sm:$0xf]
  %v124 = vld [vmem:[%s1 + $0x78] sm:$0xf]
  %v125 = vld [vmem:[%s1 + $0x7c] sm:$0xf]
  %v126 = vld [vmem:[%s5] sm:$0xf]
  %v127 = vld [vmem:[%s5 + $0x4] sm:$0xf]
  %v128 = vld [vmem:[%s5 + $0x8] sm:$0xf]
  %v129 = vld [vmem:[%s5 + $0xc] sm:$0xf]
  %v130 = vld [vmem:[%s5 + $0x10] sm:$0xf]
  %v131 = vld [vmem:[%s5 + $0x14] sm:$0xf]
  %v132 = vld [vmem:[%s5 + $0x18] sm:$0xf]
  %v133 = vld [vmem:[%s5 + $0x1c] sm:$0xf]
  %v134 = vld [vmem:[%s5 + $0x20] sm:$0xf]
  %v135 = vld [vmem:[%s5 + $0x24] sm:$0xf]
  %v136 = vld [vmem:[%s5 + $0x28] sm:$0xf]
  %v137 = vld [vmem:[%s5 + $0x2c] sm:$0xf]
  %v138 = vld [vmem:[%s5 + $0x30] sm:$0xf]
  %v139 = vld [vmem:[%s5 + $0x34] sm:$0xf]
  %v140 = vld [vmem:[%s5 + $0x38] sm:$0xf]
  %v141 = vld [vmem:[%s5 + $0x3c] sm:$0xf]
  %v174 = vunpack.c.l.b16 %v94
  %v175 = vunpack.c.l.b16 %v95
  %v176 = vunpack.c.l.b16 %v96
  %v177 = vunpack.c.l.b16 %v97
  %v178 = vunpack.c.l.b16 %v98
  %v179 = vunpack.c.l.b16 %v99
  %v180 = vunpack.c.l.b16 %v100
  %v181 = vunpack.c.l.b16 %v101
  %v182 = vunpack.c.l.b16 %v102
  %v183 = vunpack.c.l.b16 %v103
  %v184 = vunpack.c.l.b16 %v104
  %v185 = vunpack.c.l.b16 %v105
  %v186 = vunpack.c.l.b16 %v106
  %v187 = vunpack.c.l.b16 %v107
  %v188 = vunpack.c.l.b16 %v108
  %v189 = vunpack.c.l.b16 %v109
  %v190 = vunpack.c.l.b16 %v110
  %v191 = vunpack.c.l.b16 %v111
  %v192 = vunpack.c.l.b16 %v112
  %v193 = vunpack.c.l.b16 %v113
  %v194 = vunpack.c.l.b16 %v114
  %v195 = vunpack.c.l.b16 %v115
  %v196 = vunpack.c.l.b16 %v116
  %v197 = vunpack.c.l.b16 %v117
  %v198 = vunpack.c.l.b16 %v118
  %v199 = vunpack.c.l.b16 %v119
  %v200 = vunpack.c.l.b16 %v120
  %v201 = vunpack.c.l.b16 %v121
  %v202 = vunpack.c.l.b16 %v122
  %v203 = vunpack.c.l.b16 %v123
  %v204 = vunpack.c.l.b16 %v124
  %v205 = vunpack.c.l.b16 %v125
  %v206 = vpack.c.b16 %v175, %v174
  %v207 = vpack.c.b16 %v177, %v176
  %v208 = vpack.c.b16 %v179, %v178
  %v209 = vpack.c.b16 %v181, %v180
  %v210 = vpack.c.b16 %v183, %v182
  %v211 = vpack.c.b16 %v185, %v184
  %v212 = vpack.c.b16 %v187, %v186
  %v213 = vpack.c.b16 %v189, %v188
  %v214 = vpack.c.b16 %v191, %v190
  %v215 = vpack.c.b16 %v193, %v192
  %v216 = vpack.c.b16 %v195, %v194
  %v217 = vpack.c.b16 %v197, %v196
  %v218 = vpack.c.b16 %v199, %v198
  %v219 = vpack.c.b16 %v201, %v200
  %v220 = vpack.c.b16 %v203, %v202
  %v221 = vpack.c.b16 %v205, %v204
  %v254 = vunpack.c.l.b16 %v126
  %v255 = vunpack.c.l.b16 %v127
  %v256 = vunpack.c.l.b16 %v128
  %v257 = vunpack.c.l.b16 %v129
  %v258 = vunpack.c.l.b16 %v130
  %v259 = vunpack.c.l.b16 %v131
  %v260 = vunpack.c.l.b16 %v132
  %v261 = vunpack.c.l.b16 %v133
  %v262 = vunpack.c.l.b16 %v134
  %v263 = vunpack.c.l.b16 %v135
  %v264 = vunpack.c.l.b16 %v136
  %v265 = vunpack.c.l.b16 %v137
  %v266 = vunpack.c.l.b16 %v138
  %v267 = vunpack.c.l.b16 %v139
  %v268 = vunpack.c.l.b16 %v140
  %v269 = vunpack.c.l.b16 %v141
  %v270 = vpack.c.b16 %v255, %v254
  %v271 = vpack.c.b16 %v257, %v256
  %v272 = vpack.c.b16 %v259, %v258
  %v273 = vpack.c.b16 %v261, %v260
  %v274 = vpack.c.b16 %v263, %v262
  %v275 = vpack.c.b16 %v265, %v264
  %v276 = vpack.c.b16 %v267, %v266
  %v277 = vpack.c.b16 %v269, %v268
  %286 = vmatpush.bf16.msra.mxu0 %v277
  %287 = vmatpush.bf16.msra.mxu0 %v276
  %288 = vmatpush.bf16.msra.mxu0 %v275
  %289 = vmatpush.bf16.msra.mxu0 %v274
  %290 = vmatpush.bf16.msra.mxu0 %v273
  %291 = vmatpush.bf16.msra.mxu0 %v272
  %292 = vmatpush.bf16.msra.mxu0 %v271
  %293 = vmatpush.bf16.msra.mxu0 %v270
  %294 = vmatmul.bf16.gmra.mxu0 %v206
  %v295 = vpop.f32.mrf.mxu0
  %v296 = vadd.f32 0.0, %v295
  %v297 = vpop.f32.mrf.mxu0
  %v298 = vadd.f32 0.0, %v297
  %299 = vmatmul.bf16.gmra.mxu0 %v207
  %v300 = vpop.f32.mrf.mxu0
  %v301 = vadd.f32 0.0, %v300
  %v302 = vpop.f32.mrf.mxu0
  %v303 = vadd.f32 0.0, %v302
  %304 = vmatmul.bf16.gmra.mxu0 %v208
  %v305 = vpop.f32.mrf.mxu0
  %v306 = vadd.f32 0.0, %v305
  %v307 = vpop.f32.mrf.mxu0
  %v308 = vadd.f32 0.0, %v307
  %309 = vmatmul.bf16.gmra.mxu0 %v209
  %v310 = vpop.f32.mrf.mxu0
  %v311 = vadd.f32 0.0, %v310
  %v312 = vpop.f32.mrf.mxu0
  %v313 = vadd.f32 0.0, %v312
  %314 = vmatmul.bf16.gmra.mxu0 %v210
  %v315 = vpop.f32.mrf.mxu0
  %v316 = vadd.f32 0.0, %v315
  %v317 = vpop.f32.mrf.mxu0
  %v318 = vadd.f32 0.0, %v317
  %319 = vmatmul.bf16.gmra.mxu0 %v211
  %v320 = vpop.f32.mrf.mxu0
  %v321 = vadd.f32 0.0, %v320
  %v322 = vpop.f32.mrf.mxu0
  %v323 = vadd.f32 0.0, %v322
  %324 = vmatmul.bf16.gmra.mxu0 %v212
  %v325 = vpop.f32.mrf.mxu0
  %v326 = vadd.f32 0.0, %v325
  %v327 = vpop.f32.mrf.mxu0
  %v328 = vadd.f32 0.0, %v327
  %329 = vmatmul.bf16.gmra.mxu0 %v213
  %v330 = vpop.f32.mrf.mxu0
  %v331 = vadd.f32 0.0, %v330
  %v332 = vpop.f32.mrf.mxu0
  %v333 = vadd.f32 0.0, %v332
  %334 = vmatmul.bf16.gmra.mxu0 %v214
  %v335 = vpop.f32.mrf.mxu0
  %v336 = vadd.f32 0.0, %v335
  %v337 = vpop.f32.mrf.mxu0
  %v338 = vadd.f32 0.0, %v337
  %339 = vmatmul.bf16.gmra.mxu0 %v215
  %v340 = vpop.f32.mrf.mxu0
  %v341 = vadd.f32 0.0, %v340
  %v342 = vpop.f32.mrf.mxu0
  %v343 = vadd.f32 0.0, %v342
  %344 = vmatmul.bf16.gmra.mxu0 %v216
  %v345 = vpop.f32.mrf.mxu0
  %v346 = vadd.f32 0.0, %v345
  %v347 = vpop.f32.mrf.mxu0
  %v348 = vadd.f32 0.0, %v347
  %349 = vmatmul.bf16.gmra.mxu0 %v217
  %v350 = vpop.f32.mrf.mxu0
  %v351 = vadd.f32 0.0, %v350
  %v352 = vpop.f32.mrf.mxu0
  %v353 = vadd.f32 0.0, %v352
  %354 = vmatmul.bf16.gmra.mxu0 %v218
  %v355 = vpop.f32.mrf.mxu0
  %v356 = vadd.f32 0.0, %v355
  %v357 = vpop.f32.mrf.mxu0
  %v358 = vadd.f32 0.0, %v357
  %359 = vmatmul.bf16.gmra.mxu0 %v219
  %v360 = vpop.f32.mrf.mxu0
  %v361 = vadd.f32 0.0, %v360
  %v362 = vpop.f32.mrf.mxu0
  %v363 = vadd.f32 0.0, %v362
  %364 = vmatmul.bf16.gmra.mxu0 %v220
  %v365 = vpop.f32.mrf.mxu0
  %v366 = vadd.f32 0.0, %v365
  %v367 = vpop.f32.mrf.mxu0
  %v368 = vadd.f32 0.0, %v367
  %369 = vmatmul.bf16.gmra.mxu0 %v221
  %v370 = vpop.f32.mrf.mxu0
  %v371 = vadd.f32 0.0, %v370
  %v372 = vpop.f32.mrf.mxu0
  %v373 = vadd.f32 0.0, %v372
  %374 = vdwg.mxu0
  %v375 = vld [vmem:[%s0] sm:$0xf]
  %v376 = vld [vmem:[%s0 + $0x4] sm:$0xf]
  %v377 = vld [vmem:[%s0 + $0x8] sm:$0xf]
  %v378 = vld [vmem:[%s0 + $0xc] sm:$0xf]
  %v379 = vld [vmem:[%s0 + $0x10] sm:$0xf]
  %v380 = vld [vmem:[%s0 + $0x14] sm:$0xf]
  %v381 = vld [vmem:[%s0 + $0x18] sm:$0xf]
  %v382 = vld [vmem:[%s0 + $0x1c] sm:$0xf]
  %v383 = vld [vmem:[%s0 + $0x20] sm:$0xf]
  %v384 = vld [vmem:[%s0 + $0x24] sm:$0xf]
  %v385 = vld [vmem:[%s0 + $0x28] sm:$0xf]
  %v386 = vld [vmem:[%s0 + $0x2c] sm:$0xf]
  %v387 = vld [vmem:[%s0 + $0x30] sm:$0xf]
  %v388 = vld [vmem:[%s0 + $0x34] sm:$0xf]
  %v389 = vld [vmem:[%s0 + $0x38] sm:$0xf]
  %v390 = vld [vmem:[%s0 + $0x3c] sm:$0xf]
  %v391 = vld [vmem:[%s0 + $0x40] sm:$0xf]
  %v392 = vld [vmem:[%s0 + $0x44] sm:$0xf]
  %v393 = vld [vmem:[%s0 + $0x48] sm:$0xf]
  %v394 = vld [vmem:[%s0 + $0x4c] sm:$0xf]
  %v395 = vld [vmem:[%s0 + $0x50] sm:$0xf]
  %v396 = vld [vmem:[%s0 + $0x54] sm:$0xf]
  %v397 = vld [vmem:[%s0 + $0x58] sm:$0xf]
  %v398 = vld [vmem:[%s0 + $0x5c] sm:$0xf]
  %v399 = vld [vmem:[%s0 + $0x60] sm:$0xf]
  %v400 = vld [vmem:[%s0 + $0x64] sm:$0xf]
  %v401 = vld [vmem:[%s0 + $0x68] sm:$0xf]
  %v402 = vld [vmem:[%s0 + $0x6c] sm:$0xf]
  %v403 = vld [vmem:[%s0 + $0x70] sm:$0xf]
  %v404 = vld [vmem:[%s0 + $0x74] sm:$0xf]
  %v405 = vld [vmem:[%s0 + $0x78] sm:$0xf]
  %v406 = vld [vmem:[%s0 + $0x7c] sm:$0xf]
  %v407 = vunpack.c.l.bf16 %v375
  %v408 = vunpack.c.l.bf16 %v376
  %v409 = vunpack.c.l.bf16 %v377
  %v410 = vunpack.c.l.bf16 %v378
  %v411 = vunpack.c.l.bf16 %v379
  %v412 = vunpack.c.l.bf16 %v380
  %v413 = vunpack.c.l.bf16 %v381
  %v414 = vunpack.c.l.bf16 %v382
  %v415 = vunpack.c.l.bf16 %v383
  %v416 = vunpack.c.l.bf16 %v384
  %v417 = vunpack.c.l.bf16 %v385
  %v418 = vunpack.c.l.bf16 %v386
  %v419 = vunpack.c.l.bf16 %v387
  %v420 = vunpack.c.l.bf16 %v388
  %v421 = vunpack.c.l.bf16 %v389
  %v422 = vunpack.c.l.bf16 %v390
  %v423 = vunpack.c.l.bf16 %v391
  %v424 = vunpack.c.l.bf16 %v392
  %v425 = vunpack.c.l.bf16 %v393
  %v426 = vunpack.c.l.bf16 %v394
  %v427 = vunpack.c.l.bf16 %v395
  %v428 = vunpack.c.l.bf16 %v396
  %v429 = vunpack.c.l.bf16 %v397
  %v430 = vunpack.c.l.bf16 %v398
  %v431 = vunpack.c.l.bf16 %v399
  %v432 = vunpack.c.l.bf16 %v400
  %v433 = vunpack.c.l.bf16 %v401
  %v434 = vunpack.c.l.bf16 %v402
  %v435 = vunpack.c.l.bf16 %v403
  %v436 = vunpack.c.l.bf16 %v404
  %v437 = vunpack.c.l.bf16 %v405
  %v438 = vunpack.c.l.bf16 %v406
  %v439 = vmul.f32 %v407, %v296
  %v440 = vmul.f32 %v408, %v298
  %v441 = vmul.f32 %v409, %v301
  %v442 = vmul.f32 %v410, %v303
  %v443 = vmul.f32 %v411, %v306
  %v444 = vmul.f32 %v412, %v308
  %v445 = vmul.f32 %v413, %v311
  %v446 = vmul.f32 %v414, %v313
  %v447 = vmul.f32 %v415, %v316
  %v448 = vmul.f32 %v416, %v318
  %v449 = vmul.f32 %v417, %v321
  %v450 = vmul.f32 %v418, %v323
  %v451 = vmul.f32 %v419, %v326
  %v452 = vmul.f32 %v420, %v328
  %v453 = vmul.f32 %v421, %v331
  %v454 = vmul.f32 %v422, %v333
  %v455 = vmul.f32 %v423, %v336
  %v456 = vmul.f32 %v424, %v338
  %v457 = vmul.f32 %v425, %v341
  %v458 = vmul.f32 %v426, %v343
  %v459 = vmul.f32 %v427, %v346
  %v460 = vmul.f32 %v428, %v348
  %v461 = vmul.f32 %v429, %v351
  %v462 = vmul.f32 %v430, %v353
  %v463 = vmul.f32 %v431, %v356
  %v464 = vmul.f32 %v432, %v358
  %v465 = vmul.f32 %v433, %v361
  %v466 = vmul.f32 %v434, %v363
  %v467 = vmul.f32 %v435, %v366
  %v468 = vmul.f32 %v436, %v368
  %v469 = vmul.f32 %v437, %v371
  %v470 = vmul.f32 %v438, %v373
  %v471 = vld [vmem:[%s2] sm:$0x3]
  %v472 = vlaneseq
  %v473 = vshrl.u32 %v472, 7
  %v474 = vadd.s32 %v473, 8
  %v475 = vadd.s32 %v473, 16
  %v476 = vadd.s32 %v473, 24
  %v477 = vadd.s32 %v473, 32
  %v478 = vadd.s32 %v473, 40
  %v479 = vadd.s32 %v473, 48
  %v480 = vadd.s32 %v473, 56
  %v481 = vadd.s32 %v473, 64
  %v482 = vadd.s32 %v473, 72
  %v483 = vadd.s32 %v473, 80
  %v484 = vadd.s32 %v473, 88
  %v485 = vadd.s32 %v473, 96
  %v486 = vadd.s32 %v473, 104
  %v487 = vadd.s32 %v473, 112
  %v488 = vadd.s32 %v473, 120
  %v489 = vadd.s32 %v473, 128
  %v490 = vadd.s32 %v473, 136
  %v491 = vadd.s32 %v473, 144
  %v492 = vadd.s32 %v473, 152
  %v493 = vadd.s32 %v473, 160
  %v494 = vadd.s32 %v473, 168
  %v495 = vadd.s32 %v473, 176
  %v496 = vadd.s32 %v473, 184
  %v497 = vadd.s32 %v473, 192
  %v498 = vadd.s32 %v473, 200
  %v499 = vadd.s32 %v473, 208
  %v500 = vadd.s32 %v473, 216
  %v501 = vadd.s32 %v473, 224
  %v502 = vadd.s32 %v473, 232
  %v503 = vadd.s32 %v473, 240
  %v504 = vadd.s32 %v473, 248
  %v505 = vadd.s32 %v473, 256
  %v506 = vadd.s32 %v473, 264
  %v507 = vadd.s32 %v473, 272
  %v508 = vadd.s32 %v473, 280
  %v509 = vadd.s32 %v473, 288
  %v510 = vadd.s32 %v473, 296
  %v511 = vadd.s32 %v473, 304
  %v512 = vadd.s32 %v473, 312
  %v513 = vadd.s32 %v473, 320
  %v514 = vadd.s32 %v473, 328
  %v515 = vadd.s32 %v473, 336
  %v516 = vadd.s32 %v473, 344
  %v517 = vadd.s32 %v473, 352
  %v518 = vadd.s32 %v473, 360
  %v519 = vadd.s32 %v473, 368
  %v520 = vadd.s32 %v473, 376
  %v521 = vadd.s32 %v473, 384
  %v522 = vadd.s32 %v473, 392
  %v523 = vadd.s32 %v473, 400
  %v524 = vadd.s32 %v473, 408
  %v525 = vadd.s32 %v473, 416
  %v526 = vadd.s32 %v473, 424
  %v527 = vadd.s32 %v473, 432
  %v528 = vadd.s32 %v473, 440
  %v529 = vadd.s32 %v473, 448
  %v530 = vadd.s32 %v473, 456
  %v531 = vadd.s32 %v473, 464
  %v532 = vadd.s32 %v473, 472
  %v533 = vadd.s32 %v473, 480
  %v534 = vadd.s32 %v473, 488
  %v535 = vadd.s32 %v473, 496
  %v536 = vadd.s32 %v473, 504
  %v537 = vperm.slane %v471, 0
  %v538 = vperm.slane %v471, 1
  %vm539 = vcmp.eq.s32.totalorder %v473, %v537
  %vm540 = vcmp.eq.s32.totalorder %v473, %v538
  %vm541 = vcmp.eq.s32.totalorder %v474, %v537
  %vm542 = vcmp.eq.s32.totalorder %v474, %v538
  %vm543 = vcmp.eq.s32.totalorder %v475, %v537
  %vm544 = vcmp.eq.s32.totalorder %v475, %v538
  %vm545 = vcmp.eq.s32.totalorder %v476, %v537
  %vm546 = vcmp.eq.s32.totalorder %v476, %v538
  %vm547 = vcmp.eq.s32.totalorder %v477, %v537
  %vm548 = vcmp.eq.s32.totalorder %v477, %v538
  %vm549 = vcmp.eq.s32.totalorder %v478, %v537
  %vm550 = vcmp.eq.s32.totalorder %v478, %v538
  %vm551 = vcmp.eq.s32.totalorder %v479, %v537
  %vm552 = vcmp.eq.s32.totalorder %v479, %v538
  %vm553 = vcmp.eq.s32.totalorder %v480, %v537
  %vm554 = vcmp.eq.s32.totalorder %v480, %v538
  %vm555 = vcmp.eq.s32.totalorder %v481, %v537
  %vm556 = vcmp.eq.s32.totalorder %v481, %v538
  %vm557 = vcmp.eq.s32.totalorder %v482, %v537
  %vm558 = vcmp.eq.s32.totalorder %v482, %v538
  %vm559 = vcmp.eq.s32.totalorder %v483, %v537
  %vm560 = vcmp.eq.s32.totalorder %v483, %v538
  %vm561 = vcmp.eq.s32.totalorder %v484, %v537
  %vm562 = vcmp.eq.s32.totalorder %v484, %v538
  %vm563 = vcmp.eq.s32.totalorder %v485, %v537
  %vm564 = vcmp.eq.s32.totalorder %v485, %v538
  %vm565 = vcmp.eq.s32.totalorder %v486, %v537
  %vm566 = vcmp.eq.s32.totalorder %v486, %v538
  %vm567 = vcmp.eq.s32.totalorder %v487, %v537
  %vm568 = vcmp.eq.s32.totalorder %v487, %v538
  %vm569 = vcmp.eq.s32.totalorder %v488, %v537
  %vm570 = vcmp.eq.s32.totalorder %v488, %v538
  %vm571 = vcmp.eq.s32.totalorder %v489, %v537
  %vm572 = vcmp.eq.s32.totalorder %v489, %v538
  %vm573 = vcmp.eq.s32.totalorder %v490, %v537
  %vm574 = vcmp.eq.s32.totalorder %v490, %v538
  %vm575 = vcmp.eq.s32.totalorder %v491, %v537
  %vm576 = vcmp.eq.s32.totalorder %v491, %v538
  %vm577 = vcmp.eq.s32.totalorder %v492, %v537
  %vm578 = vcmp.eq.s32.totalorder %v492, %v538
  %vm579 = vcmp.eq.s32.totalorder %v493, %v537
  %vm580 = vcmp.eq.s32.totalorder %v493, %v538
  %vm581 = vcmp.eq.s32.totalorder %v494, %v537
  %vm582 = vcmp.eq.s32.totalorder %v494, %v538
  %vm583 = vcmp.eq.s32.totalorder %v495, %v537
  %vm584 = vcmp.eq.s32.totalorder %v495, %v538
  %vm585 = vcmp.eq.s32.totalorder %v496, %v537
  %vm586 = vcmp.eq.s32.totalorder %v496, %v538
  %vm587 = vcmp.eq.s32.totalorder %v497, %v537
  %vm588 = vcmp.eq.s32.totalorder %v497, %v538
  %vm589 = vcmp.eq.s32.totalorder %v498, %v537
  %vm590 = vcmp.eq.s32.totalorder %v498, %v538
  %vm591 = vcmp.eq.s32.totalorder %v499, %v537
  %vm592 = vcmp.eq.s32.totalorder %v499, %v538
  %vm593 = vcmp.eq.s32.totalorder %v500, %v537
  %vm594 = vcmp.eq.s32.totalorder %v500, %v538
  %vm595 = vcmp.eq.s32.totalorder %v501, %v537
  %vm596 = vcmp.eq.s32.totalorder %v501, %v538
  %vm597 = vcmp.eq.s32.totalorder %v502, %v537
  %vm598 = vcmp.eq.s32.totalorder %v502, %v538
  %vm599 = vcmp.eq.s32.totalorder %v503, %v537
  %vm600 = vcmp.eq.s32.totalorder %v503, %v538
  %vm601 = vcmp.eq.s32.totalorder %v504, %v537
  %vm602 = vcmp.eq.s32.totalorder %v504, %v538
  %vm603 = vcmp.eq.s32.totalorder %v505, %v537
  %vm604 = vcmp.eq.s32.totalorder %v505, %v538
  %vm605 = vcmp.eq.s32.totalorder %v506, %v537
  %vm606 = vcmp.eq.s32.totalorder %v506, %v538
  %vm607 = vcmp.eq.s32.totalorder %v507, %v537
  %vm608 = vcmp.eq.s32.totalorder %v507, %v538
  %vm609 = vcmp.eq.s32.totalorder %v508, %v537
  %vm610 = vcmp.eq.s32.totalorder %v508, %v538
  %vm611 = vcmp.eq.s32.totalorder %v509, %v537
  %vm612 = vcmp.eq.s32.totalorder %v509, %v538
  %vm613 = vcmp.eq.s32.totalorder %v510, %v537
  %vm614 = vcmp.eq.s32.totalorder %v510, %v538
  %vm615 = vcmp.eq.s32.totalorder %v511, %v537
  %vm616 = vcmp.eq.s32.totalorder %v511, %v538
  %vm617 = vcmp.eq.s32.totalorder %v512, %v537
  %vm618 = vcmp.eq.s32.totalorder %v512, %v538
  %vm619 = vcmp.eq.s32.totalorder %v513, %v537
  %vm620 = vcmp.eq.s32.totalorder %v513, %v538
  %vm621 = vcmp.eq.s32.totalorder %v514, %v537
  %vm622 = vcmp.eq.s32.totalorder %v514, %v538
  %vm623 = vcmp.eq.s32.totalorder %v515, %v537
  %vm624 = vcmp.eq.s32.totalorder %v515, %v538
  %vm625 = vcmp.eq.s32.totalorder %v516, %v537
  %vm626 = vcmp.eq.s32.totalorder %v516, %v538
  %vm627 = vcmp.eq.s32.totalorder %v517, %v537
  %vm628 = vcmp.eq.s32.totalorder %v517, %v538
  %vm629 = vcmp.eq.s32.totalorder %v518, %v537
  %vm630 = vcmp.eq.s32.totalorder %v518, %v538
  %vm631 = vcmp.eq.s32.totalorder %v519, %v537
  %vm632 = vcmp.eq.s32.totalorder %v519, %v538
  %vm633 = vcmp.eq.s32.totalorder %v520, %v537
  %vm634 = vcmp.eq.s32.totalorder %v520, %v538
  %vm635 = vcmp.eq.s32.totalorder %v521, %v537
  %vm636 = vcmp.eq.s32.totalorder %v521, %v538
  %vm637 = vcmp.eq.s32.totalorder %v522, %v537
  %vm638 = vcmp.eq.s32.totalorder %v522, %v538
  %vm639 = vcmp.eq.s32.totalorder %v523, %v537
  %vm640 = vcmp.eq.s32.totalorder %v523, %v538
  %vm641 = vcmp.eq.s32.totalorder %v524, %v537
  %vm642 = vcmp.eq.s32.totalorder %v524, %v538
  %vm643 = vcmp.eq.s32.totalorder %v525, %v537
  %vm644 = vcmp.eq.s32.totalorder %v525, %v538
  %vm645 = vcmp.eq.s32.totalorder %v526, %v537
  %vm646 = vcmp.eq.s32.totalorder %v526, %v538
  %vm647 = vcmp.eq.s32.totalorder %v527, %v537
  %vm648 = vcmp.eq.s32.totalorder %v527, %v538
  %vm649 = vcmp.eq.s32.totalorder %v528, %v537
  %vm650 = vcmp.eq.s32.totalorder %v528, %v538
  %vm651 = vcmp.eq.s32.totalorder %v529, %v537
  %vm652 = vcmp.eq.s32.totalorder %v529, %v538
  %vm653 = vcmp.eq.s32.totalorder %v530, %v537
  %vm654 = vcmp.eq.s32.totalorder %v530, %v538
  %vm655 = vcmp.eq.s32.totalorder %v531, %v537
  %vm656 = vcmp.eq.s32.totalorder %v531, %v538
  %vm657 = vcmp.eq.s32.totalorder %v532, %v537
  %vm658 = vcmp.eq.s32.totalorder %v532, %v538
  %vm659 = vcmp.eq.s32.totalorder %v533, %v537
  %vm660 = vcmp.eq.s32.totalorder %v533, %v538
  %vm661 = vcmp.eq.s32.totalorder %v534, %v537
  %vm662 = vcmp.eq.s32.totalorder %v534, %v538
  %vm663 = vcmp.eq.s32.totalorder %v535, %v537
  %vm664 = vcmp.eq.s32.totalorder %v535, %v538
  %vm665 = vcmp.eq.s32.totalorder %v536, %v537
  %vm666 = vcmp.eq.s32.totalorder %v536, %v538
  %v667 = vsel %vm539, 1.0, 0.0
  %v668 = vsel %vm540, 1.0, 0.0
  %v669 = vsel %vm541, 1.0, 0.0
  %v670 = vsel %vm542, 1.0, 0.0
  %v671 = vsel %vm543, 1.0, 0.0
  %v672 = vsel %vm544, 1.0, 0.0
  %v673 = vsel %vm545, 1.0, 0.0
  %v674 = vsel %vm546, 1.0, 0.0
  %v675 = vsel %vm547, 1.0, 0.0
  %v676 = vsel %vm548, 1.0, 0.0
  %v677 = vsel %vm549, 1.0, 0.0
  %v678 = vsel %vm550, 1.0, 0.0
  %v679 = vsel %vm551, 1.0, 0.0
  %v680 = vsel %vm552, 1.0, 0.0
  %v681 = vsel %vm553, 1.0, 0.0
  %v682 = vsel %vm554, 1.0, 0.0
  %v683 = vsel %vm555, 1.0, 0.0
  %v684 = vsel %vm556, 1.0, 0.0
  %v685 = vsel %vm557, 1.0, 0.0
  %v686 = vsel %vm558, 1.0, 0.0
  %v687 = vsel %vm559, 1.0, 0.0
  %v688 = vsel %vm560, 1.0, 0.0
  %v689 = vsel %vm561, 1.0, 0.0
  %v690 = vsel %vm562, 1.0, 0.0
  %v691 = vsel %vm563, 1.0, 0.0
  %v692 = vsel %vm564, 1.0, 0.0
  %v693 = vsel %vm565, 1.0, 0.0
  %v694 = vsel %vm566, 1.0, 0.0
  %v695 = vsel %vm567, 1.0, 0.0
  %v696 = vsel %vm568, 1.0, 0.0
  %v697 = vsel %vm569, 1.0, 0.0
  %v698 = vsel %vm570, 1.0, 0.0
  %v699 = vsel %vm571, 1.0, 0.0
  %v700 = vsel %vm572, 1.0, 0.0
  %v701 = vsel %vm573, 1.0, 0.0
  %v702 = vsel %vm574, 1.0, 0.0
  %v703 = vsel %vm575, 1.0, 0.0
  %v704 = vsel %vm576, 1.0, 0.0
  %v705 = vsel %vm577, 1.0, 0.0
  %v706 = vsel %vm578, 1.0, 0.0
  %v707 = vsel %vm579, 1.0, 0.0
  %v708 = vsel %vm580, 1.0, 0.0
  %v709 = vsel %vm581, 1.0, 0.0
  %v710 = vsel %vm582, 1.0, 0.0
  %v711 = vsel %vm583, 1.0, 0.0
  %v712 = vsel %vm584, 1.0, 0.0
  %v713 = vsel %vm585, 1.0, 0.0
  %v714 = vsel %vm586, 1.0, 0.0
  %v715 = vsel %vm587, 1.0, 0.0
  %v716 = vsel %vm588, 1.0, 0.0
  %v717 = vsel %vm589, 1.0, 0.0
  %v718 = vsel %vm590, 1.0, 0.0
  %v719 = vsel %vm591, 1.0, 0.0
  %v720 = vsel %vm592, 1.0, 0.0
  %v721 = vsel %vm593, 1.0, 0.0
  %v722 = vsel %vm594, 1.0, 0.0
  %v723 = vsel %vm595, 1.0, 0.0
  %v724 = vsel %vm596, 1.0, 0.0
  %v725 = vsel %vm597, 1.0, 0.0
  %v726 = vsel %vm598, 1.0, 0.0
  %v727 = vsel %vm599, 1.0, 0.0
  %v728 = vsel %vm600, 1.0, 0.0
  %v729 = vsel %vm601, 1.0, 0.0
  %v730 = vsel %vm602, 1.0, 0.0
  %v731 = vsel %vm603, 1.0, 0.0
  %v732 = vsel %vm604, 1.0, 0.0
  %v733 = vsel %vm605, 1.0, 0.0
  %v734 = vsel %vm606, 1.0, 0.0
  %v735 = vsel %vm607, 1.0, 0.0
  %v736 = vsel %vm608, 1.0, 0.0
  %v737 = vsel %vm609, 1.0, 0.0
  %v738 = vsel %vm610, 1.0, 0.0
  %v739 = vsel %vm611, 1.0, 0.0
  %v740 = vsel %vm612, 1.0, 0.0
  %v741 = vsel %vm613, 1.0, 0.0
  %v742 = vsel %vm614, 1.0, 0.0
  %v743 = vsel %vm615, 1.0, 0.0
  %v744 = vsel %vm616, 1.0, 0.0
  %v745 = vsel %vm617, 1.0, 0.0
  %v746 = vsel %vm618, 1.0, 0.0
  %v747 = vsel %vm619, 1.0, 0.0
  %v748 = vsel %vm620, 1.0, 0.0
  %v749 = vsel %vm621, 1.0, 0.0
  %v750 = vsel %vm622, 1.0, 0.0
  %v751 = vsel %vm623, 1.0, 0.0
  %v752 = vsel %vm624, 1.0, 0.0
  %v753 = vsel %vm625, 1.0, 0.0
  %v754 = vsel %vm626, 1.0, 0.0
  %v755 = vsel %vm627, 1.0, 0.0
  %v756 = vsel %vm628, 1.0, 0.0
  %v757 = vsel %vm629, 1.0, 0.0
  %v758 = vsel %vm630, 1.0, 0.0
  %v759 = vsel %vm631, 1.0, 0.0
  %v760 = vsel %vm632, 1.0, 0.0
  %v761 = vsel %vm633, 1.0, 0.0
  %v762 = vsel %vm634, 1.0, 0.0
  %v763 = vsel %vm635, 1.0, 0.0
  %v764 = vsel %vm636, 1.0, 0.0
  %v765 = vsel %vm637, 1.0, 0.0
  %v766 = vsel %vm638, 1.0, 0.0
  %v767 = vsel %vm639, 1.0, 0.0
  %v768 = vsel %vm640, 1.0, 0.0
  %v769 = vsel %vm641, 1.0, 0.0
  %v770 = vsel %vm642, 1.0, 0.0
  %v771 = vsel %vm643, 1.0, 0.0
  %v772 = vsel %vm644, 1.0, 0.0
  %v773 = vsel %vm645, 1.0, 0.0
  %v774 = vsel %vm646, 1.0, 0.0
  %v775 = vsel %vm647, 1.0, 0.0
  %v776 = vsel %vm648, 1.0, 0.0
  %v777 = vsel %vm649, 1.0, 0.0
  %v778 = vsel %vm650, 1.0, 0.0
  %v779 = vsel %vm651, 1.0, 0.0
  %v780 = vsel %vm652, 1.0, 0.0
  %v781 = vsel %vm653, 1.0, 0.0
  %v782 = vsel %vm654, 1.0, 0.0
  %v783 = vsel %vm655, 1.0, 0.0
  %v784 = vsel %vm656, 1.0, 0.0
  %v785 = vsel %vm657, 1.0, 0.0
  %v786 = vsel %vm658, 1.0, 0.0
  %v787 = vsel %vm659, 1.0, 0.0
  %v788 = vsel %vm660, 1.0, 0.0
  %v789 = vsel %vm661, 1.0, 0.0
  %v790 = vsel %vm662, 1.0, 0.0
  %v791 = vsel %vm663, 1.0, 0.0
  %v792 = vsel %vm664, 1.0, 0.0
  %v793 = vsel %vm665, 1.0, 0.0
  %v794 = vsel %vm666, 1.0, 0.0
  %v795 = vpack.c.bf16 %v669, %v667
  %v796 = vpack.c.bf16 %v670, %v668
  %v797 = vpack.c.bf16 %v673, %v671
  %v798 = vpack.c.bf16 %v674, %v672
  %v799 = vpack.c.bf16 %v677, %v675
  %v800 = vpack.c.bf16 %v678, %v676
  %v801 = vpack.c.bf16 %v681, %v679
  %v802 = vpack.c.bf16 %v682, %v680
  %v803 = vpack.c.bf16 %v685, %v683
  %v804 = vpack.c.bf16 %v686, %v684
  %v805 = vpack.c.bf16 %v689, %v687
  %v806 = vpack.c.bf16 %v690, %v688
  %v807 = vpack.c.bf16 %v693, %v691
  %v808 = vpack.c.bf16 %v694, %v692
  %v809 = vpack.c.bf16 %v697, %v695
  %v810 = vpack.c.bf16 %v698, %v696
  %v811 = vpack.c.bf16 %v701, %v699
  %v812 = vpack.c.bf16 %v702, %v700
  %v813 = vpack.c.bf16 %v705, %v703
  %v814 = vpack.c.bf16 %v706, %v704
  %v815 = vpack.c.bf16 %v709, %v707
  %v816 = vpack.c.bf16 %v710, %v708
  %v817 = vpack.c.bf16 %v713, %v711
  %v818 = vpack.c.bf16 %v714, %v712
  %v819 = vpack.c.bf16 %v717, %v715
  %v820 = vpack.c.bf16 %v718, %v716
  %v821 = vpack.c.bf16 %v721, %v719
  %v822 = vpack.c.bf16 %v722, %v720
  %v823 = vpack.c.bf16 %v725, %v723
  %v824 = vpack.c.bf16 %v726, %v724
  %v825 = vpack.c.bf16 %v729, %v727
  %v826 = vpack.c.bf16 %v730, %v728
  %v827 = vpack.c.bf16 %v733, %v731
  %v828 = vpack.c.bf16 %v734, %v732
  %v829 = vpack.c.bf16 %v737, %v735
  %v830 = vpack.c.bf16 %v738, %v736
  %v831 = vpack.c.bf16 %v741, %v739
  %v832 = vpack.c.bf16 %v742, %v740
  %v833 = vpack.c.bf16 %v745, %v743
  %v834 = vpack.c.bf16 %v746, %v744
  %v835 = vpack.c.bf16 %v749, %v747
  %v836 = vpack.c.bf16 %v750, %v748
  %v837 = vpack.c.bf16 %v753, %v751
  %v838 = vpack.c.bf16 %v754, %v752
  %v839 = vpack.c.bf16 %v757, %v755
  %v840 = vpack.c.bf16 %v758, %v756
  %v841 = vpack.c.bf16 %v761, %v759
  %v842 = vpack.c.bf16 %v762, %v760
  %v843 = vpack.c.bf16 %v765, %v763
  %v844 = vpack.c.bf16 %v766, %v764
  %v845 = vpack.c.bf16 %v769, %v767
  %v846 = vpack.c.bf16 %v770, %v768
  %v847 = vpack.c.bf16 %v773, %v771
  %v848 = vpack.c.bf16 %v774, %v772
  %v849 = vpack.c.bf16 %v777, %v775
  %v850 = vpack.c.bf16 %v778, %v776
  %v851 = vpack.c.bf16 %v781, %v779
  %v852 = vpack.c.bf16 %v782, %v780
  %v853 = vpack.c.bf16 %v785, %v783
  %v854 = vpack.c.bf16 %v786, %v784
  %v855 = vpack.c.bf16 %v789, %v787
  %v856 = vpack.c.bf16 %v790, %v788
  %v857 = vpack.c.bf16 %v793, %v791
  %v858 = vpack.c.bf16 %v794, %v792
  %v859 = vld [vmem:[#allocation2] sm:$0xff]
  %v860 = vld [vmem:[#allocation2 + $0x8] sm:$0xff]
  %v861 = vld [vmem:[#allocation2 + $0x10] sm:$0xff]
  %v862 = vld [vmem:[#allocation2 + $0x18] sm:$0xff]
  %v863 = vld [vmem:[#allocation2 + $0x20] sm:$0xff]
  %v864 = vld [vmem:[#allocation2 + $0x28] sm:$0xff]
  %v865 = vld [vmem:[#allocation2 + $0x30] sm:$0xff]
  %v866 = vld [vmem:[#allocation2 + $0x38] sm:$0xff]
  %v867 = vld [vmem:[#allocation2 + $0x40] sm:$0xff]
  %v868 = vld [vmem:[#allocation2 + $0x48] sm:$0xff]
  %v869 = vld [vmem:[#allocation2 + $0x50] sm:$0xff]
  %v870 = vld [vmem:[#allocation2 + $0x58] sm:$0xff]
  %v871 = vld [vmem:[#allocation2 + $0x60] sm:$0xff]
  %v872 = vld [vmem:[#allocation2 + $0x68] sm:$0xff]
  %v873 = vld [vmem:[#allocation2 + $0x70] sm:$0xff]
  %v874 = vld [vmem:[#allocation2 + $0x78] sm:$0xff]
  %v875 = vld [vmem:[#allocation2 + $0x80] sm:$0xff]
  %v876 = vld [vmem:[#allocation2 + $0x88] sm:$0xff]
  %v877 = vld [vmem:[#allocation2 + $0x90] sm:$0xff]
  %v878 = vld [vmem:[#allocation2 + $0x98] sm:$0xff]
  %v879 = vld [vmem:[#allocation2 + $0xa0] sm:$0xff]
  %v880 = vld [vmem:[#allocation2 + $0xa8] sm:$0xff]
  %v881 = vld [vmem:[#allocation2 + $0xb0] sm:$0xff]
  %v882 = vld [vmem:[#allocation2 + $0xb8] sm:$0xff]
  %v883 = vld [vmem:[#allocation2 + $0xc0] sm:$0xff]
  %v884 = vld [vmem:[#allocation2 + $0xc8] sm:$0xff]
  %v885 = vld [vmem:[#allocation2 + $0xd0] sm:$0xff]
  %v886 = vld [vmem:[#allocation2 + $0xd8] sm:$0xff]
  %v887 = vld [vmem:[#allocation2 + $0xe0] sm:$0xff]
  %v888 = vld [vmem:[#allocation2 + $0xe8] sm:$0xff]
  %v889 = vld [vmem:[#allocation2 + $0xf0] sm:$0xff]
  %v890 = vld [vmem:[#allocation2 + $0xf8] sm:$0xff]
  %v891 = vld [vmem:[#allocation2 + $0x100] sm:$0xff]
  %v892 = vld [vmem:[#allocation2 + $0x108] sm:$0xff]
  %v893 = vld [vmem:[#allocation2 + $0x110] sm:$0xff]
  %v894 = vld [vmem:[#allocation2 + $0x118] sm:$0xff]
  %v895 = vld [vmem:[#allocation2 + $0x120] sm:$0xff]
  %v896 = vld [vmem:[#allocation2 + $0x128] sm:$0xff]
  %v897 = vld [vmem:[#allocation2 + $0x130] sm:$0xff]
  %v898 = vld [vmem:[#allocation2 + $0x138] sm:$0xff]
  %v899 = vld [vmem:[#allocation2 + $0x140] sm:$0xff]
  %v900 = vld [vmem:[#allocation2 + $0x148] sm:$0xff]
  %v901 = vld [vmem:[#allocation2 + $0x150] sm:$0xff]
  %v902 = vld [vmem:[#allocation2 + $0x158] sm:$0xff]
  %v903 = vld [vmem:[#allocation2 + $0x160] sm:$0xff]
  %v904 = vld [vmem:[#allocation2 + $0x168] sm:$0xff]
  %v905 = vld [vmem:[#allocation2 + $0x170] sm:$0xff]
  %v906 = vld [vmem:[#allocation2 + $0x178] sm:$0xff]
  %v907 = vld [vmem:[#allocation2 + $0x180] sm:$0xff]
  %v908 = vld [vmem:[#allocation2 + $0x188] sm:$0xff]
  %v909 = vld [vmem:[#allocation2 + $0x190] sm:$0xff]
  %v910 = vld [vmem:[#allocation2 + $0x198] sm:$0xff]
  %v911 = vld [vmem:[#allocation2 + $0x1a0] sm:$0xff]
  %v912 = vld [vmem:[#allocation2 + $0x1a8] sm:$0xff]
  %v913 = vld [vmem:[#allocation2 + $0x1b0] sm:$0xff]
  %v914 = vld [vmem:[#allocation2 + $0x1b8] sm:$0xff]
  %v915 = vld [vmem:[#allocation2 + $0x1c0] sm:$0xff]
  %v916 = vld [vmem:[#allocation2 + $0x1c8] sm:$0xff]
  %v917 = vld [vmem:[#allocation2 + $0x1d0] sm:$0xff]
  %v918 = vld [vmem:[#allocation2 + $0x1d8] sm:$0xff]
  %v919 = vld [vmem:[#allocation2 + $0x1e0] sm:$0xff]
  %v920 = vld [vmem:[#allocation2 + $0x1e8] sm:$0xff]
  %v921 = vld [vmem:[#allocation2 + $0x1f0] sm:$0xff]
  %v922 = vld [vmem:[#allocation2 + $0x1f8] sm:$0xff]
  %v923 = vpack.c.bf16 %v440, %v439
  %v924 = vpack.c.bf16 %v442, %v441
  %v925 = vpack.c.bf16 %v444, %v443
  %v926 = vpack.c.bf16 %v446, %v445
  %v927 = vpack.c.bf16 %v448, %v447
  %v928 = vpack.c.bf16 %v450, %v449
  %v929 = vpack.c.bf16 %v452, %v451
  %v930 = vpack.c.bf16 %v454, %v453
  %v931 = vpack.c.bf16 %v456, %v455
  %v932 = vpack.c.bf16 %v458, %v457
  %v933 = vpack.c.bf16 %v460, %v459
  %v934 = vpack.c.bf16 %v462, %v461
  %v935 = vpack.c.bf16 %v464, %v463
  %v936 = vpack.c.bf16 %v466, %v465
  %v937 = vpack.c.bf16 %v468, %v467
  %v938 = vpack.c.bf16 %v470, %v469
  %939 = vmatpush.bf16.msra.mxu0 %v930
  %940 = vmatpush.bf16.msra.mxu0 %v929
  %941 = vmatpush.bf16.msra.mxu0 %v928
  %942 = vmatpush.bf16.msra.mxu0 %v927
  %943 = vmatpush.bf16.msra.mxu0 %v926
  %944 = vmatpush.bf16.msra.mxu0 %v925
  %945 = vmatpush.bf16.msra.mxu0 %v924
  %946 = vmatpush.bf16.msra.mxu0 %v923
  %947 = vmatmul.bf16.gmra.mxu0 %v795
  %v948 = vpop.f32.mrf.mxu0
  %v949 = vadd.f32 0.0, %v948
  %v950 = vpop.f32.mrf.mxu0
  %v951 = vadd.f32 0.0, %v950
  %952 = vmatmul.bf16.gmra.mxu0 %v797
  %v953 = vpop.f32.mrf.mxu0
  %v954 = vadd.f32 0.0, %v953
  %v955 = vpop.f32.mrf.mxu0
  %v956 = vadd.f32 0.0, %v955
  %957 = vmatmul.bf16.gmra.mxu0 %v799
  %v958 = vpop.f32.mrf.mxu0
  %v959 = vadd.f32 0.0, %v958
  %v960 = vpop.f32.mrf.mxu0
  %v961 = vadd.f32 0.0, %v960
  %962 = vmatmul.bf16.gmra.mxu0 %v801
  %v963 = vpop.f32.mrf.mxu0
  %v964 = vadd.f32 0.0, %v963
  %v965 = vpop.f32.mrf.mxu0
  %v966 = vadd.f32 0.0, %v965
  %967 = vmatmul.bf16.gmra.mxu0 %v803
  %v968 = vpop.f32.mrf.mxu0
  %v969 = vadd.f32 0.0, %v968
  %v970 = vpop.f32.mrf.mxu0
  %v971 = vadd.f32 0.0, %v970
  %972 = vmatmul.bf16.gmra.mxu0 %v805
  %v973 = vpop.f32.mrf.mxu0
  %v974 = vadd.f32 0.0, %v973
  %v975 = vpop.f32.mrf.mxu0
  %v976 = vadd.f32 0.0, %v975
  %977 = vmatmul.bf16.gmra.mxu0 %v807
  %v978 = vpop.f32.mrf.mxu0
  %v979 = vadd.f32 0.0, %v978
  %v980 = vpop.f32.mrf.mxu0
  %v981 = vadd.f32 0.0, %v980
  %982 = vmatmul.bf16.gmra.mxu0 %v809
  %v983 = vpop.f32.mrf.mxu0
  %v984 = vadd.f32 0.0, %v983
  %v985 = vpop.f32.mrf.mxu0
  %v986 = vadd.f32 0.0, %v985
  %987 = vmatmul.bf16.gmra.mxu0 %v811
  %v988 = vpop.f32.mrf.mxu0
  %v989 = vadd.f32 0.0, %v988
  %v990 = vpop.f32.mrf.mxu0
  %v991 = vadd.f32 0.0, %v990
  %992 = vmatmul.bf16.gmra.mxu0 %v813
  %v993 = vpop.f32.mrf.mxu0
  %v994 = vadd.f32 0.0, %v993
  %v995 = vpop.f32.mrf.mxu0
  %v996 = vadd.f32 0.0, %v995
  %997 = vmatmul.bf16.gmra.mxu0 %v815
  %v998 = vpop.f32.mrf.mxu0
  %v999 = vadd.f32 0.0, %v998
  %v1000 = vpop.f32.mrf.mxu0
  %v1001 = vadd.f32 0.0, %v1000
  %1002 = vmatmul.bf16.gmra.mxu0 %v817
  %v1003 = vpop.f32.mrf.mxu0
  %v1004 = vadd.f32 0.0, %v1003
  %v1005 = vpop.f32.mrf.mxu0
  %v1006 = vadd.f32 0.0, %v1005
  %1007 = vmatmul.bf16.gmra.mxu0 %v819
  %v1008 = vpop.f32.mrf.mxu0
  %v1009 = vadd.f32 0.0, %v1008
  %v1010 = vpop.f32.mrf.mxu0
  %v1011 = vadd.f32 0.0, %v1010
  %1012 = vmatmul.bf16.gmra.mxu0 %v821
  %v1013 = vpop.f32.mrf.mxu0
  %v1014 = vadd.f32 0.0, %v1013
  %v1015 = vpop.f32.mrf.mxu0
  %v1016 = vadd.f32 0.0, %v1015
  %1017 = vmatmul.bf16.gmra.mxu0 %v823
  %v1018 = vpop.f32.mrf.mxu0
  %v1019 = vadd.f32 0.0, %v1018
  %v1020 = vpop.f32.mrf.mxu0
  %v1021 = vadd.f32 0.0, %v1020
  %1022 = vmatmul.bf16.gmra.mxu0 %v825
  %v1023 = vpop.f32.mrf.mxu0
  %v1024 = vadd.f32 0.0, %v1023
  %v1025 = vpop.f32.mrf.mxu0
  %v1026 = vadd.f32 0.0, %v1025
  %1027 = vmatmul.bf16.gmra.mxu0 %v827
  %v1028 = vpop.f32.mrf.mxu0
  %v1029 = vadd.f32 0.0, %v1028
  %v1030 = vpop.f32.mrf.mxu0
  %v1031 = vadd.f32 0.0, %v1030
  %1032 = vmatmul.bf16.gmra.mxu0 %v829
  %v1033 = vpop.f32.mrf.mxu0
  %v1034 = vadd.f32 0.0, %v1033
  %v1035 = vpop.f32.mrf.mxu0
  %v1036 = vadd.f32 0.0, %v1035
  %1037 = vmatmul.bf16.gmra.mxu0 %v831
  %v1038 = vpop.f32.mrf.mxu0
  %v1039 = vadd.f32 0.0, %v1038
  %v1040 = vpop.f32.mrf.mxu0
  %v1041 = vadd.f32 0.0, %v1040
  %1042 = vmatmul.bf16.gmra.mxu0 %v833
  %v1043 = vpop.f32.mrf.mxu0
  %v1044 = vadd.f32 0.0, %v1043
  %v1045 = vpop.f32.mrf.mxu0
  %v1046 = vadd.f32 0.0, %v1045
  %1047 = vmatmul.bf16.gmra.mxu0 %v835
  %v1048 = vpop.f32.mrf.mxu0
  %v1049 = vadd.f32 0.0, %v1048
  %v1050 = vpop.f32.mrf.mxu0
  %v1051 = vadd.f32 0.0, %v1050
  %1052 = vmatmul.bf16.gmra.mxu0 %v837
  %v1053 = vpop.f32.mrf.mxu0
  %v1054 = vadd.f32 0.0, %v1053
  %v1055 = vpop.f32.mrf.mxu0
  %v1056 = vadd.f32 0.0, %v1055
  %1057 = vmatmul.bf16.gmra.mxu0 %v839
  %v1058 = vpop.f32.mrf.mxu0
  %v1059 = vadd.f32 0.0, %v1058
  %v1060 = vpop.f32.mrf.mxu0
  %v1061 = vadd.f32 0.0, %v1060
  %1062 = vmatmul.bf16.gmra.mxu0 %v841
  %v1063 = vpop.f32.mrf.mxu0
  %v1064 = vadd.f32 0.0, %v1063
  %v1065 = vpop.f32.mrf.mxu0
  %v1066 = vadd.f32 0.0, %v1065
  %1067 = vmatmul.bf16.gmra.mxu0 %v843
  %v1068 = vpop.f32.mrf.mxu0
  %v1069 = vadd.f32 0.0, %v1068
  %v1070 = vpop.f32.mrf.mxu0
  %v1071 = vadd.f32 0.0, %v1070
  %1072 = vmatmul.bf16.gmra.mxu0 %v845
  %v1073 = vpop.f32.mrf.mxu0
  %v1074 = vadd.f32 0.0, %v1073
  %v1075 = vpop.f32.mrf.mxu0
  %v1076 = vadd.f32 0.0, %v1075
  %1077 = vmatmul.bf16.gmra.mxu0 %v847
  %v1078 = vpop.f32.mrf.mxu0
  %v1079 = vadd.f32 0.0, %v1078
  %v1080 = vpop.f32.mrf.mxu0
  %v1081 = vadd.f32 0.0, %v1080
  %1082 = vmatmul.bf16.gmra.mxu0 %v849
  %v1083 = vpop.f32.mrf.mxu0
  %v1084 = vadd.f32 0.0, %v1083
  %v1085 = vpop.f32.mrf.mxu0
  %v1086 = vadd.f32 0.0, %v1085
  %1087 = vmatmul.bf16.gmra.mxu0 %v851
  %v1088 = vpop.f32.mrf.mxu0
  %v1089 = vadd.f32 0.0, %v1088
  %v1090 = vpop.f32.mrf.mxu0
  %v1091 = vadd.f32 0.0, %v1090
  %1092 = vmatmul.bf16.gmra.mxu0 %v853
  %v1093 = vpop.f32.mrf.mxu0
  %v1094 = vadd.f32 0.0, %v1093
  %v1095 = vpop.f32.mrf.mxu0
  %v1096 = vadd.f32 0.0, %v1095
  %1097 = vmatmul.bf16.gmra.mxu0 %v855
  %v1098 = vpop.f32.mrf.mxu0
  %v1099 = vadd.f32 0.0, %v1098
  %v1100 = vpop.f32.mrf.mxu0
  %v1101 = vadd.f32 0.0, %v1100
  %1102 = vmatmul.bf16.gmra.mxu0 %v857
  %v1103 = vpop.f32.mrf.mxu0
  %v1104 = vadd.f32 0.0, %v1103
  %v1105 = vpop.f32.mrf.mxu0
  %v1106 = vadd.f32 0.0, %v1105
  %1107 = vdwg.mxu0
  %1108 = vmatpush.bf16.msra.mxu0 %v938
  %1109 = vmatpush.bf16.msra.mxu0 %v937
  %1110 = vmatpush.bf16.msra.mxu0 %v936
  %1111 = vmatpush.bf16.msra.mxu0 %v935
  %1112 = vmatpush.bf16.msra.mxu0 %v934
  %1113 = vmatpush.bf16.msra.mxu0 %v933
  %1114 = vmatpush.bf16.msra.mxu0 %v932
  %1115 = vmatpush.bf16.msra.mxu0 %v931
  %1116 = vmatmul.bf16.gmra.mxu0 %v796
  %v1117 = vpop.f32.mrf.mxu0
  %v1118 = vadd.f32 %v949, %v1117
  %v1119 = vpop.f32.mrf.mxu0
  %v1120 = vadd.f32 %v951, %v1119
  %1121 = vmatmul.bf16.gmra.mxu0 %v798
  %v1122 = vpop.f32.mrf.mxu0
  %v1123 = vadd.f32 %v954, %v1122
  %v1124 = vpop.f32.mrf.mxu0
  %v1125 = vadd.f32 %v956, %v1124
  %1126 = vmatmul.bf16.gmra.mxu0 %v800
  %v1127 = vpop.f32.mrf.mxu0
  %v1128 = vadd.f32 %v959, %v1127
  %v1129 = vpop.f32.mrf.mxu0
  %v1130 = vadd.f32 %v961, %v1129
  %1131 = vmatmul.bf16.gmra.mxu0 %v802
  %v1132 = vpop.f32.mrf.mxu0
  %v1133 = vadd.f32 %v964, %v1132
  %v1134 = vpop.f32.mrf.mxu0
  %v1135 = vadd.f32 %v966, %v1134
  %1136 = vmatmul.bf16.gmra.mxu0 %v804
  %v1137 = vpop.f32.mrf.mxu0
  %v1138 = vadd.f32 %v969, %v1137
  %v1139 = vpop.f32.mrf.mxu0
  %v1140 = vadd.f32 %v971, %v1139
  %1141 = vmatmul.bf16.gmra.mxu0 %v806
  %v1142 = vpop.f32.mrf.mxu0
  %v1143 = vadd.f32 %v974, %v1142
  %v1144 = vpop.f32.mrf.mxu0
  %v1145 = vadd.f32 %v976, %v1144
  %1146 = vmatmul.bf16.gmra.mxu0 %v808
  %v1147 = vpop.f32.mrf.mxu0
  %v1148 = vadd.f32 %v979, %v1147
  %v1149 = vpop.f32.mrf.mxu0
  %v1150 = vadd.f32 %v981, %v1149
  %1151 = vmatmul.bf16.gmra.mxu0 %v810
  %v1152 = vpop.f32.mrf.mxu0
  %v1153 = vadd.f32 %v984, %v1152
  %v1154 = vpop.f32.mrf.mxu0
  %v1155 = vadd.f32 %v986, %v1154
  %1156 = vmatmul.bf16.gmra.mxu0 %v812
  %v1157 = vpop.f32.mrf.mxu0
  %v1158 = vadd.f32 %v989, %v1157
  %v1159 = vpop.f32.mrf.mxu0
  %v1160 = vadd.f32 %v991, %v1159
  %1161 = vmatmul.bf16.gmra.mxu0 %v814
  %v1162 = vpop.f32.mrf.mxu0
  %v1163 = vadd.f32 %v994, %v1162
  %v1164 = vpop.f32.mrf.mxu0
  %v1165 = vadd.f32 %v996, %v1164
  %1166 = vmatmul.bf16.gmra.mxu0 %v816
  %v1167 = vpop.f32.mrf.mxu0
  %v1168 = vadd.f32 %v999, %v1167
  %v1169 = vpop.f32.mrf.mxu0
  %v1170 = vadd.f32 %v1001, %v1169
  %1171 = vmatmul.bf16.gmra.mxu0 %v818
  %v1172 = vpop.f32.mrf.mxu0
  %v1173 = vadd.f32 %v1004, %v1172
  %v1174 = vpop.f32.mrf.mxu0
  %v1175 = vadd.f32 %v1006, %v1174
  %1176 = vmatmul.bf16.gmra.mxu0 %v820
  %v1177 = vpop.f32.mrf.mxu0
  %v1178 = vadd.f32 %v1009, %v1177
  %v1179 = vpop.f32.mrf.mxu0
  %v1180 = vadd.f32 %v1011, %v1179
  %1181 = vmatmul.bf16.gmra.mxu0 %v822
  %v1182 = vpop.f32.mrf.mxu0
  %v1183 = vadd.f32 %v1014, %v1182
  %v1184 = vpop.f32.mrf.mxu0
  %v1185 = vadd.f32 %v1016, %v1184
  %1186 = vmatmul.bf16.gmra.mxu0 %v824
  %v1187 = vpop.f32.mrf.mxu0
  %v1188 = vadd.f32 %v1019, %v1187
  %v1189 = vpop.f32.mrf.mxu0
  %v1190 = vadd.f32 %v1021, %v1189
  %1191 = vmatmul.bf16.gmra.mxu0 %v826
  %v1192 = vpop.f32.mrf.mxu0
  %v1193 = vadd.f32 %v1024, %v1192
  %v1194 = vpop.f32.mrf.mxu0
  %v1195 = vadd.f32 %v1026, %v1194
  %1196 = vmatmul.bf16.gmra.mxu0 %v828
  %v1197 = vpop.f32.mrf.mxu0
  %v1198 = vadd.f32 %v1029, %v1197
  %v1199 = vpop.f32.mrf.mxu0
  %v1200 = vadd.f32 %v1031, %v1199
  %1201 = vmatmul.bf16.gmra.mxu0 %v830
  %v1202 = vpop.f32.mrf.mxu0
  %v1203 = vadd.f32 %v1034, %v1202
  %v1204 = vpop.f32.mrf.mxu0
  %v1205 = vadd.f32 %v1036, %v1204
  %1206 = vmatmul.bf16.gmra.mxu0 %v832
  %v1207 = vpop.f32.mrf.mxu0
  %v1208 = vadd.f32 %v1039, %v1207
  %v1209 = vpop.f32.mrf.mxu0
  %v1210 = vadd.f32 %v1041, %v1209
  %1211 = vmatmul.bf16.gmra.mxu0 %v834
  %v1212 = vpop.f32.mrf.mxu0
  %v1213 = vadd.f32 %v1044, %v1212
  %v1214 = vpop.f32.mrf.mxu0
  %v1215 = vadd.f32 %v1046, %v1214
  %1216 = vmatmul.bf16.gmra.mxu0 %v836
  %v1217 = vpop.f32.mrf.mxu0
  %v1218 = vadd.f32 %v1049, %v1217
  %v1219 = vpop.f32.mrf.mxu0
  %v1220 = vadd.f32 %v1051, %v1219
  %1221 = vmatmul.bf16.gmra.mxu0 %v838
  %v1222 = vpop.f32.mrf.mxu0
  %v1223 = vadd.f32 %v1054, %v1222
  %v1224 = vpop.f32.mrf.mxu0
  %v1225 = vadd.f32 %v1056, %v1224
  %1226 = vmatmul.bf16.gmra.mxu0 %v840
  %v1227 = vpop.f32.mrf.mxu0
  %v1228 = vadd.f32 %v1059, %v1227
  %v1229 = vpop.f32.mrf.mxu0
  %v1230 = vadd.f32 %v1061, %v1229
  %1231 = vmatmul.bf16.gmra.mxu0 %v842
  %v1232 = vpop.f32.mrf.mxu0
  %v1233 = vadd.f32 %v1064, %v1232
  %v1234 = vpop.f32.mrf.mxu0
  %v1235 = vadd.f32 %v1066, %v1234
  %1236 = vmatmul.bf16.gmra.mxu0 %v844
  %v1237 = vpop.f32.mrf.mxu0
  %v1238 = vadd.f32 %v1069, %v1237
  %v1239 = vpop.f32.mrf.mxu0
  %v1240 = vadd.f32 %v1071, %v1239
  %1241 = vmatmul.bf16.gmra.mxu0 %v846
  %v1242 = vpop.f32.mrf.mxu0
  %v1243 = vadd.f32 %v1074, %v1242
  %v1244 = vpop.f32.mrf.mxu0
  %v1245 = vadd.f32 %v1076, %v1244
  %1246 = vmatmul.bf16.gmra.mxu0 %v848
  %v1247 = vpop.f32.mrf.mxu0
  %v1248 = vadd.f32 %v1079, %v1247
  %v1249 = vpop.f32.mrf.mxu0
  %v1250 = vadd.f32 %v1081, %v1249
  %1251 = vmatmul.bf16.gmra.mxu0 %v850
  %v1252 = vpop.f32.mrf.mxu0
  %v1253 = vadd.f32 %v1084, %v1252
  %v1254 = vpop.f32.mrf.mxu0
  %v1255 = vadd.f32 %v1086, %v1254
  %1256 = vmatmul.bf16.gmra.mxu0 %v852
  %v1257 = vpop.f32.mrf.mxu0
  %v1258 = vadd.f32 %v1089, %v1257
  %v1259 = vpop.f32.mrf.mxu0
  %v1260 = vadd.f32 %v1091, %v1259
  %1261 = vmatmul.bf16.gmra.mxu0 %v854
  %v1262 = vpop.f32.mrf.mxu0
  %v1263 = vadd.f32 %v1094, %v1262
  %v1264 = vpop.f32.mrf.mxu0
  %v1265 = vadd.f32 %v1096, %v1264
  %1266 = vmatmul.bf16.gmra.mxu0 %v856
  %v1267 = vpop.f32.mrf.mxu0
  %v1268 = vadd.f32 %v1099, %v1267
  %v1269 = vpop.f32.mrf.mxu0
  %v1270 = vadd.f32 %v1101, %v1269
  %1271 = vmatmul.bf16.gmra.mxu0 %v858
  %v1272 = vpop.f32.mrf.mxu0
  %v1273 = vadd.f32 %v1104, %v1272
  %v1274 = vpop.f32.mrf.mxu0
  %v1275 = vadd.f32 %v1106, %v1274
  %1276 = vdwg.mxu0
  %v1277 = vadd.f32 %v859, %v1118
  %v1278 = vadd.f32 %v860, %v1120
  %v1279 = vadd.f32 %v861, %v1123
  %v1280 = vadd.f32 %v862, %v1125
  %v1281 = vadd.f32 %v863, %v1128
  %v1282 = vadd.f32 %v864, %v1130
  %v1283 = vadd.f32 %v865, %v1133
  %v1284 = vadd.f32 %v866, %v1135
  %v1285 = vadd.f32 %v867, %v1138
  %v1286 = vadd.f32 %v868, %v1140
  %v1287 = vadd.f32 %v869, %v1143
  %v1288 = vadd.f32 %v870, %v1145
  %v1289 = vadd.f32 %v871, %v1148
  %v1290 = vadd.f32 %v872, %v1150
  %v1291 = vadd.f32 %v873, %v1153
  %v1292 = vadd.f32 %v874, %v1155
  %v1293 = vadd.f32 %v875, %v1158
  %v1294 = vadd.f32 %v876, %v1160
  %v1295 = vadd.f32 %v877, %v1163
  %v1296 = vadd.f32 %v878, %v1165
  %v1297 = vadd.f32 %v879, %v1168
  %v1298 = vadd.f32 %v880, %v1170
  %v1299 = vadd.f32 %v881, %v1173
  %v1300 = vadd.f32 %v882, %v1175
  %v1301 = vadd.f32 %v883, %v1178
  %v1302 = vadd.f32 %v884, %v1180
  %v1303 = vadd.f32 %v885, %v1183
  %v1304 = vadd.f32 %v886, %v1185
  %v1305 = vadd.f32 %v887, %v1188
  %v1306 = vadd.f32 %v888, %v1190
  %v1307 = vadd.f32 %v889, %v1193
  %v1308 = vadd.f32 %v890, %v1195
  %v1309 = vadd.f32 %v891, %v1198
  %v1310 = vadd.f32 %v892, %v1200
  %v1311 = vadd.f32 %v893, %v1203
  %v1312 = vadd.f32 %v894, %v1205
  %v1313 = vadd.f32 %v895, %v1208
  %v1314 = vadd.f32 %v896, %v1210
  %v1315 = vadd.f32 %v897, %v1213
  %v1316 = vadd.f32 %v898, %v1215
  %v1317 = vadd.f32 %v899, %v1218
  %v1318 = vadd.f32 %v900, %v1220
  %v1319 = vadd.f32 %v901, %v1223
  %v1320 = vadd.f32 %v902, %v1225
  %v1321 = vadd.f32 %v903, %v1228
  %v1322 = vadd.f32 %v904, %v1230
  %v1323 = vadd.f32 %v905, %v1233
  %v1324 = vadd.f32 %v906, %v1235
  %v1325 = vadd.f32 %v907, %v1238
  %v1326 = vadd.f32 %v908, %v1240
  %v1327 = vadd.f32 %v909, %v1243
  %v1328 = vadd.f32 %v910, %v1245
  %v1329 = vadd.f32 %v911, %v1248
  %v1330 = vadd.f32 %v912, %v1250
  %v1331 = vadd.f32 %v913, %v1253
  %v1332 = vadd.f32 %v914, %v1255
  %v1333 = vadd.f32 %v915, %v1258
  %v1334 = vadd.f32 %v916, %v1260
  %v1335 = vadd.f32 %v917, %v1263
  %v1336 = vadd.f32 %v918, %v1265
  %v1337 = vadd.f32 %v919, %v1268
  %v1338 = vadd.f32 %v920, %v1270
  %v1339 = vadd.f32 %v921, %v1273
  %v1340 = vadd.f32 %v922, %v1275
  %1341 = vst [vmem:[#allocation2] sm:$0xff] %v1277
  %1342 = vst [vmem:[#allocation2 + $0x8] sm:$0xff] %v1278
  %1343 = vst [vmem:[#allocation2 + $0x10] sm:$0xff] %v1279
  %1344 = vst [vmem:[#allocation2 + $0x18] sm:$0xff] %v1280
  %1345 = vst [vmem:[#allocation2 + $0x20] sm:$0xff] %v1281
  %1346 = vst [vmem:[#allocation2 + $0x28] sm:$0xff] %v1282
  %1347 = vst [vmem:[#allocation2 + $0x30] sm:$0xff] %v1283
  %1348 = vst [vmem:[#allocation2 + $0x38] sm:$0xff] %v1284
  %1349 = vst [vmem:[#allocation2 + $0x40] sm:$0xff] %v1285
  %1350 = vst [vmem:[#allocation2 + $0x48] sm:$0xff] %v1286
  %1351 = vst [vmem:[#allocation2 + $0x50] sm:$0xff] %v1287
  %1352 = vst [vmem:[#allocation2 + $0x58] sm:$0xff] %v1288
  %1353 = vst [vmem:[#allocation2 + $0x60] sm:$0xff] %v1289
  %1354 = vst [vmem:[#allocation2 + $0x68] sm:$0xff] %v1290
  %1355 = vst [vmem:[#allocation2 + $0x70] sm:$0xff] %v1291
  %1356 = vst [vmem:[#allocation2 + $0x78] sm:$0xff] %v1292
  %1357 = vst [vmem:[#allocation2 + $0x80] sm:$0xff] %v1293
  %1358 = vst [vmem:[#allocation2 + $0x88] sm:$0xff] %v1294
  %1359 = vst [vmem:[#allocation2 + $0x90] sm:$0xff] %v1295
  %1360 = vst [vmem:[#allocation2 + $0x98] sm:$0xff] %v1296
  %1361 = vst [vmem:[#allocation2 + $0xa0] sm:$0xff] %v1297
  %1362 = vst [vmem:[#allocation2 + $0xa8] sm:$0xff] %v1298
  %1363 = vst [vmem:[#allocation2 + $0xb0] sm:$0xff] %v1299
  %1364 = vst [vmem:[#allocation2 + $0xb8] sm:$0xff] %v1300
  %1365 = vst [vmem:[#allocation2 + $0xc0] sm:$0xff] %v1301
  %1366 = vst [vmem:[#allocation2 + $0xc8] sm:$0xff] %v1302
  %1367 = vst [vmem:[#allocation2 + $0xd0] sm:$0xff] %v1303
  %1368 = vst [vmem:[#allocation2 + $0xd8] sm:$0xff] %v1304
  %1369 = vst [vmem:[#allocation2 + $0xe0] sm:$0xff] %v1305
  %1370 = vst [vmem:[#allocation2 + $0xe8] sm:$0xff] %v1306
  %1371 = vst [vmem:[#allocation2 + $0xf0] sm:$0xff] %v1307
  %1372 = vst [vmem:[#allocation2 + $0xf8] sm:$0xff] %v1308
  %1373 = vst [vmem:[#allocation2 + $0x100] sm:$0xff] %v1309
  %1374 = vst [vmem:[#allocation2 + $0x108] sm:$0xff] %v1310
  %1375 = vst [vmem:[#allocation2 + $0x110] sm:$0xff] %v1311
  %1376 = vst [vmem:[#allocation2 + $0x118] sm:$0xff] %v1312
  %1377 = vst [vmem:[#allocation2 + $0x120] sm:$0xff] %v1313
  %1378 = vst [vmem:[#allocation2 + $0x128] sm:$0xff] %v1314
  %1379 = vst [vmem:[#allocation2 + $0x130] sm:$0xff] %v1315
  %1380 = vst [vmem:[#allocation2 + $0x138] sm:$0xff] %v1316
  %1381 = vst [vmem:[#allocation2 + $0x140] sm:$0xff] %v1317
  %1382 = vst [vmem:[#allocation2 + $0x148] sm:$0xff] %v1318
  %1383 = vst [vmem:[#allocation2 + $0x150] sm:$0xff] %v1319
  %1384 = vst [vmem:[#allocation2 + $0x158] sm:$0xff] %v1320
  %1385 = vst [vmem:[#allocation2 + $0x160] sm:$0xff] %v1321
  %1386 = vst [vmem:[#allocation2 + $0x168] sm:$0xff] %v1322
  %1387 = vst [vmem:[#allocation2 + $0x170] sm:$0xff] %v1323
  %1388 = vst [vmem:[#allocation2 + $0x178] sm:$0xff] %v1324
  %1389 = vst [vmem:[#allocation2 + $0x180] sm:$0xff] %v1325
  %1390 = vst [vmem:[#allocation2 + $0x188] sm:$0xff] %v1326
  %1391 = vst [vmem:[#allocation2 + $0x190] sm:$0xff] %v1327
  %1392 = vst [vmem:[#allocation2 + $0x198] sm:$0xff] %v1328
  %1393 = vst [vmem:[#allocation2 + $0x1a0] sm:$0xff] %v1329
  %1394 = vst [vmem:[#allocation2 + $0x1a8] sm:$0xff] %v1330
  %1395 = vst [vmem:[#allocation2 + $0x1b0] sm:$0xff] %v1331
  %1396 = vst [vmem:[#allocation2 + $0x1b8] sm:$0xff] %v1332
  %1397 = vst [vmem:[#allocation2 + $0x1c0] sm:$0xff] %v1333
  %1398 = vst [vmem:[#allocation2 + $0x1c8] sm:$0xff] %v1334
  %1399 = vst [vmem:[#allocation2 + $0x1d0] sm:$0xff] %v1335
  %1400 = vst [vmem:[#allocation2 + $0x1d8] sm:$0xff] %v1336
  %1401 = vst [vmem:[#allocation2 + $0x1e0] sm:$0xff] %v1337
  %1402 = vst [vmem:[#allocation2 + $0x1e8] sm:$0xff] %v1338
  %1403 = vst [vmem:[#allocation2 + $0x1f0] sm:$0xff] %v1339
  %1404 = vst [vmem:[#allocation2 + $0x1f8] sm:$0xff] %v1340
  // Predicated region
  $region34: #{dimenet_forward.11} parent=0 // pred_check
    %p1405 = pneg %p26
  $region35: #{dimenet_forward.11} parent=0 // pred_check_branch
    %1407 = sbr.rel (%p1405) target = $region37
  $region36: #{dimenet_forward.11} parent=0 // pred_region
    %v1408 = vld [vmem:[#allocation2] sm:$0xff]
    %v1409 = vld [vmem:[#allocation2 + $0x8] sm:$0xff]
    %v1410 = vld [vmem:[#allocation2 + $0x10] sm:$0xff]
    %v1411 = vld [vmem:[#allocation2 + $0x18] sm:$0xff]
    %v1412 = vld [vmem:[#allocation2 + $0x20] sm:$0xff]
    %v1413 = vld [vmem:[#allocation2 + $0x28] sm:$0xff]
    %v1414 = vld [vmem:[#allocation2 + $0x30] sm:$0xff]
    %v1415 = vld [vmem:[#allocation2 + $0x38] sm:$0xff]
    %v1416 = vld [vmem:[#allocation2 + $0x40] sm:$0xff]
    %v1417 = vld [vmem:[#allocation2 + $0x48] sm:$0xff]
    %v1418 = vld [vmem:[#allocation2 + $0x50] sm:$0xff]
    %v1419 = vld [vmem:[#allocation2 + $0x58] sm:$0xff]
    %v1420 = vld [vmem:[#allocation2 + $0x60] sm:$0xff]
    %v1421 = vld [vmem:[#allocation2 + $0x68] sm:$0xff]
    %v1422 = vld [vmem:[#allocation2 + $0x70] sm:$0xff]
    %v1423 = vld [vmem:[#allocation2 + $0x78] sm:$0xff]
    %v1424 = vld [vmem:[#allocation2 + $0x80] sm:$0xff]
    %v1425 = vld [vmem:[#allocation2 + $0x88] sm:$0xff]
    %v1426 = vld [vmem:[#allocation2 + $0x90] sm:$0xff]
    %v1427 = vld [vmem:[#allocation2 + $0x98] sm:$0xff]
    %v1428 = vld [vmem:[#allocation2 + $0xa0] sm:$0xff]
    %v1429 = vld [vmem:[#allocation2 + $0xa8] sm:$0xff]
    %v1430 = vld [vmem:[#allocation2 + $0xb0] sm:$0xff]
    %v1431 = vld [vmem:[#allocation2 + $0xb8] sm:$0xff]
    %v1432 = vld [vmem:[#allocation2 + $0xc0] sm:$0xff]
    %v1433 = vld [vmem:[#allocation2 + $0xc8] sm:$0xff]
    %v1434 = vld [vmem:[#allocation2 + $0xd0] sm:$0xff]
    %v1435 = vld [vmem:[#allocation2 + $0xd8] sm:$0xff]
    %v1436 = vld [vmem:[#allocation2 + $0xe0] sm:$0xff]
    %v1437 = vld [vmem:[#allocation2 + $0xe8] sm:$0xff]
    %v1438 = vld [vmem:[#allocation2 + $0xf0] sm:$0xff]
    %v1439 = vld [vmem:[#allocation2 + $0xf8] sm:$0xff]
    %v1440 = vld [vmem:[#allocation2 + $0x100] sm:$0xff]
    %v1441 = vld [vmem:[#allocation2 + $0x108] sm:$0xff]
    %v1442 = vld [vmem:[#allocation2 + $0x110] sm:$0xff]
    %v1443 = vld [vmem:[#allocation2 + $0x118] sm:$0xff]
    %v1444 = vld [vmem:[#allocation2 + $0x120] sm:$0xff]
    %v1445 = vld [vmem:[#allocation2 + $0x128] sm:$0xff]
    %v1446 = vld [vmem:[#allocation2 + $0x130] sm:$0xff]
    %v1447 = vld [vmem:[#allocation2 + $0x138] sm:$0xff]
    %v1448 = vld [vmem:[#allocation2 + $0x140] sm:$0xff]
    %v1449 = vld [vmem:[#allocation2 + $0x148] sm:$0xff]
    %v1450 = vld [vmem:[#allocation2 + $0x150] sm:$0xff]
    %v1451 = vld [vmem:[#allocation2 + $0x158] sm:$0xff]
    %v1452 = vld [vmem:[#allocation2 + $0x160] sm:$0xff]
    %v1453 = vld [vmem:[#allocation2 + $0x168] sm:$0xff]
    %v1454 = vld [vmem:[#allocation2 + $0x170] sm:$0xff]
    %v1455 = vld [vmem:[#allocation2 + $0x178] sm:$0xff]
    %v1456 = vld [vmem:[#allocation2 + $0x180] sm:$0xff]
    %v1457 = vld [vmem:[#allocation2 + $0x188] sm:$0xff]
    %v1458 = vld [vmem:[#allocation2 + $0x190] sm:$0xff]
    %v1459 = vld [vmem:[#allocation2 + $0x198] sm:$0xff]
    %v1460 = vld [vmem:[#allocation2 + $0x1a0] sm:$0xff]
    %v1461 = vld [vmem:[#allocation2 + $0x1a8] sm:$0xff]
    %v1462 = vld [vmem:[#allocation2 + $0x1b0] sm:$0xff]
    %v1463 = vld [vmem:[#allocation2 + $0x1b8] sm:$0xff]
    %v1464 = vld [vmem:[#allocation2 + $0x1c0] sm:$0xff]
    %v1465 = vld [vmem:[#allocation2 + $0x1c8] sm:$0xff]
    %v1466 = vld [vmem:[#allocation2 + $0x1d0] sm:$0xff]
    %v1467 = vld [vmem:[#allocation2 + $0x1d8] sm:$0xff]
    %v1468 = vld [vmem:[#allocation2 + $0x1e0] sm:$0xff]
    %v1469 = vld [vmem:[#allocation2 + $0x1e8] sm:$0xff]
    %v1470 = vld [vmem:[#allocation2 + $0x1f0] sm:$0xff]
    %v1471 = vld [vmem:[#allocation2 + $0x1f8] sm:$0xff]
    %s1472 = scalar_lea.vmem %s5, 64
    %v1473 = vld [vmem:[%s1472] sm:$0xf]
    %v1474 = vld [vmem:[%s1472 + $0x4] sm:$0xf]
    %v1475 = vld [vmem:[%s1472 + $0x8] sm:$0xf]
    %v1476 = vld [vmem:[%s1472 + $0xc] sm:$0xf]
    %v1477 = vld [vmem:[%s1472 + $0x10] sm:$0xf]
    %v1478 = vld [vmem:[%s1472 + $0x14] sm:$0xf]
    %v1479 = vld [vmem:[%s1472 + $0x18] sm:$0xf]
    %v1480 = vld [vmem:[%s1472 + $0x1c] sm:$0xf]
    %v1481 = vld [vmem:[%s1472 + $0x20] sm:$0xf]
    %v1482 = vld [vmem:[%s1472 + $0x24] sm:$0xf]
    %v1483 = vld [vmem:[%s1472 + $0x28] sm:$0xf]
    %v1484 = vld [vmem:[%s1472 + $0x2c] sm:$0xf]
    %v1485 = vld [vmem:[%s1472 + $0x30] sm:$0xf]
    %v1486 = vld [vmem:[%s1472 + $0x34] sm:$0xf]
    %v1487 = vld [vmem:[%s1472 + $0x38] sm:$0xf]
    %v1488 = vld [vmem:[%s1472 + $0x3c] sm:$0xf]
    %v1489 = vpack.c.bf16 %v1409, %v1408
    %v1490 = vpack.c.bf16 %v1411, %v1410
    %v1491 = vpack.c.bf16 %v1413, %v1412
    %v1492 = vpack.c.bf16 %v1415, %v1414
    %v1493 = vpack.c.bf16 %v1417, %v1416
    %v1494 = vpack.c.bf16 %v1419, %v1418
    %v1495 = vpack.c.bf16 %v1421, %v1420
    %v1496 = vpack.c.bf16 %v1423, %v1422
    %v1497 = vpack.c.bf16 %v1425, %v1424
    %v1498 = vpack.c.bf16 %v1427, %v1426
    %v1499 = vpack.c.bf16 %v1429, %v1428
    %v1500 = vpack.c.bf16 %v1431, %v1430
    %v1501 = vpack.c.bf16 %v1433, %v1432
    %v1502 = vpack.c.bf16 %v1435, %v1434
    %v1503 = vpack.c.bf16 %v1437, %v1436
    %v1504 = vpack.c.bf16 %v1439, %v1438
    %v1505 = vpack.c.bf16 %v1441, %v1440
    %v1506 = vpack.c.bf16 %v1443, %v1442
    %v1507 = vpack.c.bf16 %v1445, %v1444
    %v1508 = vpack.c.bf16 %v1447, %v1446
    %v1509 = vpack.c.bf16 %v1449, %v1448
    %v1510 = vpack.c.bf16 %v1451, %v1450
    %v1511 = vpack.c.bf16 %v1453, %v1452
    %v1512 = vpack.c.bf16 %v1455, %v1454
    %v1513 = vpack.c.bf16 %v1457, %v1456
    %v1514 = vpack.c.bf16 %v1459, %v1458
    %v1515 = vpack.c.bf16 %v1461, %v1460
    %v1516 = vpack.c.bf16 %v1463, %v1462
    %v1517 = vpack.c.bf16 %v1465, %v1464
    %v1518 = vpack.c.bf16 %v1467, %v1466
    %v1519 = vpack.c.bf16 %v1469, %v1468
    %v1520 = vpack.c.bf16 %v1471, %v1470
    %v1537 = vunpack.c.l.b16 %v1473
    %v1538 = vunpack.c.l.b16 %v1474
    %v1539 = vunpack.c.l.b16 %v1475
    %v1540 = vunpack.c.l.b16 %v1476
    %v1541 = vunpack.c.l.b16 %v1477
    %v1542 = vunpack.c.l.b16 %v1478
    %v1543 = vunpack.c.l.b16 %v1479
    %v1544 = vunpack.c.l.b16 %v1480
    %v1545 = vunpack.c.l.b16 %v1481
    %v1546 = vunpack.c.l.b16 %v1482
    %v1547 = vunpack.c.l.b16 %v1483
    %v1548 = vunpack.c.l.b16 %v1484
    %v1549 = vunpack.c.l.b16 %v1485
    %v1550 = vunpack.c.l.b16 %v1486
    %v1551 = vunpack.c.l.b16 %v1487
    %v1552 = vunpack.c.l.b16 %v1488
    %v1553 = vpack.c.b16 %v1538, %v1537
    %v1554 = vpack.c.b16 %v1540, %v1539
    %v1555 = vpack.c.b16 %v1542, %v1541
    %v1556 = vpack.c.b16 %v1544, %v1543
    %v1557 = vpack.c.b16 %v1546, %v1545
    %v1558 = vpack.c.b16 %v1548, %v1547
    %v1559 = vpack.c.b16 %v1550, %v1549
    %v1560 = vpack.c.b16 %v1552, %v1551
    %1569 = vmatpush.bf16.msra.mxu0 %v1560
    %1570 = vmatpush.bf16.msra.mxu0 %v1559
    %1571 = vmatpush.bf16.msra.mxu0 %v1558
    %1572 = vmatpush.bf16.msra.mxu0 %v1557
    %1573 = vmatpush.bf16.msra.mxu0 %v1556
    %1574 = vmatpush.bf16.msra.mxu0 %v1555
    %1575 = vmatpush.bf16.msra.mxu0 %v1554
    %1576 = vmatpush.bf16.msra.mxu0 %v1553
    %1577 = vmatmul.bf16.gmra.mxu0 %v1489
    %v1578 = vpop.f32.mrf.mxu0
    %v1579 = vadd.f32 0.0, %v1578
    %v1580 = vpop.f32.mrf.mxu0
    %v1581 = vadd.f32 0.0, %v1580
    %1582 = vmatmul.bf16.gmra.mxu0 %v1490
    %v1583 = vpop.f32.mrf.mxu0
    %v1584 = vadd.f32 0.0, %v1583
    %v1585 = vpop.f32.mrf.mxu0
    %v1586 = vadd.f32 0.0, %v1585
    %1587 = vmatmul.bf16.gmra.mxu0 %v1491
    %v1588 = vpop.f32.mrf.mxu0
    %v1589 = vadd.f32 0.0, %v1588
    %v1590 = vpop.f32.mrf.mxu0
    %v1591 = vadd.f32 0.0, %v1590
    %1592 = vmatmul.bf16.gmra.mxu0 %v1492
    %v1593 = vpop.f32.mrf.mxu0
    %v1594 = vadd.f32 0.0, %v1593
    %v1595 = vpop.f32.mrf.mxu0
    %v1596 = vadd.f32 0.0, %v1595
    %1597 = vmatmul.bf16.gmra.mxu0 %v1493
    %v1598 = vpop.f32.mrf.mxu0
    %v1599 = vadd.f32 0.0, %v1598
    %v1600 = vpop.f32.mrf.mxu0
    %v1601 = vadd.f32 0.0, %v1600
    %1602 = vmatmul.bf16.gmra.mxu0 %v1494
    %v1603 = vpop.f32.mrf.mxu0
    %v1604 = vadd.f32 0.0, %v1603
    %v1605 = vpop.f32.mrf.mxu0
    %v1606 = vadd.f32 0.0, %v1605
    %1607 = vmatmul.bf16.gmra.mxu0 %v1495
    %v1608 = vpop.f32.mrf.mxu0
    %v1609 = vadd.f32 0.0, %v1608
    %v1610 = vpop.f32.mrf.mxu0
    %v1611 = vadd.f32 0.0, %v1610
    %1612 = vmatmul.bf16.gmra.mxu0 %v1496
    %v1613 = vpop.f32.mrf.mxu0
    %v1614 = vadd.f32 0.0, %v1613
    %v1615 = vpop.f32.mrf.mxu0
    %v1616 = vadd.f32 0.0, %v1615
    %1617 = vmatmul.bf16.gmra.mxu0 %v1497
    %v1618 = vpop.f32.mrf.mxu0
    %v1619 = vadd.f32 0.0, %v1618
    %v1620 = vpop.f32.mrf.mxu0
    %v1621 = vadd.f32 0.0, %v1620
    %1622 = vmatmul.bf16.gmra.mxu0 %v1498
    %v1623 = vpop.f32.mrf.mxu0
    %v1624 = vadd.f32 0.0, %v1623
    %v1625 = vpop.f32.mrf.mxu0
    %v1626 = vadd.f32 0.0, %v1625
    %1627 = vmatmul.bf16.gmra.mxu0 %v1499
    %v1628 = vpop.f32.mrf.mxu0
    %v1629 = vadd.f32 0.0, %v1628
    %v1630 = vpop.f32.mrf.mxu0
    %v1631 = vadd.f32 0.0, %v1630
    %1632 = vmatmul.bf16.gmra.mxu0 %v1500
    %v1633 = vpop.f32.mrf.mxu0
    %v1634 = vadd.f32 0.0, %v1633
    %v1635 = vpop.f32.mrf.mxu0
    %v1636 = vadd.f32 0.0, %v1635
    %1637 = vmatmul.bf16.gmra.mxu0 %v1501
    %v1638 = vpop.f32.mrf.mxu0
    %v1639 = vadd.f32 0.0, %v1638
    %v1640 = vpop.f32.mrf.mxu0
    %v1641 = vadd.f32 0.0, %v1640
    %1642 = vmatmul.bf16.gmra.mxu0 %v1502
    %v1643 = vpop.f32.mrf.mxu0
    %v1644 = vadd.f32 0.0, %v1643
    %v1645 = vpop.f32.mrf.mxu0
    %v1646 = vadd.f32 0.0, %v1645
    %1647 = vmatmul.bf16.gmra.mxu0 %v1503
    %v1648 = vpop.f32.mrf.mxu0
    %v1649 = vadd.f32 0.0, %v1648
    %v1650 = vpop.f32.mrf.mxu0
    %v1651 = vadd.f32 0.0, %v1650
    %1652 = vmatmul.bf16.gmra.mxu0 %v1504
    %v1653 = vpop.f32.mrf.mxu0
    %v1654 = vadd.f32 0.0, %v1653
    %v1655 = vpop.f32.mrf.mxu0
    %v1656 = vadd.f32 0.0, %v1655
    %1657 = vmatmul.bf16.gmra.mxu0 %v1505
    %v1658 = vpop.f32.mrf.mxu0
    %v1659 = vadd.f32 0.0, %v1658
    %v1660 = vpop.f32.mrf.mxu0
    %v1661 = vadd.f32 0.0, %v1660
    %1662 = vmatmul.bf16.gmra.mxu0 %v1506
    %v1663 = vpop.f32.mrf.mxu0
    %v1664 = vadd.f32 0.0, %v1663
    %v1665 = vpop.f32.mrf.mxu0
    %v1666 = vadd.f32 0.0, %v1665
    %1667 = vmatmul.bf16.gmra.mxu0 %v1507
    %v1668 = vpop.f32.mrf.mxu0
    %v1669 = vadd.f32 0.0, %v1668
    %v1670 = vpop.f32.mrf.mxu0
    %v1671 = vadd.f32 0.0, %v1670
    %1672 = vmatmul.bf16.gmra.mxu0 %v1508
    %v1673 = vpop.f32.mrf.mxu0
    %v1674 = vadd.f32 0.0, %v1673
    %v1675 = vpop.f32.mrf.mxu0
    %v1676 = vadd.f32 0.0, %v1675
    %1677 = vmatmul.bf16.gmra.mxu0 %v1509
    %v1678 = vpop.f32.mrf.mxu0
    %v1679 = vadd.f32 0.0, %v1678
    %v1680 = vpop.f32.mrf.mxu0
    %v1681 = vadd.f32 0.0, %v1680
    %1682 = vmatmul.bf16.gmra.mxu0 %v1510
    %v1683 = vpop.f32.mrf.mxu0
    %v1684 = vadd.f32 0.0, %v1683
    %v1685 = vpop.f32.mrf.mxu0
    %v1686 = vadd.f32 0.0, %v1685
    %1687 = vmatmul.bf16.gmra.mxu0 %v1511
    %v1688 = vpop.f32.mrf.mxu0
    %v1689 = vadd.f32 0.0, %v1688
    %v1690 = vpop.f32.mrf.mxu0
    %v1691 = vadd.f32 0.0, %v1690
    %1692 = vmatmul.bf16.gmra.mxu0 %v1512
    %v1693 = vpop.f32.mrf.mxu0
    %v1694 = vadd.f32 0.0, %v1693
    %v1695 = vpop.f32.mrf.mxu0
    %v1696 = vadd.f32 0.0, %v1695
    %1697 = vmatmul.bf16.gmra.mxu0 %v1513
    %v1698 = vpop.f32.mrf.mxu0
    %v1699 = vadd.f32 0.0, %v1698
    %v1700 = vpop.f32.mrf.mxu0
    %v1701 = vadd.f32 0.0, %v1700
    %1702 = vmatmul.bf16.gmra.mxu0 %v1514
    %v1703 = vpop.f32.mrf.mxu0
    %v1704 = vadd.f32 0.0, %v1703
    %v1705 = vpop.f32.mrf.mxu0
    %v1706 = vadd.f32 0.0, %v1705
    %1707 = vmatmul.bf16.gmra.mxu0 %v1515
    %v1708 = vpop.f32.mrf.mxu0
    %v1709 = vadd.f32 0.0, %v1708
    %v1710 = vpop.f32.mrf.mxu0
    %v1711 = vadd.f32 0.0, %v1710
    %1712 = vmatmul.bf16.gmra.mxu0 %v1516
    %v1713 = vpop.f32.mrf.mxu0
    %v1714 = vadd.f32 0.0, %v1713
    %v1715 = vpop.f32.mrf.mxu0
    %v1716 = vadd.f32 0.0, %v1715
    %1717 = vmatmul.bf16.gmra.mxu0 %v1517
    %v1718 = vpop.f32.mrf.mxu0
    %v1719 = vadd.f32 0.0, %v1718
    %v1720 = vpop.f32.mrf.mxu0
    %v1721 = vadd.f32 0.0, %v1720
    %1722 = vmatmul.bf16.gmra.mxu0 %v1518
    %v1723 = vpop.f32.mrf.mxu0
    %v1724 = vadd.f32 0.0, %v1723
    %v1725 = vpop.f32.mrf.mxu0
    %v1726 = vadd.f32 0.0, %v1725
    %1727 = vmatmul.bf16.gmra.mxu0 %v1519
    %v1728 = vpop.f32.mrf.mxu0
    %v1729 = vadd.f32 0.0, %v1728
    %v1730 = vpop.f32.mrf.mxu0
    %v1731 = vadd.f32 0.0, %v1730
    %1732 = vmatmul.bf16.gmra.mxu0 %v1520
    %v1733 = vpop.f32.mrf.mxu0
    %v1734 = vadd.f32 0.0, %v1733
    %v1735 = vpop.f32.mrf.mxu0
    %v1736 = vadd.f32 0.0, %v1735
    %1737 = vdwg.mxu0
    %v1738 = vsub.f32 0.0, %v1579
    %v1739 = vsub.f32 0.0, %v1581
    %v1740 = vsub.f32 0.0, %v1584
    %v1741 = vsub.f32 0.0, %v1586
    %v1742 = vsub.f32 0.0, %v1589
    %v1743 = vsub.f32 0.0, %v1591
    %v1744 = vsub.f32 0.0, %v1594
    %v1745 = vsub.f32 0.0, %v1596
    %v1746 = vsub.f32 0.0, %v1599
    %v1747 = vsub.f32 0.0, %v1601
    %v1748 = vsub.f32 0.0, %v1604
    %v1749 = vsub.f32 0.0, %v1606
    %v1750 = vsub.f32 0.0, %v1609
    %v1751 = vsub.f32 0.0, %v1611
    %v1752 = vsub.f32 0.0, %v1614
    %v1753 = vsub.f32 0.0, %v1616
    %v1754 = vsub.f32 0.0, %v1619
    %v1755 = vsub.f32 0.0, %v1621
    %v1756 = vsub.f32 0.0, %v1624
    %v1757 = vsub.f32 0.0, %v1626
    %v1758 = vsub.f32 0.0, %v1629
    %v1759 = vsub.f32 0.0, %v1631
    %v1760 = vsub.f32 0.0, %v1634
    %v1761 = vsub.f32 0.0, %v1636
    %v1762 = vsub.f32 0.0, %v1639
    %v1763 = vsub.f32 0.0, %v1641
    %v1764 = vsub.f32 0.0, %v1644
    %v1765 = vsub.f32 0.0, %v1646
    %v1766 = vsub.f32 0.0, %v1649
    %v1767 = vsub.f32 0.0, %v1651
    %v1768 = vsub.f32 0.0, %v1654
    %v1769 = vsub.f32 0.0, %v1656
    %v1770 = vsub.f32 0.0, %v1659
    %v1771 = vsub.f32 0.0, %v1661
    %v1772 = vsub.f32 0.0, %v1664
    %v1773 = vsub.f32 0.0, %v1666
    %v1774 = vsub.f32 0.0, %v1669
    %v1775 = vsub.f32 0.0, %v1671
    %v1776 = vsub.f32 0.0, %v1674
    %v1777 = vsub.f32 0.0, %v1676
    %v1778 = vsub.f32 0.0, %v1679
    %v1779 = vsub.f32 0.0, %v1681
    %v1780 = vsub.f32 0.0, %v1684
    %v1781 = vsub.f32 0.0, %v1686
    %v1782 = vsub.f32 0.0, %v1689
    %v1783 = vsub.f32 0.0, %v1691
    %v1784 = vsub.f32 0.0, %v1694
    %v1785 = vsub.f32 0.0, %v1696
    %v1786 = vsub.f32 0.0, %v1699
    %v1787 = vsub.f32 0.0, %v1701
    %v1788 = vsub.f32 0.0, %v1704
    %v1789 = vsub.f32 0.0, %v1706
    %v1790 = vsub.f32 0.0, %v1709
    %v1791 = vsub.f32 0.0, %v1711
    %v1792 = vsub.f32 0.0, %v1714
    %v1793 = vsub.f32 0.0, %v1716
    %v1794 = vsub.f32 0.0, %v1719
    %v1795 = vsub.f32 0.0, %v1721
    %v1796 = vsub.f32 0.0, %v1724
    %v1797 = vsub.f32 0.0, %v1726
    %v1798 = vsub.f32 0.0, %v1729
    %v1799 = vsub.f32 0.0, %v1731
    %v1800 = vsub.f32 0.0, %v1734
    %v1801 = vsub.f32 0.0, %v1736
    %v1802 = vmul.f32 %v1738, 1.442695
    %v1803 = vpow.pop %v1802
    %v1804 = vmul.f32 %v1739, 1.442695
    %v1805 = vpow.pop %v1804
    %v1806 = vmul.f32 %v1740, 1.442695
    %v1807 = vpow.pop %v1806
    %v1808 = vmul.f32 %v1741, 1.442695
    %v1809 = vpow.pop %v1808
    %v1810 = vmul.f32 %v1742, 1.442695
    %v1811 = vpow.pop %v1810
    %v1812 = vmul.f32 %v1743, 1.442695
    %v1813 = vpow.pop %v1812
    %v1814 = vmul.f32 %v1744, 1.442695
    %v1815 = vpow.pop %v1814
    %v1816 = vmul.f32 %v1745, 1.442695
    %v1817 = vpow.pop %v1816
    %v1818 = vmul.f32 %v1746, 1.442695
    %v1819 = vpow.pop %v1818
    %v1820 = vmul.f32 %v1747, 1.442695
    %v1821 = vpow.pop %v1820
    %v1822 = vmul.f32 %v1748, 1.442695
    %v1823 = vpow.pop %v1822
    %v1824 = vmul.f32 %v1749, 1.442695
    %v1825 = vpow.pop %v1824
    %v1826 = vmul.f32 %v1750, 1.442695
    %v1827 = vpow.pop %v1826
    %v1828 = vmul.f32 %v1751, 1.442695
    %v1829 = vpow.pop %v1828
    %v1830 = vmul.f32 %v1752, 1.442695
    %v1831 = vpow.pop %v1830
    %v1832 = vmul.f32 %v1753, 1.442695
    %v1833 = vpow.pop %v1832
    %v1834 = vmul.f32 %v1754, 1.442695
    %v1835 = vpow.pop %v1834
    %v1836 = vmul.f32 %v1755, 1.442695
    %v1837 = vpow.pop %v1836
    %v1838 = vmul.f32 %v1756, 1.442695
    %v1839 = vpow.pop %v1838
    %v1840 = vmul.f32 %v1757, 1.442695
    %v1841 = vpow.pop %v1840
    %v1842 = vmul.f32 %v1758, 1.442695
    %v1843 = vpow.pop %v1842
    %v1844 = vmul.f32 %v1759, 1.442695
    %v1845 = vpow.pop %v1844
    %v1846 = vmul.f32 %v1760, 1.442695
    %v1847 = vpow.pop %v1846
    %v1848 = vmul.f32 %v1761, 1.442695
    %v1849 = vpow.pop %v1848
    %v1850 = vmul.f32 %v1762, 1.442695
    %v1851 = vpow.pop %v1850
    %v1852 = vmul.f32 %v1763, 1.442695
    %v1853 = vpow.pop %v1852
    %v1854 = vmul.f32 %v1764, 1.442695
    %v1855 = vpow.pop %v1854
    %v1856 = vmul.f32 %v1765, 1.442695
    %v1857 = vpow.pop %v1856
    %v1858 = vmul.f32 %v1766, 1.442695
    %v1859 = vpow.pop %v1858
    %v1860 = vmul.f32 %v1767, 1.442695
    %v1861 = vpow.pop %v1860
    %v1862 = vmul.f32 %v1768, 1.442695
    %v1863 = vpow.pop %v1862
    %v1864 = vmul.f32 %v1769, 1.442695
    %v1865 = vpow.pop %v1864
    %v1866 = vmul.f32 %v1770, 1.442695
    %v1867 = vpow.pop %v1866
    %v1868 = vmul.f32 %v1771, 1.442695
    %v1869 = vpow.pop %v1868
    %v1870 = vmul.f32 %v1772, 1.442695
    %v1871 = vpow.pop %v1870
    %v1872 = vmul.f32 %v1773, 1.442695
    %v1873 = vpow.pop %v1872
    %v1874 = vmul.f32 %v1774, 1.442695
    %v1875 = vpow.pop %v1874
    %v1876 = vmul.f32 %v1775, 1.442695
    %v1877 = vpow.pop %v1876
    %v1878 = vmul.f32 %v1776, 1.442695
    %v1879 = vpow.pop %v1878
    %v1880 = vmul.f32 %v1777, 1.442695
    %v1881 = vpow.pop %v1880
    %v1882 = vmul.f32 %v1778, 1.442695
    %v1883 = vpow.pop %v1882
    %v1884 = vmul.f32 %v1779, 1.442695
    %v1885 = vpow.pop %v1884
    %v1886 = vmul.f32 %v1780, 1.442695
    %v1887 = vpow.pop %v1886
    %v1888 = vmul.f32 %v1781, 1.442695
    %v1889 = vpow.pop %v1888
    %v1890 = vmul.f32 %v1782, 1.442695
    %v1891 = vpow.pop %v1890
    %v1892 = vmul.f32 %v1783, 1.442695
    %v1893 = vpow.pop %v1892
    %v1894 = vmul.f32 %v1784, 1.442695
    %v1895 = vpow.pop %v1894
    %v1896 = vmul.f32 %v1785, 1.442695
    %v1897 = vpow.pop %v1896
    %v1898 = vmul.f32 %v1786, 1.442695
    %v1899 = vpow.pop %v1898
    %v1900 = vmul.f32 %v1787, 1.442695
    %v1901 = vpow.pop %v1900
    %v1902 = vmul.f32 %v1788, 1.442695
    %v1903 = vpow.pop %v1902
    %v1904 = vmul.f32 %v1789, 1.442695
    %v1905 = vpow.pop %v1904
    %v1906 = vmul.f32 %v1790, 1.442695
    %v1907 = vpow.pop %v1906
    %v1908 = vmul.f32 %v1791, 1.442695
    %v1909 = vpow.pop %v1908
    %v1910 = vmul.f32 %v1792, 1.442695
    %v1911 = vpow.pop %v1910
    %v1912 = vmul.f32 %v1793, 1.442695
    %v1913 = vpow.pop %v1912
    %v1914 = vmul.f32 %v1794, 1.442695
    %v1915 = vpow.pop %v1914
    %v1916 = vmul.f32 %v1795, 1.442695
    %v1917 = vpow.pop %v1916
    %v1918 = vmul.f32 %v1796, 1.442695
    %v1919 = vpow.pop %v1918
    %v1920 = vmul.f32 %v1797, 1.442695
    %v1921 = vpow.pop %v1920
    %v1922 = vmul.f32 %v1798, 1.442695
    %v1923 = vpow.pop %v1922
    %v1924 = vmul.f32 %v1799, 1.442695
    %v1925 = vpow.pop %v1924
    %v1926 = vmul.f32 %v1800, 1.442695
    %v1927 = vpow.pop %v1926
    %v1928 = vmul.f32 %v1801, 1.442695
    %v1929 = vpow.pop %v1928
    %v1930 = vadd.f32 %v1803, 1.0
    %v1931 = vadd.f32 %v1805, 1.0
    %v1932 = vadd.f32 %v1807, 1.0
    %v1933 = vadd.f32 %v1809, 1.0
    %v1934 = vadd.f32 %v1811, 1.0
    %v1935 = vadd.f32 %v1813, 1.0
    %v1936 = vadd.f32 %v1815, 1.0
    %v1937 = vadd.f32 %v1817, 1.0
    %v1938 = vadd.f32 %v1819, 1.0
    %v1939 = vadd.f32 %v1821, 1.0
    %v1940 = vadd.f32 %v1823, 1.0
    %v1941 = vadd.f32 %v1825, 1.0
    %v1942 = vadd.f32 %v1827, 1.0
    %v1943 = vadd.f32 %v1829, 1.0
    %v1944 = vadd.f32 %v1831, 1.0
    %v1945 = vadd.f32 %v1833, 1.0
    %v1946 = vadd.f32 %v1835, 1.0
    %v1947 = vadd.f32 %v1837, 1.0
    %v1948 = vadd.f32 %v1839, 1.0
    %v1949 = vadd.f32 %v1841, 1.0
    %v1950 = vadd.f32 %v1843, 1.0
    %v1951 = vadd.f32 %v1845, 1.0
    %v1952 = vadd.f32 %v1847, 1.0
    %v1953 = vadd.f32 %v1849, 1.0
    %v1954 = vadd.f32 %v1851, 1.0
    %v1955 = vadd.f32 %v1853, 1.0
    %v1956 = vadd.f32 %v1855, 1.0
    %v1957 = vadd.f32 %v1857, 1.0
    %v1958 = vadd.f32 %v1859, 1.0
    %v1959 = vadd.f32 %v1861, 1.0
    %v1960 = vadd.f32 %v1863, 1.0
    %v1961 = vadd.f32 %v1865, 1.0
    %v1962 = vadd.f32 %v1867, 1.0
    %v1963 = vadd.f32 %v1869, 1.0
    %v1964 = vadd.f32 %v1871, 1.0
    %v1965 = vadd.f32 %v1873, 1.0
    %v1966 = vadd.f32 %v1875, 1.0
    %v1967 = vadd.f32 %v1877, 1.0
    %v1968 = vadd.f32 %v1879, 1.0
    %v1969 = vadd.f32 %v1881, 1.0
    %v1970 = vadd.f32 %v1883, 1.0
    %v1971 = vadd.f32 %v1885, 1.0
    %v1972 = vadd.f32 %v1887, 1.0
    %v1973 = vadd.f32 %v1889, 1.0
    %v1974 = vadd.f32 %v1891, 1.0
    %v1975 = vadd.f32 %v1893, 1.0
    %v1976 = vadd.f32 %v1895, 1.0
    %v1977 = vadd.f32 %v1897, 1.0
    %v1978 = vadd.f32 %v1899, 1.0
    %v1979 = vadd.f32 %v1901, 1.0
    %v1980 = vadd.f32 %v1903, 1.0
    %v1981 = vadd.f32 %v1905, 1.0
    %v1982 = vadd.f32 %v1907, 1.0
    %v1983 = vadd.f32 %v1909, 1.0
    %v1984 = vadd.f32 %v1911, 1.0
    %v1985 = vadd.f32 %v1913, 1.0
    %v1986 = vadd.f32 %v1915, 1.0
    %v1987 = vadd.f32 %v1917, 1.0
    %v1988 = vadd.f32 %v1919, 1.0
    %v1989 = vadd.f32 %v1921, 1.0
    %v1990 = vadd.f32 %v1923, 1.0
    %v1991 = vadd.f32 %v1925, 1.0
    %v1992 = vadd.f32 %v1927, 1.0
    %v1993 = vadd.f32 %v1929, 1.0
    %v1994 = vrcp.pop %v1930
    %v1995 = vrcp.pop %v1931
    %v1996 = vrcp.pop %v1932
    %v1997 = vrcp.pop %v1933
    %v1998 = vrcp.pop %v1934
    %v1999 = vrcp.pop %v1935
    %v2000 = vrcp.pop %v1936
    %v2001 = vrcp.pop %v1937
    %v2002 = vrcp.pop %v1938
    %v2003 = vrcp.pop %v1939
    %v2004 = vrcp.pop %v1940
    %v2005 = vrcp.pop %v1941
    %v2006 = vrcp.pop %v1942
    %v2007 = vrcp.pop %v1943
    %v2008 = vrcp.pop %v1944
    %v2009 = vrcp.pop %v1945
    %v2010 = vrcp.pop %v1946
    %v2011 = vrcp.pop %v1947
    %v2012 = vrcp.pop %v1948
    %v2013 = vrcp.pop %v1949
    %v2014 = vrcp.pop %v1950
    %v2015 = vrcp.pop %v1951
    %v2016 = vrcp.pop %v1952
    %v2017 = vrcp.pop %v1953
    %v2018 = vrcp.pop %v1954
    %v2019 = vrcp.pop %v1955
    %v2020 = vrcp.pop %v1956
    %v2021 = vrcp.pop %v1957
    %v2022 = vrcp.pop %v1958
    %v2023 = vrcp.pop %v1959
    %v2024 = vrcp.pop %v1960
    %v2025 = vrcp.pop %v1961
    %v2026 = vrcp.pop %v1962
    %v2027 = vrcp.pop %v1963
    %v2028 = vrcp.pop %v1964
    %v2029 = vrcp.pop %v1965
    %v2030 = vrcp.pop %v1966
    %v2031 = vrcp.pop %v1967
    %v2032 = vrcp.pop %v1968
    %v2033 = vrcp.pop %v1969
    %v2034 = vrcp.pop %v1970
    %v2035 = vrcp.pop %v1971
    %v2036 = vrcp.pop %v1972
    %v2037 = vrcp.pop %v1973
    %v2038 = vrcp.pop %v1974
    %v2039 = vrcp.pop %v1975
    %v2040 = vrcp.pop %v1976
    %v2041 = vrcp.pop %v1977
    %v2042 = vrcp.pop %v1978
    %v2043 = vrcp.pop %v1979
    %v2044 = vrcp.pop %v1980
    %v2045 = vrcp.pop %v1981
    %v2046 = vrcp.pop %v1982
    %v2047 = vrcp.pop %v1983
    %v2048 = vrcp.pop %v1984
    %v2049 = vrcp.pop %v1985
    %v2050 = vrcp.pop %v1986
    %v2051 = vrcp.pop %v1987
    %v2052 = vrcp.pop %v1988
    %v2053 = vrcp.pop %v1989
    %v2054 = vrcp.pop %v1990
    %v2055 = vrcp.pop %v1991
    %v2056 = vrcp.pop %v1992
    %v2057 = vrcp.pop %v1993
    %v2058 = vmul.f32 %v1579, %v1994
    %v2059 = vmul.f32 %v1581, %v1995
    %v2060 = vmul.f32 %v1584, %v1996
    %v2061 = vmul.f32 %v1586, %v1997
    %v2062 = vmul.f32 %v1589, %v1998
    %v2063 = vmul.f32 %v1591, %v1999
    %v2064 = vmul.f32 %v1594, %v2000
    %v2065 = vmul.f32 %v1596, %v2001
    %v2066 = vmul.f32 %v1599, %v2002
    %v2067 = vmul.f32 %v1601, %v2003
    %v2068 = vmul.f32 %v1604, %v2004
    %v2069 = vmul.f32 %v1606, %v2005
    %v2070 = vmul.f32 %v1609, %v2006
    %v2071 = vmul.f32 %v1611, %v2007
    %v2072 = vmul.f32 %v1614, %v2008
    %v2073 = vmul.f32 %v1616, %v2009
    %v2074 = vmul.f32 %v1619, %v2010
    %v2075 = vmul.f32 %v1621, %v2011
    %v2076 = vmul.f32 %v1624, %v2012
    %v2077 = vmul.f32 %v1626, %v2013
    %v2078 = vmul.f32 %v1629, %v2014
    %v2079 = vmul.f32 %v1631, %v2015
    %v2080 = vmul.f32 %v1634, %v2016
    %v2081 = vmul.f32 %v1636, %v2017
    %v2082 = vmul.f32 %v1639, %v2018
    %v2083 = vmul.f32 %v1641, %v2019
    %v2084 = vmul.f32 %v1644, %v2020
    %v2085 = vmul.f32 %v1646, %v2021
    %v2086 = vmul.f32 %v1649, %v2022
    %v2087 = vmul.f32 %v1651, %v2023
    %v2088 = vmul.f32 %v1654, %v2024
    %v2089 = vmul.f32 %v1656, %v2025
    %v2090 = vmul.f32 %v1659, %v2026
    %v2091 = vmul.f32 %v1661, %v2027
    %v2092 = vmul.f32 %v1664, %v2028
    %v2093 = vmul.f32 %v1666, %v2029
    %v2094 = vmul.f32 %v1669, %v2030
    %v2095 = vmul.f32 %v1671, %v2031
    %v2096 = vmul.f32 %v1674, %v2032
    %v2097 = vmul.f32 %v1676, %v2033
    %v2098 = vmul.f32 %v1679, %v2034
    %v2099 = vmul.f32 %v1681, %v2035
    %v2100 = vmul.f32 %v1684, %v2036
    %v2101 = vmul.f32 %v1686, %v2037
    %v2102 = vmul.f32 %v1689, %v2038
    %v2103 = vmul.f32 %v1691, %v2039
    %v2104 = vmul.f32 %v1694, %v2040
    %v2105 = vmul.f32 %v1696, %v2041
    %v2106 = vmul.f32 %v1699, %v2042
    %v2107 = vmul.f32 %v1701, %v2043
    %v2108 = vmul.f32 %v1704, %v2044
    %v2109 = vmul.f32 %v1706, %v2045
    %v2110 = vmul.f32 %v1709, %v2046
    %v2111 = vmul.f32 %v1711, %v2047
    %v2112 = vmul.f32 %v1714, %v2048
    %v2113 = vmul.f32 %v1716, %v2049
    %v2114 = vmul.f32 %v1719, %v2050
    %v2115 = vmul.f32 %v1721, %v2051
    %v2116 = vmul.f32 %v1724, %v2052
    %v2117 = vmul.f32 %v1726, %v2053
    %v2118 = vmul.f32 %v1729, %v2054
    %v2119 = vmul.f32 %v1731, %v2055
    %v2120 = vmul.f32 %v1734, %v2056
    %v2121 = vmul.f32 %v1736, %v2057
    %v2122 = vld [vmem:[%s4] sm:$0xf]
    %v2123 = vld [vmem:[%s4 + $0x4] sm:$0xf]
    %v2124 = vld [vmem:[%s4 + $0x8] sm:$0xf]
    %v2125 = vld [vmem:[%s4 + $0xc] sm:$0xf]
    %v2126 = vld [vmem:[%s4 + $0x10] sm:$0xf]
    %v2127 = vld [vmem:[%s4 + $0x14] sm:$0xf]
    %v2128 = vld [vmem:[%s4 + $0x18] sm:$0xf]
    %v2129 = vld [vmem:[%s4 + $0x1c] sm:$0xf]
    %v2130 = vld [vmem:[%s4 + $0x20] sm:$0xf]
    %v2131 = vld [vmem:[%s4 + $0x24] sm:$0xf]
    %v2132 = vld [vmem:[%s4 + $0x28] sm:$0xf]
    %v2133 = vld [vmem:[%s4 + $0x2c] sm:$0xf]
    %v2134 = vld [vmem:[%s4 + $0x30] sm:$0xf]
    %v2135 = vld [vmem:[%s4 + $0x34] sm:$0xf]
    %v2136 = vld [vmem:[%s4 + $0x38] sm:$0xf]
    %v2137 = vld [vmem:[%s4 + $0x3c] sm:$0xf]
    %v2138 = vld [vmem:[%s4 + $0x40] sm:$0xf]
    %v2139 = vld [vmem:[%s4 + $0x44] sm:$0xf]
    %v2140 = vld [vmem:[%s4 + $0x48] sm:$0xf]
    %v2141 = vld [vmem:[%s4 + $0x4c] sm:$0xf]
    %v2142 = vld [vmem:[%s4 + $0x50] sm:$0xf]
    %v2143 = vld [vmem:[%s4 + $0x54] sm:$0xf]
    %v2144 = vld [vmem:[%s4 + $0x58] sm:$0xf]
    %v2145 = vld [vmem:[%s4 + $0x5c] sm:$0xf]
    %v2146 = vld [vmem:[%s4 + $0x60] sm:$0xf]
    %v2147 = vld [vmem:[%s4 + $0x64] sm:$0xf]
    %v2148 = vld [vmem:[%s4 + $0x68] sm:$0xf]
    %v2149 = vld [vmem:[%s4 + $0x6c] sm:$0xf]
    %v2150 = vld [vmem:[%s4 + $0x70] sm:$0xf]
    %v2151 = vld [vmem:[%s4 + $0x74] sm:$0xf]
    %v2152 = vld [vmem:[%s4 + $0x78] sm:$0xf]
    %v2153 = vld [vmem:[%s4 + $0x7c] sm:$0xf]
    %v2154 = vld [vmem:[%s4 + $0x80] sm:$0xf]
    %v2155 = vld [vmem:[%s4 + $0x84] sm:$0xf]
    %v2156 = vld [vmem:[%s4 + $0x88] sm:$0xf]
    %v2157 = vld [vmem:[%s4 + $0x8c] sm:$0xf]
    %v2158 = vld [vmem:[%s4 + $0x90] sm:$0xf]
    %v2159 = vld [vmem:[%s4 + $0x94] sm:$0xf]
    %v2160 = vld [vmem:[%s4 + $0x98] sm:$0xf]
    %v2161 = vld [vmem:[%s4 + $0x9c] sm:$0xf]
    %v2162 = vld [vmem:[%s4 + $0xa0] sm:$0xf]
    %v2163 = vld [vmem:[%s4 + $0xa4] sm:$0xf]
    %v2164 = vld [vmem:[%s4 + $0xa8] sm:$0xf]
    %v2165 = vld [vmem:[%s4 + $0xac] sm:$0xf]
    %v2166 = vld [vmem:[%s4 + $0xb0] sm:$0xf]
    %v2167 = vld [vmem:[%s4 + $0xb4] sm:$0xf]
    %v2168 = vld [vmem:[%s4 + $0xb8] sm:$0xf]
    %v2169 = vld [vmem:[%s4 + $0xbc] sm:$0xf]
    %v2170 = vld [vmem:[%s4 + $0xc0] sm:$0xf]
    %v2171 = vld [vmem:[%s4 + $0xc4] sm:$0xf]
    %v2172 = vld [vmem:[%s4 + $0xc8] sm:$0xf]
    %v2173 = vld [vmem:[%s4 + $0xcc] sm:$0xf]
    %v2174 = vld [vmem:[%s4 + $0xd0] sm:$0xf]
    %v2175 = vld [vmem:[%s4 + $0xd4] sm:$0xf]
    %v2176 = vld [vmem:[%s4 + $0xd8] sm:$0xf]
    %v2177 = vld [vmem:[%s4 + $0xdc] sm:$0xf]
    %v2178 = vld [vmem:[%s4 + $0xe0] sm:$0xf]
    %v2179 = vld [vmem:[%s4 + $0xe4] sm:$0xf]
    %v2180 = vld [vmem:[%s4 + $0xe8] sm:$0xf]
    %v2181 = vld [vmem:[%s4 + $0xec] sm:$0xf]
    %v2182 = vld [vmem:[%s4 + $0xf0] sm:$0xf]
    %v2183 = vld [vmem:[%s4 + $0xf4] sm:$0xf]
    %v2184 = vld [vmem:[%s4 + $0xf8] sm:$0xf]
    %v2185 = vld [vmem:[%s4 + $0xfc] sm:$0xf]
    %v2186 = vunpack.c.l.bf16 %v2122
    %v2187 = vunpack.c.l.bf16 %v2123
    %v2188 = vunpack.c.l.bf16 %v2124
    %v2189 = vunpack.c.l.bf16 %v2125
    %v2190 = vunpack.c.l.bf16 %v2126
    %v2191 = vunpack.c.l.bf16 %v2127
    %v2192 = vunpack.c.l.bf16 %v2128
    %v2193 = vunpack.c.l.bf16 %v2129
    %v2194 = vunpack.c.l.bf16 %v2130
    %v2195 = vunpack.c.l.bf16 %v2131
    %v2196 = vunpack.c.l.bf16 %v2132
    %v2197 = vunpack.c.l.bf16 %v2133
    %v2198 = vunpack.c.l.bf16 %v2134
    %v2199 = vunpack.c.l.bf16 %v2135
    %v2200 = vunpack.c.l.bf16 %v2136
    %v2201 = vunpack.c.l.bf16 %v2137
    %v2202 = vunpack.c.l.bf16 %v2138
    %v2203 = vunpack.c.l.bf16 %v2139
    %v2204 = vunpack.c.l.bf16 %v2140
    %v2205 = vunpack.c.l.bf16 %v2141
    %v2206 = vunpack.c.l.bf16 %v2142
    %v2207 = vunpack.c.l.bf16 %v2143
    %v2208 = vunpack.c.l.bf16 %v2144
    %v2209 = vunpack.c.l.bf16 %v2145
    %v2210 = vunpack.c.l.bf16 %v2146
    %v2211 = vunpack.c.l.bf16 %v2147
    %v2212 = vunpack.c.l.bf16 %v2148
    %v2213 = vunpack.c.l.bf16 %v2149
    %v2214 = vunpack.c.l.bf16 %v2150
    %v2215 = vunpack.c.l.bf16 %v2151
    %v2216 = vunpack.c.l.bf16 %v2152
    %v2217 = vunpack.c.l.bf16 %v2153
    %v2218 = vunpack.c.l.bf16 %v2154
    %v2219 = vunpack.c.l.bf16 %v2155
    %v2220 = vunpack.c.l.bf16 %v2156
    %v2221 = vunpack.c.l.bf16 %v2157
    %v2222 = vunpack.c.l.bf16 %v2158
    %v2223 = vunpack.c.l.bf16 %v2159
    %v2224 = vunpack.c.l.bf16 %v2160
    %v2225 = vunpack.c.l.bf16 %v2161
    %v2226 = vunpack.c.l.bf16 %v2162
    %v2227 = vunpack.c.l.bf16 %v2163
    %v2228 = vunpack.c.l.bf16 %v2164
    %v2229 = vunpack.c.l.bf16 %v2165
    %v2230 = vunpack.c.l.bf16 %v2166
    %v2231 = vunpack.c.l.bf16 %v2167
    %v2232 = vunpack.c.l.bf16 %v2168
    %v2233 = vunpack.c.l.bf16 %v2169
    %v2234 = vunpack.c.l.bf16 %v2170
    %v2235 = vunpack.c.l.bf16 %v2171
    %v2236 = vunpack.c.l.bf16 %v2172
    %v2237 = vunpack.c.l.bf16 %v2173
    %v2238 = vunpack.c.l.bf16 %v2174
    %v2239 = vunpack.c.l.bf16 %v2175
    %v2240 = vunpack.c.l.bf16 %v2176
    %v2241 = vunpack.c.l.bf16 %v2177
    %v2242 = vunpack.c.l.bf16 %v2178
    %v2243 = vunpack.c.l.bf16 %v2179
    %v2244 = vunpack.c.l.bf16 %v2180
    %v2245 = vunpack.c.l.bf16 %v2181
    %v2246 = vunpack.c.l.bf16 %v2182
    %v2247 = vunpack.c.l.bf16 %v2183
    %v2248 = vunpack.c.l.bf16 %v2184
    %v2249 = vunpack.c.l.bf16 %v2185
    %v2250 = vadd.f32 %v2186, %v2058
    %v2251 = vadd.f32 %v2187, %v2059
    %v2252 = vadd.f32 %v2188, %v2060
    %v2253 = vadd.f32 %v2189, %v2061
    %v2254 = vadd.f32 %v2190, %v2062
    %v2255 = vadd.f32 %v2191, %v2063
    %v2256 = vadd.f32 %v2192, %v2064
    %v2257 = vadd.f32 %v2193, %v2065
    %v2258 = vadd.f32 %v2194, %v2066
    %v2259 = vadd.f32 %v2195, %v2067
    %v2260 = vadd.f32 %v2196, %v2068
    %v2261 = vadd.f32 %v2197, %v2069
    %v2262 = vadd.f32 %v2198, %v2070
    %v2263 = vadd.f32 %v2199, %v2071
    %v2264 = vadd.f32 %v2200, %v2072
    %v2265 = vadd.f32 %v2201, %v2073
    %v2266 = vadd.f32 %v2202, %v2074
    %v2267 = vadd.f32 %v2203, %v2075
    %v2268 = vadd.f32 %v2204, %v2076
    %v2269 = vadd.f32 %v2205, %v2077
    %v2270 = vadd.f32 %v2206, %v2078
    %v2271 = vadd.f32 %v2207, %v2079
    %v2272 = vadd.f32 %v2208, %v2080
    %v2273 = vadd.f32 %v2209, %v2081
    %v2274 = vadd.f32 %v2210, %v2082
    %v2275 = vadd.f32 %v2211, %v2083
    %v2276 = vadd.f32 %v2212, %v2084
    %v2277 = vadd.f32 %v2213, %v2085
    %v2278 = vadd.f32 %v2214, %v2086
    %v2279 = vadd.f32 %v2215, %v2087
    %v2280 = vadd.f32 %v2216, %v2088
    %v2281 = vadd.f32 %v2217, %v2089
    %v2282 = vadd.f32 %v2218, %v2090
    %v2283 = vadd.f32 %v2219, %v2091
    %v2284 = vadd.f32 %v2220, %v2092
    %v2285 = vadd.f32 %v2221, %v2093
    %v2286 = vadd.f32 %v2222, %v2094
    %v2287 = vadd.f32 %v2223, %v2095
    %v2288 = vadd.f32 %v2224, %v2096
    %v2289 = vadd.f32 %v2225, %v2097
    %v2290 = vadd.f32 %v2226, %v2098
    %v2291 = vadd.f32 %v2227, %v2099
    %v2292 = vadd.f32 %v2228, %v2100
    %v2293 = vadd.f32 %v2229, %v2101
    %v2294 = vadd.f32 %v2230, %v2102
    %v2295 = vadd.f32 %v2231, %v2103
    %v2296 = vadd.f32 %v2232, %v2104
    %v2297 = vadd.f32 %v2233, %v2105
    %v2298 = vadd.f32 %v2234, %v2106
    %v2299 = vadd.f32 %v2235, %v2107
    %v2300 = vadd.f32 %v2236, %v2108
    %v2301 = vadd.f32 %v2237, %v2109
    %v2302 = vadd.f32 %v2238, %v2110
    %v2303 = vadd.f32 %v2239, %v2111
    %v2304 = vadd.f32 %v2240, %v2112
    %v2305 = vadd.f32 %v2241, %v2113
    %v2306 = vadd.f32 %v2242, %v2114
    %v2307 = vadd.f32 %v2243, %v2115
    %v2308 = vadd.f32 %v2244, %v2116
    %v2309 = vadd.f32 %v2245, %v2117
    %v2310 = vadd.f32 %v2246, %v2118
    %v2311 = vadd.f32 %v2247, %v2119
    %v2312 = vadd.f32 %v2248, %v2120
    %v2313 = vadd.f32 %v2249, %v2121
    %s2314 = scalar_lea.vmem %s5, 128
    %v2315 = vld [vmem:[%s2314] sm:$0xf]
    %v2316 = vld [vmem:[%s2314 + $0x4] sm:$0xf]
    %v2317 = vld [vmem:[%s2314 + $0x8] sm:$0xf]
    %v2318 = vld [vmem:[%s2314 + $0xc] sm:$0xf]
    %v2319 = vld [vmem:[%s2314 + $0x10] sm:$0xf]
    %v2320 = vld [vmem:[%s2314 + $0x14] sm:$0xf]
    %v2321 = vld [vmem:[%s2314 + $0x18] sm:$0xf]
    %v2322 = vld [vmem:[%s2314 + $0x1c] sm:$0xf]
    %v2323 = vld [vmem:[%s2314 + $0x20] sm:$0xf]
    %v2324 = vld [vmem:[%s2314 + $0x24] sm:$0xf]
    %v2325 = vld [vmem:[%s2314 + $0x28] sm:$0xf]
    %v2326 = vld [vmem:[%s2314 + $0x2c] sm:$0xf]
    %v2327 = vld [vmem:[%s2314 + $0x30] sm:$0xf]
    %v2328 = vld [vmem:[%s2314 + $0x34] sm:$0xf]
    %v2329 = vld [vmem:[%s2314 + $0x38] sm:$0xf]
    %v2330 = vld [vmem:[%s2314 + $0x3c] sm:$0xf]
    %v2331 = vpack.c.bf16 %v2251, %v2250
    %v2332 = vpack.c.bf16 %v2253, %v2252
    %v2333 = vpack.c.bf16 %v2255, %v2254
    %v2334 = vpack.c.bf16 %v2257, %v2256
    %v2335 = vpack.c.bf16 %v2259, %v2258
    %v2336 = vpack.c.bf16 %v2261, %v2260
    %v2337 = vpack.c.bf16 %v2263, %v2262
    %v2338 = vpack.c.bf16 %v2265, %v2264
    %v2339 = vpack.c.bf16 %v2267, %v2266
    %v2340 = vpack.c.bf16 %v2269, %v2268
    %v2341 = vpack.c.bf16 %v2271, %v2270
    %v2342 = vpack.c.bf16 %v2273, %v2272
    %v2343 = vpack.c.bf16 %v2275, %v2274
    %v2344 = vpack.c.bf16 %v2277, %v2276
    %v2345 = vpack.c.bf16 %v2279, %v2278
    %v2346 = vpack.c.bf16 %v2281, %v2280
    %v2347 = vpack.c.bf16 %v2283, %v2282
    %v2348 = vpack.c.bf16 %v2285, %v2284
    %v2349 = vpack.c.bf16 %v2287, %v2286
    %v2350 = vpack.c.bf16 %v2289, %v2288
    %v2351 = vpack.c.bf16 %v2291, %v2290
    %v2352 = vpack.c.bf16 %v2293, %v2292
    %v2353 = vpack.c.bf16 %v2295, %v2294
    %v2354 = vpack.c.bf16 %v2297, %v2296
    %v2355 = vpack.c.bf16 %v2299, %v2298
    %v2356 = vpack.c.bf16 %v2301, %v2300
    %v2357 = vpack.c.bf16 %v2303, %v2302
    %v2358 = vpack.c.bf16 %v2305, %v2304
    %v2359 = vpack.c.bf16 %v2307, %v2306
    %v2360 = vpack.c.bf16 %v2309, %v2308
    %v2361 = vpack.c.bf16 %v2311, %v2310
    %v2362 = vpack.c.bf16 %v2313, %v2312
    %v2363 = vld [vmem:[%s6] sm:$0x1]
    %v2364 = vperm.slane %v2363, 0
    %v2381 = vunpack.c.l.b16 %v2315
    %v2382 = vunpack.c.l.b16 %v2316
    %v2383 = vunpack.c.l.b16 %v2317
    %v2384 = vunpack.c.l.b16 %v2318
    %v2385 = vunpack.c.l.b16 %v2319
    %v2386 = vunpack.c.l.b16 %v2320
    %v2387 = vunpack.c.l.b16 %v2321
    %v2388 = vunpack.c.l.b16 %v2322
    %v2389 = vunpack.c.l.b16 %v2323
    %v2390 = vunpack.c.l.b16 %v2324
    %v2391 = vunpack.c.l.b16 %v2325
    %v2392 = vunpack.c.l.b16 %v2326
    %v2393 = vunpack.c.l.b16 %v2327
    %v2394 = vunpack.c.l.b16 %v2328
    %v2395 = vunpack.c.l.b16 %v2329
    %v2396 = vunpack.c.l.b16 %v2330
    %v2397 = vpack.c.b16 %v2382, %v2381
    %v2398 = vpack.c.b16 %v2384, %v2383
    %v2399 = vpack.c.b16 %v2386, %v2385
    %v2400 = vpack.c.b16 %v2388, %v2387
    %v2401 = vpack.c.b16 %v2390, %v2389
    %v2402 = vpack.c.b16 %v2392, %v2391
    %v2403 = vpack.c.b16 %v2394, %v2393
    %v2404 = vpack.c.b16 %v2396, %v2395
    %2413 = vmatpush.bf16.msra.mxu0 %v2404
    %2414 = vmatpush.bf16.msra.mxu0 %v2403
    %2415 = vmatpush.bf16.msra.mxu0 %v2402
    %2416 = vmatpush.bf16.msra.mxu0 %v2401
    %2417 = vmatpush.bf16.msra.mxu0 %v2400
    %2418 = vmatpush.bf16.msra.mxu0 %v2399
    %2419 = vmatpush.bf16.msra.mxu0 %v2398
    %2420 = vmatpush.bf16.msra.mxu0 %v2397
    %2421 = vmatmul.bf16.gmra.mxu0 %v2331
    %v2422 = vpop.f32.mrf.mxu0
    %v2423 = vadd.f32 %v2364, %v2422
    %v2424 = vpop.f32.mrf.mxu0
    %v2425 = vadd.f32 %v2364, %v2424
    %2426 = vmatmul.bf16.gmra.mxu0 %v2332
    %v2427 = vpop.f32.mrf.mxu0
    %v2428 = vadd.f32 %v2364, %v2427
    %v2429 = vpop.f32.mrf.mxu0
    %v2430 = vadd.f32 %v2364, %v2429
    %2431 = vmatmul.bf16.gmra.mxu0 %v2333
    %v2432 = vpop.f32.mrf.mxu0
    %v2433 = vadd.f32 %v2364, %v2432
    %v2434 = vpop.f32.mrf.mxu0
    %v2435 = vadd.f32 %v2364, %v2434
    %2436 = vmatmul.bf16.gmra.mxu0 %v2334
    %v2437 = vpop.f32.mrf.mxu0
    %v2438 = vadd.f32 %v2364, %v2437
    %v2439 = vpop.f32.mrf.mxu0
    %v2440 = vadd.f32 %v2364, %v2439
    %2441 = vmatmul.bf16.gmra.mxu0 %v2335
    %v2442 = vpop.f32.mrf.mxu0
    %v2443 = vadd.f32 %v2364, %v2442
    %v2444 = vpop.f32.mrf.mxu0
    %v2445 = vadd.f32 %v2364, %v2444
    %2446 = vmatmul.bf16.gmra.mxu0 %v2336
    %v2447 = vpop.f32.mrf.mxu0
    %v2448 = vadd.f32 %v2364, %v2447
    %v2449 = vpop.f32.mrf.mxu0
    %v2450 = vadd.f32 %v2364, %v2449
    %2451 = vmatmul.bf16.gmra.mxu0 %v2337
    %v2452 = vpop.f32.mrf.mxu0
    %v2453 = vadd.f32 %v2364, %v2452
    %v2454 = vpop.f32.mrf.mxu0
    %v2455 = vadd.f32 %v2364, %v2454
    %2456 = vmatmul.bf16.gmra.mxu0 %v2338
    %v2457 = vpop.f32.mrf.mxu0
    %v2458 = vadd.f32 %v2364, %v2457
    %v2459 = vpop.f32.mrf.mxu0
    %v2460 = vadd.f32 %v2364, %v2459
    %2461 = vmatmul.bf16.gmra.mxu0 %v2339
    %v2462 = vpop.f32.mrf.mxu0
    %v2463 = vadd.f32 %v2364, %v2462
    %v2464 = vpop.f32.mrf.mxu0
    %v2465 = vadd.f32 %v2364, %v2464
    %2466 = vmatmul.bf16.gmra.mxu0 %v2340
    %v2467 = vpop.f32.mrf.mxu0
    %v2468 = vadd.f32 %v2364, %v2467
    %v2469 = vpop.f32.mrf.mxu0
    %v2470 = vadd.f32 %v2364, %v2469
    %2471 = vmatmul.bf16.gmra.mxu0 %v2341
    %v2472 = vpop.f32.mrf.mxu0
    %v2473 = vadd.f32 %v2364, %v2472
    %v2474 = vpop.f32.mrf.mxu0
    %v2475 = vadd.f32 %v2364, %v2474
    %2476 = vmatmul.bf16.gmra.mxu0 %v2342
    %v2477 = vpop.f32.mrf.mxu0
    %v2478 = vadd.f32 %v2364, %v2477
    %v2479 = vpop.f32.mrf.mxu0
    %v2480 = vadd.f32 %v2364, %v2479
    %2481 = vmatmul.bf16.gmra.mxu0 %v2343
    %v2482 = vpop.f32.mrf.mxu0
    %v2483 = vadd.f32 %v2364, %v2482
    %v2484 = vpop.f32.mrf.mxu0
    %v2485 = vadd.f32 %v2364, %v2484
    %2486 = vmatmul.bf16.gmra.mxu0 %v2344
    %v2487 = vpop.f32.mrf.mxu0
    %v2488 = vadd.f32 %v2364, %v2487
    %v2489 = vpop.f32.mrf.mxu0
    %v2490 = vadd.f32 %v2364, %v2489
    %2491 = vmatmul.bf16.gmra.mxu0 %v2345
    %v2492 = vpop.f32.mrf.mxu0
    %v2493 = vadd.f32 %v2364, %v2492
    %v2494 = vpop.f32.mrf.mxu0
    %v2495 = vadd.f32 %v2364, %v2494
    %2496 = vmatmul.bf16.gmra.mxu0 %v2346
    %v2497 = vpop.f32.mrf.mxu0
    %v2498 = vadd.f32 %v2364, %v2497
    %v2499 = vpop.f32.mrf.mxu0
    %v2500 = vadd.f32 %v2364, %v2499
    %2501 = vmatmul.bf16.gmra.mxu0 %v2347
    %v2502 = vpop.f32.mrf.mxu0
    %v2503 = vadd.f32 %v2364, %v2502
    %v2504 = vpop.f32.mrf.mxu0
    %v2505 = vadd.f32 %v2364, %v2504
    %2506 = vmatmul.bf16.gmra.mxu0 %v2348
    %v2507 = vpop.f32.mrf.mxu0
    %v2508 = vadd.f32 %v2364, %v2507
    %v2509 = vpop.f32.mrf.mxu0
    %v2510 = vadd.f32 %v2364, %v2509
    %2511 = vmatmul.bf16.gmra.mxu0 %v2349
    %v2512 = vpop.f32.mrf.mxu0
    %v2513 = vadd.f32 %v2364, %v2512
    %v2514 = vpop.f32.mrf.mxu0
    %v2515 = vadd.f32 %v2364, %v2514
    %2516 = vmatmul.bf16.gmra.mxu0 %v2350
    %v2517 = vpop.f32.mrf.mxu0
    %v2518 = vadd.f32 %v2364, %v2517
    %v2519 = vpop.f32.mrf.mxu0
    %v2520 = vadd.f32 %v2364, %v2519
    %2521 = vmatmul.bf16.gmra.mxu0 %v2351
    %v2522 = vpop.f32.mrf.mxu0
    %v2523 = vadd.f32 %v2364, %v2522
    %v2524 = vpop.f32.mrf.mxu0
    %v2525 = vadd.f32 %v2364, %v2524
    %2526 = vmatmul.bf16.gmra.mxu0 %v2352
    %v2527 = vpop.f32.mrf.mxu0
    %v2528 = vadd.f32 %v2364, %v2527
    %v2529 = vpop.f32.mrf.mxu0
    %v2530 = vadd.f32 %v2364, %v2529
    %2531 = vmatmul.bf16.gmra.mxu0 %v2353
    %v2532 = vpop.f32.mrf.mxu0
    %v2533 = vadd.f32 %v2364, %v2532
    %v2534 = vpop.f32.mrf.mxu0
    %v2535 = vadd.f32 %v2364, %v2534
    %2536 = vmatmul.bf16.gmra.mxu0 %v2354
    %v2537 = vpop.f32.mrf.mxu0
    %v2538 = vadd.f32 %v2364, %v2537
    %v2539 = vpop.f32.mrf.mxu0
    %v2540 = vadd.f32 %v2364, %v2539
    %2541 = vmatmul.bf16.gmra.mxu0 %v2355
    %v2542 = vpop.f32.mrf.mxu0
    %v2543 = vadd.f32 %v2364, %v2542
    %v2544 = vpop.f32.mrf.mxu0
    %v2545 = vadd.f32 %v2364, %v2544
    %2546 = vmatmul.bf16.gmra.mxu0 %v2356
    %v2547 = vpop.f32.mrf.mxu0
    %v2548 = vadd.f32 %v2364, %v2547
    %v2549 = vpop.f32.mrf.mxu0
    %v2550 = vadd.f32 %v2364, %v2549
    %2551 = vmatmul.bf16.gmra.mxu0 %v2357
    %v2552 = vpop.f32.mrf.mxu0
    %v2553 = vadd.f32 %v2364, %v2552
    %v2554 = vpop.f32.mrf.mxu0
    %v2555 = vadd.f32 %v2364, %v2554
    %2556 = vmatmul.bf16.gmra.mxu0 %v2358
    %v2557 = vpop.f32.mrf.mxu0
    %v2558 = vadd.f32 %v2364, %v2557
    %v2559 = vpop.f32.mrf.mxu0
    %v2560 = vadd.f32 %v2364, %v2559
    %2561 = vmatmul.bf16.gmra.mxu0 %v2359
    %v2562 = vpop.f32.mrf.mxu0
    %v2563 = vadd.f32 %v2364, %v2562
    %v2564 = vpop.f32.mrf.mxu0
    %v2565 = vadd.f32 %v2364, %v2564
    %2566 = vmatmul.bf16.gmra.mxu0 %v2360
    %v2567 = vpop.f32.mrf.mxu0
    %v2568 = vadd.f32 %v2364, %v2567
    %v2569 = vpop.f32.mrf.mxu0
    %v2570 = vadd.f32 %v2364, %v2569
    %2571 = vmatmul.bf16.gmra.mxu0 %v2361
    %v2572 = vpop.f32.mrf.mxu0
    %v2573 = vadd.f32 %v2364, %v2572
    %v2574 = vpop.f32.mrf.mxu0
    %v2575 = vadd.f32 %v2364, %v2574
    %2576 = vmatmul.bf16.gmra.mxu0 %v2362
    %v2577 = vpop.f32.mrf.mxu0
    %v2578 = vadd.f32 %v2364, %v2577
    %v2579 = vpop.f32.mrf.mxu0
    %v2580 = vadd.f32 %v2364, %v2579
    %2581 = vdwg.mxu0
    %v2582 = vsub.f32 0.0, %v2423
    %v2583 = vsub.f32 0.0, %v2425
    %v2584 = vsub.f32 0.0, %v2428
    %v2585 = vsub.f32 0.0, %v2430
    %v2586 = vsub.f32 0.0, %v2433
    %v2587 = vsub.f32 0.0, %v2435
    %v2588 = vsub.f32 0.0, %v2438
    %v2589 = vsub.f32 0.0, %v2440
    %v2590 = vsub.f32 0.0, %v2443
    %v2591 = vsub.f32 0.0, %v2445
    %v2592 = vsub.f32 0.0, %v2448
    %v2593 = vsub.f32 0.0, %v2450
    %v2594 = vsub.f32 0.0, %v2453
    %v2595 = vsub.f32 0.0, %v2455
    %v2596 = vsub.f32 0.0, %v2458
    %v2597 = vsub.f32 0.0, %v2460
    %v2598 = vsub.f32 0.0, %v2463
    %v2599 = vsub.f32 0.0, %v2465
    %v2600 = vsub.f32 0.0, %v2468
    %v2601 = vsub.f32 0.0, %v2470
    %v2602 = vsub.f32 0.0, %v2473
    %v2603 = vsub.f32 0.0, %v2475
    %v2604 = vsub.f32 0.0, %v2478
    %v2605 = vsub.f32 0.0, %v2480
    %v2606 = vsub.f32 0.0, %v2483
    %v2607 = vsub.f32 0.0, %v2485
    %v2608 = vsub.f32 0.0, %v2488
    %v2609 = vsub.f32 0.0, %v2490
    %v2610 = vsub.f32 0.0, %v2493
    %v2611 = vsub.f32 0.0, %v2495
    %v2612 = vsub.f32 0.0, %v2498
    %v2613 = vsub.f32 0.0, %v2500
    %v2614 = vsub.f32 0.0, %v2503
    %v2615 = vsub.f32 0.0, %v2505
    %v2616 = vsub.f32 0.0, %v2508
    %v2617 = vsub.f32 0.0, %v2510
    %v2618 = vsub.f32 0.0, %v2513
    %v2619 = vsub.f32 0.0, %v2515
    %v2620 = vsub.f32 0.0, %v2518
    %v2621 = vsub.f32 0.0, %v2520
    %v2622 = vsub.f32 0.0, %v2523
    %v2623 = vsub.f32 0.0, %v2525
    %v2624 = vsub.f32 0.0, %v2528
    %v2625 = vsub.f32 0.0, %v2530
    %v2626 = vsub.f32 0.0, %v2533
    %v2627 = vsub.f32 0.0, %v2535
    %v2628 = vsub.f32 0.0, %v2538
    %v2629 = vsub.f32 0.0, %v2540
    %v2630 = vsub.f32 0.0, %v2543
    %v2631 = vsub.f32 0.0, %v2545
    %v2632 = vsub.f32 0.0, %v2548
    %v2633 = vsub.f32 0.0, %v2550
    %v2634 = vsub.f32 0.0, %v2553
    %v2635 = vsub.f32 0.0, %v2555
    %v2636 = vsub.f32 0.0, %v2558
    %v2637 = vsub.f32 0.0, %v2560
    %v2638 = vsub.f32 0.0, %v2563
    %v2639 = vsub.f32 0.0, %v2565
    %v2640 = vsub.f32 0.0, %v2568
    %v2641 = vsub.f32 0.0, %v2570
    %v2642 = vsub.f32 0.0, %v2573
    %v2643 = vsub.f32 0.0, %v2575
    %v2644 = vsub.f32 0.0, %v2578
    %v2645 = vsub.f32 0.0, %v2580
    %v2646 = vmul.f32 %v2582, 1.442695
    %v2647 = vpow.pop %v2646
    %v2648 = vmul.f32 %v2583, 1.442695
    %v2649 = vpow.pop %v2648
    %v2650 = vmul.f32 %v2584, 1.442695
    %v2651 = vpow.pop %v2650
    %v2652 = vmul.f32 %v2585, 1.442695
    %v2653 = vpow.pop %v2652
    %v2654 = vmul.f32 %v2586, 1.442695
    %v2655 = vpow.pop %v2654
    %v2656 = vmul.f32 %v2587, 1.442695
    %v2657 = vpow.pop %v2656
    %v2658 = vmul.f32 %v2588, 1.442695
    %v2659 = vpow.pop %v2658
    %v2660 = vmul.f32 %v2589, 1.442695
    %v2661 = vpow.pop %v2660
    %v2662 = vmul.f32 %v2590, 1.442695
    %v2663 = vpow.pop %v2662
    %v2664 = vmul.f32 %v2591, 1.442695
    %v2665 = vpow.pop %v2664
    %v2666 = vmul.f32 %v2592, 1.442695
    %v2667 = vpow.pop %v2666
    %v2668 = vmul.f32 %v2593, 1.442695
    %v2669 = vpow.pop %v2668
    %v2670 = vmul.f32 %v2594, 1.442695
    %v2671 = vpow.pop %v2670
    %v2672 = vmul.f32 %v2595, 1.442695
    %v2673 = vpow.pop %v2672
    %v2674 = vmul.f32 %v2596, 1.442695
    %v2675 = vpow.pop %v2674
    %v2676 = vmul.f32 %v2597, 1.442695
    %v2677 = vpow.pop %v2676
    %v2678 = vmul.f32 %v2598, 1.442695
    %v2679 = vpow.pop %v2678
    %v2680 = vmul.f32 %v2599, 1.442695
    %v2681 = vpow.pop %v2680
    %v2682 = vmul.f32 %v2600, 1.442695
    %v2683 = vpow.pop %v2682
    %v2684 = vmul.f32 %v2601, 1.442695
    %v2685 = vpow.pop %v2684
    %v2686 = vmul.f32 %v2602, 1.442695
    %v2687 = vpow.pop %v2686
    %v2688 = vmul.f32 %v2603, 1.442695
    %v2689 = vpow.pop %v2688
    %v2690 = vmul.f32 %v2604, 1.442695
    %v2691 = vpow.pop %v2690
    %v2692 = vmul.f32 %v2605, 1.442695
    %v2693 = vpow.pop %v2692
    %v2694 = vmul.f32 %v2606, 1.442695
    %v2695 = vpow.pop %v2694
    %v2696 = vmul.f32 %v2607, 1.442695
    %v2697 = vpow.pop %v2696
    %v2698 = vmul.f32 %v2608, 1.442695
    %v2699 = vpow.pop %v2698
    %v2700 = vmul.f32 %v2609, 1.442695
    %v2701 = vpow.pop %v2700
    %v2702 = vmul.f32 %v2610, 1.442695
    %v2703 = vpow.pop %v2702
    %v2704 = vmul.f32 %v2611, 1.442695
    %v2705 = vpow.pop %v2704
    %v2706 = vmul.f32 %v2612, 1.442695
    %v2707 = vpow.pop %v2706
    %v2708 = vmul.f32 %v2613, 1.442695
    %v2709 = vpow.pop %v2708
    %v2710 = vmul.f32 %v2614, 1.442695
    %v2711 = vpow.pop %v2710
    %v2712 = vmul.f32 %v2615, 1.442695
    %v2713 = vpow.pop %v2712
    %v2714 = vmul.f32 %v2616, 1.442695
    %v2715 = vpow.pop %v2714
    %v2716 = vmul.f32 %v2617, 1.442695
    %v2717 = vpow.pop %v2716
    %v2718 = vmul.f32 %v2618, 1.442695
    %v2719 = vpow.pop %v2718
    %v2720 = vmul.f32 %v2619, 1.442695
    %v2721 = vpow.pop %v2720
    %v2722 = vmul.f32 %v2620, 1.442695
    %v2723 = vpow.pop %v2722
    %v2724 = vmul.f32 %v2621, 1.442695
    %v2725 = vpow.pop %v2724
    %v2726 = vmul.f32 %v2622, 1.442695
    %v2727 = vpow.pop %v2726
    %v2728 = vmul.f32 %v2623, 1.442695
    %v2729 = vpow.pop %v2728
    %v2730 = vmul.f32 %v2624, 1.442695
    %v2731 = vpow.pop %v2730
    %v2732 = vmul.f32 %v2625, 1.442695
    %v2733 = vpow.pop %v2732
    %v2734 = vmul.f32 %v2626, 1.442695
    %v2735 = vpow.pop %v2734
    %v2736 = vmul.f32 %v2627, 1.442695
    %v2737 = vpow.pop %v2736
    %v2738 = vmul.f32 %v2628, 1.442695
    %v2739 = vpow.pop %v2738
    %v2740 = vmul.f32 %v2629, 1.442695
    %v2741 = vpow.pop %v2740
    %v2742 = vmul.f32 %v2630, 1.442695
    %v2743 = vpow.pop %v2742
    %v2744 = vmul.f32 %v2631, 1.442695
    %v2745 = vpow.pop %v2744
    %v2746 = vmul.f32 %v2632, 1.442695
    %v2747 = vpow.pop %v2746
    %v2748 = vmul.f32 %v2633, 1.442695
    %v2749 = vpow.pop %v2748
    %v2750 = vmul.f32 %v2634, 1.442695
    %v2751 = vpow.pop %v2750
    %v2752 = vmul.f32 %v2635, 1.442695
    %v2753 = vpow.pop %v2752
    %v2754 = vmul.f32 %v2636, 1.442695
    %v2755 = vpow.pop %v2754
    %v2756 = vmul.f32 %v2637, 1.442695
    %v2757 = vpow.pop %v2756
    %v2758 = vmul.f32 %v2638, 1.442695
    %v2759 = vpow.pop %v2758
    %v2760 = vmul.f32 %v2639, 1.442695
    %v2761 = vpow.pop %v2760
    %v2762 = vmul.f32 %v2640, 1.442695
    %v2763 = vpow.pop %v2762
    %v2764 = vmul.f32 %v2641, 1.442695
    %v2765 = vpow.pop %v2764
    %v2766 = vmul.f32 %v2642, 1.442695
    %v2767 = vpow.pop %v2766
    %v2768 = vmul.f32 %v2643, 1.442695
    %v2769 = vpow.pop %v2768
    %v2770 = vmul.f32 %v2644, 1.442695
    %v2771 = vpow.pop %v2770
    %v2772 = vmul.f32 %v2645, 1.442695
    %v2773 = vpow.pop %v2772
    %v2774 = vadd.f32 %v2647, 1.0
    %v2775 = vadd.f32 %v2649, 1.0
    %v2776 = vadd.f32 %v2651, 1.0
    %v2777 = vadd.f32 %v2653, 1.0
    %v2778 = vadd.f32 %v2655, 1.0
    %v2779 = vadd.f32 %v2657, 1.0
    %v2780 = vadd.f32 %v2659, 1.0
    %v2781 = vadd.f32 %v2661, 1.0
    %v2782 = vadd.f32 %v2663, 1.0
    %v2783 = vadd.f32 %v2665, 1.0
    %v2784 = vadd.f32 %v2667, 1.0
    %v2785 = vadd.f32 %v2669, 1.0
    %v2786 = vadd.f32 %v2671, 1.0
    %v2787 = vadd.f32 %v2673, 1.0
    %v2788 = vadd.f32 %v2675, 1.0
    %v2789 = vadd.f32 %v2677, 1.0
    %v2790 = vadd.f32 %v2679, 1.0
    %v2791 = vadd.f32 %v2681, 1.0
    %v2792 = vadd.f32 %v2683, 1.0
    %v2793 = vadd.f32 %v2685, 1.0
    %v2794 = vadd.f32 %v2687, 1.0
    %v2795 = vadd.f32 %v2689, 1.0
    %v2796 = vadd.f32 %v2691, 1.0
    %v2797 = vadd.f32 %v2693, 1.0
    %v2798 = vadd.f32 %v2695, 1.0
    %v2799 = vadd.f32 %v2697, 1.0
    %v2800 = vadd.f32 %v2699, 1.0
    %v2801 = vadd.f32 %v2701, 1.0
    %v2802 = vadd.f32 %v2703, 1.0
    %v2803 = vadd.f32 %v2705, 1.0
    %v2804 = vadd.f32 %v2707, 1.0
    %v2805 = vadd.f32 %v2709, 1.0
    %v2806 = vadd.f32 %v2711, 1.0
    %v2807 = vadd.f32 %v2713, 1.0
    %v2808 = vadd.f32 %v2715, 1.0
    %v2809 = vadd.f32 %v2717, 1.0
    %v2810 = vadd.f32 %v2719, 1.0
    %v2811 = vadd.f32 %v2721, 1.0
    %v2812 = vadd.f32 %v2723, 1.0
    %v2813 = vadd.f32 %v2725, 1.0
    %v2814 = vadd.f32 %v2727, 1.0
    %v2815 = vadd.f32 %v2729, 1.0
    %v2816 = vadd.f32 %v2731, 1.0
    %v2817 = vadd.f32 %v2733, 1.0
    %v2818 = vadd.f32 %v2735, 1.0
    %v2819 = vadd.f32 %v2737, 1.0
    %v2820 = vadd.f32 %v2739, 1.0
    %v2821 = vadd.f32 %v2741, 1.0
    %v2822 = vadd.f32 %v2743, 1.0
    %v2823 = vadd.f32 %v2745, 1.0
    %v2824 = vadd.f32 %v2747, 1.0
    %v2825 = vadd.f32 %v2749, 1.0
    %v2826 = vadd.f32 %v2751, 1.0
    %v2827 = vadd.f32 %v2753, 1.0
    %v2828 = vadd.f32 %v2755, 1.0
    %v2829 = vadd.f32 %v2757, 1.0
    %v2830 = vadd.f32 %v2759, 1.0
    %v2831 = vadd.f32 %v2761, 1.0
    %v2832 = vadd.f32 %v2763, 1.0
    %v2833 = vadd.f32 %v2765, 1.0
    %v2834 = vadd.f32 %v2767, 1.0
    %v2835 = vadd.f32 %v2769, 1.0
    %v2836 = vadd.f32 %v2771, 1.0
    %v2837 = vadd.f32 %v2773, 1.0
    %v2838 = vrcp.pop %v2774
    %v2839 = vrcp.pop %v2775
    %v2840 = vrcp.pop %v2776
    %v2841 = vrcp.pop %v2777
    %v2842 = vrcp.pop %v2778
    %v2843 = vrcp.pop %v2779
    %v2844 = vrcp.pop %v2780
    %v2845 = vrcp.pop %v2781
    %v2846 = vrcp.pop %v2782
    %v2847 = vrcp.pop %v2783
    %v2848 = vrcp.pop %v2784
    %v2849 = vrcp.pop %v2785
    %v2850 = vrcp.pop %v2786
    %v2851 = vrcp.pop %v2787
    %v2852 = vrcp.pop %v2788
    %v2853 = vrcp.pop %v2789
    %v2854 = vrcp.pop %v2790
    %v2855 = vrcp.pop %v2791
    %v2856 = vrcp.pop %v2792
    %v2857 = vrcp.pop %v2793
    %v2858 = vrcp.pop %v2794
    %v2859 = vrcp.pop %v2795
    %v2860 = vrcp.pop %v2796
    %v2861 = vrcp.pop %v2797
    %v2862 = vrcp.pop %v2798
    %v2863 = vrcp.pop %v2799
    %v2864 = vrcp.pop %v2800
    %v2865 = vrcp.pop %v2801
    %v2866 = vrcp.pop %v2802
    %v2867 = vrcp.pop %v2803
    %v2868 = vrcp.pop %v2804
    %v2869 = vrcp.pop %v2805
    %v2870 = vrcp.pop %v2806
    %v2871 = vrcp.pop %v2807
    %v2872 = vrcp.pop %v2808
    %v2873 = vrcp.pop %v2809
    %v2874 = vrcp.pop %v2810
    %v2875 = vrcp.pop %v2811
    %v2876 = vrcp.pop %v2812
    %v2877 = vrcp.pop %v2813
    %v2878 = vrcp.pop %v2814
    %v2879 = vrcp.pop %v2815
    %v2880 = vrcp.pop %v2816
    %v2881 = vrcp.pop %v2817
    %v2882 = vrcp.pop %v2818
    %v2883 = vrcp.pop %v2819
    %v2884 = vrcp.pop %v2820
    %v2885 = vrcp.pop %v2821
    %v2886 = vrcp.pop %v2822
    %v2887 = vrcp.pop %v2823
    %v2888 = vrcp.pop %v2824
    %v2889 = vrcp.pop %v2825
    %v2890 = vrcp.pop %v2826
    %v2891 = vrcp.pop %v2827
    %v2892 = vrcp.pop %v2828
    %v2893 = vrcp.pop %v2829
    %v2894 = vrcp.pop %v2830
    %v2895 = vrcp.pop %v2831
    %v2896 = vrcp.pop %v2832
    %v2897 = vrcp.pop %v2833
    %v2898 = vrcp.pop %v2834
    %v2899 = vrcp.pop %v2835
    %v2900 = vrcp.pop %v2836
    %v2901 = vrcp.pop %v2837
    %v2902 = vmul.f32 %v2423, %v2838
    %v2903 = vmul.f32 %v2425, %v2839
    %v2904 = vmul.f32 %v2428, %v2840
    %v2905 = vmul.f32 %v2430, %v2841
    %v2906 = vmul.f32 %v2433, %v2842
    %v2907 = vmul.f32 %v2435, %v2843
    %v2908 = vmul.f32 %v2438, %v2844
    %v2909 = vmul.f32 %v2440, %v2845
    %v2910 = vmul.f32 %v2443, %v2846
    %v2911 = vmul.f32 %v2445, %v2847
    %v2912 = vmul.f32 %v2448, %v2848
    %v2913 = vmul.f32 %v2450, %v2849
    %v2914 = vmul.f32 %v2453, %v2850
    %v2915 = vmul.f32 %v2455, %v2851
    %v2916 = vmul.f32 %v2458, %v2852
    %v2917 = vmul.f32 %v2460, %v2853
    %v2918 = vmul.f32 %v2463, %v2854
    %v2919 = vmul.f32 %v2465, %v2855
    %v2920 = vmul.f32 %v2468, %v2856
    %v2921 = vmul.f32 %v2470, %v2857
    %v2922 = vmul.f32 %v2473, %v2858
    %v2923 = vmul.f32 %v2475, %v2859
    %v2924 = vmul.f32 %v2478, %v2860
    %v2925 = vmul.f32 %v2480, %v2861
    %v2926 = vmul.f32 %v2483, %v2862
    %v2927 = vmul.f32 %v2485, %v2863
    %v2928 = vmul.f32 %v2488, %v2864
    %v2929 = vmul.f32 %v2490, %v2865
    %v2930 = vmul.f32 %v2493, %v2866
    %v2931 = vmul.f32 %v2495, %v2867
    %v2932 = vmul.f32 %v2498, %v2868
    %v2933 = vmul.f32 %v2500, %v2869
    %v2934 = vmul.f32 %v2503, %v2870
    %v2935 = vmul.f32 %v2505, %v2871
    %v2936 = vmul.f32 %v2508, %v2872
    %v2937 = vmul.f32 %v2510, %v2873
    %v2938 = vmul.f32 %v2513, %v2874
    %v2939 = vmul.f32 %v2515, %v2875
    %v2940 = vmul.f32 %v2518, %v2876
    %v2941 = vmul.f32 %v2520, %v2877
    %v2942 = vmul.f32 %v2523, %v2878
    %v2943 = vmul.f32 %v2525, %v2879
    %v2944 = vmul.f32 %v2528, %v2880
    %v2945 = vmul.f32 %v2530, %v2881
    %v2946 = vmul.f32 %v2533, %v2882
    %v2947 = vmul.f32 %v2535, %v2883
    %v2948 = vmul.f32 %v2538, %v2884
    %v2949 = vmul.f32 %v2540, %v2885
    %v2950 = vmul.f32 %v2543, %v2886
    %v2951 = vmul.f32 %v2545, %v2887
    %v2952 = vmul.f32 %v2548, %v2888
    %v2953 = vmul.f32 %v2550, %v2889
    %v2954 = vmul.f32 %v2553, %v2890
    %v2955 = vmul.f32 %v2555, %v2891
    %v2956 = vmul.f32 %v2558, %v2892
    %v2957 = vmul.f32 %v2560, %v2893
    %v2958 = vmul.f32 %v2563, %v2894
    %v2959 = vmul.f32 %v2565, %v2895
    %v2960 = vmul.f32 %v2568, %v2896
    %v2961 = vmul.f32 %v2570, %v2897
    %v2962 = vmul.f32 %v2573, %v2898
    %v2963 = vmul.f32 %v2575, %v2899
    %v2964 = vmul.f32 %v2578, %v2900
    %v2965 = vmul.f32 %v2580, %v2901
    %s2966 = scalar_lea.vmem %s5, 192
    %v2967 = vld [vmem:[%s2966] sm:$0xf]
    %v2968 = vld [vmem:[%s2966 + $0x4] sm:$0xf]
    %v2969 = vld [vmem:[%s2966 + $0x8] sm:$0xf]
    %v2970 = vld [vmem:[%s2966 + $0xc] sm:$0xf]
    %v2971 = vld [vmem:[%s2966 + $0x10] sm:$0xf]
    %v2972 = vld [vmem:[%s2966 + $0x14] sm:$0xf]
    %v2973 = vld [vmem:[%s2966 + $0x18] sm:$0xf]
    %v2974 = vld [vmem:[%s2966 + $0x1c] sm:$0xf]
    %v2975 = vld [vmem:[%s2966 + $0x20] sm:$0xf]
    %v2976 = vld [vmem:[%s2966 + $0x24] sm:$0xf]
    %v2977 = vld [vmem:[%s2966 + $0x28] sm:$0xf]
    %v2978 = vld [vmem:[%s2966 + $0x2c] sm:$0xf]
    %v2979 = vld [vmem:[%s2966 + $0x30] sm:$0xf]
    %v2980 = vld [vmem:[%s2966 + $0x34] sm:$0xf]
    %v2981 = vld [vmem:[%s2966 + $0x38] sm:$0xf]
    %v2982 = vld [vmem:[%s2966 + $0x3c] sm:$0xf]
    %v2983 = vpack.c.bf16 %v2903, %v2902
    %v2984 = vpack.c.bf16 %v2905, %v2904
    %v2985 = vpack.c.bf16 %v2907, %v2906
    %v2986 = vpack.c.bf16 %v2909, %v2908
    %v2987 = vpack.c.bf16 %v2911, %v2910
    %v2988 = vpack.c.bf16 %v2913, %v2912
    %v2989 = vpack.c.bf16 %v2915, %v2914
    %v2990 = vpack.c.bf16 %v2917, %v2916
    %v2991 = vpack.c.bf16 %v2919, %v2918
    %v2992 = vpack.c.bf16 %v2921, %v2920
    %v2993 = vpack.c.bf16 %v2923, %v2922
    %v2994 = vpack.c.bf16 %v2925, %v2924
    %v2995 = vpack.c.bf16 %v2927, %v2926
    %v2996 = vpack.c.bf16 %v2929, %v2928
    %v2997 = vpack.c.bf16 %v2931, %v2930
    %v2998 = vpack.c.bf16 %v2933, %v2932
    %v2999 = vpack.c.bf16 %v2935, %v2934
    %v3000 = vpack.c.bf16 %v2937, %v2936
    %v3001 = vpack.c.bf16 %v2939, %v2938
    %v3002 = vpack.c.bf16 %v2941, %v2940
    %v3003 = vpack.c.bf16 %v2943, %v2942
    %v3004 = vpack.c.bf16 %v2945, %v2944
    %v3005 = vpack.c.bf16 %v2947, %v2946
    %v3006 = vpack.c.bf16 %v2949, %v2948
    %v3007 = vpack.c.bf16 %v2951, %v2950
    %v3008 = vpack.c.bf16 %v2953, %v2952
    %v3009 = vpack.c.bf16 %v2955, %v2954
    %v3010 = vpack.c.bf16 %v2957, %v2956
    %v3011 = vpack.c.bf16 %v2959, %v2958
    %v3012 = vpack.c.bf16 %v2961, %v2960
    %v3013 = vpack.c.bf16 %v2963, %v2962
    %v3014 = vpack.c.bf16 %v2965, %v2964
    %v3015 = vld [vmem:[%s6 + $0x1] sm:$0x1]
    %v3016 = vperm.slane %v3015, 0
    %v3033 = vunpack.c.l.b16 %v2967
    %v3034 = vunpack.c.l.b16 %v2968
    %v3035 = vunpack.c.l.b16 %v2969
    %v3036 = vunpack.c.l.b16 %v2970
    %v3037 = vunpack.c.l.b16 %v2971
    %v3038 = vunpack.c.l.b16 %v2972
    %v3039 = vunpack.c.l.b16 %v2973
    %v3040 = vunpack.c.l.b16 %v2974
    %v3041 = vunpack.c.l.b16 %v2975
    %v3042 = vunpack.c.l.b16 %v2976
    %v3043 = vunpack.c.l.b16 %v2977
    %v3044 = vunpack.c.l.b16 %v2978
    %v3045 = vunpack.c.l.b16 %v2979
    %v3046 = vunpack.c.l.b16 %v2980
    %v3047 = vunpack.c.l.b16 %v2981
    %v3048 = vunpack.c.l.b16 %v2982
    %v3049 = vpack.c.b16 %v3034, %v3033
    %v3050 = vpack.c.b16 %v3036, %v3035
    %v3051 = vpack.c.b16 %v3038, %v3037
    %v3052 = vpack.c.b16 %v3040, %v3039
    %v3053 = vpack.c.b16 %v3042, %v3041
    %v3054 = vpack.c.b16 %v3044, %v3043
    %v3055 = vpack.c.b16 %v3046, %v3045
    %v3056 = vpack.c.b16 %v3048, %v3047
    %3065 = vmatpush.bf16.msra.mxu0 %v3056
    %3066 = vmatpush.bf16.msra.mxu0 %v3055
    %3067 = vmatpush.bf16.msra.mxu0 %v3054
    %3068 = vmatpush.bf16.msra.mxu0 %v3053
    %3069 = vmatpush.bf16.msra.mxu0 %v3052
    %3070 = vmatpush.bf16.msra.mxu0 %v3051
    %3071 = vmatpush.bf16.msra.mxu0 %v3050
    %3072 = vmatpush.bf16.msra.mxu0 %v3049
    %3073 = vmatmul.bf16.gmra.mxu0 %v2983
    %v3074 = vpop.f32.mrf.mxu0
    %v3075 = vadd.f32 %v3016, %v3074
    %v3076 = vpop.f32.mrf.mxu0
    %v3077 = vadd.f32 %v3016, %v3076
    %3078 = vmatmul.bf16.gmra.mxu0 %v2984
    %v3079 = vpop.f32.mrf.mxu0
    %v3080 = vadd.f32 %v3016, %v3079
    %v3081 = vpop.f32.mrf.mxu0
    %v3082 = vadd.f32 %v3016, %v3081
    %3083 = vmatmul.bf16.gmra.mxu0 %v2985
    %v3084 = vpop.f32.mrf.mxu0
    %v3085 = vadd.f32 %v3016, %v3084
    %v3086 = vpop.f32.mrf.mxu0
    %v3087 = vadd.f32 %v3016, %v3086
    %3088 = vmatmul.bf16.gmra.mxu0 %v2986
    %v3089 = vpop.f32.mrf.mxu0
    %v3090 = vadd.f32 %v3016, %v3089
    %v3091 = vpop.f32.mrf.mxu0
    %v3092 = vadd.f32 %v3016, %v3091
    %3093 = vmatmul.bf16.gmra.mxu0 %v2987
    %v3094 = vpop.f32.mrf.mxu0
    %v3095 = vadd.f32 %v3016, %v3094
    %v3096 = vpop.f32.mrf.mxu0
    %v3097 = vadd.f32 %v3016, %v3096
    %3098 = vmatmul.bf16.gmra.mxu0 %v2988
    %v3099 = vpop.f32.mrf.mxu0
    %v3100 = vadd.f32 %v3016, %v3099
    %v3101 = vpop.f32.mrf.mxu0
    %v3102 = vadd.f32 %v3016, %v3101
    %3103 = vmatmul.bf16.gmra.mxu0 %v2989
    %v3104 = vpop.f32.mrf.mxu0
    %v3105 = vadd.f32 %v3016, %v3104
    %v3106 = vpop.f32.mrf.mxu0
    %v3107 = vadd.f32 %v3016, %v3106
    %3108 = vmatmul.bf16.gmra.mxu0 %v2990
    %v3109 = vpop.f32.mrf.mxu0
    %v3110 = vadd.f32 %v3016, %v3109
    %v3111 = vpop.f32.mrf.mxu0
    %v3112 = vadd.f32 %v3016, %v3111
    %3113 = vmatmul.bf16.gmra.mxu0 %v2991
    %v3114 = vpop.f32.mrf.mxu0
    %v3115 = vadd.f32 %v3016, %v3114
    %v3116 = vpop.f32.mrf.mxu0
    %v3117 = vadd.f32 %v3016, %v3116
    %3118 = vmatmul.bf16.gmra.mxu0 %v2992
    %v3119 = vpop.f32.mrf.mxu0
    %v3120 = vadd.f32 %v3016, %v3119
    %v3121 = vpop.f32.mrf.mxu0
    %v3122 = vadd.f32 %v3016, %v3121
    %3123 = vmatmul.bf16.gmra.mxu0 %v2993
    %v3124 = vpop.f32.mrf.mxu0
    %v3125 = vadd.f32 %v3016, %v3124
    %v3126 = vpop.f32.mrf.mxu0
    %v3127 = vadd.f32 %v3016, %v3126
    %3128 = vmatmul.bf16.gmra.mxu0 %v2994
    %v3129 = vpop.f32.mrf.mxu0
    %v3130 = vadd.f32 %v3016, %v3129
    %v3131 = vpop.f32.mrf.mxu0
    %v3132 = vadd.f32 %v3016, %v3131
    %3133 = vmatmul.bf16.gmra.mxu0 %v2995
    %v3134 = vpop.f32.mrf.mxu0
    %v3135 = vadd.f32 %v3016, %v3134
    %v3136 = vpop.f32.mrf.mxu0
    %v3137 = vadd.f32 %v3016, %v3136
    %3138 = vmatmul.bf16.gmra.mxu0 %v2996
    %v3139 = vpop.f32.mrf.mxu0
    %v3140 = vadd.f32 %v3016, %v3139
    %v3141 = vpop.f32.mrf.mxu0
    %v3142 = vadd.f32 %v3016, %v3141
    %3143 = vmatmul.bf16.gmra.mxu0 %v2997
    %v3144 = vpop.f32.mrf.mxu0
    %v3145 = vadd.f32 %v3016, %v3144
    %v3146 = vpop.f32.mrf.mxu0
    %v3147 = vadd.f32 %v3016, %v3146
    %3148 = vmatmul.bf16.gmra.mxu0 %v2998
    %v3149 = vpop.f32.mrf.mxu0
    %v3150 = vadd.f32 %v3016, %v3149
    %v3151 = vpop.f32.mrf.mxu0
    %v3152 = vadd.f32 %v3016, %v3151
    %3153 = vmatmul.bf16.gmra.mxu0 %v2999
    %v3154 = vpop.f32.mrf.mxu0
    %v3155 = vadd.f32 %v3016, %v3154
    %v3156 = vpop.f32.mrf.mxu0
    %v3157 = vadd.f32 %v3016, %v3156
    %3158 = vmatmul.bf16.gmra.mxu0 %v3000
    %v3159 = vpop.f32.mrf.mxu0
    %v3160 = vadd.f32 %v3016, %v3159
    %v3161 = vpop.f32.mrf.mxu0
    %v3162 = vadd.f32 %v3016, %v3161
    %3163 = vmatmul.bf16.gmra.mxu0 %v3001
    %v3164 = vpop.f32.mrf.mxu0
    %v3165 = vadd.f32 %v3016, %v3164
    %v3166 = vpop.f32.mrf.mxu0
    %v3167 = vadd.f32 %v3016, %v3166
    %3168 = vmatmul.bf16.gmra.mxu0 %v3002
    %v3169 = vpop.f32.mrf.mxu0
    %v3170 = vadd.f32 %v3016, %v3169
    %v3171 = vpop.f32.mrf.mxu0
    %v3172 = vadd.f32 %v3016, %v3171
    %3173 = vmatmul.bf16.gmra.mxu0 %v3003
    %v3174 = vpop.f32.mrf.mxu0
    %v3175 = vadd.f32 %v3016, %v3174
    %v3176 = vpop.f32.mrf.mxu0
    %v3177 = vadd.f32 %v3016, %v3176
    %3178 = vmatmul.bf16.gmra.mxu0 %v3004
    %v3179 = vpop.f32.mrf.mxu0
    %v3180 = vadd.f32 %v3016, %v3179
    %v3181 = vpop.f32.mrf.mxu0
    %v3182 = vadd.f32 %v3016, %v3181
    %3183 = vmatmul.bf16.gmra.mxu0 %v3005
    %v3184 = vpop.f32.mrf.mxu0
    %v3185 = vadd.f32 %v3016, %v3184
    %v3186 = vpop.f32.mrf.mxu0
    %v3187 = vadd.f32 %v3016, %v3186
    %3188 = vmatmul.bf16.gmra.mxu0 %v3006
    %v3189 = vpop.f32.mrf.mxu0
    %v3190 = vadd.f32 %v3016, %v3189
    %v3191 = vpop.f32.mrf.mxu0
    %v3192 = vadd.f32 %v3016, %v3191
    %3193 = vmatmul.bf16.gmra.mxu0 %v3007
    %v3194 = vpop.f32.mrf.mxu0
    %v3195 = vadd.f32 %v3016, %v3194
    %v3196 = vpop.f32.mrf.mxu0
    %v3197 = vadd.f32 %v3016, %v3196
    %3198 = vmatmul.bf16.gmra.mxu0 %v3008
    %v3199 = vpop.f32.mrf.mxu0
    %v3200 = vadd.f32 %v3016, %v3199
    %v3201 = vpop.f32.mrf.mxu0
    %v3202 = vadd.f32 %v3016, %v3201
    %3203 = vmatmul.bf16.gmra.mxu0 %v3009
    %v3204 = vpop.f32.mrf.mxu0
    %v3205 = vadd.f32 %v3016, %v3204
    %v3206 = vpop.f32.mrf.mxu0
    %v3207 = vadd.f32 %v3016, %v3206
    %3208 = vmatmul.bf16.gmra.mxu0 %v3010
    %v3209 = vpop.f32.mrf.mxu0
    %v3210 = vadd.f32 %v3016, %v3209
    %v3211 = vpop.f32.mrf.mxu0
    %v3212 = vadd.f32 %v3016, %v3211
    %3213 = vmatmul.bf16.gmra.mxu0 %v3011
    %v3214 = vpop.f32.mrf.mxu0
    %v3215 = vadd.f32 %v3016, %v3214
    %v3216 = vpop.f32.mrf.mxu0
    %v3217 = vadd.f32 %v3016, %v3216
    %3218 = vmatmul.bf16.gmra.mxu0 %v3012
    %v3219 = vpop.f32.mrf.mxu0
    %v3220 = vadd.f32 %v3016, %v3219
    %v3221 = vpop.f32.mrf.mxu0
    %v3222 = vadd.f32 %v3016, %v3221
    %3223 = vmatmul.bf16.gmra.mxu0 %v3013
    %v3224 = vpop.f32.mrf.mxu0
    %v3225 = vadd.f32 %v3016, %v3224
    %v3226 = vpop.f32.mrf.mxu0
    %v3227 = vadd.f32 %v3016, %v3226
    %3228 = vmatmul.bf16.gmra.mxu0 %v3014
    %v3229 = vpop.f32.mrf.mxu0
    %v3230 = vadd.f32 %v3016, %v3229
    %v3231 = vpop.f32.mrf.mxu0
    %v3232 = vadd.f32 %v3016, %v3231
    %3233 = vdwg.mxu0
    %v3234 = vsub.f32 0.0, %v3075
    %v3235 = vsub.f32 0.0, %v3077
    %v3236 = vsub.f32 0.0, %v3080
    %v3237 = vsub.f32 0.0, %v3082
    %v3238 = vsub.f32 0.0, %v3085
    %v3239 = vsub.f32 0.0, %v3087
    %v3240 = vsub.f32 0.0, %v3090
    %v3241 = vsub.f32 0.0, %v3092
    %v3242 = vsub.f32 0.0, %v3095
    %v3243 = vsub.f32 0.0, %v3097
    %v3244 = vsub.f32 0.0, %v3100
    %v3245 = vsub.f32 0.0, %v3102
    %v3246 = vsub.f32 0.0, %v3105
    %v3247 = vsub.f32 0.0, %v3107
    %v3248 = vsub.f32 0.0, %v3110
    %v3249 = vsub.f32 0.0, %v3112
    %v3250 = vsub.f32 0.0, %v3115
    %v3251 = vsub.f32 0.0, %v3117
    %v3252 = vsub.f32 0.0, %v3120
    %v3253 = vsub.f32 0.0, %v3122
    %v3254 = vsub.f32 0.0, %v3125
    %v3255 = vsub.f32 0.0, %v3127
    %v3256 = vsub.f32 0.0, %v3130
    %v3257 = vsub.f32 0.0, %v3132
    %v3258 = vsub.f32 0.0, %v3135
    %v3259 = vsub.f32 0.0, %v3137
    %v3260 = vsub.f32 0.0, %v3140
    %v3261 = vsub.f32 0.0, %v3142
    %v3262 = vsub.f32 0.0, %v3145
    %v3263 = vsub.f32 0.0, %v3147
    %v3264 = vsub.f32 0.0, %v3150
    %v3265 = vsub.f32 0.0, %v3152
    %v3266 = vsub.f32 0.0, %v3155
    %v3267 = vsub.f32 0.0, %v3157
    %v3268 = vsub.f32 0.0, %v3160
    %v3269 = vsub.f32 0.0, %v3162
    %v3270 = vsub.f32 0.0, %v3165
    %v3271 = vsub.f32 0.0, %v3167
    %v3272 = vsub.f32 0.0, %v3170
    %v3273 = vsub.f32 0.0, %v3172
    %v3274 = vsub.f32 0.0, %v3175
    %v3275 = vsub.f32 0.0, %v3177
    %v3276 = vsub.f32 0.0, %v3180
    %v3277 = vsub.f32 0.0, %v3182
    %v3278 = vsub.f32 0.0, %v3185
    %v3279 = vsub.f32 0.0, %v3187
    %v3280 = vsub.f32 0.0, %v3190
    %v3281 = vsub.f32 0.0, %v3192
    %v3282 = vsub.f32 0.0, %v3195
    %v3283 = vsub.f32 0.0, %v3197
    %v3284 = vsub.f32 0.0, %v3200
    %v3285 = vsub.f32 0.0, %v3202
    %v3286 = vsub.f32 0.0, %v3205
    %v3287 = vsub.f32 0.0, %v3207
    %v3288 = vsub.f32 0.0, %v3210
    %v3289 = vsub.f32 0.0, %v3212
    %v3290 = vsub.f32 0.0, %v3215
    %v3291 = vsub.f32 0.0, %v3217
    %v3292 = vsub.f32 0.0, %v3220
    %v3293 = vsub.f32 0.0, %v3222
    %v3294 = vsub.f32 0.0, %v3225
    %v3295 = vsub.f32 0.0, %v3227
    %v3296 = vsub.f32 0.0, %v3230
    %v3297 = vsub.f32 0.0, %v3232
    %v3298 = vmul.f32 %v3234, 1.442695
    %v3299 = vpow.pop %v3298
    %v3300 = vmul.f32 %v3235, 1.442695
    %v3301 = vpow.pop %v3300
    %v3302 = vmul.f32 %v3236, 1.442695
    %v3303 = vpow.pop %v3302
    %v3304 = vmul.f32 %v3237, 1.442695
    %v3305 = vpow.pop %v3304
    %v3306 = vmul.f32 %v3238, 1.442695
    %v3307 = vpow.pop %v3306
    %v3308 = vmul.f32 %v3239, 1.442695
    %v3309 = vpow.pop %v3308
    %v3310 = vmul.f32 %v3240, 1.442695
    %v3311 = vpow.pop %v3310
    %v3312 = vmul.f32 %v3241, 1.442695
    %v3313 = vpow.pop %v3312
    %v3314 = vmul.f32 %v3242, 1.442695
    %v3315 = vpow.pop %v3314
    %v3316 = vmul.f32 %v3243, 1.442695
    %v3317 = vpow.pop %v3316
    %v3318 = vmul.f32 %v3244, 1.442695
    %v3319 = vpow.pop %v3318
    %v3320 = vmul.f32 %v3245, 1.442695
    %v3321 = vpow.pop %v3320
    %v3322 = vmul.f32 %v3246, 1.442695
    %v3323 = vpow.pop %v3322
    %v3324 = vmul.f32 %v3247, 1.442695
    %v3325 = vpow.pop %v3324
    %v3326 = vmul.f32 %v3248, 1.442695
    %v3327 = vpow.pop %v3326
    %v3328 = vmul.f32 %v3249, 1.442695
    %v3329 = vpow.pop %v3328
    %v3330 = vmul.f32 %v3250, 1.442695
    %v3331 = vpow.pop %v3330
    %v3332 = vmul.f32 %v3251, 1.442695
    %v3333 = vpow.pop %v3332
    %v3334 = vmul.f32 %v3252, 1.442695
    %v3335 = vpow.pop %v3334
    %v3336 = vmul.f32 %v3253, 1.442695
    %v3337 = vpow.pop %v3336
    %v3338 = vmul.f32 %v3254, 1.442695
    %v3339 = vpow.pop %v3338
    %v3340 = vmul.f32 %v3255, 1.442695
    %v3341 = vpow.pop %v3340
    %v3342 = vmul.f32 %v3256, 1.442695
    %v3343 = vpow.pop %v3342
    %v3344 = vmul.f32 %v3257, 1.442695
    %v3345 = vpow.pop %v3344
    %v3346 = vmul.f32 %v3258, 1.442695
    %v3347 = vpow.pop %v3346
    %v3348 = vmul.f32 %v3259, 1.442695
    %v3349 = vpow.pop %v3348
    %v3350 = vmul.f32 %v3260, 1.442695
    %v3351 = vpow.pop %v3350
    %v3352 = vmul.f32 %v3261, 1.442695
    %v3353 = vpow.pop %v3352
    %v3354 = vmul.f32 %v3262, 1.442695
    %v3355 = vpow.pop %v3354
    %v3356 = vmul.f32 %v3263, 1.442695
    %v3357 = vpow.pop %v3356
    %v3358 = vmul.f32 %v3264, 1.442695
    %v3359 = vpow.pop %v3358
    %v3360 = vmul.f32 %v3265, 1.442695
    %v3361 = vpow.pop %v3360
    %v3362 = vmul.f32 %v3266, 1.442695
    %v3363 = vpow.pop %v3362
    %v3364 = vmul.f32 %v3267, 1.442695
    %v3365 = vpow.pop %v3364
    %v3366 = vmul.f32 %v3268, 1.442695
    %v3367 = vpow.pop %v3366
    %v3368 = vmul.f32 %v3269, 1.442695
    %v3369 = vpow.pop %v3368
    %v3370 = vmul.f32 %v3270, 1.442695
    %v3371 = vpow.pop %v3370
    %v3372 = vmul.f32 %v3271, 1.442695
    %v3373 = vpow.pop %v3372
    %v3374 = vmul.f32 %v3272, 1.442695
    %v3375 = vpow.pop %v3374
    %v3376 = vmul.f32 %v3273, 1.442695
    %v3377 = vpow.pop %v3376
    %v3378 = vmul.f32 %v3274, 1.442695
    %v3379 = vpow.pop %v3378
    %v3380 = vmul.f32 %v3275, 1.442695
    %v3381 = vpow.pop %v3380
    %v3382 = vmul.f32 %v3276, 1.442695
    %v3383 = vpow.pop %v3382
    %v3384 = vmul.f32 %v3277, 1.442695
    %v3385 = vpow.pop %v3384
    %v3386 = vmul.f32 %v3278, 1.442695
    %v3387 = vpow.pop %v3386
    %v3388 = vmul.f32 %v3279, 1.442695
    %v3389 = vpow.pop %v3388
    %v3390 = vmul.f32 %v3280, 1.442695
    %v3391 = vpow.pop %v3390
    %v3392 = vmul.f32 %v3281, 1.442695
    %v3393 = vpow.pop %v3392
    %v3394 = vmul.f32 %v3282, 1.442695
    %v3395 = vpow.pop %v3394
    %v3396 = vmul.f32 %v3283, 1.442695
    %v3397 = vpow.pop %v3396
    %v3398 = vmul.f32 %v3284, 1.442695
    %v3399 = vpow.pop %v3398
    %v3400 = vmul.f32 %v3285, 1.442695
    %v3401 = vpow.pop %v3400
    %v3402 = vmul.f32 %v3286, 1.442695
    %v3403 = vpow.pop %v3402
    %v3404 = vmul.f32 %v3287, 1.442695
    %v3405 = vpow.pop %v3404
    %v3406 = vmul.f32 %v3288, 1.442695
    %v3407 = vpow.pop %v3406
    %v3408 = vmul.f32 %v3289, 1.442695
    %v3409 = vpow.pop %v3408
    %v3410 = vmul.f32 %v3290, 1.442695
    %v3411 = vpow.pop %v3410
    %v3412 = vmul.f32 %v3291, 1.442695
    %v3413 = vpow.pop %v3412
    %v3414 = vmul.f32 %v3292, 1.442695
    %v3415 = vpow.pop %v3414
    %v3416 = vmul.f32 %v3293, 1.442695
    %v3417 = vpow.pop %v3416
    %v3418 = vmul.f32 %v3294, 1.442695
    %v3419 = vpow.pop %v3418
    %v3420 = vmul.f32 %v3295, 1.442695
    %v3421 = vpow.pop %v3420
    %v3422 = vmul.f32 %v3296, 1.442695
    %v3423 = vpow.pop %v3422
    %v3424 = vmul.f32 %v3297, 1.442695
    %v3425 = vpow.pop %v3424
    %v3426 = vadd.f32 %v3299, 1.0
    %v3427 = vadd.f32 %v3301, 1.0
    %v3428 = vadd.f32 %v3303, 1.0
    %v3429 = vadd.f32 %v3305, 1.0
    %v3430 = vadd.f32 %v3307, 1.0
    %v3431 = vadd.f32 %v3309, 1.0
    %v3432 = vadd.f32 %v3311, 1.0
    %v3433 = vadd.f32 %v3313, 1.0
    %v3434 = vadd.f32 %v3315, 1.0
    %v3435 = vadd.f32 %v3317, 1.0
    %v3436 = vadd.f32 %v3319, 1.0
    %v3437 = vadd.f32 %v3321, 1.0
    %v3438 = vadd.f32 %v3323, 1.0
    %v3439 = vadd.f32 %v3325, 1.0
    %v3440 = vadd.f32 %v3327, 1.0
    %v3441 = vadd.f32 %v3329, 1.0
    %v3442 = vadd.f32 %v3331, 1.0
    %v3443 = vadd.f32 %v3333, 1.0
    %v3444 = vadd.f32 %v3335, 1.0
    %v3445 = vadd.f32 %v3337, 1.0
    %v3446 = vadd.f32 %v3339, 1.0
    %v3447 = vadd.f32 %v3341, 1.0
    %v3448 = vadd.f32 %v3343, 1.0
    %v3449 = vadd.f32 %v3345, 1.0
    %v3450 = vadd.f32 %v3347, 1.0
    %v3451 = vadd.f32 %v3349, 1.0
    %v3452 = vadd.f32 %v3351, 1.0
    %v3453 = vadd.f32 %v3353, 1.0
    %v3454 = vadd.f32 %v3355, 1.0
    %v3455 = vadd.f32 %v3357, 1.0
    %v3456 = vadd.f32 %v3359, 1.0
    %v3457 = vadd.f32 %v3361, 1.0
    %v3458 = vadd.f32 %v3363, 1.0
    %v3459 = vadd.f32 %v3365, 1.0
    %v3460 = vadd.f32 %v3367, 1.0
    %v3461 = vadd.f32 %v3369, 1.0
    %v3462 = vadd.f32 %v3371, 1.0
    %v3463 = vadd.f32 %v3373, 1.0
    %v3464 = vadd.f32 %v3375, 1.0
    %v3465 = vadd.f32 %v3377, 1.0
    %v3466 = vadd.f32 %v3379, 1.0
    %v3467 = vadd.f32 %v3381, 1.0
    %v3468 = vadd.f32 %v3383, 1.0
    %v3469 = vadd.f32 %v3385, 1.0
    %v3470 = vadd.f32 %v3387, 1.0
    %v3471 = vadd.f32 %v3389, 1.0
    %v3472 = vadd.f32 %v3391, 1.0
    %v3473 = vadd.f32 %v3393, 1.0
    %v3474 = vadd.f32 %v3395, 1.0
    %v3475 = vadd.f32 %v3397, 1.0
    %v3476 = vadd.f32 %v3399, 1.0
    %v3477 = vadd.f32 %v3401, 1.0
    %v3478 = vadd.f32 %v3403, 1.0
    %v3479 = vadd.f32 %v3405, 1.0
    %v3480 = vadd.f32 %v3407, 1.0
    %v3481 = vadd.f32 %v3409, 1.0
    %v3482 = vadd.f32 %v3411, 1.0
    %v3483 = vadd.f32 %v3413, 1.0
    %v3484 = vadd.f32 %v3415, 1.0
    %v3485 = vadd.f32 %v3417, 1.0
    %v3486 = vadd.f32 %v3419, 1.0
    %v3487 = vadd.f32 %v3421, 1.0
    %v3488 = vadd.f32 %v3423, 1.0
    %v3489 = vadd.f32 %v3425, 1.0
    %v3490 = vrcp.pop %v3426
    %v3491 = vrcp.pop %v3427
    %v3492 = vrcp.pop %v3428
    %v3493 = vrcp.pop %v3429
    %v3494 = vrcp.pop %v3430
    %v3495 = vrcp.pop %v3431
    %v3496 = vrcp.pop %v3432
    %v3497 = vrcp.pop %v3433
    %v3498 = vrcp.pop %v3434
    %v3499 = vrcp.pop %v3435
    %v3500 = vrcp.pop %v3436
    %v3501 = vrcp.pop %v3437
    %v3502 = vrcp.pop %v3438
    %v3503 = vrcp.pop %v3439
    %v3504 = vrcp.pop %v3440
    %v3505 = vrcp.pop %v3441
    %v3506 = vrcp.pop %v3442
    %v3507 = vrcp.pop %v3443
    %v3508 = vrcp.pop %v3444
    %v3509 = vrcp.pop %v3445
    %v3510 = vrcp.pop %v3446
    %v3511 = vrcp.pop %v3447
    %v3512 = vrcp.pop %v3448
    %v3513 = vrcp.pop %v3449
    %v3514 = vrcp.pop %v3450
    %v3515 = vrcp.pop %v3451
    %v3516 = vrcp.pop %v3452
    %v3517 = vrcp.pop %v3453
    %v3518 = vrcp.pop %v3454
    %v3519 = vrcp.pop %v3455
    %v3520 = vrcp.pop %v3456
    %v3521 = vrcp.pop %v3457
    %v3522 = vrcp.pop %v3458
    %v3523 = vrcp.pop %v3459
    %v3524 = vrcp.pop %v3460
    %v3525 = vrcp.pop %v3461
    %v3526 = vrcp.pop %v3462
    %v3527 = vrcp.pop %v3463
    %v3528 = vrcp.pop %v3464
    %v3529 = vrcp.pop %v3465
    %v3530 = vrcp.pop %v3466
    %v3531 = vrcp.pop %v3467
    %v3532 = vrcp.pop %v3468
    %v3533 = vrcp.pop %v3469
    %v3534 = vrcp.pop %v3470
    %v3535 = vrcp.pop %v3471
    %v3536 = vrcp.pop %v3472
    %v3537 = vrcp.pop %v3473
    %v3538 = vrcp.pop %v3474
    %v3539 = vrcp.pop %v3475
    %v3540 = vrcp.pop %v3476
    %v3541 = vrcp.pop %v3477
    %v3542 = vrcp.pop %v3478
    %v3543 = vrcp.pop %v3479
    %v3544 = vrcp.pop %v3480
    %v3545 = vrcp.pop %v3481
    %v3546 = vrcp.pop %v3482
    %v3547 = vrcp.pop %v3483
    %v3548 = vrcp.pop %v3484
    %v3549 = vrcp.pop %v3485
    %v3550 = vrcp.pop %v3486
    %v3551 = vrcp.pop %v3487
    %v3552 = vrcp.pop %v3488
    %v3553 = vrcp.pop %v3489
    %v3554 = vmul.f32 %v3075, %v3490
    %v3555 = vmul.f32 %v3077, %v3491
    %v3556 = vmul.f32 %v3080, %v3492
    %v3557 = vmul.f32 %v3082, %v3493
    %v3558 = vmul.f32 %v3085, %v3494
    %v3559 = vmul.f32 %v3087, %v3495
    %v3560 = vmul.f32 %v3090, %v3496
    %v3561 = vmul.f32 %v3092, %v3497
    %v3562 = vmul.f32 %v3095, %v3498
    %v3563 = vmul.f32 %v3097, %v3499
    %v3564 = vmul.f32 %v3100, %v3500
    %v3565 = vmul.f32 %v3102, %v3501
    %v3566 = vmul.f32 %v3105, %v3502
    %v3567 = vmul.f32 %v3107, %v3503
    %v3568 = vmul.f32 %v3110, %v3504
    %v3569 = vmul.f32 %v3112, %v3505
    %v3570 = vmul.f32 %v3115, %v3506
    %v3571 = vmul.f32 %v3117, %v3507
    %v3572 = vmul.f32 %v3120, %v3508
    %v3573 = vmul.f32 %v3122, %v3509
    %v3574 = vmul.f32 %v3125, %v3510
    %v3575 = vmul.f32 %v3127, %v3511
    %v3576 = vmul.f32 %v3130, %v3512
    %v3577 = vmul.f32 %v3132, %v3513
    %v3578 = vmul.f32 %v3135, %v3514
    %v3579 = vmul.f32 %v3137, %v3515
    %v3580 = vmul.f32 %v3140, %v3516
    %v3581 = vmul.f32 %v3142, %v3517
    %v3582 = vmul.f32 %v3145, %v3518
    %v3583 = vmul.f32 %v3147, %v3519
    %v3584 = vmul.f32 %v3150, %v3520
    %v3585 = vmul.f32 %v3152, %v3521
    %v3586 = vmul.f32 %v3155, %v3522
    %v3587 = vmul.f32 %v3157, %v3523
    %v3588 = vmul.f32 %v3160, %v3524
    %v3589 = vmul.f32 %v3162, %v3525
    %v3590 = vmul.f32 %v3165, %v3526
    %v3591 = vmul.f32 %v3167, %v3527
    %v3592 = vmul.f32 %v3170, %v3528
    %v3593 = vmul.f32 %v3172, %v3529
    %v3594 = vmul.f32 %v3175, %v3530
    %v3595 = vmul.f32 %v3177, %v3531
    %v3596 = vmul.f32 %v3180, %v3532
    %v3597 = vmul.f32 %v3182, %v3533
    %v3598 = vmul.f32 %v3185, %v3534
    %v3599 = vmul.f32 %v3187, %v3535
    %v3600 = vmul.f32 %v3190, %v3536
    %v3601 = vmul.f32 %v3192, %v3537
    %v3602 = vmul.f32 %v3195, %v3538
    %v3603 = vmul.f32 %v3197, %v3539
    %v3604 = vmul.f32 %v3200, %v3540
    %v3605 = vmul.f32 %v3202, %v3541
    %v3606 = vmul.f32 %v3205, %v3542
    %v3607 = vmul.f32 %v3207, %v3543
    %v3608 = vmul.f32 %v3210, %v3544
    %v3609 = vmul.f32 %v3212, %v3545
    %v3610 = vmul.f32 %v3215, %v3546
    %v3611 = vmul.f32 %v3217, %v3547
    %v3612 = vmul.f32 %v3220, %v3548
    %v3613 = vmul.f32 %v3222, %v3549
    %v3614 = vmul.f32 %v3225, %v3550
    %v3615 = vmul.f32 %v3227, %v3551
    %v3616 = vmul.f32 %v3230, %v3552
    %v3617 = vmul.f32 %v3232, %v3553
    %v3618 = vadd.f32 %v2250, %v3554
    %v3619 = vadd.f32 %v2251, %v3555
    %v3620 = vadd.f32 %v2252, %v3556
    %v3621 = vadd.f32 %v2253, %v3557
    %v3622 = vadd.f32 %v2254, %v3558
    %v3623 = vadd.f32 %v2255, %v3559
    %v3624 = vadd.f32 %v2256, %v3560
    %v3625 = vadd.f32 %v2257, %v3561
    %v3626 = vadd.f32 %v2258, %v3562
    %v3627 = vadd.f32 %v2259, %v3563
    %v3628 = vadd.f32 %v2260, %v3564
    %v3629 = vadd.f32 %v2261, %v3565
    %v3630 = vadd.f32 %v2262, %v3566
    %v3631 = vadd.f32 %v2263, %v3567
    %v3632 = vadd.f32 %v2264, %v3568
    %v3633 = vadd.f32 %v2265, %v3569
    %v3634 = vadd.f32 %v2266, %v3570
    %v3635 = vadd.f32 %v2267, %v3571
    %v3636 = vadd.f32 %v2268, %v3572
    %v3637 = vadd.f32 %v2269, %v3573
    %v3638 = vadd.f32 %v2270, %v3574
    %v3639 = vadd.f32 %v2271, %v3575
    %v3640 = vadd.f32 %v2272, %v3576
    %v3641 = vadd.f32 %v2273, %v3577
    %v3642 = vadd.f32 %v2274, %v3578
    %v3643 = vadd.f32 %v2275, %v3579
    %v3644 = vadd.f32 %v2276, %v3580
    %v3645 = vadd.f32 %v2277, %v3581
    %v3646 = vadd.f32 %v2278, %v3582
    %v3647 = vadd.f32 %v2279, %v3583
    %v3648 = vadd.f32 %v2280, %v3584
    %v3649 = vadd.f32 %v2281, %v3585
    %v3650 = vadd.f32 %v2282, %v3586
    %v3651 = vadd.f32 %v2283, %v3587
    %v3652 = vadd.f32 %v2284, %v3588
    %v3653 = vadd.f32 %v2285, %v3589
    %v3654 = vadd.f32 %v2286, %v3590
    %v3655 = vadd.f32 %v2287, %v3591
    %v3656 = vadd.f32 %v2288, %v3592
    %v3657 = vadd.f32 %v2289, %v3593
    %v3658 = vadd.f32 %v2290, %v3594
    %v3659 = vadd.f32 %v2291, %v3595
    %v3660 = vadd.f32 %v2292, %v3596
    %v3661 = vadd.f32 %v2293, %v3597
    %v3662 = vadd.f32 %v2294, %v3598
    %v3663 = vadd.f32 %v2295, %v3599
    %v3664 = vadd.f32 %v2296, %v3600
    %v3665 = vadd.f32 %v2297, %v3601
    %v3666 = vadd.f32 %v2298, %v3602
    %v3667 = vadd.f32 %v2299, %v3603
    %v3668 = vadd.f32 %v2300, %v3604
    %v3669 = vadd.f32 %v2301, %v3605
    %v3670 = vadd.f32 %v2302, %v3606
    %v3671 = vadd.f32 %v2303, %v3607
    %v3672 = vadd.f32 %v2304, %v3608
    %v3673 = vadd.f32 %v2305, %v3609
    %v3674 = vadd.f32 %v2306, %v3610
    %v3675 = vadd.f32 %v2307, %v3611
    %v3676 = vadd.f32 %v2308, %v3612
    %v3677 = vadd.f32 %v2309, %v3613
    %v3678 = vadd.f32 %v2310, %v3614
    %v3679 = vadd.f32 %v2311, %v3615
    %v3680 = vadd.f32 %v2312, %v3616
    %v3681 = vadd.f32 %v2313, %v3617
    %s3682 = scalar_lea.vmem %s5, 256
    %v3683 = vld [vmem:[%s3682] sm:$0xf]
    %v3684 = vld [vmem:[%s3682 + $0x4] sm:$0xf]
    %v3685 = vld [vmem:[%s3682 + $0x8] sm:$0xf]
    %v3686 = vld [vmem:[%s3682 + $0xc] sm:$0xf]
    %v3687 = vld [vmem:[%s3682 + $0x10] sm:$0xf]
    %v3688 = vld [vmem:[%s3682 + $0x14] sm:$0xf]
    %v3689 = vld [vmem:[%s3682 + $0x18] sm:$0xf]
    %v3690 = vld [vmem:[%s3682 + $0x1c] sm:$0xf]
    %v3691 = vld [vmem:[%s3682 + $0x20] sm:$0xf]
    %v3692 = vld [vmem:[%s3682 + $0x24] sm:$0xf]
    %v3693 = vld [vmem:[%s3682 + $0x28] sm:$0xf]
    %v3694 = vld [vmem:[%s3682 + $0x2c] sm:$0xf]
    %v3695 = vld [vmem:[%s3682 + $0x30] sm:$0xf]
    %v3696 = vld [vmem:[%s3682 + $0x34] sm:$0xf]
    %v3697 = vld [vmem:[%s3682 + $0x38] sm:$0xf]
    %v3698 = vld [vmem:[%s3682 + $0x3c] sm:$0xf]
    %v3699 = vpack.c.bf16 %v3619, %v3618
    %v3700 = vpack.c.bf16 %v3621, %v3620
    %v3701 = vpack.c.bf16 %v3623, %v3622
    %v3702 = vpack.c.bf16 %v3625, %v3624
    %v3703 = vpack.c.bf16 %v3627, %v3626
    %v3704 = vpack.c.bf16 %v3629, %v3628
    %v3705 = vpack.c.bf16 %v3631, %v3630
    %v3706 = vpack.c.bf16 %v3633, %v3632
    %v3707 = vpack.c.bf16 %v3635, %v3634
    %v3708 = vpack.c.bf16 %v3637, %v3636
    %v3709 = vpack.c.bf16 %v3639, %v3638
    %v3710 = vpack.c.bf16 %v3641, %v3640
    %v3711 = vpack.c.bf16 %v3643, %v3642
    %v3712 = vpack.c.bf16 %v3645, %v3644
    %v3713 = vpack.c.bf16 %v3647, %v3646
    %v3714 = vpack.c.bf16 %v3649, %v3648
    %v3715 = vpack.c.bf16 %v3651, %v3650
    %v3716 = vpack.c.bf16 %v3653, %v3652
    %v3717 = vpack.c.bf16 %v3655, %v3654
    %v3718 = vpack.c.bf16 %v3657, %v3656
    %v3719 = vpack.c.bf16 %v3659, %v3658
    %v3720 = vpack.c.bf16 %v3661, %v3660
    %v3721 = vpack.c.bf16 %v3663, %v3662
    %v3722 = vpack.c.bf16 %v3665, %v3664
    %v3723 = vpack.c.bf16 %v3667, %v3666
    %v3724 = vpack.c.bf16 %v3669, %v3668
    %v3725 = vpack.c.bf16 %v3671, %v3670
    %v3726 = vpack.c.bf16 %v3673, %v3672
    %v3727 = vpack.c.bf16 %v3675, %v3674
    %v3728 = vpack.c.bf16 %v3677, %v3676
    %v3729 = vpack.c.bf16 %v3679, %v3678
    %v3730 = vpack.c.bf16 %v3681, %v3680
    %v3731 = vld [vmem:[%s6 + $0x2] sm:$0x1]
    %v3732 = vperm.slane %v3731, 0
    %v3749 = vunpack.c.l.b16 %v3683
    %v3750 = vunpack.c.l.b16 %v3684
    %v3751 = vunpack.c.l.b16 %v3685
    %v3752 = vunpack.c.l.b16 %v3686
    %v3753 = vunpack.c.l.b16 %v3687
    %v3754 = vunpack.c.l.b16 %v3688
    %v3755 = vunpack.c.l.b16 %v3689
    %v3756 = vunpack.c.l.b16 %v3690
    %v3757 = vunpack.c.l.b16 %v3691
    %v3758 = vunpack.c.l.b16 %v3692
    %v3759 = vunpack.c.l.b16 %v3693
    %v3760 = vunpack.c.l.b16 %v3694
    %v3761 = vunpack.c.l.b16 %v3695
    %v3762 = vunpack.c.l.b16 %v3696
    %v3763 = vunpack.c.l.b16 %v3697
    %v3764 = vunpack.c.l.b16 %v3698
    %v3765 = vpack.c.b16 %v3750, %v3749
    %v3766 = vpack.c.b16 %v3752, %v3751
    %v3767 = vpack.c.b16 %v3754, %v3753
    %v3768 = vpack.c.b16 %v3756, %v3755
    %v3769 = vpack.c.b16 %v3758, %v3757
    %v3770 = vpack.c.b16 %v3760, %v3759
    %v3771 = vpack.c.b16 %v3762, %v3761
    %v3772 = vpack.c.b16 %v3764, %v3763
    %3781 = vmatpush.bf16.msra.mxu0 %v3772
    %3782 = vmatpush.bf16.msra.mxu0 %v3771
    %3783 = vmatpush.bf16.msra.mxu0 %v3770
    %3784 = vmatpush.bf16.msra.mxu0 %v3769
    %3785 = vmatpush.bf16.msra.mxu0 %v3768
    %3786 = vmatpush.bf16.msra.mxu0 %v3767
    %3787 = vmatpush.bf16.msra.mxu0 %v3766
    %3788 = vmatpush.bf16.msra.mxu0 %v3765
    %3789 = vmatmul.bf16.gmra.mxu0 %v3699
    %v3790 = vpop.f32.mrf.mxu0
    %v3791 = vadd.f32 %v3732, %v3790
    %v3792 = vpop.f32.mrf.mxu0
    %v3793 = vadd.f32 %v3732, %v3792
    %3794 = vmatmul.bf16.gmra.mxu0 %v3700
    %v3795 = vpop.f32.mrf.mxu0
    %v3796 = vadd.f32 %v3732, %v3795
    %v3797 = vpop.f32.mrf.mxu0
    %v3798 = vadd.f32 %v3732, %v3797
    %3799 = vmatmul.bf16.gmra.mxu0 %v3701
    %v3800 = vpop.f32.mrf.mxu0
    %v3801 = vadd.f32 %v3732, %v3800
    %v3802 = vpop.f32.mrf.mxu0
    %v3803 = vadd.f32 %v3732, %v3802
    %3804 = vmatmul.bf16.gmra.mxu0 %v3702
    %v3805 = vpop.f32.mrf.mxu0
    %v3806 = vadd.f32 %v3732, %v3805
    %v3807 = vpop.f32.mrf.mxu0
    %v3808 = vadd.f32 %v3732, %v3807
    %3809 = vmatmul.bf16.gmra.mxu0 %v3703
    %v3810 = vpop.f32.mrf.mxu0
    %v3811 = vadd.f32 %v3732, %v3810
    %v3812 = vpop.f32.mrf.mxu0
    %v3813 = vadd.f32 %v3732, %v3812
    %3814 = vmatmul.bf16.gmra.mxu0 %v3704
    %v3815 = vpop.f32.mrf.mxu0
    %v3816 = vadd.f32 %v3732, %v3815
    %v3817 = vpop.f32.mrf.mxu0
    %v3818 = vadd.f32 %v3732, %v3817
    %3819 = vmatmul.bf16.gmra.mxu0 %v3705
    %v3820 = vpop.f32.mrf.mxu0
    %v3821 = vadd.f32 %v3732, %v3820
    %v3822 = vpop.f32.mrf.mxu0
    %v3823 = vadd.f32 %v3732, %v3822
    %3824 = vmatmul.bf16.gmra.mxu0 %v3706
    %v3825 = vpop.f32.mrf.mxu0
    %v3826 = vadd.f32 %v3732, %v3825
    %v3827 = vpop.f32.mrf.mxu0
    %v3828 = vadd.f32 %v3732, %v3827
    %3829 = vmatmul.bf16.gmra.mxu0 %v3707
    %v3830 = vpop.f32.mrf.mxu0
    %v3831 = vadd.f32 %v3732, %v3830
    %v3832 = vpop.f32.mrf.mxu0
    %v3833 = vadd.f32 %v3732, %v3832
    %3834 = vmatmul.bf16.gmra.mxu0 %v3708
    %v3835 = vpop.f32.mrf.mxu0
    %v3836 = vadd.f32 %v3732, %v3835
    %v3837 = vpop.f32.mrf.mxu0
    %v3838 = vadd.f32 %v3732, %v3837
    %3839 = vmatmul.bf16.gmra.mxu0 %v3709
    %v3840 = vpop.f32.mrf.mxu0
    %v3841 = vadd.f32 %v3732, %v3840
    %v3842 = vpop.f32.mrf.mxu0
    %v3843 = vadd.f32 %v3732, %v3842
    %3844 = vmatmul.bf16.gmra.mxu0 %v3710
    %v3845 = vpop.f32.mrf.mxu0
    %v3846 = vadd.f32 %v3732, %v3845
    %v3847 = vpop.f32.mrf.mxu0
    %v3848 = vadd.f32 %v3732, %v3847
    %3849 = vmatmul.bf16.gmra.mxu0 %v3711
    %v3850 = vpop.f32.mrf.mxu0
    %v3851 = vadd.f32 %v3732, %v3850
    %v3852 = vpop.f32.mrf.mxu0
    %v3853 = vadd.f32 %v3732, %v3852
    %3854 = vmatmul.bf16.gmra.mxu0 %v3712
    %v3855 = vpop.f32.mrf.mxu0
    %v3856 = vadd.f32 %v3732, %v3855
    %v3857 = vpop.f32.mrf.mxu0
    %v3858 = vadd.f32 %v3732, %v3857
    %3859 = vmatmul.bf16.gmra.mxu0 %v3713
    %v3860 = vpop.f32.mrf.mxu0
    %v3861 = vadd.f32 %v3732, %v3860
    %v3862 = vpop.f32.mrf.mxu0
    %v3863 = vadd.f32 %v3732, %v3862
    %3864 = vmatmul.bf16.gmra.mxu0 %v3714
    %v3865 = vpop.f32.mrf.mxu0
    %v3866 = vadd.f32 %v3732, %v3865
    %v3867 = vpop.f32.mrf.mxu0
    %v3868 = vadd.f32 %v3732, %v3867
    %3869 = vmatmul.bf16.gmra.mxu0 %v3715
    %v3870 = vpop.f32.mrf.mxu0
    %v3871 = vadd.f32 %v3732, %v3870
    %v3872 = vpop.f32.mrf.mxu0
    %v3873 = vadd.f32 %v3732, %v3872
    %3874 = vmatmul.bf16.gmra.mxu0 %v3716
    %v3875 = vpop.f32.mrf.mxu0
    %v3876 = vadd.f32 %v3732, %v3875
    %v3877 = vpop.f32.mrf.mxu0
    %v3878 = vadd.f32 %v3732, %v3877
    %3879 = vmatmul.bf16.gmra.mxu0 %v3717
    %v3880 = vpop.f32.mrf.mxu0
    %v3881 = vadd.f32 %v3732, %v3880
    %v3882 = vpop.f32.mrf.mxu0
    %v3883 = vadd.f32 %v3732, %v3882
    %3884 = vmatmul.bf16.gmra.mxu0 %v3718
    %v3885 = vpop.f32.mrf.mxu0
    %v3886 = vadd.f32 %v3732, %v3885
    %v3887 = vpop.f32.mrf.mxu0
    %v3888 = vadd.f32 %v3732, %v3887
    %3889 = vmatmul.bf16.gmra.mxu0 %v3719
    %v3890 = vpop.f32.mrf.mxu0
    %v3891 = vadd.f32 %v3732, %v3890
    %v3892 = vpop.f32.mrf.mxu0
    %v3893 = vadd.f32 %v3732, %v3892
    %3894 = vmatmul.bf16.gmra.mxu0 %v3720
    %v3895 = vpop.f32.mrf.mxu0
    %v3896 = vadd.f32 %v3732, %v3895
    %v3897 = vpop.f32.mrf.mxu0
    %v3898 = vadd.f32 %v3732, %v3897
    %3899 = vmatmul.bf16.gmra.mxu0 %v3721
    %v3900 = vpop.f32.mrf.mxu0
    %v3901 = vadd.f32 %v3732, %v3900
    %v3902 = vpop.f32.mrf.mxu0
    %v3903 = vadd.f32 %v3732, %v3902
    %3904 = vmatmul.bf16.gmra.mxu0 %v3722
    %v3905 = vpop.f32.mrf.mxu0
    %v3906 = vadd.f32 %v3732, %v3905
    %v3907 = vpop.f32.mrf.mxu0
    %v3908 = vadd.f32 %v3732, %v3907
    %3909 = vmatmul.bf16.gmra.mxu0 %v3723
    %v3910 = vpop.f32.mrf.mxu0
    %v3911 = vadd.f32 %v3732, %v3910
    %v3912 = vpop.f32.mrf.mxu0
    %v3913 = vadd.f32 %v3732, %v3912
    %3914 = vmatmul.bf16.gmra.mxu0 %v3724
    %v3915 = vpop.f32.mrf.mxu0
    %v3916 = vadd.f32 %v3732, %v3915
    %v3917 = vpop.f32.mrf.mxu0
    %v3918 = vadd.f32 %v3732, %v3917
    %3919 = vmatmul.bf16.gmra.mxu0 %v3725
    %v3920 = vpop.f32.mrf.mxu0
    %v3921 = vadd.f32 %v3732, %v3920
    %v3922 = vpop.f32.mrf.mxu0
    %v3923 = vadd.f32 %v3732, %v3922
    %3924 = vmatmul.bf16.gmra.mxu0 %v3726
    %v3925 = vpop.f32.mrf.mxu0
    %v3926 = vadd.f32 %v3732, %v3925
    %v3927 = vpop.f32.mrf.mxu0
    %v3928 = vadd.f32 %v3732, %v3927
    %3929 = vmatmul.bf16.gmra.mxu0 %v3727
    %v3930 = vpop.f32.mrf.mxu0
    %v3931 = vadd.f32 %v3732, %v3930
    %v3932 = vpop.f32.mrf.mxu0
    %v3933 = vadd.f32 %v3732, %v3932
    %3934 = vmatmul.bf16.gmra.mxu0 %v3728
    %v3935 = vpop.f32.mrf.mxu0
    %v3936 = vadd.f32 %v3732, %v3935
    %v3937 = vpop.f32.mrf.mxu0
    %v3938 = vadd.f32 %v3732, %v3937
    %3939 = vmatmul.bf16.gmra.mxu0 %v3729
    %v3940 = vpop.f32.mrf.mxu0
    %v3941 = vadd.f32 %v3732, %v3940
    %v3942 = vpop.f32.mrf.mxu0
    %v3943 = vadd.f32 %v3732, %v3942
    %3944 = vmatmul.bf16.gmra.mxu0 %v3730
    %v3945 = vpop.f32.mrf.mxu0
    %v3946 = vadd.f32 %v3732, %v3945
    %v3947 = vpop.f32.mrf.mxu0
    %v3948 = vadd.f32 %v3732, %v3947
    %3949 = vdwg.mxu0
    %v3950 = vsub.f32 0.0, %v3791
    %v3951 = vsub.f32 0.0, %v3793
    %v3952 = vsub.f32 0.0, %v3796
    %v3953 = vsub.f32 0.0, %v3798
    %v3954 = vsub.f32 0.0, %v3801
    %v3955 = vsub.f32 0.0, %v3803
    %v3956 = vsub.f32 0.0, %v3806
    %v3957 = vsub.f32 0.0, %v3808
    %v3958 = vsub.f32 0.0, %v3811
    %v3959 = vsub.f32 0.0, %v3813
    %v3960 = vsub.f32 0.0, %v3816
    %v3961 = vsub.f32 0.0, %v3818
    %v3962 = vsub.f32 0.0, %v3821
    %v3963 = vsub.f32 0.0, %v3823
    %v3964 = vsub.f32 0.0, %v3826
    %v3965 = vsub.f32 0.0, %v3828
    %v3966 = vsub.f32 0.0, %v3831
    %v3967 = vsub.f32 0.0, %v3833
    %v3968 = vsub.f32 0.0, %v3836
    %v3969 = vsub.f32 0.0, %v3838
    %v3970 = vsub.f32 0.0, %v3841
    %v3971 = vsub.f32 0.0, %v3843
    %v3972 = vsub.f32 0.0, %v3846
    %v3973 = vsub.f32 0.0, %v3848
    %v3974 = vsub.f32 0.0, %v3851
    %v3975 = vsub.f32 0.0, %v3853
    %v3976 = vsub.f32 0.0, %v3856
    %v3977 = vsub.f32 0.0, %v3858
    %v3978 = vsub.f32 0.0, %v3861
    %v3979 = vsub.f32 0.0, %v3863
    %v3980 = vsub.f32 0.0, %v3866
    %v3981 = vsub.f32 0.0, %v3868
    %v3982 = vsub.f32 0.0, %v3871
    %v3983 = vsub.f32 0.0, %v3873
    %v3984 = vsub.f32 0.0, %v3876
    %v3985 = vsub.f32 0.0, %v3878
    %v3986 = vsub.f32 0.0, %v3881
    %v3987 = vsub.f32 0.0, %v3883
    %v3988 = vsub.f32 0.0, %v3886
    %v3989 = vsub.f32 0.0, %v3888
    %v3990 = vsub.f32 0.0, %v3891
    %v3991 = vsub.f32 0.0, %v3893
    %v3992 = vsub.f32 0.0, %v3896
    %v3993 = vsub.f32 0.0, %v3898
    %v3994 = vsub.f32 0.0, %v3901
    %v3995 = vsub.f32 0.0, %v3903
    %v3996 = vsub.f32 0.0, %v3906
    %v3997 = vsub.f32 0.0, %v3908
    %v3998 = vsub.f32 0.0, %v3911
    %v3999 = vsub.f32 0.0, %v3913
    %v4000 = vsub.f32 0.0, %v3916
    %v4001 = vsub.f32 0.0, %v3918
    %v4002 = vsub.f32 0.0, %v3921
    %v4003 = vsub.f32 0.0, %v3923
    %v4004 = vsub.f32 0.0, %v3926
    %v4005 = vsub.f32 0.0, %v3928
    %v4006 = vsub.f32 0.0, %v3931
    %v4007 = vsub.f32 0.0, %v3933
    %v4008 = vsub.f32 0.0, %v3936
    %v4009 = vsub.f32 0.0, %v3938
    %v4010 = vsub.f32 0.0, %v3941
    %v4011 = vsub.f32 0.0, %v3943
    %v4012 = vsub.f32 0.0, %v3946
    %v4013 = vsub.f32 0.0, %v3948
    %v4014 = vmul.f32 %v3950, 1.442695
    %v4015 = vpow.pop %v4014
    %v4016 = vmul.f32 %v3951, 1.442695
    %v4017 = vpow.pop %v4016
    %v4018 = vmul.f32 %v3952, 1.442695
    %v4019 = vpow.pop %v4018
    %v4020 = vmul.f32 %v3953, 1.442695
    %v4021 = vpow.pop %v4020
    %v4022 = vmul.f32 %v3954, 1.442695
    %v4023 = vpow.pop %v4022
    %v4024 = vmul.f32 %v3955, 1.442695
    %v4025 = vpow.pop %v4024
    %v4026 = vmul.f32 %v3956, 1.442695
    %v4027 = vpow.pop %v4026
    %v4028 = vmul.f32 %v3957, 1.442695
    %v4029 = vpow.pop %v4028
    %v4030 = vmul.f32 %v3958, 1.442695
    %v4031 = vpow.pop %v4030
    %v4032 = vmul.f32 %v3959, 1.442695
    %v4033 = vpow.pop %v4032
    %v4034 = vmul.f32 %v3960, 1.442695
    %v4035 = vpow.pop %v4034
    %v4036 = vmul.f32 %v3961, 1.442695
    %v4037 = vpow.pop %v4036
    %v4038 = vmul.f32 %v3962, 1.442695
    %v4039 = vpow.pop %v4038
    %v4040 = vmul.f32 %v3963, 1.442695
    %v4041 = vpow.pop %v4040
    %v4042 = vmul.f32 %v3964, 1.442695
    %v4043 = vpow.pop %v4042
    %v4044 = vmul.f32 %v3965, 1.442695
    %v4045 = vpow.pop %v4044
    %v4046 = vmul.f32 %v3966, 1.442695
    %v4047 = vpow.pop %v4046
    %v4048 = vmul.f32 %v3967, 1.442695
    %v4049 = vpow.pop %v4048
    %v4050 = vmul.f32 %v3968, 1.442695
    %v4051 = vpow.pop %v4050
    %v4052 = vmul.f32 %v3969, 1.442695
    %v4053 = vpow.pop %v4052
    %v4054 = vmul.f32 %v3970, 1.442695
    %v4055 = vpow.pop %v4054
    %v4056 = vmul.f32 %v3971, 1.442695
    %v4057 = vpow.pop %v4056
    %v4058 = vmul.f32 %v3972, 1.442695
    %v4059 = vpow.pop %v4058
    %v4060 = vmul.f32 %v3973, 1.442695
    %v4061 = vpow.pop %v4060
    %v4062 = vmul.f32 %v3974, 1.442695
    %v4063 = vpow.pop %v4062
    %v4064 = vmul.f32 %v3975, 1.442695
    %v4065 = vpow.pop %v4064
    %v4066 = vmul.f32 %v3976, 1.442695
    %v4067 = vpow.pop %v4066
    %v4068 = vmul.f32 %v3977, 1.442695
    %v4069 = vpow.pop %v4068
    %v4070 = vmul.f32 %v3978, 1.442695
    %v4071 = vpow.pop %v4070
    %v4072 = vmul.f32 %v3979, 1.442695
    %v4073 = vpow.pop %v4072
    %v4074 = vmul.f32 %v3980, 1.442695
    %v4075 = vpow.pop %v4074
    %v4076 = vmul.f32 %v3981, 1.442695
    %v4077 = vpow.pop %v4076
    %v4078 = vmul.f32 %v3982, 1.442695
    %v4079 = vpow.pop %v4078
    %v4080 = vmul.f32 %v3983, 1.442695
    %v4081 = vpow.pop %v4080
    %v4082 = vmul.f32 %v3984, 1.442695
    %v4083 = vpow.pop %v4082
    %v4084 = vmul.f32 %v3985, 1.442695
    %v4085 = vpow.pop %v4084
    %v4086 = vmul.f32 %v3986, 1.442695
    %v4087 = vpow.pop %v4086
    %v4088 = vmul.f32 %v3987, 1.442695
    %v4089 = vpow.pop %v4088
    %v4090 = vmul.f32 %v3988, 1.442695
    %v4091 = vpow.pop %v4090
    %v4092 = vmul.f32 %v3989, 1.442695
    %v4093 = vpow.pop %v4092
    %v4094 = vmul.f32 %v3990, 1.442695
    %v4095 = vpow.pop %v4094
    %v4096 = vmul.f32 %v3991, 1.442695
    %v4097 = vpow.pop %v4096
    %v4098 = vmul.f32 %v3992, 1.442695
    %v4099 = vpow.pop %v4098
    %v4100 = vmul.f32 %v3993, 1.442695
    %v4101 = vpow.pop %v4100
    %v4102 = vmul.f32 %v3994, 1.442695
    %v4103 = vpow.pop %v4102
    %v4104 = vmul.f32 %v3995, 1.442695
    %v4105 = vpow.pop %v4104
    %v4106 = vmul.f32 %v3996, 1.442695
    %v4107 = vpow.pop %v4106
    %v4108 = vmul.f32 %v3997, 1.442695
    %v4109 = vpow.pop %v4108
    %v4110 = vmul.f32 %v3998, 1.442695
    %v4111 = vpow.pop %v4110
    %v4112 = vmul.f32 %v3999, 1.442695
    %v4113 = vpow.pop %v4112
    %v4114 = vmul.f32 %v4000, 1.442695
    %v4115 = vpow.pop %v4114
    %v4116 = vmul.f32 %v4001, 1.442695
    %v4117 = vpow.pop %v4116
    %v4118 = vmul.f32 %v4002, 1.442695
    %v4119 = vpow.pop %v4118
    %v4120 = vmul.f32 %v4003, 1.442695
    %v4121 = vpow.pop %v4120
    %v4122 = vmul.f32 %v4004, 1.442695
    %v4123 = vpow.pop %v4122
    %v4124 = vmul.f32 %v4005, 1.442695
    %v4125 = vpow.pop %v4124
    %v4126 = vmul.f32 %v4006, 1.442695
    %v4127 = vpow.pop %v4126
    %v4128 = vmul.f32 %v4007, 1.442695
    %v4129 = vpow.pop %v4128
    %v4130 = vmul.f32 %v4008, 1.442695
    %v4131 = vpow.pop %v4130
    %v4132 = vmul.f32 %v4009, 1.442695
    %v4133 = vpow.pop %v4132
    %v4134 = vmul.f32 %v4010, 1.442695
    %v4135 = vpow.pop %v4134
    %v4136 = vmul.f32 %v4011, 1.442695
    %v4137 = vpow.pop %v4136
    %v4138 = vmul.f32 %v4012, 1.442695
    %v4139 = vpow.pop %v4138
    %v4140 = vmul.f32 %v4013, 1.442695
    %v4141 = vpow.pop %v4140
    %v4142 = vadd.f32 %v4015, 1.0
    %v4143 = vadd.f32 %v4017, 1.0
    %v4144 = vadd.f32 %v4019, 1.0
    %v4145 = vadd.f32 %v4021, 1.0
    %v4146 = vadd.f32 %v4023, 1.0
    %v4147 = vadd.f32 %v4025, 1.0
    %v4148 = vadd.f32 %v4027, 1.0
    %v4149 = vadd.f32 %v4029, 1.0
    %v4150 = vadd.f32 %v4031, 1.0
    %v4151 = vadd.f32 %v4033, 1.0
    %v4152 = vadd.f32 %v4035, 1.0
    %v4153 = vadd.f32 %v4037, 1.0
    %v4154 = vadd.f32 %v4039, 1.0
    %v4155 = vadd.f32 %v4041, 1.0
    %v4156 = vadd.f32 %v4043, 1.0
    %v4157 = vadd.f32 %v4045, 1.0
    %v4158 = vadd.f32 %v4047, 1.0
    %v4159 = vadd.f32 %v4049, 1.0
    %v4160 = vadd.f32 %v4051, 1.0
    %v4161 = vadd.f32 %v4053, 1.0
    %v4162 = vadd.f32 %v4055, 1.0
    %v4163 = vadd.f32 %v4057, 1.0
    %v4164 = vadd.f32 %v4059, 1.0
    %v4165 = vadd.f32 %v4061, 1.0
    %v4166 = vadd.f32 %v4063, 1.0
    %v4167 = vadd.f32 %v4065, 1.0
    %v4168 = vadd.f32 %v4067, 1.0
    %v4169 = vadd.f32 %v4069, 1.0
    %v4170 = vadd.f32 %v4071, 1.0
    %v4171 = vadd.f32 %v4073, 1.0
    %v4172 = vadd.f32 %v4075, 1.0
    %v4173 = vadd.f32 %v4077, 1.0
    %v4174 = vadd.f32 %v4079, 1.0
    %v4175 = vadd.f32 %v4081, 1.0
    %v4176 = vadd.f32 %v4083, 1.0
    %v4177 = vadd.f32 %v4085, 1.0
    %v4178 = vadd.f32 %v4087, 1.0
    %v4179 = vadd.f32 %v4089, 1.0
    %v4180 = vadd.f32 %v4091, 1.0
    %v4181 = vadd.f32 %v4093, 1.0
    %v4182 = vadd.f32 %v4095, 1.0
    %v4183 = vadd.f32 %v4097, 1.0
    %v4184 = vadd.f32 %v4099, 1.0
    %v4185 = vadd.f32 %v4101, 1.0
    %v4186 = vadd.f32 %v4103, 1.0
    %v4187 = vadd.f32 %v4105, 1.0
    %v4188 = vadd.f32 %v4107, 1.0
    %v4189 = vadd.f32 %v4109, 1.0
    %v4190 = vadd.f32 %v4111, 1.0
    %v4191 = vadd.f32 %v4113, 1.0
    %v4192 = vadd.f32 %v4115, 1.0
    %v4193 = vadd.f32 %v4117, 1.0
    %v4194 = vadd.f32 %v4119, 1.0
    %v4195 = vadd.f32 %v4121, 1.0
    %v4196 = vadd.f32 %v4123, 1.0
    %v4197 = vadd.f32 %v4125, 1.0
    %v4198 = vadd.f32 %v4127, 1.0
    %v4199 = vadd.f32 %v4129, 1.0
    %v4200 = vadd.f32 %v4131, 1.0
    %v4201 = vadd.f32 %v4133, 1.0
    %v4202 = vadd.f32 %v4135, 1.0
    %v4203 = vadd.f32 %v4137, 1.0
    %v4204 = vadd.f32 %v4139, 1.0
    %v4205 = vadd.f32 %v4141, 1.0
    %v4206 = vrcp.pop %v4142
    %v4207 = vrcp.pop %v4143
    %v4208 = vrcp.pop %v4144
    %v4209 = vrcp.pop %v4145
    %v4210 = vrcp.pop %v4146
    %v4211 = vrcp.pop %v4147
    %v4212 = vrcp.pop %v4148
    %v4213 = vrcp.pop %v4149
    %v4214 = vrcp.pop %v4150
    %v4215 = vrcp.pop %v4151
    %v4216 = vrcp.pop %v4152
    %v4217 = vrcp.pop %v4153
    %v4218 = vrcp.pop %v4154
    %v4219 = vrcp.pop %v4155
    %v4220 = vrcp.pop %v4156
    %v4221 = vrcp.pop %v4157
    %v4222 = vrcp.pop %v4158
    %v4223 = vrcp.pop %v4159
    %v4224 = vrcp.pop %v4160
    %v4225 = vrcp.pop %v4161
    %v4226 = vrcp.pop %v4162
    %v4227 = vrcp.pop %v4163
    %v4228 = vrcp.pop %v4164
    %v4229 = vrcp.pop %v4165
    %v4230 = vrcp.pop %v4166
    %v4231 = vrcp.pop %v4167
    %v4232 = vrcp.pop %v4168
    %v4233 = vrcp.pop %v4169
    %v4234 = vrcp.pop %v4170
    %v4235 = vrcp.pop %v4171
    %v4236 = vrcp.pop %v4172
    %v4237 = vrcp.pop %v4173
    %v4238 = vrcp.pop %v4174
    %v4239 = vrcp.pop %v4175
    %v4240 = vrcp.pop %v4176
    %v4241 = vrcp.pop %v4177
    %v4242 = vrcp.pop %v4178
    %v4243 = vrcp.pop %v4179
    %v4244 = vrcp.pop %v4180
    %v4245 = vrcp.pop %v4181
    %v4246 = vrcp.pop %v4182
    %v4247 = vrcp.pop %v4183
    %v4248 = vrcp.pop %v4184
    %v4249 = vrcp.pop %v4185
    %v4250 = vrcp.pop %v4186
    %v4251 = vrcp.pop %v4187
    %v4252 = vrcp.pop %v4188
    %v4253 = vrcp.pop %v4189
    %v4254 = vrcp.pop %v4190
    %v4255 = vrcp.pop %v4191
    %v4256 = vrcp.pop %v4192
    %v4257 = vrcp.pop %v4193
    %v4258 = vrcp.pop %v4194
    %v4259 = vrcp.pop %v4195
    %v4260 = vrcp.pop %v4196
    %v4261 = vrcp.pop %v4197
    %v4262 = vrcp.pop %v4198
    %v4263 = vrcp.pop %v4199
    %v4264 = vrcp.pop %v4200
    %v4265 = vrcp.pop %v4201
    %v4266 = vrcp.pop %v4202
    %v4267 = vrcp.pop %v4203
    %v4268 = vrcp.pop %v4204
    %v4269 = vrcp.pop %v4205
    %v4270 = vmul.f32 %v3791, %v4206
    %v4271 = vmul.f32 %v3793, %v4207
    %v4272 = vmul.f32 %v3796, %v4208
    %v4273 = vmul.f32 %v3798, %v4209
    %v4274 = vmul.f32 %v3801, %v4210
    %v4275 = vmul.f32 %v3803, %v4211
    %v4276 = vmul.f32 %v3806, %v4212
    %v4277 = vmul.f32 %v3808, %v4213
    %v4278 = vmul.f32 %v3811, %v4214
    %v4279 = vmul.f32 %v3813, %v4215
    %v4280 = vmul.f32 %v3816, %v4216
    %v4281 = vmul.f32 %v3818, %v4217
    %v4282 = vmul.f32 %v3821, %v4218
    %v4283 = vmul.f32 %v3823, %v4219
    %v4284 = vmul.f32 %v3826, %v4220
    %v4285 = vmul.f32 %v3828, %v4221
    %v4286 = vmul.f32 %v3831, %v4222
    %v4287 = vmul.f32 %v3833, %v4223
    %v4288 = vmul.f32 %v3836, %v4224
    %v4289 = vmul.f32 %v3838, %v4225
    %v4290 = vmul.f32 %v3841, %v4226
    %v4291 = vmul.f32 %v3843, %v4227
    %v4292 = vmul.f32 %v3846, %v4228
    %v4293 = vmul.f32 %v3848, %v4229
    %v4294 = vmul.f32 %v3851, %v4230
    %v4295 = vmul.f32 %v3853, %v4231
    %v4296 = vmul.f32 %v3856, %v4232
    %v4297 = vmul.f32 %v3858, %v4233
    %v4298 = vmul.f32 %v3861, %v4234
    %v4299 = vmul.f32 %v3863, %v4235
    %v4300 = vmul.f32 %v3866, %v4236
    %v4301 = vmul.f32 %v3868, %v4237
    %v4302 = vmul.f32 %v3871, %v4238
    %v4303 = vmul.f32 %v3873, %v4239
    %v4304 = vmul.f32 %v3876, %v4240
    %v4305 = vmul.f32 %v3878, %v4241
    %v4306 = vmul.f32 %v3881, %v4242
    %v4307 = vmul.f32 %v3883, %v4243
    %v4308 = vmul.f32 %v3886, %v4244
    %v4309 = vmul.f32 %v3888, %v4245
    %v4310 = vmul.f32 %v3891, %v4246
    %v4311 = vmul.f32 %v3893, %v4247
    %v4312 = vmul.f32 %v3896, %v4248
    %v4313 = vmul.f32 %v3898, %v4249
    %v4314 = vmul.f32 %v3901, %v4250
    %v4315 = vmul.f32 %v3903, %v4251
    %v4316 = vmul.f32 %v3906, %v4252
    %v4317 = vmul.f32 %v3908, %v4253
    %v4318 = vmul.f32 %v3911, %v4254
    %v4319 = vmul.f32 %v3913, %v4255
    %v4320 = vmul.f32 %v3916, %v4256
    %v4321 = vmul.f32 %v3918, %v4257
    %v4322 = vmul.f32 %v3921, %v4258
    %v4323 = vmul.f32 %v3923, %v4259
    %v4324 = vmul.f32 %v3926, %v4260
    %v4325 = vmul.f32 %v3928, %v4261
    %v4326 = vmul.f32 %v3931, %v4262
    %v4327 = vmul.f32 %v3933, %v4263
    %v4328 = vmul.f32 %v3936, %v4264
    %v4329 = vmul.f32 %v3938, %v4265
    %v4330 = vmul.f32 %v3941, %v4266
    %v4331 = vmul.f32 %v3943, %v4267
    %v4332 = vmul.f32 %v3946, %v4268
    %v4333 = vmul.f32 %v3948, %v4269
    %v4334 = vld [vmem:[%s3] sm:$0xf]
    %v4335 = vld [vmem:[%s3 + $0x4] sm:$0xf]
    %v4336 = vld [vmem:[%s3 + $0x8] sm:$0xf]
    %v4337 = vld [vmem:[%s3 + $0xc] sm:$0xf]
    %v4338 = vld [vmem:[%s3 + $0x10] sm:$0xf]
    %v4339 = vld [vmem:[%s3 + $0x14] sm:$0xf]
    %v4340 = vld [vmem:[%s3 + $0x18] sm:$0xf]
    %v4341 = vld [vmem:[%s3 + $0x1c] sm:$0xf]
    %v4342 = vld [vmem:[%s3 + $0x20] sm:$0xf]
    %v4343 = vld [vmem:[%s3 + $0x24] sm:$0xf]
    %v4344 = vld [vmem:[%s3 + $0x28] sm:$0xf]
    %v4345 = vld [vmem:[%s3 + $0x2c] sm:$0xf]
    %v4346 = vld [vmem:[%s3 + $0x30] sm:$0xf]
    %v4347 = vld [vmem:[%s3 + $0x34] sm:$0xf]
    %v4348 = vld [vmem:[%s3 + $0x38] sm:$0xf]
    %v4349 = vld [vmem:[%s3 + $0x3c] sm:$0xf]
    %v4350 = vld [vmem:[%s3 + $0x40] sm:$0xf]
    %v4351 = vld [vmem:[%s3 + $0x44] sm:$0xf]
    %v4352 = vld [vmem:[%s3 + $0x48] sm:$0xf]
    %v4353 = vld [vmem:[%s3 + $0x4c] sm:$0xf]
    %v4354 = vld [vmem:[%s3 + $0x50] sm:$0xf]
    %v4355 = vld [vmem:[%s3 + $0x54] sm:$0xf]
    %v4356 = vld [vmem:[%s3 + $0x58] sm:$0xf]
    %v4357 = vld [vmem:[%s3 + $0x5c] sm:$0xf]
    %v4358 = vld [vmem:[%s3 + $0x60] sm:$0xf]
    %v4359 = vld [vmem:[%s3 + $0x64] sm:$0xf]
    %v4360 = vld [vmem:[%s3 + $0x68] sm:$0xf]
    %v4361 = vld [vmem:[%s3 + $0x6c] sm:$0xf]
    %v4362 = vld [vmem:[%s3 + $0x70] sm:$0xf]
    %v4363 = vld [vmem:[%s3 + $0x74] sm:$0xf]
    %v4364 = vld [vmem:[%s3 + $0x78] sm:$0xf]
    %v4365 = vld [vmem:[%s3 + $0x7c] sm:$0xf]
    %v4366 = vld [vmem:[%s3 + $0x80] sm:$0xf]
    %v4367 = vld [vmem:[%s3 + $0x84] sm:$0xf]
    %v4368 = vld [vmem:[%s3 + $0x88] sm:$0xf]
    %v4369 = vld [vmem:[%s3 + $0x8c] sm:$0xf]
    %v4370 = vld [vmem:[%s3 + $0x90] sm:$0xf]
    %v4371 = vld [vmem:[%s3 + $0x94] sm:$0xf]
    %v4372 = vld [vmem:[%s3 + $0x98] sm:$0xf]
    %v4373 = vld [vmem:[%s3 + $0x9c] sm:$0xf]
    %v4374 = vld [vmem:[%s3 + $0xa0] sm:$0xf]
    %v4375 = vld [vmem:[%s3 + $0xa4] sm:$0xf]
    %v4376 = vld [vmem:[%s3 + $0xa8] sm:$0xf]
    %v4377 = vld [vmem:[%s3 + $0xac] sm:$0xf]
    %v4378 = vld [vmem:[%s3 + $0xb0] sm:$0xf]
    %v4379 = vld [vmem:[%s3 + $0xb4] sm:$0xf]
    %v4380 = vld [vmem:[%s3 + $0xb8] sm:$0xf]
    %v4381 = vld [vmem:[%s3 + $0xbc] sm:$0xf]
    %v4382 = vld [vmem:[%s3 + $0xc0] sm:$0xf]
    %v4383 = vld [vmem:[%s3 + $0xc4] sm:$0xf]
    %v4384 = vld [vmem:[%s3 + $0xc8] sm:$0xf]
    %v4385 = vld [vmem:[%s3 + $0xcc] sm:$0xf]
    %v4386 = vld [vmem:[%s3 + $0xd0] sm:$0xf]
    %v4387 = vld [vmem:[%s3 + $0xd4] sm:$0xf]
    %v4388 = vld [vmem:[%s3 + $0xd8] sm:$0xf]
    %v4389 = vld [vmem:[%s3 + $0xdc] sm:$0xf]
    %v4390 = vld [vmem:[%s3 + $0xe0] sm:$0xf]
    %v4391 = vld [vmem:[%s3 + $0xe4] sm:$0xf]
    %v4392 = vld [vmem:[%s3 + $0xe8] sm:$0xf]
    %v4393 = vld [vmem:[%s3 + $0xec] sm:$0xf]
    %v4394 = vld [vmem:[%s3 + $0xf0] sm:$0xf]
    %v4395 = vld [vmem:[%s3 + $0xf4] sm:$0xf]
    %v4396 = vld [vmem:[%s3 + $0xf8] sm:$0xf]
    %v4397 = vld [vmem:[%s3 + $0xfc] sm:$0xf]
    %v4398 = vunpack.c.l.bf16 %v4334
    %v4399 = vunpack.c.l.bf16 %v4335
    %v4400 = vunpack.c.l.bf16 %v4336
    %v4401 = vunpack.c.l.bf16 %v4337
    %v4402 = vunpack.c.l.bf16 %v4338
    %v4403 = vunpack.c.l.bf16 %v4339
    %v4404 = vunpack.c.l.bf16 %v4340
    %v4405 = vunpack.c.l.bf16 %v4341
    %v4406 = vunpack.c.l.bf16 %v4342
    %v4407 = vunpack.c.l.bf16 %v4343
    %v4408 = vunpack.c.l.bf16 %v4344
    %v4409 = vunpack.c.l.bf16 %v4345
    %v4410 = vunpack.c.l.bf16 %v4346
    %v4411 = vunpack.c.l.bf16 %v4347
    %v4412 = vunpack.c.l.bf16 %v4348
    %v4413 = vunpack.c.l.bf16 %v4349
    %v4414 = vunpack.c.l.bf16 %v4350
    %v4415 = vunpack.c.l.bf16 %v4351
    %v4416 = vunpack.c.l.bf16 %v4352
    %v4417 = vunpack.c.l.bf16 %v4353
    %v4418 = vunpack.c.l.bf16 %v4354
    %v4419 = vunpack.c.l.bf16 %v4355
    %v4420 = vunpack.c.l.bf16 %v4356
    %v4421 = vunpack.c.l.bf16 %v4357
    %v4422 = vunpack.c.l.bf16 %v4358
    %v4423 = vunpack.c.l.bf16 %v4359
    %v4424 = vunpack.c.l.bf16 %v4360
    %v4425 = vunpack.c.l.bf16 %v4361
    %v4426 = vunpack.c.l.bf16 %v4362
    %v4427 = vunpack.c.l.bf16 %v4363
    %v4428 = vunpack.c.l.bf16 %v4364
    %v4429 = vunpack.c.l.bf16 %v4365
    %v4430 = vunpack.c.l.bf16 %v4366
    %v4431 = vunpack.c.l.bf16 %v4367
    %v4432 = vunpack.c.l.bf16 %v4368
    %v4433 = vunpack.c.l.bf16 %v4369
    %v4434 = vunpack.c.l.bf16 %v4370
    %v4435 = vunpack.c.l.bf16 %v4371
    %v4436 = vunpack.c.l.bf16 %v4372
    %v4437 = vunpack.c.l.bf16 %v4373
    %v4438 = vunpack.c.l.bf16 %v4374
    %v4439 = vunpack.c.l.bf16 %v4375
    %v4440 = vunpack.c.l.bf16 %v4376
    %v4441 = vunpack.c.l.bf16 %v4377
    %v4442 = vunpack.c.l.bf16 %v4378
    %v4443 = vunpack.c.l.bf16 %v4379
    %v4444 = vunpack.c.l.bf16 %v4380
    %v4445 = vunpack.c.l.bf16 %v4381
    %v4446 = vunpack.c.l.bf16 %v4382
    %v4447 = vunpack.c.l.bf16 %v4383
    %v4448 = vunpack.c.l.bf16 %v4384
    %v4449 = vunpack.c.l.bf16 %v4385
    %v4450 = vunpack.c.l.bf16 %v4386
    %v4451 = vunpack.c.l.bf16 %v4387
    %v4452 = vunpack.c.l.bf16 %v4388
    %v4453 = vunpack.c.l.bf16 %v4389
    %v4454 = vunpack.c.l.bf16 %v4390
    %v4455 = vunpack.c.l.bf16 %v4391
    %v4456 = vunpack.c.l.bf16 %v4392
    %v4457 = vunpack.c.l.bf16 %v4393
    %v4458 = vunpack.c.l.bf16 %v4394
    %v4459 = vunpack.c.l.bf16 %v4395
    %v4460 = vunpack.c.l.bf16 %v4396
    %v4461 = vunpack.c.l.bf16 %v4397
    %v4462 = vadd.f32 %v4270, %v4398
    %v4463 = vadd.f32 %v4271, %v4399
    %v4464 = vadd.f32 %v4272, %v4400
    %v4465 = vadd.f32 %v4273, %v4401
    %v4466 = vadd.f32 %v4274, %v4402
    %v4467 = vadd.f32 %v4275, %v4403
    %v4468 = vadd.f32 %v4276, %v4404
    %v4469 = vadd.f32 %v4277, %v4405
    %v4470 = vadd.f32 %v4278, %v4406
    %v4471 = vadd.f32 %v4279, %v4407
    %v4472 = vadd.f32 %v4280, %v4408
    %v4473 = vadd.f32 %v4281, %v4409
    %v4474 = vadd.f32 %v4282, %v4410
    %v4475 = vadd.f32 %v4283, %v4411
    %v4476 = vadd.f32 %v4284, %v4412
    %v4477 = vadd.f32 %v4285, %v4413
    %v4478 = vadd.f32 %v4286, %v4414
    %v4479 = vadd.f32 %v4287, %v4415
    %v4480 = vadd.f32 %v4288, %v4416
    %v4481 = vadd.f32 %v4289, %v4417
    %v4482 = vadd.f32 %v4290, %v4418
    %v4483 = vadd.f32 %v4291, %v4419
    %v4484 = vadd.f32 %v4292, %v4420
    %v4485 = vadd.f32 %v4293, %v4421
    %v4486 = vadd.f32 %v4294, %v4422
    %v4487 = vadd.f32 %v4295, %v4423
    %v4488 = vadd.f32 %v4296, %v4424
    %v4489 = vadd.f32 %v4297, %v4425
    %v4490 = vadd.f32 %v4298, %v4426
    %v4491 = vadd.f32 %v4299, %v4427
    %v4492 = vadd.f32 %v4300, %v4428
    %v4493 = vadd.f32 %v4301, %v4429
    %v4494 = vadd.f32 %v4302, %v4430
    %v4495 = vadd.f32 %v4303, %v4431
    %v4496 = vadd.f32 %v4304, %v4432
    %v4497 = vadd.f32 %v4305, %v4433
    %v4498 = vadd.f32 %v4306, %v4434
    %v4499 = vadd.f32 %v4307, %v4435
    %v4500 = vadd.f32 %v4308, %v4436
    %v4501 = vadd.f32 %v4309, %v4437
    %v4502 = vadd.f32 %v4310, %v4438
    %v4503 = vadd.f32 %v4311, %v4439
    %v4504 = vadd.f32 %v4312, %v4440
    %v4505 = vadd.f32 %v4313, %v4441
    %v4506 = vadd.f32 %v4314, %v4442
    %v4507 = vadd.f32 %v4315, %v4443
    %v4508 = vadd.f32 %v4316, %v4444
    %v4509 = vadd.f32 %v4317, %v4445
    %v4510 = vadd.f32 %v4318, %v4446
    %v4511 = vadd.f32 %v4319, %v4447
    %v4512 = vadd.f32 %v4320, %v4448
    %v4513 = vadd.f32 %v4321, %v4449
    %v4514 = vadd.f32 %v4322, %v4450
    %v4515 = vadd.f32 %v4323, %v4451
    %v4516 = vadd.f32 %v4324, %v4452
    %v4517 = vadd.f32 %v4325, %v4453
    %v4518 = vadd.f32 %v4326, %v4454
    %v4519 = vadd.f32 %v4327, %v4455
    %v4520 = vadd.f32 %v4328, %v4456
    %v4521 = vadd.f32 %v4329, %v4457
    %v4522 = vadd.f32 %v4330, %v4458
    %v4523 = vadd.f32 %v4331, %v4459
    %v4524 = vadd.f32 %v4332, %v4460
    %v4525 = vadd.f32 %v4333, %v4461
    %s4526 = scalar_lea.vmem %s5, 320
    %v4527 = vld [vmem:[%s4526] sm:$0xf]
    %v4528 = vld [vmem:[%s4526 + $0x4] sm:$0xf]
    %v4529 = vld [vmem:[%s4526 + $0x8] sm:$0xf]
    %v4530 = vld [vmem:[%s4526 + $0xc] sm:$0xf]
    %v4531 = vld [vmem:[%s4526 + $0x10] sm:$0xf]
    %v4532 = vld [vmem:[%s4526 + $0x14] sm:$0xf]
    %v4533 = vld [vmem:[%s4526 + $0x18] sm:$0xf]
    %v4534 = vld [vmem:[%s4526 + $0x1c] sm:$0xf]
    %v4535 = vld [vmem:[%s4526 + $0x20] sm:$0xf]
    %v4536 = vld [vmem:[%s4526 + $0x24] sm:$0xf]
    %v4537 = vld [vmem:[%s4526 + $0x28] sm:$0xf]
    %v4538 = vld [vmem:[%s4526 + $0x2c] sm:$0xf]
    %v4539 = vld [vmem:[%s4526 + $0x30] sm:$0xf]
    %v4540 = vld [vmem:[%s4526 + $0x34] sm:$0xf]
    %v4541 = vld [vmem:[%s4526 + $0x38] sm:$0xf]
    %v4542 = vld [vmem:[%s4526 + $0x3c] sm:$0xf]
    %v4543 = vpack.c.bf16 %v4463, %v4462
    %v4544 = vpack.c.bf16 %v4465, %v4464
    %v4545 = vpack.c.bf16 %v4467, %v4466
    %v4546 = vpack.c.bf16 %v4469, %v4468
    %v4547 = vpack.c.bf16 %v4471, %v4470
    %v4548 = vpack.c.bf16 %v4473, %v4472
    %v4549 = vpack.c.bf16 %v4475, %v4474
    %v4550 = vpack.c.bf16 %v4477, %v4476
    %v4551 = vpack.c.bf16 %v4479, %v4478
    %v4552 = vpack.c.bf16 %v4481, %v4480
    %v4553 = vpack.c.bf16 %v4483, %v4482
    %v4554 = vpack.c.bf16 %v4485, %v4484
    %v4555 = vpack.c.bf16 %v4487, %v4486
    %v4556 = vpack.c.bf16 %v4489, %v4488
    %v4557 = vpack.c.bf16 %v4491, %v4490
    %v4558 = vpack.c.bf16 %v4493, %v4492
    %v4559 = vpack.c.bf16 %v4495, %v4494
    %v4560 = vpack.c.bf16 %v4497, %v4496
    %v4561 = vpack.c.bf16 %v4499, %v4498
    %v4562 = vpack.c.bf16 %v4501, %v4500
    %v4563 = vpack.c.bf16 %v4503, %v4502
    %v4564 = vpack.c.bf16 %v4505, %v4504
    %v4565 = vpack.c.bf16 %v4507, %v4506
    %v4566 = vpack.c.bf16 %v4509, %v4508
    %v4567 = vpack.c.bf16 %v4511, %v4510
    %v4568 = vpack.c.bf16 %v4513, %v4512
    %v4569 = vpack.c.bf16 %v4515, %v4514
    %v4570 = vpack.c.bf16 %v4517, %v4516
    %v4571 = vpack.c.bf16 %v4519, %v4518
    %v4572 = vpack.c.bf16 %v4521, %v4520
    %v4573 = vpack.c.bf16 %v4523, %v4522
    %v4574 = vpack.c.bf16 %v4525, %v4524
    %v4575 = vld [vmem:[%s6 + $0x3] sm:$0x1]
    %v4576 = vperm.slane %v4575, 0
    %v4593 = vunpack.c.l.b16 %v4527
    %v4594 = vunpack.c.l.b16 %v4528
    %v4595 = vunpack.c.l.b16 %v4529
    %v4596 = vunpack.c.l.b16 %v4530
    %v4597 = vunpack.c.l.b16 %v4531
    %v4598 = vunpack.c.l.b16 %v4532
    %v4599 = vunpack.c.l.b16 %v4533
    %v4600 = vunpack.c.l.b16 %v4534
    %v4601 = vunpack.c.l.b16 %v4535
    %v4602 = vunpack.c.l.b16 %v4536
    %v4603 = vunpack.c.l.b16 %v4537
    %v4604 = vunpack.c.l.b16 %v4538
    %v4605 = vunpack.c.l.b16 %v4539
    %v4606 = vunpack.c.l.b16 %v4540
    %v4607 = vunpack.c.l.b16 %v4541
    %v4608 = vunpack.c.l.b16 %v4542
    %v4609 = vpack.c.b16 %v4594, %v4593
    %v4610 = vpack.c.b16 %v4596, %v4595
    %v4611 = vpack.c.b16 %v4598, %v4597
    %v4612 = vpack.c.b16 %v4600, %v4599
    %v4613 = vpack.c.b16 %v4602, %v4601
    %v4614 = vpack.c.b16 %v4604, %v4603
    %v4615 = vpack.c.b16 %v4606, %v4605
    %v4616 = vpack.c.b16 %v4608, %v4607
    %4625 = vmatpush.bf16.msra.mxu0 %v4616
    %4626 = vmatpush.bf16.msra.mxu0 %v4615
    %4627 = vmatpush.bf16.msra.mxu0 %v4614
    %4628 = vmatpush.bf16.msra.mxu0 %v4613
    %4629 = vmatpush.bf16.msra.mxu0 %v4612
    %4630 = vmatpush.bf16.msra.mxu0 %v4611
    %4631 = vmatpush.bf16.msra.mxu0 %v4610
    %4632 = vmatpush.bf16.msra.mxu0 %v4609
    %4633 = vmatmul.bf16.gmra.mxu0 %v4543
    %v4634 = vpop.f32.mrf.mxu0
    %v4635 = vadd.f32 %v4576, %v4634
    %v4636 = vpop.f32.mrf.mxu0
    %v4637 = vadd.f32 %v4576, %v4636
    %4638 = vmatmul.bf16.gmra.mxu0 %v4544
    %v4639 = vpop.f32.mrf.mxu0
    %v4640 = vadd.f32 %v4576, %v4639
    %v4641 = vpop.f32.mrf.mxu0
    %v4642 = vadd.f32 %v4576, %v4641
    %4643 = vmatmul.bf16.gmra.mxu0 %v4545
    %v4644 = vpop.f32.mrf.mxu0
    %v4645 = vadd.f32 %v4576, %v4644
    %v4646 = vpop.f32.mrf.mxu0
    %v4647 = vadd.f32 %v4576, %v4646
    %4648 = vmatmul.bf16.gmra.mxu0 %v4546
    %v4649 = vpop.f32.mrf.mxu0
    %v4650 = vadd.f32 %v4576, %v4649
    %v4651 = vpop.f32.mrf.mxu0
    %v4652 = vadd.f32 %v4576, %v4651
    %4653 = vmatmul.bf16.gmra.mxu0 %v4547
    %v4654 = vpop.f32.mrf.mxu0
    %v4655 = vadd.f32 %v4576, %v4654
    %v4656 = vpop.f32.mrf.mxu0
    %v4657 = vadd.f32 %v4576, %v4656
    %4658 = vmatmul.bf16.gmra.mxu0 %v4548
    %v4659 = vpop.f32.mrf.mxu0
    %v4660 = vadd.f32 %v4576, %v4659
    %v4661 = vpop.f32.mrf.mxu0
    %v4662 = vadd.f32 %v4576, %v4661
    %4663 = vmatmul.bf16.gmra.mxu0 %v4549
    %v4664 = vpop.f32.mrf.mxu0
    %v4665 = vadd.f32 %v4576, %v4664
    %v4666 = vpop.f32.mrf.mxu0
    %v4667 = vadd.f32 %v4576, %v4666
    %4668 = vmatmul.bf16.gmra.mxu0 %v4550
    %v4669 = vpop.f32.mrf.mxu0
    %v4670 = vadd.f32 %v4576, %v4669
    %v4671 = vpop.f32.mrf.mxu0
    %v4672 = vadd.f32 %v4576, %v4671
    %4673 = vmatmul.bf16.gmra.mxu0 %v4551
    %v4674 = vpop.f32.mrf.mxu0
    %v4675 = vadd.f32 %v4576, %v4674
    %v4676 = vpop.f32.mrf.mxu0
    %v4677 = vadd.f32 %v4576, %v4676
    %4678 = vmatmul.bf16.gmra.mxu0 %v4552
    %v4679 = vpop.f32.mrf.mxu0
    %v4680 = vadd.f32 %v4576, %v4679
    %v4681 = vpop.f32.mrf.mxu0
    %v4682 = vadd.f32 %v4576, %v4681
    %4683 = vmatmul.bf16.gmra.mxu0 %v4553
    %v4684 = vpop.f32.mrf.mxu0
    %v4685 = vadd.f32 %v4576, %v4684
    %v4686 = vpop.f32.mrf.mxu0
    %v4687 = vadd.f32 %v4576, %v4686
    %4688 = vmatmul.bf16.gmra.mxu0 %v4554
    %v4689 = vpop.f32.mrf.mxu0
    %v4690 = vadd.f32 %v4576, %v4689
    %v4691 = vpop.f32.mrf.mxu0
    %v4692 = vadd.f32 %v4576, %v4691
    %4693 = vmatmul.bf16.gmra.mxu0 %v4555
    %v4694 = vpop.f32.mrf.mxu0
    %v4695 = vadd.f32 %v4576, %v4694
    %v4696 = vpop.f32.mrf.mxu0
    %v4697 = vadd.f32 %v4576, %v4696
    %4698 = vmatmul.bf16.gmra.mxu0 %v4556
    %v4699 = vpop.f32.mrf.mxu0
    %v4700 = vadd.f32 %v4576, %v4699
    %v4701 = vpop.f32.mrf.mxu0
    %v4702 = vadd.f32 %v4576, %v4701
    %4703 = vmatmul.bf16.gmra.mxu0 %v4557
    %v4704 = vpop.f32.mrf.mxu0
    %v4705 = vadd.f32 %v4576, %v4704
    %v4706 = vpop.f32.mrf.mxu0
    %v4707 = vadd.f32 %v4576, %v4706
    %4708 = vmatmul.bf16.gmra.mxu0 %v4558
    %v4709 = vpop.f32.mrf.mxu0
    %v4710 = vadd.f32 %v4576, %v4709
    %v4711 = vpop.f32.mrf.mxu0
    %v4712 = vadd.f32 %v4576, %v4711
    %4713 = vmatmul.bf16.gmra.mxu0 %v4559
    %v4714 = vpop.f32.mrf.mxu0
    %v4715 = vadd.f32 %v4576, %v4714
    %v4716 = vpop.f32.mrf.mxu0
    %v4717 = vadd.f32 %v4576, %v4716
    %4718 = vmatmul.bf16.gmra.mxu0 %v4560
    %v4719 = vpop.f32.mrf.mxu0
    %v4720 = vadd.f32 %v4576, %v4719
    %v4721 = vpop.f32.mrf.mxu0
    %v4722 = vadd.f32 %v4576, %v4721
    %4723 = vmatmul.bf16.gmra.mxu0 %v4561
    %v4724 = vpop.f32.mrf.mxu0
    %v4725 = vadd.f32 %v4576, %v4724
    %v4726 = vpop.f32.mrf.mxu0
    %v4727 = vadd.f32 %v4576, %v4726
    %4728 = vmatmul.bf16.gmra.mxu0 %v4562
    %v4729 = vpop.f32.mrf.mxu0
    %v4730 = vadd.f32 %v4576, %v4729
    %v4731 = vpop.f32.mrf.mxu0
    %v4732 = vadd.f32 %v4576, %v4731
    %4733 = vmatmul.bf16.gmra.mxu0 %v4563
    %v4734 = vpop.f32.mrf.mxu0
    %v4735 = vadd.f32 %v4576, %v4734
    %v4736 = vpop.f32.mrf.mxu0
    %v4737 = vadd.f32 %v4576, %v4736
    %4738 = vmatmul.bf16.gmra.mxu0 %v4564
    %v4739 = vpop.f32.mrf.mxu0
    %v4740 = vadd.f32 %v4576, %v4739
    %v4741 = vpop.f32.mrf.mxu0
    %v4742 = vadd.f32 %v4576, %v4741
    %4743 = vmatmul.bf16.gmra.mxu0 %v4565
    %v4744 = vpop.f32.mrf.mxu0
    %v4745 = vadd.f32 %v4576, %v4744
    %v4746 = vpop.f32.mrf.mxu0
    %v4747 = vadd.f32 %v4576, %v4746
    %4748 = vmatmul.bf16.gmra.mxu0 %v4566
    %v4749 = vpop.f32.mrf.mxu0
    %v4750 = vadd.f32 %v4576, %v4749
    %v4751 = vpop.f32.mrf.mxu0
    %v4752 = vadd.f32 %v4576, %v4751
    %4753 = vmatmul.bf16.gmra.mxu0 %v4567
    %v4754 = vpop.f32.mrf.mxu0
    %v4755 = vadd.f32 %v4576, %v4754
    %v4756 = vpop.f32.mrf.mxu0
    %v4757 = vadd.f32 %v4576, %v4756
    %4758 = vmatmul.bf16.gmra.mxu0 %v4568
    %v4759 = vpop.f32.mrf.mxu0
    %v4760 = vadd.f32 %v4576, %v4759
    %v4761 = vpop.f32.mrf.mxu0
    %v4762 = vadd.f32 %v4576, %v4761
    %4763 = vmatmul.bf16.gmra.mxu0 %v4569
    %v4764 = vpop.f32.mrf.mxu0
    %v4765 = vadd.f32 %v4576, %v4764
    %v4766 = vpop.f32.mrf.mxu0
    %v4767 = vadd.f32 %v4576, %v4766
    %4768 = vmatmul.bf16.gmra.mxu0 %v4570
    %v4769 = vpop.f32.mrf.mxu0
    %v4770 = vadd.f32 %v4576, %v4769
    %v4771 = vpop.f32.mrf.mxu0
    %v4772 = vadd.f32 %v4576, %v4771
    %4773 = vmatmul.bf16.gmra.mxu0 %v4571
    %v4774 = vpop.f32.mrf.mxu0
    %v4775 = vadd.f32 %v4576, %v4774
    %v4776 = vpop.f32.mrf.mxu0
    %v4777 = vadd.f32 %v4576, %v4776
    %4778 = vmatmul.bf16.gmra.mxu0 %v4572
    %v4779 = vpop.f32.mrf.mxu0
    %v4780 = vadd.f32 %v4576, %v4779
    %v4781 = vpop.f32.mrf.mxu0
    %v4782 = vadd.f32 %v4576, %v4781
    %4783 = vmatmul.bf16.gmra.mxu0 %v4573
    %v4784 = vpop.f32.mrf.mxu0
    %v4785 = vadd.f32 %v4576, %v4784
    %v4786 = vpop.f32.mrf.mxu0
    %v4787 = vadd.f32 %v4576, %v4786
    %4788 = vmatmul.bf16.gmra.mxu0 %v4574
    %v4789 = vpop.f32.mrf.mxu0
    %v4790 = vadd.f32 %v4576, %v4789
    %v4791 = vpop.f32.mrf.mxu0
    %v4792 = vadd.f32 %v4576, %v4791
    %4793 = vdwg.mxu0
    %v4794 = vsub.f32 0.0, %v4635
    %v4795 = vsub.f32 0.0, %v4637
    %v4796 = vsub.f32 0.0, %v4640
    %v4797 = vsub.f32 0.0, %v4642
    %v4798 = vsub.f32 0.0, %v4645
    %v4799 = vsub.f32 0.0, %v4647
    %v4800 = vsub.f32 0.0, %v4650
    %v4801 = vsub.f32 0.0, %v4652
    %v4802 = vsub.f32 0.0, %v4655
    %v4803 = vsub.f32 0.0, %v4657
    %v4804 = vsub.f32 0.0, %v4660
    %v4805 = vsub.f32 0.0, %v4662
    %v4806 = vsub.f32 0.0, %v4665
    %v4807 = vsub.f32 0.0, %v4667
    %v4808 = vsub.f32 0.0, %v4670
    %v4809 = vsub.f32 0.0, %v4672
    %v4810 = vsub.f32 0.0, %v4675
    %v4811 = vsub.f32 0.0, %v4677
    %v4812 = vsub.f32 0.0, %v4680
    %v4813 = vsub.f32 0.0, %v4682
    %v4814 = vsub.f32 0.0, %v4685
    %v4815 = vsub.f32 0.0, %v4687
    %v4816 = vsub.f32 0.0, %v4690
    %v4817 = vsub.f32 0.0, %v4692
    %v4818 = vsub.f32 0.0, %v4695
    %v4819 = vsub.f32 0.0, %v4697
    %v4820 = vsub.f32 0.0, %v4700
    %v4821 = vsub.f32 0.0, %v4702
    %v4822 = vsub.f32 0.0, %v4705
    %v4823 = vsub.f32 0.0, %v4707
    %v4824 = vsub.f32 0.0, %v4710
    %v4825 = vsub.f32 0.0, %v4712
    %v4826 = vsub.f32 0.0, %v4715
    %v4827 = vsub.f32 0.0, %v4717
    %v4828 = vsub.f32 0.0, %v4720
    %v4829 = vsub.f32 0.0, %v4722
    %v4830 = vsub.f32 0.0, %v4725
    %v4831 = vsub.f32 0.0, %v4727
    %v4832 = vsub.f32 0.0, %v4730
    %v4833 = vsub.f32 0.0, %v4732
    %v4834 = vsub.f32 0.0, %v4735
    %v4835 = vsub.f32 0.0, %v4737
    %v4836 = vsub.f32 0.0, %v4740
    %v4837 = vsub.f32 0.0, %v4742
    %v4838 = vsub.f32 0.0, %v4745
    %v4839 = vsub.f32 0.0, %v4747
    %v4840 = vsub.f32 0.0, %v4750
    %v4841 = vsub.f32 0.0, %v4752
    %v4842 = vsub.f32 0.0, %v4755
    %v4843 = vsub.f32 0.0, %v4757
    %v4844 = vsub.f32 0.0, %v4760
    %v4845 = vsub.f32 0.0, %v4762
    %v4846 = vsub.f32 0.0, %v4765
    %v4847 = vsub.f32 0.0, %v4767
    %v4848 = vsub.f32 0.0, %v4770
    %v4849 = vsub.f32 0.0, %v4772
    %v4850 = vsub.f32 0.0, %v4775
    %v4851 = vsub.f32 0.0, %v4777
    %v4852 = vsub.f32 0.0, %v4780
    %v4853 = vsub.f32 0.0, %v4782
    %v4854 = vsub.f32 0.0, %v4785
    %v4855 = vsub.f32 0.0, %v4787
    %v4856 = vsub.f32 0.0, %v4790
    %v4857 = vsub.f32 0.0, %v4792
    %v4858 = vmul.f32 %v4794, 1.442695
    %v4859 = vpow.pop %v4858
    %v4860 = vmul.f32 %v4795, 1.442695
    %v4861 = vpow.pop %v4860
    %v4862 = vmul.f32 %v4796, 1.442695
    %v4863 = vpow.pop %v4862
    %v4864 = vmul.f32 %v4797, 1.442695
    %v4865 = vpow.pop %v4864
    %v4866 = vmul.f32 %v4798, 1.442695
    %v4867 = vpow.pop %v4866
    %v4868 = vmul.f32 %v4799, 1.442695
    %v4869 = vpow.pop %v4868
    %v4870 = vmul.f32 %v4800, 1.442695
    %v4871 = vpow.pop %v4870
    %v4872 = vmul.f32 %v4801, 1.442695
    %v4873 = vpow.pop %v4872
    %v4874 = vmul.f32 %v4802, 1.442695
    %v4875 = vpow.pop %v4874
    %v4876 = vmul.f32 %v4803, 1.442695
    %v4877 = vpow.pop %v4876
    %v4878 = vmul.f32 %v4804, 1.442695
    %v4879 = vpow.pop %v4878
    %v4880 = vmul.f32 %v4805, 1.442695
    %v4881 = vpow.pop %v4880
    %v4882 = vmul.f32 %v4806, 1.442695
    %v4883 = vpow.pop %v4882
    %v4884 = vmul.f32 %v4807, 1.442695
    %v4885 = vpow.pop %v4884
    %v4886 = vmul.f32 %v4808, 1.442695
    %v4887 = vpow.pop %v4886
    %v4888 = vmul.f32 %v4809, 1.442695
    %v4889 = vpow.pop %v4888
    %v4890 = vmul.f32 %v4810, 1.442695
    %v4891 = vpow.pop %v4890
    %v4892 = vmul.f32 %v4811, 1.442695
    %v4893 = vpow.pop %v4892
    %v4894 = vmul.f32 %v4812, 1.442695
    %v4895 = vpow.pop %v4894
    %v4896 = vmul.f32 %v4813, 1.442695
    %v4897 = vpow.pop %v4896
    %v4898 = vmul.f32 %v4814, 1.442695
    %v4899 = vpow.pop %v4898
    %v4900 = vmul.f32 %v4815, 1.442695
    %v4901 = vpow.pop %v4900
    %v4902 = vmul.f32 %v4816, 1.442695
    %v4903 = vpow.pop %v4902
    %v4904 = vmul.f32 %v4817, 1.442695
    %v4905 = vpow.pop %v4904
    %v4906 = vmul.f32 %v4818, 1.442695
    %v4907 = vpow.pop %v4906
    %v4908 = vmul.f32 %v4819, 1.442695
    %v4909 = vpow.pop %v4908
    %v4910 = vmul.f32 %v4820, 1.442695
    %v4911 = vpow.pop %v4910
    %v4912 = vmul.f32 %v4821, 1.442695
    %v4913 = vpow.pop %v4912
    %v4914 = vmul.f32 %v4822, 1.442695
    %v4915 = vpow.pop %v4914
    %v4916 = vmul.f32 %v4823, 1.442695
    %v4917 = vpow.pop %v4916
    %v4918 = vmul.f32 %v4824, 1.442695
    %v4919 = vpow.pop %v4918
    %v4920 = vmul.f32 %v4825, 1.442695
    %v4921 = vpow.pop %v4920
    %v4922 = vmul.f32 %v4826, 1.442695
    %v4923 = vpow.pop %v4922
    %v4924 = vmul.f32 %v4827, 1.442695
    %v4925 = vpow.pop %v4924
    %v4926 = vmul.f32 %v4828, 1.442695
    %v4927 = vpow.pop %v4926
    %v4928 = vmul.f32 %v4829, 1.442695
    %v4929 = vpow.pop %v4928
    %v4930 = vmul.f32 %v4830, 1.442695
    %v4931 = vpow.pop %v4930
    %v4932 = vmul.f32 %v4831, 1.442695
    %v4933 = vpow.pop %v4932
    %v4934 = vmul.f32 %v4832, 1.442695
    %v4935 = vpow.pop %v4934
    %v4936 = vmul.f32 %v4833, 1.442695
    %v4937 = vpow.pop %v4936
    %v4938 = vmul.f32 %v4834, 1.442695
    %v4939 = vpow.pop %v4938
    %v4940 = vmul.f32 %v4835, 1.442695
    %v4941 = vpow.pop %v4940
    %v4942 = vmul.f32 %v4836, 1.442695
    %v4943 = vpow.pop %v4942
    %v4944 = vmul.f32 %v4837, 1.442695
    %v4945 = vpow.pop %v4944
    %v4946 = vmul.f32 %v4838, 1.442695
    %v4947 = vpow.pop %v4946
    %v4948 = vmul.f32 %v4839, 1.442695
    %v4949 = vpow.pop %v4948
    %v4950 = vmul.f32 %v4840, 1.442695
    %v4951 = vpow.pop %v4950
    %v4952 = vmul.f32 %v4841, 1.442695
    %v4953 = vpow.pop %v4952
    %v4954 = vmul.f32 %v4842, 1.442695
    %v4955 = vpow.pop %v4954
    %v4956 = vmul.f32 %v4843, 1.442695
    %v4957 = vpow.pop %v4956
    %v4958 = vmul.f32 %v4844, 1.442695
    %v4959 = vpow.pop %v4958
    %v4960 = vmul.f32 %v4845, 1.442695
    %v4961 = vpow.pop %v4960
    %v4962 = vmul.f32 %v4846, 1.442695
    %v4963 = vpow.pop %v4962
    %v4964 = vmul.f32 %v4847, 1.442695
    %v4965 = vpow.pop %v4964
    %v4966 = vmul.f32 %v4848, 1.442695
    %v4967 = vpow.pop %v4966
    %v4968 = vmul.f32 %v4849, 1.442695
    %v4969 = vpow.pop %v4968
    %v4970 = vmul.f32 %v4850, 1.442695
    %v4971 = vpow.pop %v4970
    %v4972 = vmul.f32 %v4851, 1.442695
    %v4973 = vpow.pop %v4972
    %v4974 = vmul.f32 %v4852, 1.442695
    %v4975 = vpow.pop %v4974
    %v4976 = vmul.f32 %v4853, 1.442695
    %v4977 = vpow.pop %v4976
    %v4978 = vmul.f32 %v4854, 1.442695
    %v4979 = vpow.pop %v4978
    %v4980 = vmul.f32 %v4855, 1.442695
    %v4981 = vpow.pop %v4980
    %v4982 = vmul.f32 %v4856, 1.442695
    %v4983 = vpow.pop %v4982
    %v4984 = vmul.f32 %v4857, 1.442695
    %v4985 = vpow.pop %v4984
    %v4986 = vadd.f32 %v4859, 1.0
    %v4987 = vadd.f32 %v4861, 1.0
    %v4988 = vadd.f32 %v4863, 1.0
    %v4989 = vadd.f32 %v4865, 1.0
    %v4990 = vadd.f32 %v4867, 1.0
    %v4991 = vadd.f32 %v4869, 1.0
    %v4992 = vadd.f32 %v4871, 1.0
    %v4993 = vadd.f32 %v4873, 1.0
    %v4994 = vadd.f32 %v4875, 1.0
    %v4995 = vadd.f32 %v4877, 1.0
    %v4996 = vadd.f32 %v4879, 1.0
    %v4997 = vadd.f32 %v4881, 1.0
    %v4998 = vadd.f32 %v4883, 1.0
    %v4999 = vadd.f32 %v4885, 1.0
    %v5000 = vadd.f32 %v4887, 1.0
    %v5001 = vadd.f32 %v4889, 1.0
    %v5002 = vadd.f32 %v4891, 1.0
    %v5003 = vadd.f32 %v4893, 1.0
    %v5004 = vadd.f32 %v4895, 1.0
    %v5005 = vadd.f32 %v4897, 1.0
    %v5006 = vadd.f32 %v4899, 1.0
    %v5007 = vadd.f32 %v4901, 1.0
    %v5008 = vadd.f32 %v4903, 1.0
    %v5009 = vadd.f32 %v4905, 1.0
    %v5010 = vadd.f32 %v4907, 1.0
    %v5011 = vadd.f32 %v4909, 1.0
    %v5012 = vadd.f32 %v4911, 1.0
    %v5013 = vadd.f32 %v4913, 1.0
    %v5014 = vadd.f32 %v4915, 1.0
    %v5015 = vadd.f32 %v4917, 1.0
    %v5016 = vadd.f32 %v4919, 1.0
    %v5017 = vadd.f32 %v4921, 1.0
    %v5018 = vadd.f32 %v4923, 1.0
    %v5019 = vadd.f32 %v4925, 1.0
    %v5020 = vadd.f32 %v4927, 1.0
    %v5021 = vadd.f32 %v4929, 1.0
    %v5022 = vadd.f32 %v4931, 1.0
    %v5023 = vadd.f32 %v4933, 1.0
    %v5024 = vadd.f32 %v4935, 1.0
    %v5025 = vadd.f32 %v4937, 1.0
    %v5026 = vadd.f32 %v4939, 1.0
    %v5027 = vadd.f32 %v4941, 1.0
    %v5028 = vadd.f32 %v4943, 1.0
    %v5029 = vadd.f32 %v4945, 1.0
    %v5030 = vadd.f32 %v4947, 1.0
    %v5031 = vadd.f32 %v4949, 1.0
    %v5032 = vadd.f32 %v4951, 1.0
    %v5033 = vadd.f32 %v4953, 1.0
    %v5034 = vadd.f32 %v4955, 1.0
    %v5035 = vadd.f32 %v4957, 1.0
    %v5036 = vadd.f32 %v4959, 1.0
    %v5037 = vadd.f32 %v4961, 1.0
    %v5038 = vadd.f32 %v4963, 1.0
    %v5039 = vadd.f32 %v4965, 1.0
    %v5040 = vadd.f32 %v4967, 1.0
    %v5041 = vadd.f32 %v4969, 1.0
    %v5042 = vadd.f32 %v4971, 1.0
    %v5043 = vadd.f32 %v4973, 1.0
    %v5044 = vadd.f32 %v4975, 1.0
    %v5045 = vadd.f32 %v4977, 1.0
    %v5046 = vadd.f32 %v4979, 1.0
    %v5047 = vadd.f32 %v4981, 1.0
    %v5048 = vadd.f32 %v4983, 1.0
    %v5049 = vadd.f32 %v4985, 1.0
    %v5050 = vrcp.pop %v4986
    %v5051 = vrcp.pop %v4987
    %v5052 = vrcp.pop %v4988
    %v5053 = vrcp.pop %v4989
    %v5054 = vrcp.pop %v4990
    %v5055 = vrcp.pop %v4991
    %v5056 = vrcp.pop %v4992
    %v5057 = vrcp.pop %v4993
    %v5058 = vrcp.pop %v4994
    %v5059 = vrcp.pop %v4995
    %v5060 = vrcp.pop %v4996
    %v5061 = vrcp.pop %v4997
    %v5062 = vrcp.pop %v4998
    %v5063 = vrcp.pop %v4999
    %v5064 = vrcp.pop %v5000
    %v5065 = vrcp.pop %v5001
    %v5066 = vrcp.pop %v5002
    %v5067 = vrcp.pop %v5003
    %v5068 = vrcp.pop %v5004
    %v5069 = vrcp.pop %v5005
    %v5070 = vrcp.pop %v5006
    %v5071 = vrcp.pop %v5007
    %v5072 = vrcp.pop %v5008
    %v5073 = vrcp.pop %v5009
    %v5074 = vrcp.pop %v5010
    %v5075 = vrcp.pop %v5011
    %v5076 = vrcp.pop %v5012
    %v5077 = vrcp.pop %v5013
    %v5078 = vrcp.pop %v5014
    %v5079 = vrcp.pop %v5015
    %v5080 = vrcp.pop %v5016
    %v5081 = vrcp.pop %v5017
    %v5082 = vrcp.pop %v5018
    %v5083 = vrcp.pop %v5019
    %v5084 = vrcp.pop %v5020
    %v5085 = vrcp.pop %v5021
    %v5086 = vrcp.pop %v5022
    %v5087 = vrcp.pop %v5023
    %v5088 = vrcp.pop %v5024
    %v5089 = vrcp.pop %v5025
    %v5090 = vrcp.pop %v5026
    %v5091 = vrcp.pop %v5027
    %v5092 = vrcp.pop %v5028
    %v5093 = vrcp.pop %v5029
    %v5094 = vrcp.pop %v5030
    %v5095 = vrcp.pop %v5031
    %v5096 = vrcp.pop %v5032
    %v5097 = vrcp.pop %v5033
    %v5098 = vrcp.pop %v5034
    %v5099 = vrcp.pop %v5035
    %v5100 = vrcp.pop %v5036
    %v5101 = vrcp.pop %v5037
    %v5102 = vrcp.pop %v5038
    %v5103 = vrcp.pop %v5039
    %v5104 = vrcp.pop %v5040
    %v5105 = vrcp.pop %v5041
    %v5106 = vrcp.pop %v5042
    %v5107 = vrcp.pop %v5043
    %v5108 = vrcp.pop %v5044
    %v5109 = vrcp.pop %v5045
    %v5110 = vrcp.pop %v5046
    %v5111 = vrcp.pop %v5047
    %v5112 = vrcp.pop %v5048
    %v5113 = vrcp.pop %v5049
    %v5114 = vmul.f32 %v4635, %v5050
    %v5115 = vmul.f32 %v4637, %v5051
    %v5116 = vmul.f32 %v4640, %v5052
    %v5117 = vmul.f32 %v4642, %v5053
    %v5118 = vmul.f32 %v4645, %v5054
    %v5119 = vmul.f32 %v4647, %v5055
    %v5120 = vmul.f32 %v4650, %v5056
    %v5121 = vmul.f32 %v4652, %v5057
    %v5122 = vmul.f32 %v4655, %v5058
    %v5123 = vmul.f32 %v4657, %v5059
    %v5124 = vmul.f32 %v4660, %v5060
    %v5125 = vmul.f32 %v4662, %v5061
    %v5126 = vmul.f32 %v4665, %v5062
    %v5127 = vmul.f32 %v4667, %v5063
    %v5128 = vmul.f32 %v4670, %v5064
    %v5129 = vmul.f32 %v4672, %v5065
    %v5130 = vmul.f32 %v4675, %v5066
    %v5131 = vmul.f32 %v4677, %v5067
    %v5132 = vmul.f32 %v4680, %v5068
    %v5133 = vmul.f32 %v4682, %v5069
    %v5134 = vmul.f32 %v4685, %v5070
    %v5135 = vmul.f32 %v4687, %v5071
    %v5136 = vmul.f32 %v4690, %v5072
    %v5137 = vmul.f32 %v4692, %v5073
    %v5138 = vmul.f32 %v4695, %v5074
    %v5139 = vmul.f32 %v4697, %v5075
    %v5140 = vmul.f32 %v4700, %v5076
    %v5141 = vmul.f32 %v4702, %v5077
    %v5142 = vmul.f32 %v4705, %v5078
    %v5143 = vmul.f32 %v4707, %v5079
    %v5144 = vmul.f32 %v4710, %v5080
    %v5145 = vmul.f32 %v4712, %v5081
    %v5146 = vmul.f32 %v4715, %v5082
    %v5147 = vmul.f32 %v4717, %v5083
    %v5148 = vmul.f32 %v4720, %v5084
    %v5149 = vmul.f32 %v4722, %v5085
    %v5150 = vmul.f32 %v4725, %v5086
    %v5151 = vmul.f32 %v4727, %v5087
    %v5152 = vmul.f32 %v4730, %v5088
    %v5153 = vmul.f32 %v4732, %v5089
    %v5154 = vmul.f32 %v4735, %v5090
    %v5155 = vmul.f32 %v4737, %v5091
    %v5156 = vmul.f32 %v4740, %v5092
    %v5157 = vmul.f32 %v4742, %v5093
    %v5158 = vmul.f32 %v4745, %v5094
    %v5159 = vmul.f32 %v4747, %v5095
    %v5160 = vmul.f32 %v4750, %v5096
    %v5161 = vmul.f32 %v4752, %v5097
    %v5162 = vmul.f32 %v4755, %v5098
    %v5163 = vmul.f32 %v4757, %v5099
    %v5164 = vmul.f32 %v4760, %v5100
    %v5165 = vmul.f32 %v4762, %v5101
    %v5166 = vmul.f32 %v4765, %v5102
    %v5167 = vmul.f32 %v4767, %v5103
    %v5168 = vmul.f32 %v4770, %v5104
    %v5169 = vmul.f32 %v4772, %v5105
    %v5170 = vmul.f32 %v4775, %v5106
    %v5171 = vmul.f32 %v4777, %v5107
    %v5172 = vmul.f32 %v4780, %v5108
    %v5173 = vmul.f32 %v4782, %v5109
    %v5174 = vmul.f32 %v4785, %v5110
    %v5175 = vmul.f32 %v4787, %v5111
    %v5176 = vmul.f32 %v4790, %v5112
    %v5177 = vmul.f32 %v4792, %v5113
    %s5178 = scalar_lea.vmem %s5, 384
    %v5179 = vld [vmem:[%s5178] sm:$0xf]
    %v5180 = vld [vmem:[%s5178 + $0x4] sm:$0xf]
    %v5181 = vld [vmem:[%s5178 + $0x8] sm:$0xf]
    %v5182 = vld [vmem:[%s5178 + $0xc] sm:$0xf]
    %v5183 = vld [vmem:[%s5178 + $0x10] sm:$0xf]
    %v5184 = vld [vmem:[%s5178 + $0x14] sm:$0xf]
    %v5185 = vld [vmem:[%s5178 + $0x18] sm:$0xf]
    %v5186 = vld [vmem:[%s5178 + $0x1c] sm:$0xf]
    %v5187 = vld [vmem:[%s5178 + $0x20] sm:$0xf]
    %v5188 = vld [vmem:[%s5178 + $0x24] sm:$0xf]
    %v5189 = vld [vmem:[%s5178 + $0x28] sm:$0xf]
    %v5190 = vld [vmem:[%s5178 + $0x2c] sm:$0xf]
    %v5191 = vld [vmem:[%s5178 + $0x30] sm:$0xf]
    %v5192 = vld [vmem:[%s5178 + $0x34] sm:$0xf]
    %v5193 = vld [vmem:[%s5178 + $0x38] sm:$0xf]
    %v5194 = vld [vmem:[%s5178 + $0x3c] sm:$0xf]
    %v5195 = vpack.c.bf16 %v5115, %v5114
    %v5196 = vpack.c.bf16 %v5117, %v5116
    %v5197 = vpack.c.bf16 %v5119, %v5118
    %v5198 = vpack.c.bf16 %v5121, %v5120
    %v5199 = vpack.c.bf16 %v5123, %v5122
    %v5200 = vpack.c.bf16 %v5125, %v5124
    %v5201 = vpack.c.bf16 %v5127, %v5126
    %v5202 = vpack.c.bf16 %v5129, %v5128
    %v5203 = vpack.c.bf16 %v5131, %v5130
    %v5204 = vpack.c.bf16 %v5133, %v5132
    %v5205 = vpack.c.bf16 %v5135, %v5134
    %v5206 = vpack.c.bf16 %v5137, %v5136
    %v5207 = vpack.c.bf16 %v5139, %v5138
    %v5208 = vpack.c.bf16 %v5141, %v5140
    %v5209 = vpack.c.bf16 %v5143, %v5142
    %v5210 = vpack.c.bf16 %v5145, %v5144
    %v5211 = vpack.c.bf16 %v5147, %v5146
    %v5212 = vpack.c.bf16 %v5149, %v5148
    %v5213 = vpack.c.bf16 %v5151, %v5150
    %v5214 = vpack.c.bf16 %v5153, %v5152
    %v5215 = vpack.c.bf16 %v5155, %v5154
    %v5216 = vpack.c.bf16 %v5157, %v5156
    %v5217 = vpack.c.bf16 %v5159, %v5158
    %v5218 = vpack.c.bf16 %v5161, %v5160
    %v5219 = vpack.c.bf16 %v5163, %v5162
    %v5220 = vpack.c.bf16 %v5165, %v5164
    %v5221 = vpack.c.bf16 %v5167, %v5166
    %v5222 = vpack.c.bf16 %v5169, %v5168
    %v5223 = vpack.c.bf16 %v5171, %v5170
    %v5224 = vpack.c.bf16 %v5173, %v5172
    %v5225 = vpack.c.bf16 %v5175, %v5174
    %v5226 = vpack.c.bf16 %v5177, %v5176
    %v5227 = vld [vmem:[%s6 + $0x4] sm:$0x1]
    %v5228 = vperm.slane %v5227, 0
    %v5245 = vunpack.c.l.b16 %v5179
    %v5246 = vunpack.c.l.b16 %v5180
    %v5247 = vunpack.c.l.b16 %v5181
    %v5248 = vunpack.c.l.b16 %v5182
    %v5249 = vunpack.c.l.b16 %v5183
    %v5250 = vunpack.c.l.b16 %v5184
    %v5251 = vunpack.c.l.b16 %v5185
    %v5252 = vunpack.c.l.b16 %v5186
    %v5253 = vunpack.c.l.b16 %v5187
    %v5254 = vunpack.c.l.b16 %v5188
    %v5255 = vunpack.c.l.b16 %v5189
    %v5256 = vunpack.c.l.b16 %v5190
    %v5257 = vunpack.c.l.b16 %v5191
    %v5258 = vunpack.c.l.b16 %v5192
    %v5259 = vunpack.c.l.b16 %v5193
    %v5260 = vunpack.c.l.b16 %v5194
    %v5261 = vpack.c.b16 %v5246, %v5245
    %v5262 = vpack.c.b16 %v5248, %v5247
    %v5263 = vpack.c.b16 %v5250, %v5249
    %v5264 = vpack.c.b16 %v5252, %v5251
    %v5265 = vpack.c.b16 %v5254, %v5253
    %v5266 = vpack.c.b16 %v5256, %v5255
    %v5267 = vpack.c.b16 %v5258, %v5257
    %v5268 = vpack.c.b16 %v5260, %v5259
    %5277 = vmatpush.bf16.msra.mxu0 %v5268
    %5278 = vmatpush.bf16.msra.mxu0 %v5267
    %5279 = vmatpush.bf16.msra.mxu0 %v5266
    %5280 = vmatpush.bf16.msra.mxu0 %v5265
    %5281 = vmatpush.bf16.msra.mxu0 %v5264
    %5282 = vmatpush.bf16.msra.mxu0 %v5263
    %5283 = vmatpush.bf16.msra.mxu0 %v5262
    %5284 = vmatpush.bf16.msra.mxu0 %v5261
    %5285 = vmatmul.bf16.gmra.mxu0 %v5195
    %v5286 = vpop.f32.mrf.mxu0
    %v5287 = vadd.f32 %v5228, %v5286
    %v5288 = vpop.f32.mrf.mxu0
    %v5289 = vadd.f32 %v5228, %v5288
    %5290 = vmatmul.bf16.gmra.mxu0 %v5196
    %v5291 = vpop.f32.mrf.mxu0
    %v5292 = vadd.f32 %v5228, %v5291
    %v5293 = vpop.f32.mrf.mxu0
    %v5294 = vadd.f32 %v5228, %v5293
    %5295 = vmatmul.bf16.gmra.mxu0 %v5197
    %v5296 = vpop.f32.mrf.mxu0
    %v5297 = vadd.f32 %v5228, %v5296
    %v5298 = vpop.f32.mrf.mxu0
    %v5299 = vadd.f32 %v5228, %v5298
    %5300 = vmatmul.bf16.gmra.mxu0 %v5198
    %v5301 = vpop.f32.mrf.mxu0
    %v5302 = vadd.f32 %v5228, %v5301
    %v5303 = vpop.f32.mrf.mxu0
    %v5304 = vadd.f32 %v5228, %v5303
    %5305 = vmatmul.bf16.gmra.mxu0 %v5199
    %v5306 = vpop.f32.mrf.mxu0
    %v5307 = vadd.f32 %v5228, %v5306
    %v5308 = vpop.f32.mrf.mxu0
    %v5309 = vadd.f32 %v5228, %v5308
    %5310 = vmatmul.bf16.gmra.mxu0 %v5200
    %v5311 = vpop.f32.mrf.mxu0
    %v5312 = vadd.f32 %v5228, %v5311
    %v5313 = vpop.f32.mrf.mxu0
    %v5314 = vadd.f32 %v5228, %v5313
    %5315 = vmatmul.bf16.gmra.mxu0 %v5201
    %v5316 = vpop.f32.mrf.mxu0
    %v5317 = vadd.f32 %v5228, %v5316
    %v5318 = vpop.f32.mrf.mxu0
    %v5319 = vadd.f32 %v5228, %v5318
    %5320 = vmatmul.bf16.gmra.mxu0 %v5202
    %v5321 = vpop.f32.mrf.mxu0
    %v5322 = vadd.f32 %v5228, %v5321
    %v5323 = vpop.f32.mrf.mxu0
    %v5324 = vadd.f32 %v5228, %v5323
    %5325 = vmatmul.bf16.gmra.mxu0 %v5203
    %v5326 = vpop.f32.mrf.mxu0
    %v5327 = vadd.f32 %v5228, %v5326
    %v5328 = vpop.f32.mrf.mxu0
    %v5329 = vadd.f32 %v5228, %v5328
    %5330 = vmatmul.bf16.gmra.mxu0 %v5204
    %v5331 = vpop.f32.mrf.mxu0
    %v5332 = vadd.f32 %v5228, %v5331
    %v5333 = vpop.f32.mrf.mxu0
    %v5334 = vadd.f32 %v5228, %v5333
    %5335 = vmatmul.bf16.gmra.mxu0 %v5205
    %v5336 = vpop.f32.mrf.mxu0
    %v5337 = vadd.f32 %v5228, %v5336
    %v5338 = vpop.f32.mrf.mxu0
    %v5339 = vadd.f32 %v5228, %v5338
    %5340 = vmatmul.bf16.gmra.mxu0 %v5206
    %v5341 = vpop.f32.mrf.mxu0
    %v5342 = vadd.f32 %v5228, %v5341
    %v5343 = vpop.f32.mrf.mxu0
    %v5344 = vadd.f32 %v5228, %v5343
    %5345 = vmatmul.bf16.gmra.mxu0 %v5207
    %v5346 = vpop.f32.mrf.mxu0
    %v5347 = vadd.f32 %v5228, %v5346
    %v5348 = vpop.f32.mrf.mxu0
    %v5349 = vadd.f32 %v5228, %v5348
    %5350 = vmatmul.bf16.gmra.mxu0 %v5208
    %v5351 = vpop.f32.mrf.mxu0
    %v5352 = vadd.f32 %v5228, %v5351
    %v5353 = vpop.f32.mrf.mxu0
    %v5354 = vadd.f32 %v5228, %v5353
    %5355 = vmatmul.bf16.gmra.mxu0 %v5209
    %v5356 = vpop.f32.mrf.mxu0
    %v5357 = vadd.f32 %v5228, %v5356
    %v5358 = vpop.f32.mrf.mxu0
    %v5359 = vadd.f32 %v5228, %v5358
    %5360 = vmatmul.bf16.gmra.mxu0 %v5210
    %v5361 = vpop.f32.mrf.mxu0
    %v5362 = vadd.f32 %v5228, %v5361
    %v5363 = vpop.f32.mrf.mxu0
    %v5364 = vadd.f32 %v5228, %v5363
    %5365 = vmatmul.bf16.gmra.mxu0 %v5211
    %v5366 = vpop.f32.mrf.mxu0
    %v5367 = vadd.f32 %v5228, %v5366
    %v5368 = vpop.f32.mrf.mxu0
    %v5369 = vadd.f32 %v5228, %v5368
    %5370 = vmatmul.bf16.gmra.mxu0 %v5212
    %v5371 = vpop.f32.mrf.mxu0
    %v5372 = vadd.f32 %v5228, %v5371
    %v5373 = vpop.f32.mrf.mxu0
    %v5374 = vadd.f32 %v5228, %v5373
    %5375 = vmatmul.bf16.gmra.mxu0 %v5213
    %v5376 = vpop.f32.mrf.mxu0
    %v5377 = vadd.f32 %v5228, %v5376
    %v5378 = vpop.f32.mrf.mxu0
    %v5379 = vadd.f32 %v5228, %v5378
    %5380 = vmatmul.bf16.gmra.mxu0 %v5214
    %v5381 = vpop.f32.mrf.mxu0
    %v5382 = vadd.f32 %v5228, %v5381
    %v5383 = vpop.f32.mrf.mxu0
    %v5384 = vadd.f32 %v5228, %v5383
    %5385 = vmatmul.bf16.gmra.mxu0 %v5215
    %v5386 = vpop.f32.mrf.mxu0
    %v5387 = vadd.f32 %v5228, %v5386
    %v5388 = vpop.f32.mrf.mxu0
    %v5389 = vadd.f32 %v5228, %v5388
    %5390 = vmatmul.bf16.gmra.mxu0 %v5216
    %v5391 = vpop.f32.mrf.mxu0
    %v5392 = vadd.f32 %v5228, %v5391
    %v5393 = vpop.f32.mrf.mxu0
    %v5394 = vadd.f32 %v5228, %v5393
    %5395 = vmatmul.bf16.gmra.mxu0 %v5217
    %v5396 = vpop.f32.mrf.mxu0
    %v5397 = vadd.f32 %v5228, %v5396
    %v5398 = vpop.f32.mrf.mxu0
    %v5399 = vadd.f32 %v5228, %v5398
    %5400 = vmatmul.bf16.gmra.mxu0 %v5218
    %v5401 = vpop.f32.mrf.mxu0
    %v5402 = vadd.f32 %v5228, %v5401
    %v5403 = vpop.f32.mrf.mxu0
    %v5404 = vadd.f32 %v5228, %v5403
    %5405 = vmatmul.bf16.gmra.mxu0 %v5219
    %v5406 = vpop.f32.mrf.mxu0
    %v5407 = vadd.f32 %v5228, %v5406
    %v5408 = vpop.f32.mrf.mxu0
    %v5409 = vadd.f32 %v5228, %v5408
    %5410 = vmatmul.bf16.gmra.mxu0 %v5220
    %v5411 = vpop.f32.mrf.mxu0
    %v5412 = vadd.f32 %v5228, %v5411
    %v5413 = vpop.f32.mrf.mxu0
    %v5414 = vadd.f32 %v5228, %v5413
    %5415 = vmatmul.bf16.gmra.mxu0 %v5221
    %v5416 = vpop.f32.mrf.mxu0
    %v5417 = vadd.f32 %v5228, %v5416
    %v5418 = vpop.f32.mrf.mxu0
    %v5419 = vadd.f32 %v5228, %v5418
    %5420 = vmatmul.bf16.gmra.mxu0 %v5222
    %v5421 = vpop.f32.mrf.mxu0
    %v5422 = vadd.f32 %v5228, %v5421
    %v5423 = vpop.f32.mrf.mxu0
    %v5424 = vadd.f32 %v5228, %v5423
    %5425 = vmatmul.bf16.gmra.mxu0 %v5223
    %v5426 = vpop.f32.mrf.mxu0
    %v5427 = vadd.f32 %v5228, %v5426
    %v5428 = vpop.f32.mrf.mxu0
    %v5429 = vadd.f32 %v5228, %v5428
    %5430 = vmatmul.bf16.gmra.mxu0 %v5224
    %v5431 = vpop.f32.mrf.mxu0
    %v5432 = vadd.f32 %v5228, %v5431
    %v5433 = vpop.f32.mrf.mxu0
    %v5434 = vadd.f32 %v5228, %v5433
    %5435 = vmatmul.bf16.gmra.mxu0 %v5225
    %v5436 = vpop.f32.mrf.mxu0
    %v5437 = vadd.f32 %v5228, %v5436
    %v5438 = vpop.f32.mrf.mxu0
    %v5439 = vadd.f32 %v5228, %v5438
    %5440 = vmatmul.bf16.gmra.mxu0 %v5226
    %v5441 = vpop.f32.mrf.mxu0
    %v5442 = vadd.f32 %v5228, %v5441
    %v5443 = vpop.f32.mrf.mxu0
    %v5444 = vadd.f32 %v5228, %v5443
    %5445 = vdwg.mxu0
    %v5446 = vsub.f32 0.0, %v5287
    %v5447 = vsub.f32 0.0, %v5289
    %v5448 = vsub.f32 0.0, %v5292
    %v5449 = vsub.f32 0.0, %v5294
    %v5450 = vsub.f32 0.0, %v5297
    %v5451 = vsub.f32 0.0, %v5299
    %v5452 = vsub.f32 0.0, %v5302
    %v5453 = vsub.f32 0.0, %v5304
    %v5454 = vsub.f32 0.0, %v5307
    %v5455 = vsub.f32 0.0, %v5309
    %v5456 = vsub.f32 0.0, %v5312
    %v5457 = vsub.f32 0.0, %v5314
    %v5458 = vsub.f32 0.0, %v5317
    %v5459 = vsub.f32 0.0, %v5319
    %v5460 = vsub.f32 0.0, %v5322
    %v5461 = vsub.f32 0.0, %v5324
    %v5462 = vsub.f32 0.0, %v5327
    %v5463 = vsub.f32 0.0, %v5329
    %v5464 = vsub.f32 0.0, %v5332
    %v5465 = vsub.f32 0.0, %v5334
    %v5466 = vsub.f32 0.0, %v5337
    %v5467 = vsub.f32 0.0, %v5339
    %v5468 = vsub.f32 0.0, %v5342
    %v5469 = vsub.f32 0.0, %v5344
    %v5470 = vsub.f32 0.0, %v5347
    %v5471 = vsub.f32 0.0, %v5349
    %v5472 = vsub.f32 0.0, %v5352
    %v5473 = vsub.f32 0.0, %v5354
    %v5474 = vsub.f32 0.0, %v5357
    %v5475 = vsub.f32 0.0, %v5359
    %v5476 = vsub.f32 0.0, %v5362
    %v5477 = vsub.f32 0.0, %v5364
    %v5478 = vsub.f32 0.0, %v5367
    %v5479 = vsub.f32 0.0, %v5369
    %v5480 = vsub.f32 0.0, %v5372
    %v5481 = vsub.f32 0.0, %v5374
    %v5482 = vsub.f32 0.0, %v5377
    %v5483 = vsub.f32 0.0, %v5379
    %v5484 = vsub.f32 0.0, %v5382
    %v5485 = vsub.f32 0.0, %v5384
    %v5486 = vsub.f32 0.0, %v5387
    %v5487 = vsub.f32 0.0, %v5389
    %v5488 = vsub.f32 0.0, %v5392
    %v5489 = vsub.f32 0.0, %v5394
    %v5490 = vsub.f32 0.0, %v5397
    %v5491 = vsub.f32 0.0, %v5399
    %v5492 = vsub.f32 0.0, %v5402
    %v5493 = vsub.f32 0.0, %v5404
    %v5494 = vsub.f32 0.0, %v5407
    %v5495 = vsub.f32 0.0, %v5409
    %v5496 = vsub.f32 0.0, %v5412
    %v5497 = vsub.f32 0.0, %v5414
    %v5498 = vsub.f32 0.0, %v5417
    %v5499 = vsub.f32 0.0, %v5419
    %v5500 = vsub.f32 0.0, %v5422
    %v5501 = vsub.f32 0.0, %v5424
    %v5502 = vsub.f32 0.0, %v5427
    %v5503 = vsub.f32 0.0, %v5429
    %v5504 = vsub.f32 0.0, %v5432
    %v5505 = vsub.f32 0.0, %v5434
    %v5506 = vsub.f32 0.0, %v5437
    %v5507 = vsub.f32 0.0, %v5439
    %v5508 = vsub.f32 0.0, %v5442
    %v5509 = vsub.f32 0.0, %v5444
    %v5510 = vmul.f32 %v5446, 1.442695
    %v5511 = vpow.pop %v5510
    %v5512 = vmul.f32 %v5447, 1.442695
    %v5513 = vpow.pop %v5512
    %v5514 = vmul.f32 %v5448, 1.442695
    %v5515 = vpow.pop %v5514
    %v5516 = vmul.f32 %v5449, 1.442695
    %v5517 = vpow.pop %v5516
    %v5518 = vmul.f32 %v5450, 1.442695
    %v5519 = vpow.pop %v5518
    %v5520 = vmul.f32 %v5451, 1.442695
    %v5521 = vpow.pop %v5520
    %v5522 = vmul.f32 %v5452, 1.442695
    %v5523 = vpow.pop %v5522
    %v5524 = vmul.f32 %v5453, 1.442695
    %v5525 = vpow.pop %v5524
    %v5526 = vmul.f32 %v5454, 1.442695
    %v5527 = vpow.pop %v5526
    %v5528 = vmul.f32 %v5455, 1.442695
    %v5529 = vpow.pop %v5528
    %v5530 = vmul.f32 %v5456, 1.442695
    %v5531 = vpow.pop %v5530
    %v5532 = vmul.f32 %v5457, 1.442695
    %v5533 = vpow.pop %v5532
    %v5534 = vmul.f32 %v5458, 1.442695
    %v5535 = vpow.pop %v5534
    %v5536 = vmul.f32 %v5459, 1.442695
    %v5537 = vpow.pop %v5536
    %v5538 = vmul.f32 %v5460, 1.442695
    %v5539 = vpow.pop %v5538
    %v5540 = vmul.f32 %v5461, 1.442695
    %v5541 = vpow.pop %v5540
    %v5542 = vmul.f32 %v5462, 1.442695
    %v5543 = vpow.pop %v5542
    %v5544 = vmul.f32 %v5463, 1.442695
    %v5545 = vpow.pop %v5544
    %v5546 = vmul.f32 %v5464, 1.442695
    %v5547 = vpow.pop %v5546
    %v5548 = vmul.f32 %v5465, 1.442695
    %v5549 = vpow.pop %v5548
    %v5550 = vmul.f32 %v5466, 1.442695
    %v5551 = vpow.pop %v5550
    %v5552 = vmul.f32 %v5467, 1.442695
    %v5553 = vpow.pop %v5552
    %v5554 = vmul.f32 %v5468, 1.442695
    %v5555 = vpow.pop %v5554
    %v5556 = vmul.f32 %v5469, 1.442695
    %v5557 = vpow.pop %v5556
    %v5558 = vmul.f32 %v5470, 1.442695
    %v5559 = vpow.pop %v5558
    %v5560 = vmul.f32 %v5471, 1.442695
    %v5561 = vpow.pop %v5560
    %v5562 = vmul.f32 %v5472, 1.442695
    %v5563 = vpow.pop %v5562
    %v5564 = vmul.f32 %v5473, 1.442695
    %v5565 = vpow.pop %v5564
    %v5566 = vmul.f32 %v5474, 1.442695
    %v5567 = vpow.pop %v5566
    %v5568 = vmul.f32 %v5475, 1.442695
    %v5569 = vpow.pop %v5568
    %v5570 = vmul.f32 %v5476, 1.442695
    %v5571 = vpow.pop %v5570
    %v5572 = vmul.f32 %v5477, 1.442695
    %v5573 = vpow.pop %v5572
    %v5574 = vmul.f32 %v5478, 1.442695
    %v5575 = vpow.pop %v5574
    %v5576 = vmul.f32 %v5479, 1.442695
    %v5577 = vpow.pop %v5576
    %v5578 = vmul.f32 %v5480, 1.442695
    %v5579 = vpow.pop %v5578
    %v5580 = vmul.f32 %v5481, 1.442695
    %v5581 = vpow.pop %v5580
    %v5582 = vmul.f32 %v5482, 1.442695
    %v5583 = vpow.pop %v5582
    %v5584 = vmul.f32 %v5483, 1.442695
    %v5585 = vpow.pop %v5584
    %v5586 = vmul.f32 %v5484, 1.442695
    %v5587 = vpow.pop %v5586
    %v5588 = vmul.f32 %v5485, 1.442695
    %v5589 = vpow.pop %v5588
    %v5590 = vmul.f32 %v5486, 1.442695
    %v5591 = vpow.pop %v5590
    %v5592 = vmul.f32 %v5487, 1.442695
    %v5593 = vpow.pop %v5592
    %v5594 = vmul.f32 %v5488, 1.442695
    %v5595 = vpow.pop %v5594
    %v5596 = vmul.f32 %v5489, 1.442695
    %v5597 = vpow.pop %v5596
    %v5598 = vmul.f32 %v5490, 1.442695
    %v5599 = vpow.pop %v5598
    %v5600 = vmul.f32 %v5491, 1.442695
    %v5601 = vpow.pop %v5600
    %v5602 = vmul.f32 %v5492, 1.442695
    %v5603 = vpow.pop %v5602
    %v5604 = vmul.f32 %v5493, 1.442695
    %v5605 = vpow.pop %v5604
    %v5606 = vmul.f32 %v5494, 1.442695
    %v5607 = vpow.pop %v5606
    %v5608 = vmul.f32 %v5495, 1.442695
    %v5609 = vpow.pop %v5608
    %v5610 = vmul.f32 %v5496, 1.442695
    %v5611 = vpow.pop %v5610
    %v5612 = vmul.f32 %v5497, 1.442695
    %v5613 = vpow.pop %v5612
    %v5614 = vmul.f32 %v5498, 1.442695
    %v5615 = vpow.pop %v5614
    %v5616 = vmul.f32 %v5499, 1.442695
    %v5617 = vpow.pop %v5616
    %v5618 = vmul.f32 %v5500, 1.442695
    %v5619 = vpow.pop %v5618
    %v5620 = vmul.f32 %v5501, 1.442695
    %v5621 = vpow.pop %v5620
    %v5622 = vmul.f32 %v5502, 1.442695
    %v5623 = vpow.pop %v5622
    %v5624 = vmul.f32 %v5503, 1.442695
    %v5625 = vpow.pop %v5624
    %v5626 = vmul.f32 %v5504, 1.442695
    %v5627 = vpow.pop %v5626
    %v5628 = vmul.f32 %v5505, 1.442695
    %v5629 = vpow.pop %v5628
    %v5630 = vmul.f32 %v5506, 1.442695
    %v5631 = vpow.pop %v5630
    %v5632 = vmul.f32 %v5507, 1.442695
    %v5633 = vpow.pop %v5632
    %v5634 = vmul.f32 %v5508, 1.442695
    %v5635 = vpow.pop %v5634
    %v5636 = vmul.f32 %v5509, 1.442695
    %v5637 = vpow.pop %v5636
    %v5638 = vadd.f32 %v5511, 1.0
    %v5639 = vadd.f32 %v5513, 1.0
    %v5640 = vadd.f32 %v5515, 1.0
    %v5641 = vadd.f32 %v5517, 1.0
    %v5642 = vadd.f32 %v5519, 1.0
    %v5643 = vadd.f32 %v5521, 1.0
    %v5644 = vadd.f32 %v5523, 1.0
    %v5645 = vadd.f32 %v5525, 1.0
    %v5646 = vadd.f32 %v5527, 1.0
    %v5647 = vadd.f32 %v5529, 1.0
    %v5648 = vadd.f32 %v5531, 1.0
    %v5649 = vadd.f32 %v5533, 1.0
    %v5650 = vadd.f32 %v5535, 1.0
    %v5651 = vadd.f32 %v5537, 1.0
    %v5652 = vadd.f32 %v5539, 1.0
    %v5653 = vadd.f32 %v5541, 1.0
    %v5654 = vadd.f32 %v5543, 1.0
    %v5655 = vadd.f32 %v5545, 1.0
    %v5656 = vadd.f32 %v5547, 1.0
    %v5657 = vadd.f32 %v5549, 1.0
    %v5658 = vadd.f32 %v5551, 1.0
    %v5659 = vadd.f32 %v5553, 1.0
    %v5660 = vadd.f32 %v5555, 1.0
    %v5661 = vadd.f32 %v5557, 1.0
    %v5662 = vadd.f32 %v5559, 1.0
    %v5663 = vadd.f32 %v5561, 1.0
    %v5664 = vadd.f32 %v5563, 1.0
    %v5665 = vadd.f32 %v5565, 1.0
    %v5666 = vadd.f32 %v5567, 1.0
    %v5667 = vadd.f32 %v5569, 1.0
    %v5668 = vadd.f32 %v5571, 1.0
    %v5669 = vadd.f32 %v5573, 1.0
    %v5670 = vadd.f32 %v5575, 1.0
    %v5671 = vadd.f32 %v5577, 1.0
    %v5672 = vadd.f32 %v5579, 1.0
    %v5673 = vadd.f32 %v5581, 1.0
    %v5674 = vadd.f32 %v5583, 1.0
    %v5675 = vadd.f32 %v5585, 1.0
    %v5676 = vadd.f32 %v5587, 1.0
    %v5677 = vadd.f32 %v5589, 1.0
    %v5678 = vadd.f32 %v5591, 1.0
    %v5679 = vadd.f32 %v5593, 1.0
    %v5680 = vadd.f32 %v5595, 1.0
    %v5681 = vadd.f32 %v5597, 1.0
    %v5682 = vadd.f32 %v5599, 1.0
    %v5683 = vadd.f32 %v5601, 1.0
    %v5684 = vadd.f32 %v5603, 1.0
    %v5685 = vadd.f32 %v5605, 1.0
    %v5686 = vadd.f32 %v5607, 1.0
    %v5687 = vadd.f32 %v5609, 1.0
    %v5688 = vadd.f32 %v5611, 1.0
    %v5689 = vadd.f32 %v5613, 1.0
    %v5690 = vadd.f32 %v5615, 1.0
    %v5691 = vadd.f32 %v5617, 1.0
    %v5692 = vadd.f32 %v5619, 1.0
    %v5693 = vadd.f32 %v5621, 1.0
    %v5694 = vadd.f32 %v5623, 1.0
    %v5695 = vadd.f32 %v5625, 1.0
    %v5696 = vadd.f32 %v5627, 1.0
    %v5697 = vadd.f32 %v5629, 1.0
    %v5698 = vadd.f32 %v5631, 1.0
    %v5699 = vadd.f32 %v5633, 1.0
    %v5700 = vadd.f32 %v5635, 1.0
    %v5701 = vadd.f32 %v5637, 1.0
    %v5702 = vrcp.pop %v5638
    %v5703 = vrcp.pop %v5639
    %v5704 = vrcp.pop %v5640
    %v5705 = vrcp.pop %v5641
    %v5706 = vrcp.pop %v5642
    %v5707 = vrcp.pop %v5643
    %v5708 = vrcp.pop %v5644
    %v5709 = vrcp.pop %v5645
    %v5710 = vrcp.pop %v5646
    %v5711 = vrcp.pop %v5647
    %v5712 = vrcp.pop %v5648
    %v5713 = vrcp.pop %v5649
    %v5714 = vrcp.pop %v5650
    %v5715 = vrcp.pop %v5651
    %v5716 = vrcp.pop %v5652
    %v5717 = vrcp.pop %v5653
    %v5718 = vrcp.pop %v5654
    %v5719 = vrcp.pop %v5655
    %v5720 = vrcp.pop %v5656
    %v5721 = vrcp.pop %v5657
    %v5722 = vrcp.pop %v5658
    %v5723 = vrcp.pop %v5659
    %v5724 = vrcp.pop %v5660
    %v5725 = vrcp.pop %v5661
    %v5726 = vrcp.pop %v5662
    %v5727 = vrcp.pop %v5663
    %v5728 = vrcp.pop %v5664
    %v5729 = vrcp.pop %v5665
    %v5730 = vrcp.pop %v5666
    %v5731 = vrcp.pop %v5667
    %v5732 = vrcp.pop %v5668
    %v5733 = vrcp.pop %v5669
    %v5734 = vrcp.pop %v5670
    %v5735 = vrcp.pop %v5671
    %v5736 = vrcp.pop %v5672
    %v5737 = vrcp.pop %v5673
    %v5738 = vrcp.pop %v5674
    %v5739 = vrcp.pop %v5675
    %v5740 = vrcp.pop %v5676
    %v5741 = vrcp.pop %v5677
    %v5742 = vrcp.pop %v5678
    %v5743 = vrcp.pop %v5679
    %v5744 = vrcp.pop %v5680
    %v5745 = vrcp.pop %v5681
    %v5746 = vrcp.pop %v5682
    %v5747 = vrcp.pop %v5683
    %v5748 = vrcp.pop %v5684
    %v5749 = vrcp.pop %v5685
    %v5750 = vrcp.pop %v5686
    %v5751 = vrcp.pop %v5687
    %v5752 = vrcp.pop %v5688
    %v5753 = vrcp.pop %v5689
    %v5754 = vrcp.pop %v5690
    %v5755 = vrcp.pop %v5691
    %v5756 = vrcp.pop %v5692
    %v5757 = vrcp.pop %v5693
    %v5758 = vrcp.pop %v5694
    %v5759 = vrcp.pop %v5695
    %v5760 = vrcp.pop %v5696
    %v5761 = vrcp.pop %v5697
    %v5762 = vrcp.pop %v5698
    %v5763 = vrcp.pop %v5699
    %v5764 = vrcp.pop %v5700
    %v5765 = vrcp.pop %v5701
    %v5766 = vmul.f32 %v5287, %v5702
    %v5767 = vmul.f32 %v5289, %v5703
    %v5768 = vmul.f32 %v5292, %v5704
    %v5769 = vmul.f32 %v5294, %v5705
    %v5770 = vmul.f32 %v5297, %v5706
    %v5771 = vmul.f32 %v5299, %v5707
    %v5772 = vmul.f32 %v5302, %v5708
    %v5773 = vmul.f32 %v5304, %v5709
    %v5774 = vmul.f32 %v5307, %v5710
    %v5775 = vmul.f32 %v5309, %v5711
    %v5776 = vmul.f32 %v5312, %v5712
    %v5777 = vmul.f32 %v5314, %v5713
    %v5778 = vmul.f32 %v5317, %v5714
    %v5779 = vmul.f32 %v5319, %v5715
    %v5780 = vmul.f32 %v5322, %v5716
    %v5781 = vmul.f32 %v5324, %v5717
    %v5782 = vmul.f32 %v5327, %v5718
    %v5783 = vmul.f32 %v5329, %v5719
    %v5784 = vmul.f32 %v5332, %v5720
    %v5785 = vmul.f32 %v5334, %v5721
    %v5786 = vmul.f32 %v5337, %v5722
    %v5787 = vmul.f32 %v5339, %v5723
    %v5788 = vmul.f32 %v5342, %v5724
    %v5789 = vmul.f32 %v5344, %v5725
    %v5790 = vmul.f32 %v5347, %v5726
    %v5791 = vmul.f32 %v5349, %v5727
    %v5792 = vmul.f32 %v5352, %v5728
    %v5793 = vmul.f32 %v5354, %v5729
    %v5794 = vmul.f32 %v5357, %v5730
    %v5795 = vmul.f32 %v5359, %v5731
    %v5796 = vmul.f32 %v5362, %v5732
    %v5797 = vmul.f32 %v5364, %v5733
    %v5798 = vmul.f32 %v5367, %v5734
    %v5799 = vmul.f32 %v5369, %v5735
    %v5800 = vmul.f32 %v5372, %v5736
    %v5801 = vmul.f32 %v5374, %v5737
    %v5802 = vmul.f32 %v5377, %v5738
    %v5803 = vmul.f32 %v5379, %v5739
    %v5804 = vmul.f32 %v5382, %v5740
    %v5805 = vmul.f32 %v5384, %v5741
    %v5806 = vmul.f32 %v5387, %v5742
    %v5807 = vmul.f32 %v5389, %v5743
    %v5808 = vmul.f32 %v5392, %v5744
    %v5809 = vmul.f32 %v5394, %v5745
    %v5810 = vmul.f32 %v5397, %v5746
    %v5811 = vmul.f32 %v5399, %v5747
    %v5812 = vmul.f32 %v5402, %v5748
    %v5813 = vmul.f32 %v5404, %v5749
    %v5814 = vmul.f32 %v5407, %v5750
    %v5815 = vmul.f32 %v5409, %v5751
    %v5816 = vmul.f32 %v5412, %v5752
    %v5817 = vmul.f32 %v5414, %v5753
    %v5818 = vmul.f32 %v5417, %v5754
    %v5819 = vmul.f32 %v5419, %v5755
    %v5820 = vmul.f32 %v5422, %v5756
    %v5821 = vmul.f32 %v5424, %v5757
    %v5822 = vmul.f32 %v5427, %v5758
    %v5823 = vmul.f32 %v5429, %v5759
    %v5824 = vmul.f32 %v5432, %v5760
    %v5825 = vmul.f32 %v5434, %v5761
    %v5826 = vmul.f32 %v5437, %v5762
    %v5827 = vmul.f32 %v5439, %v5763
    %v5828 = vmul.f32 %v5442, %v5764
    %v5829 = vmul.f32 %v5444, %v5765
    %v5830 = vadd.f32 %v4462, %v5766
    %v5831 = vadd.f32 %v4463, %v5767
    %v5832 = vadd.f32 %v4464, %v5768
    %v5833 = vadd.f32 %v4465, %v5769
    %v5834 = vadd.f32 %v4466, %v5770
    %v5835 = vadd.f32 %v4467, %v5771
    %v5836 = vadd.f32 %v4468, %v5772
    %v5837 = vadd.f32 %v4469, %v5773
    %v5838 = vadd.f32 %v4470, %v5774
    %v5839 = vadd.f32 %v4471, %v5775
    %v5840 = vadd.f32 %v4472, %v5776
    %v5841 = vadd.f32 %v4473, %v5777
    %v5842 = vadd.f32 %v4474, %v5778
    %v5843 = vadd.f32 %v4475, %v5779
    %v5844 = vadd.f32 %v4476, %v5780
    %v5845 = vadd.f32 %v4477, %v5781
    %v5846 = vadd.f32 %v4478, %v5782
    %v5847 = vadd.f32 %v4479, %v5783
    %v5848 = vadd.f32 %v4480, %v5784
    %v5849 = vadd.f32 %v4481, %v5785
    %v5850 = vadd.f32 %v4482, %v5786
    %v5851 = vadd.f32 %v4483, %v5787
    %v5852 = vadd.f32 %v4484, %v5788
    %v5853 = vadd.f32 %v4485, %v5789
    %v5854 = vadd.f32 %v4486, %v5790
    %v5855 = vadd.f32 %v4487, %v5791
    %v5856 = vadd.f32 %v4488, %v5792
    %v5857 = vadd.f32 %v4489, %v5793
    %v5858 = vadd.f32 %v4490, %v5794
    %v5859 = vadd.f32 %v4491, %v5795
    %v5860 = vadd.f32 %v4492, %v5796
    %v5861 = vadd.f32 %v4493, %v5797
    %v5862 = vadd.f32 %v4494, %v5798
    %v5863 = vadd.f32 %v4495, %v5799
    %v5864 = vadd.f32 %v4496, %v5800
    %v5865 = vadd.f32 %v4497, %v5801
    %v5866 = vadd.f32 %v4498, %v5802
    %v5867 = vadd.f32 %v4499, %v5803
    %v5868 = vadd.f32 %v4500, %v5804
    %v5869 = vadd.f32 %v4501, %v5805
    %v5870 = vadd.f32 %v4502, %v5806
    %v5871 = vadd.f32 %v4503, %v5807
    %v5872 = vadd.f32 %v4504, %v5808
    %v5873 = vadd.f32 %v4505, %v5809
    %v5874 = vadd.f32 %v4506, %v5810
    %v5875 = vadd.f32 %v4507, %v5811
    %v5876 = vadd.f32 %v4508, %v5812
    %v5877 = vadd.f32 %v4509, %v5813
    %v5878 = vadd.f32 %v4510, %v5814
    %v5879 = vadd.f32 %v4511, %v5815
    %v5880 = vadd.f32 %v4512, %v5816
    %v5881 = vadd.f32 %v4513, %v5817
    %v5882 = vadd.f32 %v4514, %v5818
    %v5883 = vadd.f32 %v4515, %v5819
    %v5884 = vadd.f32 %v4516, %v5820
    %v5885 = vadd.f32 %v4517, %v5821
    %v5886 = vadd.f32 %v4518, %v5822
    %v5887 = vadd.f32 %v4519, %v5823
    %v5888 = vadd.f32 %v4520, %v5824
    %v5889 = vadd.f32 %v4521, %v5825
    %v5890 = vadd.f32 %v4522, %v5826
    %v5891 = vadd.f32 %v4523, %v5827
    %v5892 = vadd.f32 %v4524, %v5828
    %v5893 = vadd.f32 %v4525, %v5829
    %v5894 = vpack.c.bf16 %v5830, %v5830
    %v5895 = vpack.c.bf16 %v5831, %v5831
    %v5896 = vpack.c.bf16 %v5832, %v5832
    %v5897 = vpack.c.bf16 %v5833, %v5833
    %v5898 = vpack.c.bf16 %v5834, %v5834
    %v5899 = vpack.c.bf16 %v5835, %v5835
    %v5900 = vpack.c.bf16 %v5836, %v5836
    %v5901 = vpack.c.bf16 %v5837, %v5837
    %v5902 = vpack.c.bf16 %v5838, %v5838
    %v5903 = vpack.c.bf16 %v5839, %v5839
    %v5904 = vpack.c.bf16 %v5840, %v5840
    %v5905 = vpack.c.bf16 %v5841, %v5841
    %v5906 = vpack.c.bf16 %v5842, %v5842
    %v5907 = vpack.c.bf16 %v5843, %v5843
    %v5908 = vpack.c.bf16 %v5844, %v5844
    %v5909 = vpack.c.bf16 %v5845, %v5845
    %v5910 = vpack.c.bf16 %v5846, %v5846
    %v5911 = vpack.c.bf16 %v5847, %v5847
    %v5912 = vpack.c.bf16 %v5848, %v5848
    %v5913 = vpack.c.bf16 %v5849, %v5849
    %v5914 = vpack.c.bf16 %v5850, %v5850
    %v5915 = vpack.c.bf16 %v5851, %v5851
    %v5916 = vpack.c.bf16 %v5852, %v5852
    %v5917 = vpack.c.bf16 %v5853, %v5853
    %v5918 = vpack.c.bf16 %v5854, %v5854
    %v5919 = vpack.c.bf16 %v5855, %v5855
    %v5920 = vpack.c.bf16 %v5856, %v5856
    %v5921 = vpack.c.bf16 %v5857, %v5857
    %v5922 = vpack.c.bf16 %v5858, %v5858
    %v5923 = vpack.c.bf16 %v5859, %v5859
    %v5924 = vpack.c.bf16 %v5860, %v5860
    %v5925 = vpack.c.bf16 %v5861, %v5861
    %v5926 = vpack.c.bf16 %v5862, %v5862
    %v5927 = vpack.c.bf16 %v5863, %v5863
    %v5928 = vpack.c.bf16 %v5864, %v5864
    %v5929 = vpack.c.bf16 %v5865, %v5865
    %v5930 = vpack.c.bf16 %v5866, %v5866
    %v5931 = vpack.c.bf16 %v5867, %v5867
    %v5932 = vpack.c.bf16 %v5868, %v5868
    %v5933 = vpack.c.bf16 %v5869, %v5869
    %v5934 = vpack.c.bf16 %v5870, %v5870
    %v5935 = vpack.c.bf16 %v5871, %v5871
    %v5936 = vpack.c.bf16 %v5872, %v5872
    %v5937 = vpack.c.bf16 %v5873, %v5873
    %v5938 = vpack.c.bf16 %v5874, %v5874
    %v5939 = vpack.c.bf16 %v5875, %v5875
    %v5940 = vpack.c.bf16 %v5876, %v5876
    %v5941 = vpack.c.bf16 %v5877, %v5877
    %v5942 = vpack.c.bf16 %v5878, %v5878
    %v5943 = vpack.c.bf16 %v5879, %v5879
    %v5944 = vpack.c.bf16 %v5880, %v5880
    %v5945 = vpack.c.bf16 %v5881, %v5881
    %v5946 = vpack.c.bf16 %v5882, %v5882
    %v5947 = vpack.c.bf16 %v5883, %v5883
    %v5948 = vpack.c.bf16 %v5884, %v5884
    %v5949 = vpack.c.bf16 %v5885, %v5885
    %v5950 = vpack.c.bf16 %v5886, %v5886
    %v5951 = vpack.c.bf16 %v5887, %v5887
    %v5952 = vpack.c.bf16 %v5888, %v5888
    %v5953 = vpack.c.bf16 %v5889, %v5889
    %v5954 = vpack.c.bf16 %v5890, %v5890
    %v5955 = vpack.c.bf16 %v5891, %v5891
    %v5956 = vpack.c.bf16 %v5892, %v5892
    %v5957 = vpack.c.bf16 %v5893, %v5893
    %5958 = vst [vmem:[%s7] sm:$0xf] %v5894
    %5959 = vst [vmem:[%s7 + $0x4] sm:$0xf] %v5895
    %5960 = vst [vmem:[%s7 + $0x8] sm:$0xf] %v5896
    %5961 = vst [vmem:[%s7 + $0xc] sm:$0xf] %v5897
    %5962 = vst [vmem:[%s7 + $0x10] sm:$0xf] %v5898
    %5963 = vst [vmem:[%s7 + $0x14] sm:$0xf] %v5899
    %5964 = vst [vmem:[%s7 + $0x18] sm:$0xf] %v5900
    %5965 = vst [vmem:[%s7 + $0x1c] sm:$0xf] %v5901
    %5966 = vst [vmem:[%s7 + $0x20] sm:$0xf] %v5902
    %5967 = vst [vmem:[%s7 + $0x24] sm:$0xf] %v5903
    %5968 = vst [vmem:[%s7 + $0x28] sm:$0xf] %v5904
    %5969 = vst [vmem:[%s7 + $0x2c] sm:$0xf] %v5905
    %5970 = vst [vmem:[%s7 + $0x30] sm:$0xf] %v5906
    %5971 = vst [vmem:[%s7 + $0x34] sm:$0xf] %v5907
    %5972 = vst [vmem:[%s7 + $0x38] sm:$0xf] %v5908
    %5973 = vst [vmem:[%s7 + $0x3c] sm:$0xf] %v5909
    %5974 = vst [vmem:[%s7 + $0x40] sm:$0xf] %v5910
    %5975 = vst [vmem:[%s7 + $0x44] sm:$0xf] %v5911
    %5976 = vst [vmem:[%s7 + $0x48] sm:$0xf] %v5912
    %5977 = vst [vmem:[%s7 + $0x4c] sm:$0xf] %v5913
    %5978 = vst [vmem:[%s7 + $0x50] sm:$0xf] %v5914
    %5979 = vst [vmem:[%s7 + $0x54] sm:$0xf] %v5915
    %5980 = vst [vmem:[%s7 + $0x58] sm:$0xf] %v5916
    %5981 = vst [vmem:[%s7 + $0x5c] sm:$0xf] %v5917
    %5982 = vst [vmem:[%s7 + $0x60] sm:$0xf] %v5918
    %5983 = vst [vmem:[%s7 + $0x64] sm:$0xf] %v5919
    %5984 = vst [vmem:[%s7 + $0x68] sm:$0xf] %v5920
    %5985 = vst [vmem:[%s7 + $0x6c] sm:$0xf] %v5921
    %5986 = vst [vmem:[%s7 + $0x70] sm:$0xf] %v5922
    %5987 = vst [vmem:[%s7 + $0x74] sm:$0xf] %v5923
    %5988 = vst [vmem:[%s7 + $0x78] sm:$0xf] %v5924
    %5989 = vst [vmem:[%s7 + $0x7c] sm:$0xf] %v5925
    %5990 = vst [vmem:[%s7 + $0x80] sm:$0xf] %v5926
    %5991 = vst [vmem:[%s7 + $0x84] sm:$0xf] %v5927
    %5992 = vst [vmem:[%s7 + $0x88] sm:$0xf] %v5928
    %5993 = vst [vmem:[%s7 + $0x8c] sm:$0xf] %v5929
    %5994 = vst [vmem:[%s7 + $0x90] sm:$0xf] %v5930
    %5995 = vst [vmem:[%s7 + $0x94] sm:$0xf] %v5931
    %5996 = vst [vmem:[%s7 + $0x98] sm:$0xf] %v5932
    %5997 = vst [vmem:[%s7 + $0x9c] sm:$0xf] %v5933
    %5998 = vst [vmem:[%s7 + $0xa0] sm:$0xf] %v5934
    %5999 = vst [vmem:[%s7 + $0xa4] sm:$0xf] %v5935
    %6000 = vst [vmem:[%s7 + $0xa8] sm:$0xf] %v5936
    %6001 = vst [vmem:[%s7 + $0xac] sm:$0xf] %v5937
    %6002 = vst [vmem:[%s7 + $0xb0] sm:$0xf] %v5938
    %6003 = vst [vmem:[%s7 + $0xb4] sm:$0xf] %v5939
    %6004 = vst [vmem:[%s7 + $0xb8] sm:$0xf] %v5940
    %6005 = vst [vmem:[%s7 + $0xbc] sm:$0xf] %v5941
    %6006 = vst [vmem:[%s7 + $0xc0] sm:$0xf] %v5942
    %6007 = vst [vmem:[%s7 + $0xc4] sm:$0xf] %v5943
    %6008 = vst [vmem:[%s7 + $0xc8] sm:$0xf] %v5944
    %6009 = vst [vmem:[%s7 + $0xcc] sm:$0xf] %v5945
    %6010 = vst [vmem:[%s7 + $0xd0] sm:$0xf] %v5946
    %6011 = vst [vmem:[%s7 + $0xd4] sm:$0xf] %v5947
    %6012 = vst [vmem:[%s7 + $0xd8] sm:$0xf] %v5948
    %6013 = vst [vmem:[%s7 + $0xdc] sm:$0xf] %v5949
    %6014 = vst [vmem:[%s7 + $0xe0] sm:$0xf] %v5950
    %6015 = vst [vmem:[%s7 + $0xe4] sm:$0xf] %v5951
    %6016 = vst [vmem:[%s7 + $0xe8] sm:$0xf] %v5952
    %6017 = vst [vmem:[%s7 + $0xec] sm:$0xf] %v5953
    %6018 = vst [vmem:[%s7 + $0xf0] sm:$0xf] %v5954
    %6019 = vst [vmem:[%s7 + $0xf4] sm:$0xf] %v5955
    %6020 = vst [vmem:[%s7 + $0xf8] sm:$0xf] %v5956
    %6021 = vst [vmem:[%s7 + $0xfc] sm:$0xf] %v5957
  $region37: #{dimenet_forward.11} parent=0 // pred_fallthru
    _
  // Predicated region
  $region38: #{dimenet_forward.11} parent=0 // pred_check
    _
  $region39: #{dimenet_forward.11} parent=0 // pred_check_branch
    %6023 = sbr.rel (0) target = $region41
  $region40: #{dimenet_forward.11} parent=0 // pred_region
    _
  $region41: #{dimenet_forward.11} parent=0 // pred_fallthru
    _
  // Predicated region
  $region42: #{dimenet_forward.11} parent=0 // pred_check
    _
  $region43: #{dimenet_forward.11} parent=0 // pred_check_branch
    %6025 = sbr.rel (0) target = $region45
  $region44: #{dimenet_forward.11} parent=0 // pred_region
    _
  $region45: #{dimenet_forward.11} parent=0 // pred_fallthru
    _

</llo_original>
